<compile_context>
chip_gen: v7x
topology: tpu7x:2x2x1
jax: 0.10.0
libtpu: 0.0.40
codegen_flags: <defaults>
</compile_context>

<pallas_src>
import jax
import jax.numpy as jnp
from jax import lax
from jax.experimental import pallas as pl
from jax.experimental.pallas import tpu as pltpu

H_IN = 28                      # input spatial size implied by fc1 (2704 = 16*13*13)
K = 3                          # conv kernel size
H_CONV = H_IN - K + 1          # 26
H_POOL = H_CONV // 2           # 13
C_OUT = 16
FEAT = C_OUT * H_POOL * H_POOL  # 2704
HID = 128
NCLS = 10
NREAL = H_POOL * C_OUT         # 208 real columns per (even/odd parity) block
HALF = 256                     # lane-aligned parity block (208 real + 48 zero pad)
WCONV = 2 * HALF               # 512 columns per conv row: parity*256 + w'*16 + c
KPACK = 128                    # packed contraction dim (4 rows * 28 = 112 + 16 pad)
OUT_PAD = 128                  # lane-dense logits width (10 real + 118 pad)


# ----------------------------------------------------------------------------
# Fused kernel: whole network for a batch tile of TB images
# ----------------------------------------------------------------------------
def fused_net_kernel(xp_ref, t_ref, cb_ref, w1_ref, b1_ref, w2_ref, b2_ref,
                     o_ref, h_acc):
    # xp_ref: (13, TB, 128) bf16  packed rows: slab i holds image rows 2i..2i+3
    # t_ref:  (128, 1024)   bf16  combined Toeplitz RHS (cols 0:512 -> conv row 2i,
    #                             cols 512:1024 -> conv row 2i+1)
    # cb_ref: (1, 512)  f32       conv bias (0 on pad columns)
    # w1_ref: (13, 256, 128) bf16 fc1 slabs (zero rows on pad columns)
    # b1_ref: (1, 128)  f32
    # w2_ref: (128, 128) bf16     fc2 weights (cols >= 10 are zero)
    # b2_ref: (1, 128)  f32       fc2 bias (cols >= 10 are -1e30)
    # o_ref:  (TB, 128) f32       log-probabilities (wrapper slices [:, :10])
    # h_acc:  (TB, 128) f32       VMEM scratch: fc1 accumulator
    h_acc[...] = jnp.zeros_like(h_acc)

    def body(i, carry):
        xp = xp_ref[i]                                            # (TB, 128) bf16
        # both conv rows of the pair in ONE K=128 MXU dot
        rr = jnp.dot(xp, t_ref[...],
                     preferred_element_type=jnp.float32)          # (TB, 1024)
        # relu(max(rows) + bias) == max_pool over the two rows of relu(conv + b)
        row = jnp.maximum(
            jnp.maximum(rr[:, :WCONV], rr[:, WCONV:]) + cb_ref[...], 0.0)  # (TB,512)
        # finish 2x2 pool: max of even-column block and odd-column block
        rowp = jnp.maximum(row[:, :HALF], row[:, HALF:])          # (TB, 256)
        # partial fc1: contract this pooled row against its fc1 weight slab
        h_acc[...] += jnp.dot(rowp.astype(jnp.bfloat16), w1_ref[i],
                              preferred_element_type=jnp.float32)
        return carry

    lax.fori_loop(0, H_POOL, body, 0, unroll=True)

    h = jnp.maximum(h_acc[...] + b1_ref[...], 0.0)                # fc1 bias + ReLU
    logits = jnp.dot(h.astype(jnp.bfloat16), w2_ref[...],
                     preferred_element_type=jnp.float32) + b2_ref[...]
    # pad columns carry bias -1e30 -> excluded from max / exp-sum automatically
    m = jnp.max(logits, axis=-1, keepdims=True)
    z = logits - m
    lse = jnp.log(jnp.sum(jnp.exp(z), axis=-1, keepdims=True))
    o_ref[...] = z - lse                                          # log_softmax


# ----------------------------------------------------------------------------
# Wrapper-side parameter packing (plain XLA, runs outside the kernel)
# ----------------------------------------------------------------------------
def _pack_params(params):
    conv_w = params["conv_w"].astype(jnp.float32)     # (16, 1, 3, 3)  torch layout
    conv_b = params["conv_b"].astype(jnp.float32)     # (16,)
    fc1_w = params["fc1_w"].astype(jnp.float32)       # (128, 2704)
    fc1_b = params["fc1_b"].astype(jnp.float32)       # (128,)
    fc2_w = params["fc2_w"].astype(jnp.float32)       # (10, 128)
    fc2_b = params["fc2_b"].astype(jnp.float32)       # (10,)

    w = conv_w[:, 0]                                  # (16, 3, 3)  [c, dy, dx]
    # Width-Toeplitz matrices: T[dy, win, j, c] = w[c, dy, win - j], win-j in {0,1,2}
    tjc = jnp.zeros((K, H_IN, H_CONV, C_OUT), jnp.float32)
    for dy in range(K):
        for dx in range(K):
            tjc = tjc.at[dy].add(
                jnp.eye(H_IN, H_CONV, k=-dx, dtype=jnp.float32)[:, :, None]
                * w[:, dy, dx][None, None, :])
    # remap output column j = 2*w' + parity  ->  col = parity*256 + w'*16 + c
    t = tjc.reshape(K, H_IN, H_POOL, 2, C_OUT)        # [dy, win, w', parity, c]
    t = jnp.transpose(t, (0, 1, 3, 2, 4))             # [dy, win, parity, w', c]
    t = t.reshape(K, H_IN, 2, NREAL)
    t = jnp.pad(t, ((0, 0), (0, 0), (0, 0), (0, HALF - NREAL)))
    t = t.reshape(K, H_IN, WCONV)                     # (3, 28, 512)

    # Combined RHS for the packed K=128 contraction:
    #   input rows [dy*28:(dy+1)*28] are image row 2i+dy.
    #   conv row 2i   uses image rows 2i..2i+2  -> t[dy] at rows dy*28, cols 0:512
    #   conv row 2i+1 uses image rows 2i+1..2i+3 -> t[dy] at rows (dy+1)*28, cols 512:
    tc = jnp.zeros((KPACK, 2 * WCONV), jnp.float32)
    for dy in range(K):
        tc = tc.at[dy * H_IN:(dy + 1) * H_IN, :WCONV].set(t[dy])
        tc = tc.at[(dy + 1) * H_IN:(dy + 2) * H_IN, WCONV:].set(t[dy])
    tc = tc.astype(jnp.bfloat16)                      # (128, 1024)

    cb = jnp.tile(conv_b[None, :], (H_POOL, 1)).reshape(NREAL)   # b[c] at w'*16+c
    cb = jnp.pad(cb, (0, HALF - NREAL))
    cb = jnp.tile(cb, 2)[None, :]                     # (1, 512) f32

    # fc1: torch flatten order is (c, h, w'); re-pack as per-row (h) slabs with
    # row index w'*16 + c, zero rows on the 48 pad columns.
    w1 = fc1_w.reshape(HID, C_OUT, H_POOL, H_POOL)    # [k, c, h, w']
    w1 = jnp.transpose(w1, (2, 3, 1, 0))              # [h, w', c, k]
    w1 = w1.reshape(H_POOL, NREAL, HID)
    w1 = jnp.pad(w1, ((0, 0), (0, HALF - NREAL), (0, 0)))
    w1 = w1.astype(jnp.bfloat16)                      # (13, 256, 128)

    b1 = fc1_b[None, :]                               # (1, 128) f32

    # fc2 padded to 128 lane-dense logits; pad bias -1e30 keeps log_softmax exact.
    w2 = jnp.zeros((HID, OUT_PAD), jnp.float32).at[:, :NCLS].set(fc2_w.T)
    w2 = w2.astype(jnp.bfloat16)                      # (128, 128)
    b2 = jnp.full((1, OUT_PAD), -1e30, jnp.float32).at[0, :NCLS].set(fc2_b)
    return tc, cb, w1, b1, w2, b2


def _round_up(n, m):
    return ((n + m - 1) // m) * m


def _choose_tb(batch):
    """Batch tile: as large as possible (<=256), multiple of 8, and for large
    batches capped so the grid has >=2 steps (v7x has 2 TensorCores)."""
    bp8 = _round_up(max(batch, 1), 8)
    if bp8 <= 16:
        return bp8
    return min(256, _round_up((bp8 + 1) // 2, 8))


# ----------------------------------------------------------------------------
# Full forward (dropout layers are identity at inference)
# ----------------------------------------------------------------------------
# TODO(synk): dropout1/dropout2 are inference no-ops; training-mode dropout is
# not implemented in the kernel.
@jax.jit
def net_forward(x_nchw, params):
    B = x_nchw.shape[0]
    TB = _choose_tb(B)
    Bp = _round_up(B, TB)
    x = x_nchw[:, 0, :, :].astype(jnp.float32)        # (B, 28, 28), C_in == 1
    if Bp != B:
        x = jnp.pad(x, ((0, Bp - B), (0, 0), (0, 0)))

    # Pack image rows: slab i = concat(rows 2i..2i+3) -> 112 lanes, pad to 128,
    # laid out (13, Bp, 128) so the kernel indexes the leading axis dynamically.
    ridx = 2 * jnp.arange(H_POOL)[:, None] + jnp.arange(4)[None, :]   # (13, 4)
    xp = x[:, ridx, :]                                # (Bp, 13, 4, 28)
    xp = xp.reshape(Bp, H_POOL, 4 * H_IN)             # (Bp, 13, 112)
    xp = jnp.pad(xp, ((0, 0), (0, 0), (0, KPACK - 4 * H_IN)))
    xp = jnp.transpose(xp, (1, 0, 2)).astype(jnp.bfloat16)            # (13, Bp, 128)

    tc, cb, w1, b1, w2, b2 = _pack_params(params)

    out = pl.pallas_call(
        fused_net_kernel,
        out_shape=jax.ShapeDtypeStruct((Bp, OUT_PAD), jnp.float32),
        grid=(Bp // TB,),
        in_specs=[
            pl.BlockSpec((H_POOL, TB, KPACK), lambda b: (0, b, 0)),   # packed images
            pl.BlockSpec((KPACK, 2 * WCONV), lambda b: (0, 0)),       # conv Toeplitz
            pl.BlockSpec((1, WCONV), lambda b: (0, 0)),               # conv bias
            pl.BlockSpec((H_POOL, HALF, HID), lambda b: (0, 0, 0)),   # fc1 slabs
            pl.BlockSpec((1, HID), lambda b: (0, 0)),                 # fc1 bias
            pl.BlockSpec((HID, OUT_PAD), lambda b: (0, 0)),           # fc2 weights
            pl.BlockSpec((1, OUT_PAD), lambda b: (0, 0)),             # fc2 bias
        ],
        out_specs=pl.BlockSpec((TB, OUT_PAD), lambda b: (b, 0)),
        scratch_shapes=[pltpu.VMEM((TB, HID), jnp.float32)],
        compiler_params=pltpu.CompilerParams(
            dimension_semantics=("parallel",),
            vmem_limit_bytes=32 * 1024 * 1024),
    )(xp, tc, cb, w1, b1, w2, b2)
    return out[:B, :NCLS]


# ----------------------------------------------------------------------------
# Pure-JAX reference (mirrors the PyTorch forward, torch parameter layouts)
# ----------------------------------------------------------------------------
@jax.jit
def reference(x_nchw, params):
    x = x_nchw[:, 0].astype(jnp.float32)              # (B, 28, 28)
    B = x.shape[0]
    w = params["conv_w"][:, 0]                        # (16, 3, 3)
    acc = jnp.zeros((B, H_CONV, H_CONV, C_OUT), jnp.float32)
    for dy in range(K):
        for dx in range(K):
            acc = acc + (x[:, dy:dy + H_CONV, dx:dx + H_CONV, None]
                         * w[:, dy, dx][None, None, None, :])
    acc = jnp.maximum(acc + params["conv_b"][None, None, None, :], 0.0)
    pooled = acc.reshape(B, H_POOL, 2, H_POOL, 2, C_OUT).max(axis=(2, 4))
    feats = jnp.transpose(pooled, (0, 3, 1, 2)).reshape(B, FEAT)   # torch CHW flatten
    h = jnp.maximum(feats @ params["fc1_w"].T + params["fc1_b"], 0.0)
    logits = h @ params["fc2_w"].T + params["fc2_b"]
    return jax.nn.log_softmax(logits, axis=-1)


if __name__ == "__main__":
    key = jax.random.PRNGKey(0)
    kx, k0, k1, k2, k3, k4, k5 = jax.random.split(key, 7)

    # Deterministic synthetic parameters in the PyTorch layouts:
    #   conv1.weight (16,1,3,3), conv1.bias (16,), fc1 (128,2704)/(128,), fc2 (10,128)/(10,)
    params = {
        "conv_w": jax.random.normal(k0, (C_OUT, 1, K, K), jnp.float32) * 0.10,
        "conv_b": jax.random.normal(k1, (C_OUT,), jnp.float32) * 0.10,
        "fc1_w": jax.random.normal(k2, (HID, FEAT), jnp.float32) * 0.02,
        "fc1_b": jax.random.normal(k3, (HID,), jnp.float32) * 0.02,
        "fc2_w": jax.random.normal(k4, (NCLS, HID), jnp.float32) * 0.05,
        "fc2_b": jax.random.normal(k5, (NCLS,), jnp.float32) * 0.05,
    }

    # Small batch; spatial size is fixed at 28 by the module (fc1 expects 2704 inputs).
    x = jax.random.normal(kx, (2, 1, H_IN, H_IN), jnp.float32)

    out = jax.block_until_ready(net_forward(x, params))
    ref = jax.block_until_ready(reference(x, params))

    assert out.shape == (2, NCLS), out.shape
    if not bool(jnp.allclose(out, ref, atol=2e-2, rtol=2e-2)):
        max_err = float(jnp.max(jnp.abs(out - ref)))
        raise SystemExit(f"kernel/reference mismatch (max abs err {max_err:.3e})")
    print("KERNEL_OK")
</pallas_src>

<mosaic_0001>
module attributes {stable_mosaic.version = 11 : i64} {
  func.func @fused_net_kernel(%arg0: i32, %arg1: memref<13x8x128xbf16, #tpu.memory_space<vmem>>, %arg2: memref<128x1024xbf16, #tpu.memory_space<vmem>>, %arg3: memref<1x512xf32, #tpu.memory_space<vmem>>, %arg4: memref<13x256x128xbf16, #tpu.memory_space<vmem>>, %arg5: memref<1x128xf32, #tpu.memory_space<vmem>>, %arg6: memref<128x128xbf16, #tpu.memory_space<vmem>>, %arg7: memref<1x128xf32, #tpu.memory_space<vmem>>, %arg8: memref<8x128xf32, #tpu.memory_space<vmem>>, %arg9: memref<8x128xf32, #tpu.memory_space<vmem>>) attributes {dimension_semantics = [#tpu.dimension_semantics<parallel>], iteration_bounds = array<i64: 1>, scalar_prefetch = 0 : i64, scratch_operands = 1 : i64, tpu.core_type = #tpu.core_type<tc>, window_params = [{transform_indices = @transform_0, window_bounds = array<i64: 13, 8, 128>}, {pipeline_mode = #tpu.pipeline_mode<synchronous>, transform_indices = @transform_1, window_bounds = array<i64: 128, 1024>}, {pipeline_mode = #tpu.pipeline_mode<synchronous>, transform_indices = @transform_2, window_bounds = array<i64: 1, 512>}, {pipeline_mode = #tpu.pipeline_mode<synchronous>, transform_indices = @transform_3, window_bounds = array<i64: 13, 256, 128>}, {pipeline_mode = #tpu.pipeline_mode<synchronous>, transform_indices = @transform_4, window_bounds = array<i64: 1, 128>}, {pipeline_mode = #tpu.pipeline_mode<synchronous>, transform_indices = @transform_5, window_bounds = array<i64: 128, 128>}, {pipeline_mode = #tpu.pipeline_mode<synchronous>, transform_indices = @transform_6, window_bounds = array<i64: 1, 128>}, {transform_indices = @transform_7, window_bounds = array<i64: 8, 128>}]} {
    %cst = arith.constant 0.000000e+00 : f32
    %0 = vector.broadcast %cst : f32 to vector<8x128xf32>
    %c0 = arith.constant 0 : index
    %c0_0 = arith.constant 0 : index
    %1 = vector.load %arg9[%c0, %c0_0] : memref<8x128xf32, #tpu.memory_space<vmem>>, vector<8x128xf32>
    tpu.vector_store %arg9[%c0, %c0_0], %0 {strides = array<i32>} : memref<8x128xf32, #tpu.memory_space<vmem>>, vector<8x128xf32>,
    %c0_i32 = arith.constant 0 : i32
    %2 = arith.index_cast %c0_i32 : i32 to index
    %c0_1 = arith.constant 0 : index
    %c0_2 = arith.constant 0 : index
    %3 = vector.load %arg1[%2, %c0_1, %c0_2] : memref<13x8x128xbf16, #tpu.memory_space<vmem>>, vector<1x8x128xbf16>
    %4 = vector.shape_cast %3 : vector<1x8x128xbf16> to vector<8x128xbf16>
    %c0_3 = arith.constant 0 : index
    %c0_4 = arith.constant 0 : index
    %5 = vector.load %arg2[%c0_3, %c0_4] : memref<128x1024xbf16, #tpu.memory_space<vmem>>, vector<128x1024xbf16>
    %cst_5 = arith.constant dense<0.000000e+00> : vector<8x1024xf32>
    %6 = tpu.matmul %4, %5, %cst_5 {dimension_numbers = #tpu.dot_dimension_numbers<[1], [0], [0], [1], [0, 0, 1, 1], [], []>} : vector<8x128xbf16>, vector<128x1024xbf16>, vector<8x1024xf32> -> vector<8x1024xf32>
    %7 = vector.extract_strided_slice %6 {offsets = [0, 0], sizes = [8, 512], strides = [1, 1]} : vector<8x1024xf32> to vector<8x512xf32>
    %8 = vector.extract_strided_slice %6 {offsets = [0, 512], sizes = [8, 512], strides = [1, 1]} : vector<8x1024xf32> to vector<8x512xf32>
    %9 = arith.maximumf %7, %8 : vector<8x512xf32>
    %c0_6 = arith.constant 0 : index
    %c0_7 = arith.constant 0 : index
    %10 = vector.load %arg3[%c0_6, %c0_7] : memref<1x512xf32, #tpu.memory_space<vmem>>, vector<1x512xf32>
    %11 = vector.broadcast %10 : vector<1x512xf32> to vector<8x512xf32>
    %12 = arith.addf %9, %11 : vector<8x512xf32>
    %cst_8 = arith.constant 0.000000e+00 : f32
    %13 = vector.broadcast %cst_8 : f32 to vector<8x512xf32>
    %14 = arith.maximumf %12, %13 : vector<8x512xf32>
    %15 = vector.extract_strided_slice %14 {offsets = [0, 0], sizes = [8, 256], strides = [1, 1]} : vector<8x512xf32> to vector<8x256xf32>
    %16 = vector.extract_strided_slice %14 {offsets = [0, 256], sizes = [8, 256], strides = [1, 1]} : vector<8x512xf32> to vector<8x256xf32>
    %17 = arith.maximumf %15, %16 : vector<8x256xf32>
    %c0_9 = arith.constant 0 : index
    %c0_10 = arith.constant 0 : index
    %18 = vector.load %arg9[%c0_9, %c0_10] : memref<8x128xf32, #tpu.memory_space<vmem>>, vector<8x128xf32>
    %19 = arith.truncf %17 : vector<8x256xf32> to vector<8x256xbf16>
    %20 = arith.index_cast %c0_i32 : i32 to index
    %c0_11 = arith.constant 0 : index
    %c0_12 = arith.constant 0 : index
    %21 = vector.load %arg4[%20, %c0_11, %c0_12] : memref<13x256x128xbf16, #tpu.memory_space<vmem>>, vector<1x256x128xbf16>
    %22 = vector.shape_cast %21 : vector<1x256x128xbf16> to vector<256x128xbf16>
    %cst_13 = arith.constant dense<0.000000e+00> : vector<8x128xf32>
    %23 = tpu.matmul %19, %22, %cst_13 {dimension_numbers = #tpu.dot_dimension_numbers<[1], [0], [0], [1], [0, 0, 1, 1], [], []>} : vector<8x256xbf16>, vector<256x128xbf16>, vector<8x128xf32> -> vector<8x128xf32>
    %24 = arith.addf %18, %23 : vector<8x128xf32>
    %c0_14 = arith.constant 0 : index
    %c0_15 = arith.constant 0 : index
    %25 = vector.load %arg9[%c0_14, %c0_15] : memref<8x128xf32, #tpu.memory_space<vmem>>, vector<8x128xf32>
    tpu.vector_store %arg9[%c0_14, %c0_15], %24 {strides = array<i32>} : memref<8x128xf32, #tpu.memory_space<vmem>>, vector<8x128xf32>,
    %c1_i32 = arith.constant 1 : i32
    %26 = arith.index_cast %c1_i32 : i32 to index
    %c0_16 = arith.constant 0 : index
    %c0_17 = arith.constant 0 : index
    %27 = vector.load %arg1[%26, %c0_16, %c0_17] : memref<13x8x128xbf16, #tpu.memory_space<vmem>>, vector<1x8x128xbf16>
    %28 = vector.shape_cast %27 : vector<1x8x128xbf16> to vector<8x128xbf16>
    %c0_18 = arith.constant 0 : index
    %c0_19 = arith.constant 0 : index
    %29 = vector.load %arg2[%c0_18, %c0_19] : memref<128x1024xbf16, #tpu.memory_space<vmem>>, vector<128x1024xbf16>
    %cst_20 = arith.constant dense<0.000000e+00> : vector<8x1024xf32>
    %30 = tpu.matmul %28, %29, %cst_20 {dimension_numbers = #tpu.dot_dimension_numbers<[1], [0], [0], [1], [0, 0, 1, 1], [], []>} : vector<8x128xbf16>, vector<128x1024xbf16>, vector<8x1024xf32> -> vector<8x1024xf32>
    %31 = vector.extract_strided_slice %30 {offsets = [0, 0], sizes = [8, 512], strides = [1, 1]} : vector<8x1024xf32> to vector<8x512xf32>
    %32 = vector.extract_strided_slice %30 {offsets = [0, 512], sizes = [8, 512], strides = [1, 1]} : vector<8x1024xf32> to vector<8x512xf32>
    %33 = arith.maximumf %31, %32 : vector<8x512xf32>
    %c0_21 = arith.constant 0 : index
    %c0_22 = arith.constant 0 : index
    %34 = vector.load %arg3[%c0_21, %c0_22] : memref<1x512xf32, #tpu.memory_space<vmem>>, vector<1x512xf32>
    %35 = vector.broadcast %34 : vector<1x512xf32> to vector<8x512xf32>
    %36 = arith.addf %33, %35 : vector<8x512xf32>
    %cst_23 = arith.constant 0.000000e+00 : f32
    %37 = vector.broadcast %cst_23 : f32 to vector<8x512xf32>
    %38 = arith.maximumf %36, %37 : vector<8x512xf32>
    %39 = vector.extract_strided_slice %38 {offsets = [0, 0], sizes = [8, 256], strides = [1, 1]} : vector<8x512xf32> to vector<8x256xf32>
    %40 = vector.extract_strided_slice %38 {offsets = [0, 256], sizes = [8, 256], strides = [1, 1]} : vector<8x512xf32> to vector<8x256xf32>
    %41 = arith.maximumf %39, %40 : vector<8x256xf32>
    %c0_24 = arith.constant 0 : index
    %c0_25 = arith.constant 0 : index
    %42 = vector.load %arg9[%c0_24, %c0_25] : memref<8x128xf32, #tpu.memory_space<vmem>>, vector<8x128xf32>
    %43 = arith.truncf %41 : vector<8x256xf32> to vector<8x256xbf16>
    %44 = arith.index_cast %c1_i32 : i32 to index
    %c0_26 = arith.constant 0 : index
    %c0_27 = arith.constant 0 : index
    %45 = vector.load %arg4[%44, %c0_26, %c0_27] : memref<13x256x128xbf16, #tpu.memory_space<vmem>>, vector<1x256x128xbf16>
    %46 = vector.shape_cast %45 : vector<1x256x128xbf16> to vector<256x128xbf16>
    %cst_28 = arith.constant dense<0.000000e+00> : vector<8x128xf32>
    %47 = tpu.matmul %43, %46, %cst_28 {dimension_numbers = #tpu.dot_dimension_numbers<[1], [0], [0], [1], [0, 0, 1, 1], [], []>} : vector<8x256xbf16>, vector<256x128xbf16>, vector<8x128xf32> -> vector<8x128xf32>
    %48 = arith.addf %42, %47 : vector<8x128xf32>
    %c0_29 = arith.constant 0 : index
    %c0_30 = arith.constant 0 : index
    %49 = vector.load %arg9[%c0_29, %c0_30] : memref<8x128xf32, #tpu.memory_space<vmem>>, vector<8x128xf32>
    tpu.vector_store %arg9[%c0_29, %c0_30], %48 {strides = array<i32>} : memref<8x128xf32, #tpu.memory_space<vmem>>, vector<8x128xf32>,
    %c2_i32 = arith.constant 2 : i32
    %50 = arith.index_cast %c2_i32 : i32 to index
    %c0_31 = arith.constant 0 : index
    %c0_32 = arith.constant 0 : index
    %51 = vector.load %arg1[%50, %c0_31, %c0_32] : memref<13x8x128xbf16, #tpu.memory_space<vmem>>, vector<1x8x128xbf16>
    %52 = vector.shape_cast %51 : vector<1x8x128xbf16> to vector<8x128xbf16>
    %c0_33 = arith.constant 0 : index
    %c0_34 = arith.constant 0 : index
    %53 = vector.load %arg2[%c0_33, %c0_34] : memref<128x1024xbf16, #tpu.memory_space<vmem>>, vector<128x1024xbf16>
    %cst_35 = arith.constant dense<0.000000e+00> : vector<8x1024xf32>
    %54 = tpu.matmul %52, %53, %cst_35 {dimension_numbers = #tpu.dot_dimension_numbers<[1], [0], [0], [1], [0, 0, 1, 1], [], []>} : vector<8x128xbf16>, vector<128x1024xbf16>, vector<8x1024xf32> -> vector<8x1024xf32>
    %55 = vector.extract_strided_slice %54 {offsets = [0, 0], sizes = [8, 512], strides = [1, 1]} : vector<8x1024xf32> to vector<8x512xf32>
    %56 = vector.extract_strided_slice %54 {offsets = [0, 512], sizes = [8, 512], strides = [1, 1]} : vector<8x1024xf32> to vector<8x512xf32>
    %57 = arith.maximumf %55, %56 : vector<8x512xf32>
    %c0_36 = arith.constant 0 : index
    %c0_37 = arith.constant 0 : index
    %58 = vector.load %arg3[%c0_36, %c0_37] : memref<1x512xf32, #tpu.memory_space<vmem>>, vector<1x512xf32>
    %59 = vector.broadcast %58 : vector<1x512xf32> to vector<8x512xf32>
    %60 = arith.addf %57, %59 : vector<8x512xf32>
    %cst_38 = arith.constant 0.000000e+00 : f32
    %61 = vector.broadcast %cst_38 : f32 to vector<8x512xf32>
    %62 = arith.maximumf %60, %61 : vector<8x512xf32>
    %63 = vector.extract_strided_slice %62 {offsets = [0, 0], sizes = [8, 256], strides = [1, 1]} : vector<8x512xf32> to vector<8x256xf32>
    %64 = vector.extract_strided_slice %62 {offsets = [0, 256], sizes = [8, 256], strides = [1, 1]} : vector<8x512xf32> to vector<8x256xf32>
    %65 = arith.maximumf %63, %64 : vector<8x256xf32>
    %c0_39 = arith.constant 0 : index
    %c0_40 = arith.constant 0 : index
    %66 = vector.load %arg9[%c0_39, %c0_40] : memref<8x128xf32, #tpu.memory_space<vmem>>, vector<8x128xf32>
    %67 = arith.truncf %65 : vector<8x256xf32> to vector<8x256xbf16>
    %68 = arith.index_cast %c2_i32 : i32 to index
    %c0_41 = arith.constant 0 : index
    %c0_42 = arith.constant 0 : index
    %69 = vector.load %arg4[%68, %c0_41, %c0_42] : memref<13x256x128xbf16, #tpu.memory_space<vmem>>, vector<1x256x128xbf16>
    %70 = vector.shape_cast %69 : vector<1x256x128xbf16> to vector<256x128xbf16>
    %cst_43 = arith.constant dense<0.000000e+00> : vector<8x128xf32>
    %71 = tpu.matmul %67, %70, %cst_43 {dimension_numbers = #tpu.dot_dimension_numbers<[1], [0], [0], [1], [0, 0, 1, 1], [], []>} : vector<8x256xbf16>, vector<256x128xbf16>, vector<8x128xf32> -> vector<8x128xf32>
    %72 = arith.addf %66, %71 : vector<8x128xf32>
    %c0_44 = arith.constant 0 : index
    %c0_45 = arith.constant 0 : index
    %73 = vector.load %arg9[%c0_44, %c0_45] : memref<8x128xf32, #tpu.memory_space<vmem>>, vector<8x128xf32>
    tpu.vector_store %arg9[%c0_44, %c0_45], %72 {strides = array<i32>} : memref<8x128xf32, #tpu.memory_space<vmem>>, vector<8x128xf32>,
    %c3_i32 = arith.constant 3 : i32
    %74 = arith.index_cast %c3_i32 : i32 to index
    %c0_46 = arith.constant 0 : index
    %c0_47 = arith.constant 0 : index
    %75 = vector.load %arg1[%74, %c0_46, %c0_47] : memref<13x8x128xbf16, #tpu.memory_space<vmem>>, vector<1x8x128xbf16>
    %76 = vector.shape_cast %75 : vector<1x8x128xbf16> to vector<8x128xbf16>
    %c0_48 = arith.constant 0 : index
    %c0_49 = arith.constant 0 : index
    %77 = vector.load %arg2[%c0_48, %c0_49] : memref<128x1024xbf16, #tpu.memory_space<vmem>>, vector<128x1024xbf16>
    %cst_50 = arith.constant dense<0.000000e+00> : vector<8x1024xf32>
    %78 = tpu.matmul %76, %77, %cst_50 {dimension_numbers = #tpu.dot_dimension_numbers<[1], [0], [0], [1], [0, 0, 1, 1], [], []>} : vector<8x128xbf16>, vector<128x1024xbf16>, vector<8x1024xf32> -> vector<8x1024xf32>
    %79 = vector.extract_strided_slice %78 {offsets = [0, 0], sizes = [8, 512], strides = [1, 1]} : vector<8x1024xf32> to vector<8x512xf32>
    %80 = vector.extract_strided_slice %78 {offsets = [0, 512], sizes = [8, 512], strides = [1, 1]} : vector<8x1024xf32> to vector<8x512xf32>
    %81 = arith.maximumf %79, %80 : vector<8x512xf32>
    %c0_51 = arith.constant 0 : index
    %c0_52 = arith.constant 0 : index
    %82 = vector.load %arg3[%c0_51, %c0_52] : memref<1x512xf32, #tpu.memory_space<vmem>>, vector<1x512xf32>
    %83 = vector.broadcast %82 : vector<1x512xf32> to vector<8x512xf32>
    %84 = arith.addf %81, %83 : vector<8x512xf32>
    %cst_53 = arith.constant 0.000000e+00 : f32
    %85 = vector.broadcast %cst_53 : f32 to vector<8x512xf32>
    %86 = arith.maximumf %84, %85 : vector<8x512xf32>
    %87 = vector.extract_strided_slice %86 {offsets = [0, 0], sizes = [8, 256], strides = [1, 1]} : vector<8x512xf32> to vector<8x256xf32>
    %88 = vector.extract_strided_slice %86 {offsets = [0, 256], sizes = [8, 256], strides = [1, 1]} : vector<8x512xf32> to vector<8x256xf32>
    %89 = arith.maximumf %87, %88 : vector<8x256xf32>
    %c0_54 = arith.constant 0 : index
    %c0_55 = arith.constant 0 : index
    %90 = vector.load %arg9[%c0_54, %c0_55] : memref<8x128xf32, #tpu.memory_space<vmem>>, vector<8x128xf32>
    %91 = arith.truncf %89 : vector<8x256xf32> to vector<8x256xbf16>
    %92 = arith.index_cast %c3_i32 : i32 to index
    %c0_56 = arith.constant 0 : index
    %c0_57 = arith.constant 0 : index
    %93 = vector.load %arg4[%92, %c0_56, %c0_57] : memref<13x256x128xbf16, #tpu.memory_space<vmem>>, vector<1x256x128xbf16>
    %94 = vector.shape_cast %93 : vector<1x256x128xbf16> to vector<256x128xbf16>
    %cst_58 = arith.constant dense<0.000000e+00> : vector<8x128xf32>
    %95 = tpu.matmul %91, %94, %cst_58 {dimension_numbers = #tpu.dot_dimension_numbers<[1], [0], [0], [1], [0, 0, 1, 1], [], []>} : vector<8x256xbf16>, vector<256x128xbf16>, vector<8x128xf32> -> vector<8x128xf32>
    %96 = arith.addf %90, %95 : vector<8x128xf32>
    %c0_59 = arith.constant 0 : index
    %c0_60 = arith.constant 0 : index
    %97 = vector.load %arg9[%c0_59, %c0_60] : memref<8x128xf32, #tpu.memory_space<vmem>>, vector<8x128xf32>
    tpu.vector_store %arg9[%c0_59, %c0_60], %96 {strides = array<i32>} : memref<8x128xf32, #tpu.memory_space<vmem>>, vector<8x128xf32>,
    %c4_i32 = arith.constant 4 : i32
    %98 = arith.index_cast %c4_i32 : i32 to index
    %c0_61 = arith.constant 0 : index
    %c0_62 = arith.constant 0 : index
    %99 = vector.load %arg1[%98, %c0_61, %c0_62] : memref<13x8x128xbf16, #tpu.memory_space<vmem>>, vector<1x8x128xbf16>
    %100 = vector.shape_cast %99 : vector<1x8x128xbf16> to vector<8x128xbf16>
    %c0_63 = arith.constant 0 : index
    %c0_64 = arith.constant 0 : index
    %101 = vector.load %arg2[%c0_63, %c0_64] : memref<128x1024xbf16, #tpu.memory_space<vmem>>, vector<128x1024xbf16>
    %cst_65 = arith.constant dense<0.000000e+00> : vector<8x1024xf32>
    %102 = tpu.matmul %100, %101, %cst_65 {dimension_numbers = #tpu.dot_dimension_numbers<[1], [0], [0], [1], [0, 0, 1, 1], [], []>} : vector<8x128xbf16>, vector<128x1024xbf16>, vector<8x1024xf32> -> vector<8x1024xf32>
    %103 = vector.extract_strided_slice %102 {offsets = [0, 0], sizes = [8, 512], strides = [1, 1]} : vector<8x1024xf32> to vector<8x512xf32>
    %104 = vector.extract_strided_slice %102 {offsets = [0, 512], sizes = [8, 512], strides = [1, 1]} : vector<8x1024xf32> to vector<8x512xf32>
    %105 = arith.maximumf %103, %104 : vector<8x512xf32>
    %c0_66 = arith.constant 0 : index
    %c0_67 = arith.constant 0 : index
    %106 = vector.load %arg3[%c0_66, %c0_67] : memref<1x512xf32, #tpu.memory_space<vmem>>, vector<1x512xf32>
    %107 = vector.broadcast %106 : vector<1x512xf32> to vector<8x512xf32>
    %108 = arith.addf %105, %107 : vector<8x512xf32>
    %cst_68 = arith.constant 0.000000e+00 : f32
    %109 = vector.broadcast %cst_68 : f32 to vector<8x512xf32>
    %110 = arith.maximumf %108, %109 : vector<8x512xf32>
    %111 = vector.extract_strided_slice %110 {offsets = [0, 0], sizes = [8, 256], strides = [1, 1]} : vector<8x512xf32> to vector<8x256xf32>
    %112 = vector.extract_strided_slice %110 {offsets = [0, 256], sizes = [8, 256], strides = [1, 1]} : vector<8x512xf32> to vector<8x256xf32>
    %113 = arith.maximumf %111, %112 : vector<8x256xf32>
    %c0_69 = arith.constant 0 : index
    %c0_70 = arith.constant 0 : index
    %114 = vector.load %arg9[%c0_69, %c0_70] : memref<8x128xf32, #tpu.memory_space<vmem>>, vector<8x128xf32>
    %115 = arith.truncf %113 : vector<8x256xf32> to vector<8x256xbf16>
    %116 = arith.index_cast %c4_i32 : i32 to index
    %c0_71 = arith.constant 0 : index
    %c0_72 = arith.constant 0 : index
    %117 = vector.load %arg4[%116, %c0_71, %c0_72] : memref<13x256x128xbf16, #tpu.memory_space<vmem>>, vector<1x256x128xbf16>
    %118 = vector.shape_cast %117 : vector<1x256x128xbf16> to vector<256x128xbf16>
    %cst_73 = arith.constant dense<0.000000e+00> : vector<8x128xf32>
    %119 = tpu.matmul %115, %118, %cst_73 {dimension_numbers = #tpu.dot_dimension_numbers<[1], [0], [0], [1], [0, 0, 1, 1], [], []>} : vector<8x256xbf16>, vector<256x128xbf16>, vector<8x128xf32> -> vector<8x128xf32>
    %120 = arith.addf %114, %119 : vector<8x128xf32>
    %c0_74 = arith.constant 0 : index
    %c0_75 = arith.constant 0 : index
    %121 = vector.load %arg9[%c0_74, %c0_75] : memref<8x128xf32, #tpu.memory_space<vmem>>, vector<8x128xf32>
    tpu.vector_store %arg9[%c0_74, %c0_75], %120 {strides = array<i32>} : memref<8x128xf32, #tpu.memory_space<vmem>>, vector<8x128xf32>,
    %c5_i32 = arith.constant 5 : i32
    %122 = arith.index_cast %c5_i32 : i32 to index
    %c0_76 = arith.constant 0 : index
    %c0_77 = arith.constant 0 : index
    %123 = vector.load %arg1[%122, %c0_76, %c0_77] : memref<13x8x128xbf16, #tpu.memory_space<vmem>>, vector<1x8x128xbf16>
    %124 = vector.shape_cast %123 : vector<1x8x128xbf16> to vector<8x128xbf16>
    %c0_78 = arith.constant 0 : index
    %c0_79 = arith.constant 0 : index
    %125 = vector.load %arg2[%c0_78, %c0_79] : memref<128x1024xbf16, #tpu.memory_space<vmem>>, vector<128x1024xbf16>
    %cst_80 = arith.constant dense<0.000000e+00> : vector<8x1024xf32>
    %126 = tpu.matmul %124, %125, %cst_80 {dimension_numbers = #tpu.dot_dimension_numbers<[1], [0], [0], [1], [0, 0, 1, 1], [], []>} : vector<8x128xbf16>, vector<128x1024xbf16>, vector<8x1024xf32> -> vector<8x1024xf32>
    %127 = vector.extract_strided_slice %126 {offsets = [0, 0], sizes = [8, 512], strides = [1, 1]} : vector<8x1024xf32> to vector<8x512xf32>
    %128 = vector.extract_strided_slice %126 {offsets = [0, 512], sizes = [8, 512], strides = [1, 1]} : vector<8x1024xf32> to vector<8x512xf32>
    %129 = arith.maximumf %127, %128 : vector<8x512xf32>
    %c0_81 = arith.constant 0 : index
    %c0_82 = arith.constant 0 : index
    %130 = vector.load %arg3[%c0_81, %c0_82] : memref<1x512xf32, #tpu.memory_space<vmem>>, vector<1x512xf32>
    %131 = vector.broadcast %130 : vector<1x512xf32> to vector<8x512xf32>
    %132 = arith.addf %129, %131 : vector<8x512xf32>
    %cst_83 = arith.constant 0.000000e+00 : f32
    %133 = vector.broadcast %cst_83 : f32 to vector<8x512xf32>
    %134 = arith.maximumf %132, %133 : vector<8x512xf32>
    %135 = vector.extract_strided_slice %134 {offsets = [0, 0], sizes = [8, 256], strides = [1, 1]} : vector<8x512xf32> to vector<8x256xf32>
    %136 = vector.extract_strided_slice %134 {offsets = [0, 256], sizes = [8, 256], strides = [1, 1]} : vector<8x512xf32> to vector<8x256xf32>
    %137 = arith.maximumf %135, %136 : vector<8x256xf32>
    %c0_84 = arith.constant 0 : index
    %c0_85 = arith.constant 0 : index
    %138 = vector.load %arg9[%c0_84, %c0_85] : memref<8x128xf32, #tpu.memory_space<vmem>>, vector<8x128xf32>
    %139 = arith.truncf %137 : vector<8x256xf32> to vector<8x256xbf16>
    %140 = arith.index_cast %c5_i32 : i32 to index
    %c0_86 = arith.constant 0 : index
    %c0_87 = arith.constant 0 : index
    %141 = vector.load %arg4[%140, %c0_86, %c0_87] : memref<13x256x128xbf16, #tpu.memory_space<vmem>>, vector<1x256x128xbf16>
    %142 = vector.shape_cast %141 : vector<1x256x128xbf16> to vector<256x128xbf16>
    %cst_88 = arith.constant dense<0.000000e+00> : vector<8x128xf32>
    %143 = tpu.matmul %139, %142, %cst_88 {dimension_numbers = #tpu.dot_dimension_numbers<[1], [0], [0], [1], [0, 0, 1, 1], [], []>} : vector<8x256xbf16>, vector<256x128xbf16>, vector<8x128xf32> -> vector<8x128xf32>
    %144 = arith.addf %138, %143 : vector<8x128xf32>
    %c0_89 = arith.constant 0 : index
    %c0_90 = arith.constant 0 : index
    %145 = vector.load %arg9[%c0_89, %c0_90] : memref<8x128xf32, #tpu.memory_space<vmem>>, vector<8x128xf32>
    tpu.vector_store %arg9[%c0_89, %c0_90], %144 {strides = array<i32>} : memref<8x128xf32, #tpu.memory_space<vmem>>, vector<8x128xf32>,
    %c6_i32 = arith.constant 6 : i32
    %146 = arith.index_cast %c6_i32 : i32 to index
    %c0_91 = arith.constant 0 : index
    %c0_92 = arith.constant 0 : index
    %147 = vector.load %arg1[%146, %c0_91, %c0_92] : memref<13x8x128xbf16, #tpu.memory_space<vmem>>, vector<1x8x128xbf16>
    %148 = vector.shape_cast %147 : vector<1x8x128xbf16> to vector<8x128xbf16>
    %c0_93 = arith.constant 0 : index
    %c0_94 = arith.constant 0 : index
    %149 = vector.load %arg2[%c0_93, %c0_94] : memref<128x1024xbf16, #tpu.memory_space<vmem>>, vector<128x1024xbf16>
    %cst_95 = arith.constant dense<0.000000e+00> : vector<8x1024xf32>
    %150 = tpu.matmul %148, %149, %cst_95 {dimension_numbers = #tpu.dot_dimension_numbers<[1], [0], [0], [1], [0, 0, 1, 1], [], []>} : vector<8x128xbf16>, vector<128x1024xbf16>, vector<8x1024xf32> -> vector<8x1024xf32>
    %151 = vector.extract_strided_slice %150 {offsets = [0, 0], sizes = [8, 512], strides = [1, 1]} : vector<8x1024xf32> to vector<8x512xf32>
    %152 = vector.extract_strided_slice %150 {offsets = [0, 512], sizes = [8, 512], strides = [1, 1]} : vector<8x1024xf32> to vector<8x512xf32>
    %153 = arith.maximumf %151, %152 : vector<8x512xf32>
    %c0_96 = arith.constant 0 : index
    %c0_97 = arith.constant 0 : index
    %154 = vector.load %arg3[%c0_96, %c0_97] : memref<1x512xf32, #tpu.memory_space<vmem>>, vector<1x512xf32>
    %155 = vector.broadcast %154 : vector<1x512xf32> to vector<8x512xf32>
    %156 = arith.addf %153, %155 : vector<8x512xf32>
    %cst_98 = arith.constant 0.000000e+00 : f32
    %157 = vector.broadcast %cst_98 : f32 to vector<8x512xf32>
    %158 = arith.maximumf %156, %157 : vector<8x512xf32>
    %159 = vector.extract_strided_slice %158 {offsets = [0, 0], sizes = [8, 256], strides = [1, 1]} : vector<8x512xf32> to vector<8x256xf32>
    %160 = vector.extract_strided_slice %158 {offsets = [0, 256], sizes = [8, 256], strides = [1, 1]} : vector<8x512xf32> to vector<8x256xf32>
    %161 = arith.maximumf %159, %160 : vector<8x256xf32>
    %c0_99 = arith.constant 0 : index
    %c0_100 = arith.constant 0 : index
    %162 = vector.load %arg9[%c0_99, %c0_100] : memref<8x128xf32, #tpu.memory_space<vmem>>, vector<8x128xf32>
    %163 = arith.truncf %161 : vector<8x256xf32> to vector<8x256xbf16>
    %164 = arith.index_cast %c6_i32 : i32 to index
    %c0_101 = arith.constant 0 : index
    %c0_102 = arith.constant 0 : index
    %165 = vector.load %arg4[%164, %c0_101, %c0_102] : memref<13x256x128xbf16, #tpu.memory_space<vmem>>, vector<1x256x128xbf16>
    %166 = vector.shape_cast %165 : vector<1x256x128xbf16> to vector<256x128xbf16>
    %cst_103 = arith.constant dense<0.000000e+00> : vector<8x128xf32>
    %167 = tpu.matmul %163, %166, %cst_103 {dimension_numbers = #tpu.dot_dimension_numbers<[1], [0], [0], [1], [0, 0, 1, 1], [], []>} : vector<8x256xbf16>, vector<256x128xbf16>, vector<8x128xf32> -> vector<8x128xf32>
    %168 = arith.addf %162, %167 : vector<8x128xf32>
    %c0_104 = arith.constant 0 : index
    %c0_105 = arith.constant 0 : index
    %169 = vector.load %arg9[%c0_104, %c0_105] : memref<8x128xf32, #tpu.memory_space<vmem>>, vector<8x128xf32>
    tpu.vector_store %arg9[%c0_104, %c0_105], %168 {strides = array<i32>} : memref<8x128xf32, #tpu.memory_space<vmem>>, vector<8x128xf32>,
    %c7_i32 = arith.constant 7 : i32
    %170 = arith.index_cast %c7_i32 : i32 to index
    %c0_106 = arith.constant 0 : index
    %c0_107 = arith.constant 0 : index
    %171 = vector.load %arg1[%170, %c0_106, %c0_107] : memref<13x8x128xbf16, #tpu.memory_space<vmem>>, vector<1x8x128xbf16>
    %172 = vector.shape_cast %171 : vector<1x8x128xbf16> to vector<8x128xbf16>
    %c0_108 = arith.constant 0 : index
    %c0_109 = arith.constant 0 : index
    %173 = vector.load %arg2[%c0_108, %c0_109] : memref<128x1024xbf16, #tpu.memory_space<vmem>>, vector<128x1024xbf16>
    %cst_110 = arith.constant dense<0.000000e+00> : vector<8x1024xf32>
    %174 = tpu.matmul %172, %173, %cst_110 {dimension_numbers = #tpu.dot_dimension_numbers<[1], [0], [0], [1], [0, 0, 1, 1], [], []>} : vector<8x128xbf16>, vector<128x1024xbf16>, vector<8x1024xf32> -> vector<8x1024xf32>
    %175 = vector.extract_strided_slice %174 {offsets = [0, 0], sizes = [8, 512], strides = [1, 1]} : vector<8x1024xf32> to vector<8x512xf32>
    %176 = vector.extract_strided_slice %174 {offsets = [0, 512], sizes = [8, 512], strides = [1, 1]} : vector<8x1024xf32> to vector<8x512xf32>
    %177 = arith.maximumf %175, %176 : vector<8x512xf32>
    %c0_111 = arith.constant 0 : index
    %c0_112 = arith.constant 0 : index
    %178 = vector.load %arg3[%c0_111, %c0_112] : memref<1x512xf32, #tpu.memory_space<vmem>>, vector<1x512xf32>
    %179 = vector.broadcast %178 : vector<1x512xf32> to vector<8x512xf32>
    %180 = arith.addf %177, %179 : vector<8x512xf32>
    %cst_113 = arith.constant 0.000000e+00 : f32
    %181 = vector.broadcast %cst_113 : f32 to vector<8x512xf32>
    %182 = arith.maximumf %180, %181 : vector<8x512xf32>
    %183 = vector.extract_strided_slice %182 {offsets = [0, 0], sizes = [8, 256], strides = [1, 1]} : vector<8x512xf32> to vector<8x256xf32>
    %184 = vector.extract_strided_slice %182 {offsets = [0, 256], sizes = [8, 256], strides = [1, 1]} : vector<8x512xf32> to vector<8x256xf32>
    %185 = arith.maximumf %183, %184 : vector<8x256xf32>
    %c0_114 = arith.constant 0 : index
    %c0_115 = arith.constant 0 : index
    %186 = vector.load %arg9[%c0_114, %c0_115] : memref<8x128xf32, #tpu.memory_space<vmem>>, vector<8x128xf32>
    %187 = arith.truncf %185 : vector<8x256xf32> to vector<8x256xbf16>
    %188 = arith.index_cast %c7_i32 : i32 to index
    %c0_116 = arith.constant 0 : index
    %c0_117 = arith.constant 0 : index
    %189 = vector.load %arg4[%188, %c0_116, %c0_117] : memref<13x256x128xbf16, #tpu.memory_space<vmem>>, vector<1x256x128xbf16>
    %190 = vector.shape_cast %189 : vector<1x256x128xbf16> to vector<256x128xbf16>
    %cst_118 = arith.constant dense<0.000000e+00> : vector<8x128xf32>
    %191 = tpu.matmul %187, %190, %cst_118 {dimension_numbers = #tpu.dot_dimension_numbers<[1], [0], [0], [1], [0, 0, 1, 1], [], []>} : vector<8x256xbf16>, vector<256x128xbf16>, vector<8x128xf32> -> vector<8x128xf32>
    %192 = arith.addf %186, %191 : vector<8x128xf32>
    %c0_119 = arith.constant 0 : index
    %c0_120 = arith.constant 0 : index
    %193 = vector.load %arg9[%c0_119, %c0_120] : memref<8x128xf32, #tpu.memory_space<vmem>>, vector<8x128xf32>
    tpu.vector_store %arg9[%c0_119, %c0_120], %192 {strides = array<i32>} : memref<8x128xf32, #tpu.memory_space<vmem>>, vector<8x128xf32>,
    %c8_i32 = arith.constant 8 : i32
    %194 = arith.index_cast %c8_i32 : i32 to index
    %c0_121 = arith.constant 0 : index
    %c0_122 = arith.constant 0 : index
    %195 = vector.load %arg1[%194, %c0_121, %c0_122] : memref<13x8x128xbf16, #tpu.memory_space<vmem>>, vector<1x8x128xbf16>
    %196 = vector.shape_cast %195 : vector<1x8x128xbf16> to vector<8x128xbf16>
    %c0_123 = arith.constant 0 : index
    %c0_124 = arith.constant 0 : index
    %197 = vector.load %arg2[%c0_123, %c0_124] : memref<128x1024xbf16, #tpu.memory_space<vmem>>, vector<128x1024xbf16>
    %cst_125 = arith.constant dense<0.000000e+00> : vector<8x1024xf32>
    %198 = tpu.matmul %196, %197, %cst_125 {dimension_numbers = #tpu.dot_dimension_numbers<[1], [0], [0], [1], [0, 0, 1, 1], [], []>} : vector<8x128xbf16>, vector<128x1024xbf16>, vector<8x1024xf32> -> vector<8x1024xf32>
    %199 = vector.extract_strided_slice %198 {offsets = [0, 0], sizes = [8, 512], strides = [1, 1]} : vector<8x1024xf32> to vector<8x512xf32>
    %200 = vector.extract_strided_slice %198 {offsets = [0, 512], sizes = [8, 512], strides = [1, 1]} : vector<8x1024xf32> to vector<8x512xf32>
    %201 = arith.maximumf %199, %200 : vector<8x512xf32>
    %c0_126 = arith.constant 0 : index
    %c0_127 = arith.constant 0 : index
    %202 = vector.load %arg3[%c0_126, %c0_127] : memref<1x512xf32, #tpu.memory_space<vmem>>, vector<1x512xf32>
    %203 = vector.broadcast %202 : vector<1x512xf32> to vector<8x512xf32>
    %204 = arith.addf %201, %203 : vector<8x512xf32>
    %cst_128 = arith.constant 0.000000e+00 : f32
    %205 = vector.broadcast %cst_128 : f32 to vector<8x512xf32>
    %206 = arith.maximumf %204, %205 : vector<8x512xf32>
    %207 = vector.extract_strided_slice %206 {offsets = [0, 0], sizes = [8, 256], strides = [1, 1]} : vector<8x512xf32> to vector<8x256xf32>
    %208 = vector.extract_strided_slice %206 {offsets = [0, 256], sizes = [8, 256], strides = [1, 1]} : vector<8x512xf32> to vector<8x256xf32>
    %209 = arith.maximumf %207, %208 : vector<8x256xf32>
    %c0_129 = arith.constant 0 : index
    %c0_130 = arith.constant 0 : index
    %210 = vector.load %arg9[%c0_129, %c0_130] : memref<8x128xf32, #tpu.memory_space<vmem>>, vector<8x128xf32>
    %211 = arith.truncf %209 : vector<8x256xf32> to vector<8x256xbf16>
    %212 = arith.index_cast %c8_i32 : i32 to index
    %c0_131 = arith.constant 0 : index
    %c0_132 = arith.constant 0 : index
    %213 = vector.load %arg4[%212, %c0_131, %c0_132] : memref<13x256x128xbf16, #tpu.memory_space<vmem>>, vector<1x256x128xbf16>
    %214 = vector.shape_cast %213 : vector<1x256x128xbf16> to vector<256x128xbf16>
    %cst_133 = arith.constant dense<0.000000e+00> : vector<8x128xf32>
    %215 = tpu.matmul %211, %214, %cst_133 {dimension_numbers = #tpu.dot_dimension_numbers<[1], [0], [0], [1], [0, 0, 1, 1], [], []>} : vector<8x256xbf16>, vector<256x128xbf16>, vector<8x128xf32> -> vector<8x128xf32>
    %216 = arith.addf %210, %215 : vector<8x128xf32>
    %c0_134 = arith.constant 0 : index
    %c0_135 = arith.constant 0 : index
    %217 = vector.load %arg9[%c0_134, %c0_135] : memref<8x128xf32, #tpu.memory_space<vmem>>, vector<8x128xf32>
    tpu.vector_store %arg9[%c0_134, %c0_135], %216 {strides = array<i32>} : memref<8x128xf32, #tpu.memory_space<vmem>>, vector<8x128xf32>,
    %c9_i32 = arith.constant 9 : i32
    %218 = arith.index_cast %c9_i32 : i32 to index
    %c0_136 = arith.constant 0 : index
    %c0_137 = arith.constant 0 : index
    %219 = vector.load %arg1[%218, %c0_136, %c0_137] : memref<13x8x128xbf16, #tpu.memory_space<vmem>>, vector<1x8x128xbf16>
    %220 = vector.shape_cast %219 : vector<1x8x128xbf16> to vector<8x128xbf16>
    %c0_138 = arith.constant 0 : index
    %c0_139 = arith.constant 0 : index
    %221 = vector.load %arg2[%c0_138, %c0_139] : memref<128x1024xbf16, #tpu.memory_space<vmem>>, vector<128x1024xbf16>
    %cst_140 = arith.constant dense<0.000000e+00> : vector<8x1024xf32>
    %222 = tpu.matmul %220, %221, %cst_140 {dimension_numbers = #tpu.dot_dimension_numbers<[1], [0], [0], [1], [0, 0, 1, 1], [], []>} : vector<8x128xbf16>, vector<128x1024xbf16>, vector<8x1024xf32> -> vector<8x1024xf32>
    %223 = vector.extract_strided_slice %222 {offsets = [0, 0], sizes = [8, 512], strides = [1, 1]} : vector<8x1024xf32> to vector<8x512xf32>
    %224 = vector.extract_strided_slice %222 {offsets = [0, 512], sizes = [8, 512], strides = [1, 1]} : vector<8x1024xf32> to vector<8x512xf32>
    %225 = arith.maximumf %223, %224 : vector<8x512xf32>
    %c0_141 = arith.constant 0 : index
    %c0_142 = arith.constant 0 : index
    %226 = vector.load %arg3[%c0_141, %c0_142] : memref<1x512xf32, #tpu.memory_space<vmem>>, vector<1x512xf32>
    %227 = vector.broadcast %226 : vector<1x512xf32> to vector<8x512xf32>
    %228 = arith.addf %225, %227 : vector<8x512xf32>
    %cst_143 = arith.constant 0.000000e+00 : f32
    %229 = vector.broadcast %cst_143 : f32 to vector<8x512xf32>
    %230 = arith.maximumf %228, %229 : vector<8x512xf32>
    %231 = vector.extract_strided_slice %230 {offsets = [0, 0], sizes = [8, 256], strides = [1, 1]} : vector<8x512xf32> to vector<8x256xf32>
    %232 = vector.extract_strided_slice %230 {offsets = [0, 256], sizes = [8, 256], strides = [1, 1]} : vector<8x512xf32> to vector<8x256xf32>
    %233 = arith.maximumf %231, %232 : vector<8x256xf32>
    %c0_144 = arith.constant 0 : index
    %c0_145 = arith.constant 0 : index
    %234 = vector.load %arg9[%c0_144, %c0_145] : memref<8x128xf32, #tpu.memory_space<vmem>>, vector<8x128xf32>
    %235 = arith.truncf %233 : vector<8x256xf32> to vector<8x256xbf16>
    %236 = arith.index_cast %c9_i32 : i32 to index
    %c0_146 = arith.constant 0 : index
    %c0_147 = arith.constant 0 : index
    %237 = vector.load %arg4[%236, %c0_146, %c0_147] : memref<13x256x128xbf16, #tpu.memory_space<vmem>>, vector<1x256x128xbf16>
    %238 = vector.shape_cast %237 : vector<1x256x128xbf16> to vector<256x128xbf16>
    %cst_148 = arith.constant dense<0.000000e+00> : vector<8x128xf32>
    %239 = tpu.matmul %235, %238, %cst_148 {dimension_numbers = #tpu.dot_dimension_numbers<[1], [0], [0], [1], [0, 0, 1, 1], [], []>} : vector<8x256xbf16>, vector<256x128xbf16>, vector<8x128xf32> -> vector<8x128xf32>
    %240 = arith.addf %234, %239 : vector<8x128xf32>
    %c0_149 = arith.constant 0 : index
    %c0_150 = arith.constant 0 : index
    %241 = vector.load %arg9[%c0_149, %c0_150] : memref<8x128xf32, #tpu.memory_space<vmem>>, vector<8x128xf32>
    tpu.vector_store %arg9[%c0_149, %c0_150], %240 {strides = array<i32>} : memref<8x128xf32, #tpu.memory_space<vmem>>, vector<8x128xf32>,
    %c10_i32 = arith.constant 10 : i32
    %242 = arith.index_cast %c10_i32 : i32 to index
    %c0_151 = arith.constant 0 : index
    %c0_152 = arith.constant 0 : index
    %243 = vector.load %arg1[%242, %c0_151, %c0_152] : memref<13x8x128xbf16, #tpu.memory_space<vmem>>, vector<1x8x128xbf16>
    %244 = vector.shape_cast %243 : vector<1x8x128xbf16> to vector<8x128xbf16>
    %c0_153 = arith.constant 0 : index
    %c0_154 = arith.constant 0 : index
    %245 = vector.load %arg2[%c0_153, %c0_154] : memref<128x1024xbf16, #tpu.memory_space<vmem>>, vector<128x1024xbf16>
    %cst_155 = arith.constant dense<0.000000e+00> : vector<8x1024xf32>
    %246 = tpu.matmul %244, %245, %cst_155 {dimension_numbers = #tpu.dot_dimension_numbers<[1], [0], [0], [1], [0, 0, 1, 1], [], []>} : vector<8x128xbf16>, vector<128x1024xbf16>, vector<8x1024xf32> -> vector<8x1024xf32>
    %247 = vector.extract_strided_slice %246 {offsets = [0, 0], sizes = [8, 512], strides = [1, 1]} : vector<8x1024xf32> to vector<8x512xf32>
    %248 = vector.extract_strided_slice %246 {offsets = [0, 512], sizes = [8, 512], strides = [1, 1]} : vector<8x1024xf32> to vector<8x512xf32>
    %249 = arith.maximumf %247, %248 : vector<8x512xf32>
    %c0_156 = arith.constant 0 : index
    %c0_157 = arith.constant 0 : index
    %250 = vector.load %arg3[%c0_156, %c0_157] : memref<1x512xf32, #tpu.memory_space<vmem>>, vector<1x512xf32>
    %251 = vector.broadcast %250 : vector<1x512xf32> to vector<8x512xf32>
    %252 = arith.addf %249, %251 : vector<8x512xf32>
    %cst_158 = arith.constant 0.000000e+00 : f32
    %253 = vector.broadcast %cst_158 : f32 to vector<8x512xf32>
    %254 = arith.maximumf %252, %253 : vector<8x512xf32>
    %255 = vector.extract_strided_slice %254 {offsets = [0, 0], sizes = [8, 256], strides = [1, 1]} : vector<8x512xf32> to vector<8x256xf32>
    %256 = vector.extract_strided_slice %254 {offsets = [0, 256], sizes = [8, 256], strides = [1, 1]} : vector<8x512xf32> to vector<8x256xf32>
    %257 = arith.maximumf %255, %256 : vector<8x256xf32>
    %c0_159 = arith.constant 0 : index
    %c0_160 = arith.constant 0 : index
    %258 = vector.load %arg9[%c0_159, %c0_160] : memref<8x128xf32, #tpu.memory_space<vmem>>, vector<8x128xf32>
    %259 = arith.truncf %257 : vector<8x256xf32> to vector<8x256xbf16>
    %260 = arith.index_cast %c10_i32 : i32 to index
    %c0_161 = arith.constant 0 : index
    %c0_162 = arith.constant 0 : index
    %261 = vector.load %arg4[%260, %c0_161, %c0_162] : memref<13x256x128xbf16, #tpu.memory_space<vmem>>, vector<1x256x128xbf16>
    %262 = vector.shape_cast %261 : vector<1x256x128xbf16> to vector<256x128xbf16>
    %cst_163 = arith.constant dense<0.000000e+00> : vector<8x128xf32>
    %263 = tpu.matmul %259, %262, %cst_163 {dimension_numbers = #tpu.dot_dimension_numbers<[1], [0], [0], [1], [0, 0, 1, 1], [], []>} : vector<8x256xbf16>, vector<256x128xbf16>, vector<8x128xf32> -> vector<8x128xf32>
    %264 = arith.addf %258, %263 : vector<8x128xf32>
    %c0_164 = arith.constant 0 : index
    %c0_165 = arith.constant 0 : index
    %265 = vector.load %arg9[%c0_164, %c0_165] : memref<8x128xf32, #tpu.memory_space<vmem>>, vector<8x128xf32>
    tpu.vector_store %arg9[%c0_164, %c0_165], %264 {strides = array<i32>} : memref<8x128xf32, #tpu.memory_space<vmem>>, vector<8x128xf32>,
    %c11_i32 = arith.constant 11 : i32
    %266 = arith.index_cast %c11_i32 : i32 to index
    %c0_166 = arith.constant 0 : index
    %c0_167 = arith.constant 0 : index
    %267 = vector.load %arg1[%266, %c0_166, %c0_167] : memref<13x8x128xbf16, #tpu.memory_space<vmem>>, vector<1x8x128xbf16>
    %268 = vector.shape_cast %267 : vector<1x8x128xbf16> to vector<8x128xbf16>
    %c0_168 = arith.constant 0 : index
    %c0_169 = arith.constant 0 : index
    %269 = vector.load %arg2[%c0_168, %c0_169] : memref<128x1024xbf16, #tpu.memory_space<vmem>>, vector<128x1024xbf16>
    %cst_170 = arith.constant dense<0.000000e+00> : vector<8x1024xf32>
    %270 = tpu.matmul %268, %269, %cst_170 {dimension_numbers = #tpu.dot_dimension_numbers<[1], [0], [0], [1], [0, 0, 1, 1], [], []>} : vector<8x128xbf16>, vector<128x1024xbf16>, vector<8x1024xf32> -> vector<8x1024xf32>
    %271 = vector.extract_strided_slice %270 {offsets = [0, 0], sizes = [8, 512], strides = [1, 1]} : vector<8x1024xf32> to vector<8x512xf32>
    %272 = vector.extract_strided_slice %270 {offsets = [0, 512], sizes = [8, 512], strides = [1, 1]} : vector<8x1024xf32> to vector<8x512xf32>
    %273 = arith.maximumf %271, %272 : vector<8x512xf32>
    %c0_171 = arith.constant 0 : index
    %c0_172 = arith.constant 0 : index
    %274 = vector.load %arg3[%c0_171, %c0_172] : memref<1x512xf32, #tpu.memory_space<vmem>>, vector<1x512xf32>
    %275 = vector.broadcast %274 : vector<1x512xf32> to vector<8x512xf32>
    %276 = arith.addf %273, %275 : vector<8x512xf32>
    %cst_173 = arith.constant 0.000000e+00 : f32
    %277 = vector.broadcast %cst_173 : f32 to vector<8x512xf32>
    %278 = arith.maximumf %276, %277 : vector<8x512xf32>
    %279 = vector.extract_strided_slice %278 {offsets = [0, 0], sizes = [8, 256], strides = [1, 1]} : vector<8x512xf32> to vector<8x256xf32>
    %280 = vector.extract_strided_slice %278 {offsets = [0, 256], sizes = [8, 256], strides = [1, 1]} : vector<8x512xf32> to vector<8x256xf32>
    %281 = arith.maximumf %279, %280 : vector<8x256xf32>
    %c0_174 = arith.constant 0 : index
    %c0_175 = arith.constant 0 : index
    %282 = vector.load %arg9[%c0_174, %c0_175] : memref<8x128xf32, #tpu.memory_space<vmem>>, vector<8x128xf32>
    %283 = arith.truncf %281 : vector<8x256xf32> to vector<8x256xbf16>
    %284 = arith.index_cast %c11_i32 : i32 to index
    %c0_176 = arith.constant 0 : index
    %c0_177 = arith.constant 0 : index
    %285 = vector.load %arg4[%284, %c0_176, %c0_177] : memref<13x256x128xbf16, #tpu.memory_space<vmem>>, vector<1x256x128xbf16>
    %286 = vector.shape_cast %285 : vector<1x256x128xbf16> to vector<256x128xbf16>
    %cst_178 = arith.constant dense<0.000000e+00> : vector<8x128xf32>
    %287 = tpu.matmul %283, %286, %cst_178 {dimension_numbers = #tpu.dot_dimension_numbers<[1], [0], [0], [1], [0, 0, 1, 1], [], []>} : vector<8x256xbf16>, vector<256x128xbf16>, vector<8x128xf32> -> vector<8x128xf32>
    %288 = arith.addf %282, %287 : vector<8x128xf32>
    %c0_179 = arith.constant 0 : index
    %c0_180 = arith.constant 0 : index
    %289 = vector.load %arg9[%c0_179, %c0_180] : memref<8x128xf32, #tpu.memory_space<vmem>>, vector<8x128xf32>
    tpu.vector_store %arg9[%c0_179, %c0_180], %288 {strides = array<i32>} : memref<8x128xf32, #tpu.memory_space<vmem>>, vector<8x128xf32>,
    %c12_i32 = arith.constant 12 : i32
    %290 = arith.index_cast %c12_i32 : i32 to index
    %c0_181 = arith.constant 0 : index
    %c0_182 = arith.constant 0 : index
    %291 = vector.load %arg1[%290, %c0_181, %c0_182] : memref<13x8x128xbf16, #tpu.memory_space<vmem>>, vector<1x8x128xbf16>
    %292 = vector.shape_cast %291 : vector<1x8x128xbf16> to vector<8x128xbf16>
    %c0_183 = arith.constant 0 : index
    %c0_184 = arith.constant 0 : index
    %293 = vector.load %arg2[%c0_183, %c0_184] : memref<128x1024xbf16, #tpu.memory_space<vmem>>, vector<128x1024xbf16>
    %cst_185 = arith.constant dense<0.000000e+00> : vector<8x1024xf32>
    %294 = tpu.matmul %292, %293, %cst_185 {dimension_numbers = #tpu.dot_dimension_numbers<[1], [0], [0], [1], [0, 0, 1, 1], [], []>} : vector<8x128xbf16>, vector<128x1024xbf16>, vector<8x1024xf32> -> vector<8x1024xf32>
    %295 = vector.extract_strided_slice %294 {offsets = [0, 0], sizes = [8, 512], strides = [1, 1]} : vector<8x1024xf32> to vector<8x512xf32>
    %296 = vector.extract_strided_slice %294 {offsets = [0, 512], sizes = [8, 512], strides = [1, 1]} : vector<8x1024xf32> to vector<8x512xf32>
    %297 = arith.maximumf %295, %296 : vector<8x512xf32>
    %c0_186 = arith.constant 0 : index
    %c0_187 = arith.constant 0 : index
    %298 = vector.load %arg3[%c0_186, %c0_187] : memref<1x512xf32, #tpu.memory_space<vmem>>, vector<1x512xf32>
    %299 = vector.broadcast %298 : vector<1x512xf32> to vector<8x512xf32>
    %300 = arith.addf %297, %299 : vector<8x512xf32>
    %cst_188 = arith.constant 0.000000e+00 : f32
    %301 = vector.broadcast %cst_188 : f32 to vector<8x512xf32>
    %302 = arith.maximumf %300, %301 : vector<8x512xf32>
    %303 = vector.extract_strided_slice %302 {offsets = [0, 0], sizes = [8, 256], strides = [1, 1]} : vector<8x512xf32> to vector<8x256xf32>
    %304 = vector.extract_strided_slice %302 {offsets = [0, 256], sizes = [8, 256], strides = [1, 1]} : vector<8x512xf32> to vector<8x256xf32>
    %305 = arith.maximumf %303, %304 : vector<8x256xf32>
    %c0_189 = arith.constant 0 : index
    %c0_190 = arith.constant 0 : index
    %306 = vector.load %arg9[%c0_189, %c0_190] : memref<8x128xf32, #tpu.memory_space<vmem>>, vector<8x128xf32>
    %307 = arith.truncf %305 : vector<8x256xf32> to vector<8x256xbf16>
    %308 = arith.index_cast %c12_i32 : i32 to index
    %c0_191 = arith.constant 0 : index
    %c0_192 = arith.constant 0 : index
    %309 = vector.load %arg4[%308, %c0_191, %c0_192] : memref<13x256x128xbf16, #tpu.memory_space<vmem>>, vector<1x256x128xbf16>
    %310 = vector.shape_cast %309 : vector<1x256x128xbf16> to vector<256x128xbf16>
    %cst_193 = arith.constant dense<0.000000e+00> : vector<8x128xf32>
    %311 = tpu.matmul %307, %310, %cst_193 {dimension_numbers = #tpu.dot_dimension_numbers<[1], [0], [0], [1], [0, 0, 1, 1], [], []>} : vector<8x256xbf16>, vector<256x128xbf16>, vector<8x128xf32> -> vector<8x128xf32>
    %312 = arith.addf %306, %311 : vector<8x128xf32>
    %c0_194 = arith.constant 0 : index
    %c0_195 = arith.constant 0 : index
    %313 = vector.load %arg9[%c0_194, %c0_195] : memref<8x128xf32, #tpu.memory_space<vmem>>, vector<8x128xf32>
    tpu.vector_store %arg9[%c0_194, %c0_195], %312 {strides = array<i32>} : memref<8x128xf32, #tpu.memory_space<vmem>>, vector<8x128xf32>,
    %c13_i32 = arith.constant 13 : i32
    %c0_196 = arith.constant 0 : index
    %c0_197 = arith.constant 0 : index
    %314 = vector.load %arg9[%c0_196, %c0_197] : memref<8x128xf32, #tpu.memory_space<vmem>>, vector<8x128xf32>
    %c0_198 = arith.constant 0 : index
    %c0_199 = arith.constant 0 : index
    %315 = vector.load %arg5[%c0_198, %c0_199] : memref<1x128xf32, #tpu.memory_space<vmem>>, vector<1x128xf32>
    %316 = vector.broadcast %315 : vector<1x128xf32> to vector<8x128xf32>
    %317 = arith.addf %314, %316 : vector<8x128xf32>
    %cst_200 = arith.constant 0.000000e+00 : f32
    %318 = vector.broadcast %cst_200 : f32 to vector<8x128xf32>
    %319 = arith.maximumf %317, %318 : vector<8x128xf32>
    %320 = arith.truncf %319 : vector<8x128xf32> to vector<8x128xbf16>
    %c0_201 = arith.constant 0 : index
    %c0_202 = arith.constant 0 : index
    %321 = vector.load %arg6[%c0_201, %c0_202] : memref<128x128xbf16, #tpu.memory_space<vmem>>, vector<128x128xbf16>
    %cst_203 = arith.constant dense<0.000000e+00> : vector<8x128xf32>
    %322 = tpu.matmul %320, %321, %cst_203 {dimension_numbers = #tpu.dot_dimension_numbers<[1], [0], [0], [1], [0, 0, 1, 1], [], []>} : vector<8x128xbf16>, vector<128x128xbf16>, vector<8x128xf32> -> vector<8x128xf32>
    %c0_204 = arith.constant 0 : index
    %c0_205 = arith.constant 0 : index
    %323 = vector.load %arg7[%c0_204, %c0_205] : memref<1x128xf32, #tpu.memory_space<vmem>>, vector<1x128xf32>
    %324 = vector.broadcast %323 : vector<1x128xf32> to vector<8x128xf32>
    %325 = arith.addf %322, %324 : vector<8x128xf32>
    %cst_206 = arith.constant dense<0xFF800000> : vector<8xf32>
    %326 = vector.multi_reduction <maximumf>, %325, %cst_206 [1] : vector<8x128xf32> to vector<8xf32>
    %327 = vector.shape_cast %326 : vector<8xf32> to vector<8x1xf32>
    %328 = vector.broadcast %327 : vector<8x1xf32> to vector<8x128xf32>
    %329 = arith.subf %325, %328 : vector<8x128xf32>
    %330 = math.exp %329 : vector<8x128xf32>
    %cst_207 = arith.constant dense<0.000000e+00> : vector<8xf32>
    %331 = vector.multi_reduction <add>, %330, %cst_207 [1] : vector<8x128xf32> to vector<8xf32>
    %332 = vector.shape_cast %331 : vector<8xf32> to vector<8x1xf32>
    %333 = math.log %332 : vector<8x1xf32>
    %334 = vector.broadcast %333 : vector<8x1xf32> to vector<8x128xf32>
    %335 = arith.subf %329, %334 : vector<8x128xf32>
    %c0_208 = arith.constant 0 : index
    %c0_209 = arith.constant 0 : index
    %336 = vector.load %arg8[%c0_208, %c0_209] : memref<8x128xf32, #tpu.memory_space<vmem>>, vector<8x128xf32>
    tpu.vector_store %arg8[%c0_208, %c0_209], %335 {strides = array<i32>} : memref<8x128xf32, #tpu.memory_space<vmem>>, vector<8x128xf32>,
    return
  }
  func.func @transform_0(%arg0: i32) -> (i32, i32, i32) {
    %c0_i32 = arith.constant 0 : i32
    %c0_i32_0 = arith.constant 0 : i32
    %c0_i32_1 = arith.constant 0 : i32
    return %c0_i32, %arg0, %c0_i32_0 : i32, i32, i32
  }
  func.func @transform_1(%arg0: i32) -> (i32, i32) {
    %c0_i32 = arith.constant 0 : i32
    %c0_i32_0 = arith.constant 0 : i32
    %c0_i32_1 = arith.constant 0 : i32
    return %c0_i32, %c0_i32_0 : i32, i32
  }
  func.func @transform_2(%arg0: i32) -> (i32, i32) {
    %c0_i32 = arith.constant 0 : i32
    %c0_i32_0 = arith.constant 0 : i32
    %c0_i32_1 = arith.constant 0 : i32
    return %c0_i32, %c0_i32_0 : i32, i32
  }
  func.func @transform_3(%arg0: i32) -> (i32, i32, i32) {
    %c0_i32 = arith.constant 0 : i32
    %c0_i32_0 = arith.constant 0 : i32
    %c0_i32_1 = arith.constant 0 : i32
    %c0_i32_2 = arith.constant 0 : i32
    return %c0_i32, %c0_i32_0, %c0_i32_1 : i32, i32, i32
  }
  func.func @transform_4(%arg0: i32) -> (i32, i32) {
    %c0_i32 = arith.constant 0 : i32
    %c0_i32_0 = arith.constant 0 : i32
    %c0_i32_1 = arith.constant 0 : i32
    return %c0_i32, %c0_i32_0 : i32, i32
  }
  func.func @transform_5(%arg0: i32) -> (i32, i32) {
    %c0_i32 = arith.constant 0 : i32
    %c0_i32_0 = arith.constant 0 : i32
    %c0_i32_1 = arith.constant 0 : i32
    return %c0_i32, %c0_i32_0 : i32, i32
  }
  func.func @transform_6(%arg0: i32) -> (i32, i32) {
    %c0_i32 = arith.constant 0 : i32
    %c0_i32_0 = arith.constant 0 : i32
    %c0_i32_1 = arith.constant 0 : i32
    return %c0_i32, %c0_i32_0 : i32, i32
  }
  func.func @transform_7(%arg0: i32) -> (i32, i32) {
    %c0_i32 = arith.constant 0 : i32
    %c0_i32_0 = arith.constant 0 : i32
    return %arg0, %c0_i32 : i32, i32
  }
}

</mosaic_0001>

<llo_original>
// kernel: tile.12
$region0: #{tile.12}
  %s0 = inlined_call_operand.vmem [shape: f32[13,16], index: 0, kind: input, shape index: {}]
  %s1 = inlined_call_operand.vmem [shape: f32[208], index: 1, kind: output, shape index: {}]
  $region1: #{tile.12} parent=0
    #allocation0 [shape = 'u8[4096]{0}', space=vmem, size = 0x1000, scoped, tag = 'scoped mem for output reshape']
    %s2 = smov 3
    %v3 = vld [vmem:[%s0] ss:$8 sm:%s2]
    %vm4 = vcmask 130048
    %5 = vst.msk [vmem:[#allocation0] sm:$0x3] %vm4, %v3
    %s6 = scalar_lea.vmem %s0, 7
    %v7 = vld [vmem:[%s6] sm:$0x1]
    %8 = vrot.lane.b32.xlu0 %v7, 112
    %v9 = vpop.permute.xlu0 %8
    %vm10 = vcmask 1048448
    %11 = vst.msk [vmem:[#allocation0] sm:$0x1] %vm10, %v9
    %s12 = scalar_lea.vmem %s0, 6
    %v13 = vld [vmem:[%s12] sm:$0x1]
    %14 = vrot.lane.b32.xlu0 %v13, 96
    %v15 = vpop.permute.xlu0 %14
    %vm16 = vcmask 917248
    %17 = vst.msk [vmem:[#allocation0] sm:$0x1] %vm16, %v15
    %s18 = scalar_lea.vmem %s0, 5
    %v19 = vld [vmem:[%s18] sm:$0x1]
    %20 = vrot.lane.b32.xlu0 %v19, 80
    %v21 = vpop.permute.xlu0 %20
    %vm22 = vcmask 786048
    %23 = vst.msk [vmem:[#allocation0] sm:$0x1] %vm22, %v21
    %s24 = scalar_lea.vmem %s0, 4
    %s25 = smov 3
    %v26 = vld [vmem:[%s24] ss:$8 sm:%s25]
    %27 = vrot.lane.b32.xlu0 %v26, 64
    %v28 = vpop.permute.xlu0 %27
    %vm29 = vcmask 654848
    %30 = vst.msk [vmem:[#allocation0] sm:$0x3] %vm29, %v28
    %s31 = scalar_lea.vmem %s0, 3
    %s32 = smov 3
    %v33 = vld [vmem:[%s31] ss:$8 sm:%s32]
    %34 = vrot.lane.b32.xlu0 %v33, 48
    %v35 = vpop.permute.xlu0 %34
    %vm36 = vcmask 523648
    %37 = vst.msk [vmem:[#allocation0] sm:$0x3] %vm36, %v35
    %s38 = scalar_lea.vmem %s0, 2
    %s39 = smov 3
    %v40 = vld [vmem:[%s38] ss:$8 sm:%s39]
    %41 = vrot.lane.b32.xlu0 %v40, 32
    %v42 = vpop.permute.xlu0 %41
    %vm43 = vcmask 392448
    %44 = vst.msk [vmem:[#allocation0] sm:$0x3] %vm43, %v42
    %s45 = scalar_lea.vmem %s0, 1
    %s46 = smov 3
    %v47 = vld [vmem:[%s45] ss:$8 sm:%s46]
    %48 = vrot.lane.b32.xlu0 %v47, 16
    %v49 = vpop.permute.xlu0 %48
    %vm50 = vcmask 261248
    %51 = vst.msk [vmem:[#allocation0] sm:$0x3] %vm50, %v49
    %s53 = sshllo.u32 0, 2
    %v55 = vld [vmem:[#allocation0] sm:%s53]
    %s56 = sshllo.u32 0, 2
    %57 = vst [vmem:[%s1] sm:%s56] %v55

// kernel: net_forward.1
$region0: #{net_forward.1}
  #allocation0 [shape = 'u32[]', space=smem, size = 0x4, offset = 0x4, fixed_abs, tag = 'smem constant byte address 0x4 - core index']
  #allocation1 [shape = 'u32[144,128]{1,0:T(1,128)}', space=vmem, size = 0x12000, scoped, tag = 'internal scratch']
  #allocation2 [shape = 'f32[8,128]{1,0:T(8,128)}', space=vmem, size = 0x1000, scoped, tag = 'scratch operand']
  %s0 = inlined_call_operand.vmem [shape: bf16[13,8,128], index: 0, kind: input, shape index: {}]
  %s1 = inlined_call_operand.vmem [shape: bf16[128,1024], index: 1, kind: input, shape index: {}]
  %s2 = inlined_call_operand.vmem [shape: f32[1,512], index: 2, kind: input, shape index: {}]
  %s3 = inlined_call_operand.vmem [shape: bf16[13,256,128], index: 3, kind: input, shape index: {}]
  %s4 = inlined_call_operand.vmem [shape: f32[1,128], index: 4, kind: input, shape index: {}]
  %s5 = inlined_call_operand.vmem [shape: bf16[128,128], index: 5, kind: input, shape index: {}]
  %s6 = inlined_call_operand.vmem [shape: f32[1,128], index: 6, kind: input, shape index: {}]
  %s7 = inlined_call_operand.vmem [shape: f32[8,128], index: 7, kind: output, shape index: {}]
  %s8 = sld [smem:[#allocation0]]
  $region38: #{net_forward.1} parent=0
    _
  %s10 = ssub.s32 1, %s8
  %s11 = scalar_select 0, %s10, %s8
  // Predicated region
  $region2: #{net_forward.1} parent=0 // pred_check
    _
  $region3: #{net_forward.1} parent=0 // pred_check_branch
    %13 = sbr.rel (0) target = $region5
  $region4: #{net_forward.1} parent=0 // pred_region
    _
  $region5: #{net_forward.1} parent=0 // pred_fallthru
    _
  // Predicated region
  $region6: #{net_forward.1} parent=0 // pred_check
    _
  $region7: #{net_forward.1} parent=0 // pred_check_branch
    %15 = sbr.rel (0) target = $region9
  $region8: #{net_forward.1} parent=0 // pred_region
    _
  $region9: #{net_forward.1} parent=0 // pred_fallthru
    _
  // Predicated region
  $region10: #{net_forward.1} parent=0 // pred_check
    _
  $region11: #{net_forward.1} parent=0 // pred_check_branch
    %17 = sbr.rel (0) target = $region13
  $region12: #{net_forward.1} parent=0 // pred_region
    _
  $region13: #{net_forward.1} parent=0 // pred_fallthru
    _
  // Predicated region
  $region14: #{net_forward.1} parent=0 // pred_check
    _
  $region15: #{net_forward.1} parent=0 // pred_check_branch
    %19 = sbr.rel (0) target = $region17
  $region16: #{net_forward.1} parent=0 // pred_region
    _
  $region17: #{net_forward.1} parent=0 // pred_fallthru
    _
  // Predicated region
  $region18: #{net_forward.1} parent=0 // pred_check
    _
  $region19: #{net_forward.1} parent=0 // pred_check_branch
    %21 = sbr.rel (0) target = $region21
  $region20: #{net_forward.1} parent=0 // pred_region
    _
  $region21: #{net_forward.1} parent=0 // pred_fallthru
    _
  // Predicated region
  $region22: #{net_forward.1} parent=0 // pred_check
    _
  $region23: #{net_forward.1} parent=0 // pred_check_branch
    %23 = sbr.rel (0) target = $region25
  $region24: #{net_forward.1} parent=0 // pred_region
    _
  $region25: #{net_forward.1} parent=0 // pred_fallthru
    _
  // Predicated region
  $region26: #{net_forward.1} parent=0 // pred_check
    _
  $region27: #{net_forward.1} parent=0 // pred_check_branch
    %25 = sbr.rel (0) target = $region29
  $region28: #{net_forward.1} parent=0 // pred_region
    _
  $region29: #{net_forward.1} parent=0 // pred_fallthru
    _
  %27 = vst [vmem:[#allocation2] sm:$0xff] 0.0
  %v28 = vld [vmem:[%s0] sm:$0xf]
  %v29 = vld [vmem:[%s1] sm:$0xff]
  %v30 = vld [vmem:[%s1 + $0x8] sm:$0xff]
  %v31 = vld [vmem:[%s1 + $0x10] sm:$0xff]
  %v32 = vld [vmem:[%s1 + $0x18] sm:$0xff]
  %v33 = vld [vmem:[%s1 + $0x20] sm:$0xff]
  %v34 = vld [vmem:[%s1 + $0x28] sm:$0xff]
  %v35 = vld [vmem:[%s1 + $0x30] sm:$0xff]
  %v36 = vld [vmem:[%s1 + $0x38] sm:$0xff]
  %v37 = vld [vmem:[%s1 + $0x40] sm:$0xff]
  %v38 = vld [vmem:[%s1 + $0x48] sm:$0xff]
  %v39 = vld [vmem:[%s1 + $0x50] sm:$0xff]
  %v40 = vld [vmem:[%s1 + $0x58] sm:$0xff]
  %v41 = vld [vmem:[%s1 + $0x60] sm:$0xff]
  %v42 = vld [vmem:[%s1 + $0x68] sm:$0xff]
  %v43 = vld [vmem:[%s1 + $0x70] sm:$0xff]
  %v44 = vld [vmem:[%s1 + $0x78] sm:$0xff]
  %v45 = vld [vmem:[%s1 + $0x80] sm:$0xff]
  %v46 = vld [vmem:[%s1 + $0x88] sm:$0xff]
  %v47 = vld [vmem:[%s1 + $0x90] sm:$0xff]
  %v48 = vld [vmem:[%s1 + $0x98] sm:$0xff]
  %v49 = vld [vmem:[%s1 + $0xa0] sm:$0xff]
  %v50 = vld [vmem:[%s1 + $0xa8] sm:$0xff]
  %v51 = vld [vmem:[%s1 + $0xb0] sm:$0xff]
  %v52 = vld [vmem:[%s1 + $0xb8] sm:$0xff]
  %v53 = vld [vmem:[%s1 + $0xc0] sm:$0xff]
  %v54 = vld [vmem:[%s1 + $0xc8] sm:$0xff]
  %v55 = vld [vmem:[%s1 + $0xd0] sm:$0xff]
  %v56 = vld [vmem:[%s1 + $0xd8] sm:$0xff]
  %v57 = vld [vmem:[%s1 + $0xe0] sm:$0xff]
  %v58 = vld [vmem:[%s1 + $0xe8] sm:$0xff]
  %v59 = vld [vmem:[%s1 + $0xf0] sm:$0xff]
  %v60 = vld [vmem:[%s1 + $0xf8] sm:$0xff]
  %v61 = vld [vmem:[%s1 + $0x100] sm:$0xff]
  %v62 = vld [vmem:[%s1 + $0x108] sm:$0xff]
  %v63 = vld [vmem:[%s1 + $0x110] sm:$0xff]
  %v64 = vld [vmem:[%s1 + $0x118] sm:$0xff]
  %v65 = vld [vmem:[%s1 + $0x120] sm:$0xff]
  %v66 = vld [vmem:[%s1 + $0x128] sm:$0xff]
  %v67 = vld [vmem:[%s1 + $0x130] sm:$0xff]
  %v68 = vld [vmem:[%s1 + $0x138] sm:$0xff]
  %v69 = vld [vmem:[%s1 + $0x140] sm:$0xff]
  %v70 = vld [vmem:[%s1 + $0x148] sm:$0xff]
  %v71 = vld [vmem:[%s1 + $0x150] sm:$0xff]
  %v72 = vld [vmem:[%s1 + $0x158] sm:$0xff]
  %v73 = vld [vmem:[%s1 + $0x160] sm:$0xff]
  %v74 = vld [vmem:[%s1 + $0x168] sm:$0xff]
  %v75 = vld [vmem:[%s1 + $0x170] sm:$0xff]
  %v76 = vld [vmem:[%s1 + $0x178] sm:$0xff]
  %v77 = vld [vmem:[%s1 + $0x180] sm:$0xff]
  %v78 = vld [vmem:[%s1 + $0x188] sm:$0xff]
  %v79 = vld [vmem:[%s1 + $0x190] sm:$0xff]
  %v80 = vld [vmem:[%s1 + $0x198] sm:$0xff]
  %v81 = vld [vmem:[%s1 + $0x1a0] sm:$0xff]
  %v82 = vld [vmem:[%s1 + $0x1a8] sm:$0xff]
  %v83 = vld [vmem:[%s1 + $0x1b0] sm:$0xff]
  %v84 = vld [vmem:[%s1 + $0x1b8] sm:$0xff]
  %v85 = vld [vmem:[%s1 + $0x1c0] sm:$0xff]
  %v86 = vld [vmem:[%s1 + $0x1c8] sm:$0xff]
  %v87 = vld [vmem:[%s1 + $0x1d0] sm:$0xff]
  %v88 = vld [vmem:[%s1 + $0x1d8] sm:$0xff]
  %v89 = vld [vmem:[%s1 + $0x1e0] sm:$0xff]
  %v90 = vld [vmem:[%s1 + $0x1e8] sm:$0xff]
  %v91 = vld [vmem:[%s1 + $0x1f0] sm:$0xff]
  %v92 = vld [vmem:[%s1 + $0x1f8] sm:$0xff]
  %v157 = vunpack.c.l.b16 %v29
  %v158 = vunpack.c.h.b16 %v29
  %v159 = vunpack.c.l.b16 %v30
  %v160 = vunpack.c.h.b16 %v30
  %v161 = vunpack.c.l.b16 %v31
  %v162 = vunpack.c.h.b16 %v31
  %v163 = vunpack.c.l.b16 %v32
  %v164 = vunpack.c.h.b16 %v32
  %v165 = vunpack.c.l.b16 %v33
  %v166 = vunpack.c.h.b16 %v33
  %v167 = vunpack.c.l.b16 %v34
  %v168 = vunpack.c.h.b16 %v34
  %v169 = vunpack.c.l.b16 %v35
  %v170 = vunpack.c.h.b16 %v35
  %v171 = vunpack.c.l.b16 %v36
  %v172 = vunpack.c.h.b16 %v36
  %v173 = vunpack.c.l.b16 %v37
  %v174 = vunpack.c.h.b16 %v37
  %v175 = vunpack.c.l.b16 %v38
  %v176 = vunpack.c.h.b16 %v38
  %v177 = vunpack.c.l.b16 %v39
  %v178 = vunpack.c.h.b16 %v39
  %v179 = vunpack.c.l.b16 %v40
  %v180 = vunpack.c.h.b16 %v40
  %v181 = vunpack.c.l.b16 %v41
  %v182 = vunpack.c.h.b16 %v41
  %v183 = vunpack.c.l.b16 %v42
  %v184 = vunpack.c.h.b16 %v42
  %v185 = vunpack.c.l.b16 %v43
  %v186 = vunpack.c.h.b16 %v43
  %v187 = vunpack.c.l.b16 %v44
  %v188 = vunpack.c.h.b16 %v44
  %v189 = vunpack.c.l.b16 %v45
  %v190 = vunpack.c.h.b16 %v45
  %v191 = vunpack.c.l.b16 %v46
  %v192 = vunpack.c.h.b16 %v46
  %v193 = vunpack.c.l.b16 %v47
  %v194 = vunpack.c.h.b16 %v47
  %v195 = vunpack.c.l.b16 %v48
  %v196 = vunpack.c.h.b16 %v48
  %v197 = vunpack.c.l.b16 %v49
  %v198 = vunpack.c.h.b16 %v49
  %v199 = vunpack.c.l.b16 %v50
  %v200 = vunpack.c.h.b16 %v50
  %v201 = vunpack.c.l.b16 %v51
  %v202 = vunpack.c.h.b16 %v51
  %v203 = vunpack.c.l.b16 %v52
  %v204 = vunpack.c.h.b16 %v52
  %v205 = vunpack.c.l.b16 %v53
  %v206 = vunpack.c.h.b16 %v53
  %v207 = vunpack.c.l.b16 %v54
  %v208 = vunpack.c.h.b16 %v54
  %v209 = vunpack.c.l.b16 %v55
  %v210 = vunpack.c.h.b16 %v55
  %v211 = vunpack.c.l.b16 %v56
  %v212 = vunpack.c.h.b16 %v56
  %v213 = vunpack.c.l.b16 %v57
  %v214 = vunpack.c.h.b16 %v57
  %v215 = vunpack.c.l.b16 %v58
  %v216 = vunpack.c.h.b16 %v58
  %v217 = vunpack.c.l.b16 %v59
  %v218 = vunpack.c.h.b16 %v59
  %v219 = vunpack.c.l.b16 %v60
  %v220 = vunpack.c.h.b16 %v60
  %v221 = vunpack.c.l.b16 %v61
  %v222 = vunpack.c.h.b16 %v61
  %v223 = vunpack.c.l.b16 %v62
  %v224 = vunpack.c.h.b16 %v62
  %v225 = vunpack.c.l.b16 %v63
  %v226 = vunpack.c.h.b16 %v63
  %v227 = vunpack.c.l.b16 %v64
  %v228 = vunpack.c.h.b16 %v64
  %v229 = vunpack.c.l.b16 %v65
  %v230 = vunpack.c.h.b16 %v65
  %v231 = vunpack.c.l.b16 %v66
  %v232 = vunpack.c.h.b16 %v66
  %v233 = vunpack.c.l.b16 %v67
  %v234 = vunpack.c.h.b16 %v67
  %v235 = vunpack.c.l.b16 %v68
  %v236 = vunpack.c.h.b16 %v68
  %v237 = vunpack.c.l.b16 %v69
  %v238 = vunpack.c.h.b16 %v69
  %v239 = vunpack.c.l.b16 %v70
  %v240 = vunpack.c.h.b16 %v70
  %v241 = vunpack.c.l.b16 %v71
  %v242 = vunpack.c.h.b16 %v71
  %v243 = vunpack.c.l.b16 %v72
  %v244 = vunpack.c.h.b16 %v72
  %v245 = vunpack.c.l.b16 %v73
  %v246 = vunpack.c.h.b16 %v73
  %v247 = vunpack.c.l.b16 %v74
  %v248 = vunpack.c.h.b16 %v74
  %v249 = vunpack.c.l.b16 %v75
  %v250 = vunpack.c.h.b16 %v75
  %v251 = vunpack.c.l.b16 %v76
  %v252 = vunpack.c.h.b16 %v76
  %v253 = vunpack.c.l.b16 %v77
  %v254 = vunpack.c.h.b16 %v77
  %v255 = vunpack.c.l.b16 %v78
  %v256 = vunpack.c.h.b16 %v78
  %v257 = vunpack.c.l.b16 %v79
  %v258 = vunpack.c.h.b16 %v79
  %v259 = vunpack.c.l.b16 %v80
  %v260 = vunpack.c.h.b16 %v80
  %v261 = vunpack.c.l.b16 %v81
  %v262 = vunpack.c.h.b16 %v81
  %v263 = vunpack.c.l.b16 %v82
  %v264 = vunpack.c.h.b16 %v82
  %v265 = vunpack.c.l.b16 %v83
  %v266 = vunpack.c.h.b16 %v83
  %v267 = vunpack.c.l.b16 %v84
  %v268 = vunpack.c.h.b16 %v84
  %v269 = vunpack.c.l.b16 %v85
  %v270 = vunpack.c.h.b16 %v85
  %v271 = vunpack.c.l.b16 %v86
  %v272 = vunpack.c.h.b16 %v86
  %v273 = vunpack.c.l.b16 %v87
  %v274 = vunpack.c.h.b16 %v87
  %v275 = vunpack.c.l.b16 %v88
  %v276 = vunpack.c.h.b16 %v88
  %v277 = vunpack.c.l.b16 %v89
  %v278 = vunpack.c.h.b16 %v89
  %v279 = vunpack.c.l.b16 %v90
  %v280 = vunpack.c.h.b16 %v90
  %v281 = vunpack.c.l.b16 %v91
  %v282 = vunpack.c.h.b16 %v91
  %v283 = vunpack.c.l.b16 %v92
  %v284 = vunpack.c.h.b16 %v92
  %v285 = vpack.c.b16 %v165, %v157
  %v286 = vpack.c.b16 %v166, %v158
  %v287 = vpack.c.b16 %v167, %v159
  %v288 = vpack.c.b16 %v168, %v160
  %v289 = vpack.c.b16 %v169, %v161
  %v290 = vpack.c.b16 %v170, %v162
  %v291 = vpack.c.b16 %v171, %v163
  %v292 = vpack.c.b16 %v172, %v164
  %v293 = vpack.c.b16 %v181, %v173
  %v294 = vpack.c.b16 %v182, %v174
  %v295 = vpack.c.b16 %v183, %v175
  %v296 = vpack.c.b16 %v184, %v176
  %v297 = vpack.c.b16 %v185, %v177
  %v298 = vpack.c.b16 %v186, %v178
  %v299 = vpack.c.b16 %v187, %v179
  %v300 = vpack.c.b16 %v188, %v180
  %v301 = vpack.c.b16 %v197, %v189
  %v302 = vpack.c.b16 %v198, %v190
  %v303 = vpack.c.b16 %v199, %v191
  %v304 = vpack.c.b16 %v200, %v192
  %v305 = vpack.c.b16 %v201, %v193
  %v306 = vpack.c.b16 %v202, %v194
  %v307 = vpack.c.b16 %v203, %v195
  %v308 = vpack.c.b16 %v204, %v196
  %v309 = vpack.c.b16 %v213, %v205
  %v310 = vpack.c.b16 %v214, %v206
  %v311 = vpack.c.b16 %v215, %v207
  %v312 = vpack.c.b16 %v216, %v208
  %v313 = vpack.c.b16 %v217, %v209
  %v314 = vpack.c.b16 %v218, %v210
  %v315 = vpack.c.b16 %v219, %v211
  %v316 = vpack.c.b16 %v220, %v212
  %v317 = vpack.c.b16 %v229, %v221
  %v318 = vpack.c.b16 %v230, %v222
  %v319 = vpack.c.b16 %v231, %v223
  %v320 = vpack.c.b16 %v232, %v224
  %v321 = vpack.c.b16 %v233, %v225
  %v322 = vpack.c.b16 %v234, %v226
  %v323 = vpack.c.b16 %v235, %v227
  %v324 = vpack.c.b16 %v236, %v228
  %v325 = vpack.c.b16 %v245, %v237
  %v326 = vpack.c.b16 %v246, %v238
  %v327 = vpack.c.b16 %v247, %v239
  %v328 = vpack.c.b16 %v248, %v240
  %v329 = vpack.c.b16 %v249, %v241
  %v330 = vpack.c.b16 %v250, %v242
  %v331 = vpack.c.b16 %v251, %v243
  %v332 = vpack.c.b16 %v252, %v244
  %v333 = vpack.c.b16 %v261, %v253
  %v334 = vpack.c.b16 %v262, %v254
  %v335 = vpack.c.b16 %v263, %v255
  %v336 = vpack.c.b16 %v264, %v256
  %v337 = vpack.c.b16 %v265, %v257
  %v338 = vpack.c.b16 %v266, %v258
  %v339 = vpack.c.b16 %v267, %v259
  %v340 = vpack.c.b16 %v268, %v260
  %v341 = vpack.c.b16 %v277, %v269
  %v342 = vpack.c.b16 %v278, %v270
  %v343 = vpack.c.b16 %v279, %v271
  %v344 = vpack.c.b16 %v280, %v272
  %v345 = vpack.c.b16 %v281, %v273
  %v346 = vpack.c.b16 %v282, %v274
  %v347 = vpack.c.b16 %v283, %v275
  %v348 = vpack.c.b16 %v284, %v276
  %413 = vmatprep.subr.bf16.mxu0 %v286
  %414 = vmatpush1.bf16.msra.mxu0 %v285
  %415 = vmatprep.subr.bf16.mxu0 %v294
  %416 = vmatpush1.bf16.msra.mxu0 %v293
  %417 = vmatprep.subr.bf16.mxu0 %v302
  %418 = vmatpush1.bf16.msra.mxu0 %v301
  %419 = vmatprep.subr.bf16.mxu0 %v310
  %420 = vmatpush1.bf16.msra.mxu0 %v309
  %421 = vmatprep.subr.bf16.mxu0 %v318
  %422 = vmatpush1.bf16.msra.mxu0 %v317
  %423 = vmatprep.subr.bf16.mxu0 %v326
  %424 = vmatpush1.bf16.msra.mxu0 %v325
  %425 = vmatprep.subr.bf16.mxu0 %v334
  %426 = vmatpush1.bf16.msra.mxu0 %v333
  %427 = vmatprep.subr.bf16.mxu0 %v342
  %428 = vmatpush1.bf16.msra.mxu0 %v341
  %429 = vmatprep.subr.bf16.mxu0 0
  %430 = vmatpush1.bf16.msra.mxu0 0
  %431 = vmatprep.subr.bf16.mxu0 0
  %432 = vmatpush1.bf16.msra.mxu0 0
  %433 = vmatprep.subr.bf16.mxu0 0
  %434 = vmatpush1.bf16.msra.mxu0 0
  %435 = vmatprep.subr.bf16.mxu0 0
  %436 = vmatpush1.bf16.msra.mxu0 0
  %437 = vmatprep.subr.bf16.mxu0 0
  %438 = vmatpush1.bf16.msra.mxu0 0
  %439 = vmatprep.subr.bf16.mxu0 0
  %440 = vmatpush1.bf16.msra.mxu0 0
  %441 = vmatprep.subr.bf16.mxu0 0
  %442 = vmatpush1.bf16.msra.mxu0 0
  %443 = vmatprep.subr.bf16.mxu0 0
  %444 = vmatpush1.bf16.msra.mxu0 0
  %445 = vmatprep.mubr.bf16.mxu0 0
  %446 = vmatmul.mubr.bf16.gmra.mrb[0].mxu0 %v28
  %v447 = vpop.f32.mrb[0].mxu0
  %v448 = vadd.f32 0.0, %v447
  %v449 = vpop.f32.mrb[0].mxu0
  %v450 = vadd.f32 0.0, %v449
  %v451 = vpop.f32.mrb[0].mxu0
  %v452 = vpop.f32.mrb[0].mxu0
  %453 = vdwg.mxu0
  %454 = vmatprep.subr.bf16.mxu0 %v288
  %455 = vmatpush1.bf16.msra.mxu0 %v287
  %456 = vmatprep.subr.bf16.mxu0 %v296
  %457 = vmatpush1.bf16.msra.mxu0 %v295
  %458 = vmatprep.subr.bf16.mxu0 %v304
  %459 = vmatpush1.bf16.msra.mxu0 %v303
  %460 = vmatprep.subr.bf16.mxu0 %v312
  %461 = vmatpush1.bf16.msra.mxu0 %v311
  %462 = vmatprep.subr.bf16.mxu0 %v320
  %463 = vmatpush1.bf16.msra.mxu0 %v319
  %464 = vmatprep.subr.bf16.mxu0 %v328
  %465 = vmatpush1.bf16.msra.mxu0 %v327
  %466 = vmatprep.subr.bf16.mxu0 %v336
  %467 = vmatpush1.bf16.msra.mxu0 %v335
  %468 = vmatprep.subr.bf16.mxu0 %v344
  %469 = vmatpush1.bf16.msra.mxu0 %v343
  %470 = vmatprep.subr.bf16.mxu0 0
  %471 = vmatpush1.bf16.msra.mxu0 0
  %472 = vmatprep.subr.bf16.mxu0 0
  %473 = vmatpush1.bf16.msra.mxu0 0
  %474 = vmatprep.subr.bf16.mxu0 0
  %475 = vmatpush1.bf16.msra.mxu0 0
  %476 = vmatprep.subr.bf16.mxu0 0
  %477 = vmatpush1.bf16.msra.mxu0 0
  %478 = vmatprep.subr.bf16.mxu0 0
  %479 = vmatpush1.bf16.msra.mxu0 0
  %480 = vmatprep.subr.bf16.mxu0 0
  %481 = vmatpush1.bf16.msra.mxu0 0
  %482 = vmatprep.subr.bf16.mxu0 0
  %483 = vmatpush1.bf16.msra.mxu0 0
  %484 = vmatprep.subr.bf16.mxu0 0
  %485 = vmatpush1.bf16.msra.mxu0 0
  %486 = vmatprep.mubr.bf16.mxu0 0
  %487 = vmatmul.mubr.bf16.gmra.mrb[0].mxu0 %v28
  %v488 = vpop.f32.mrb[0].mxu0
  %v489 = vadd.f32 0.0, %v488
  %v490 = vpop.f32.mrb[0].mxu0
  %v491 = vadd.f32 0.0, %v490
  %v492 = vpop.f32.mrb[0].mxu0
  %v493 = vpop.f32.mrb[0].mxu0
  %494 = vdwg.mxu0
  %495 = vmatprep.subr.bf16.mxu0 %v290
  %496 = vmatpush1.bf16.msra.mxu0 %v289
  %497 = vmatprep.subr.bf16.mxu0 %v298
  %498 = vmatpush1.bf16.msra.mxu0 %v297
  %499 = vmatprep.subr.bf16.mxu0 %v306
  %500 = vmatpush1.bf16.msra.mxu0 %v305
  %501 = vmatprep.subr.bf16.mxu0 %v314
  %502 = vmatpush1.bf16.msra.mxu0 %v313
  %503 = vmatprep.subr.bf16.mxu0 %v322
  %504 = vmatpush1.bf16.msra.mxu0 %v321
  %505 = vmatprep.subr.bf16.mxu0 %v330
  %506 = vmatpush1.bf16.msra.mxu0 %v329
  %507 = vmatprep.subr.bf16.mxu0 %v338
  %508 = vmatpush1.bf16.msra.mxu0 %v337
  %509 = vmatprep.subr.bf16.mxu0 %v346
  %510 = vmatpush1.bf16.msra.mxu0 %v345
  %511 = vmatprep.subr.bf16.mxu0 0
  %512 = vmatpush1.bf16.msra.mxu0 0
  %513 = vmatprep.subr.bf16.mxu0 0
  %514 = vmatpush1.bf16.msra.mxu0 0
  %515 = vmatprep.subr.bf16.mxu0 0
  %516 = vmatpush1.bf16.msra.mxu0 0
  %517 = vmatprep.subr.bf16.mxu0 0
  %518 = vmatpush1.bf16.msra.mxu0 0
  %519 = vmatprep.subr.bf16.mxu0 0
  %520 = vmatpush1.bf16.msra.mxu0 0
  %521 = vmatprep.subr.bf16.mxu0 0
  %522 = vmatpush1.bf16.msra.mxu0 0
  %523 = vmatprep.subr.bf16.mxu0 0
  %524 = vmatpush1.bf16.msra.mxu0 0
  %525 = vmatprep.subr.bf16.mxu0 0
  %526 = vmatpush1.bf16.msra.mxu0 0
  %527 = vmatprep.mubr.bf16.mxu0 0
  %528 = vmatmul.mubr.bf16.gmra.mrb[0].mxu0 %v28
  %v529 = vpop.f32.mrb[0].mxu0
  %v530 = vadd.f32 0.0, %v529
  %v531 = vpop.f32.mrb[0].mxu0
  %v532 = vadd.f32 0.0, %v531
  %v533 = vpop.f32.mrb[0].mxu0
  %v534 = vpop.f32.mrb[0].mxu0
  %535 = vdwg.mxu0
  %536 = vmatprep.subr.bf16.mxu0 %v292
  %537 = vmatpush1.bf16.msra.mxu0 %v291
  %538 = vmatprep.subr.bf16.mxu0 %v300
  %539 = vmatpush1.bf16.msra.mxu0 %v299
  %540 = vmatprep.subr.bf16.mxu0 %v308
  %541 = vmatpush1.bf16.msra.mxu0 %v307
  %542 = vmatprep.subr.bf16.mxu0 %v316
  %543 = vmatpush1.bf16.msra.mxu0 %v315
  %544 = vmatprep.subr.bf16.mxu0 %v324
  %545 = vmatpush1.bf16.msra.mxu0 %v323
  %546 = vmatprep.subr.bf16.mxu0 %v332
  %547 = vmatpush1.bf16.msra.mxu0 %v331
  %548 = vmatprep.subr.bf16.mxu0 %v340
  %549 = vmatpush1.bf16.msra.mxu0 %v339
  %550 = vmatprep.subr.bf16.mxu0 %v348
  %551 = vmatpush1.bf16.msra.mxu0 %v347
  %552 = vmatprep.subr.bf16.mxu0 0
  %553 = vmatpush1.bf16.msra.mxu0 0
  %554 = vmatprep.subr.bf16.mxu0 0
  %555 = vmatpush1.bf16.msra.mxu0 0
  %556 = vmatprep.subr.bf16.mxu0 0
  %557 = vmatpush1.bf16.msra.mxu0 0
  %558 = vmatprep.subr.bf16.mxu0 0
  %559 = vmatpush1.bf16.msra.mxu0 0
  %560 = vmatprep.subr.bf16.mxu0 0
  %561 = vmatpush1.bf16.msra.mxu0 0
  %562 = vmatprep.subr.bf16.mxu0 0
  %563 = vmatpush1.bf16.msra.mxu0 0
  %564 = vmatprep.subr.bf16.mxu0 0
  %565 = vmatpush1.bf16.msra.mxu0 0
  %566 = vmatprep.subr.bf16.mxu0 0
  %567 = vmatpush1.bf16.msra.mxu0 0
  %568 = vmatprep.mubr.bf16.mxu0 0
  %569 = vmatmul.mubr.bf16.gmra.mrb[0].mxu0 %v28
  %v570 = vpop.f32.mrb[0].mxu0
  %v571 = vadd.f32 0.0, %v570
  %v572 = vpop.f32.mrb[0].mxu0
  %v573 = vadd.f32 0.0, %v572
  %v574 = vpop.f32.mrb[0].mxu0
  %v575 = vpop.f32.mrb[0].mxu0
  %576 = vdwg.mxu0
  %v577 = vmax.f32 %v448, %v530
  %v578 = vmax.f32 %v450, %v532
  %v579 = vmax.f32 %v489, %v571
  %v580 = vmax.f32 %v491, %v573
  %v581 = vld [vmem:[%s2] sm:$0xf]
  %v583 = vlaneseq
  %v584 = vshrl.u32 %v583, 7
  %v585 = vsub.s32 0, %v584
  %v586 = vrot.slane %v581, %v585
  %v587 = vlaneseq
  %v588 = vshrl.u32 %v587, 7
  %v589 = vsub.s32 1, %v588
  %v590 = vrot.slane %v581, %v589
  %v591 = vlaneseq
  %v592 = vshrl.u32 %v591, 7
  %v593 = vsub.s32 2, %v592
  %v594 = vrot.slane %v581, %v593
  %v595 = vlaneseq
  %v596 = vshrl.u32 %v595, 7
  %v597 = vsub.s32 3, %v596
  %v598 = vrot.slane %v581, %v597
  %v603 = vadd.f32 %v577, %v586
  %v604 = vadd.f32 %v578, %v590
  %v605 = vadd.f32 %v579, %v594
  %v606 = vadd.f32 %v580, %v598
  %v607 = vmax.f32 %v603, 0.0
  %v608 = vmax.f32 %v604, 0.0
  %v609 = vmax.f32 %v605, 0.0
  %v610 = vmax.f32 %v606, 0.0
  %v611 = vmax.f32 %v607, %v609
  %v612 = vmax.f32 %v608, %v610
  %v613 = vld [vmem:[#allocation2] sm:$0xff]
  %v614 = vpack.c.bf16 %v611, %v611
  %v615 = vpack.c.bf16 %v612, %v612
  %v616 = vld [vmem:[%s3] sm:$0xf]
  %v617 = vld [vmem:[%s3 + $0x4] sm:$0xf]
  %v618 = vld [vmem:[%s3 + $0x8] sm:$0xf]
  %v619 = vld [vmem:[%s3 + $0xc] sm:$0xf]
  %v620 = vld [vmem:[%s3 + $0x10] sm:$0xf]
  %v621 = vld [vmem:[%s3 + $0x14] sm:$0xf]
  %v622 = vld [vmem:[%s3 + $0x18] sm:$0xf]
  %v623 = vld [vmem:[%s3 + $0x1c] sm:$0xf]
  %v624 = vld [vmem:[%s3 + $0x20] sm:$0xf]
  %v625 = vld [vmem:[%s3 + $0x24] sm:$0xf]
  %v626 = vld [vmem:[%s3 + $0x28] sm:$0xf]
  %v627 = vld [vmem:[%s3 + $0x2c] sm:$0xf]
  %v628 = vld [vmem:[%s3 + $0x30] sm:$0xf]
  %v629 = vld [vmem:[%s3 + $0x34] sm:$0xf]
  %v630 = vld [vmem:[%s3 + $0x38] sm:$0xf]
  %v631 = vld [vmem:[%s3 + $0x3c] sm:$0xf]
  %v632 = vld [vmem:[%s3 + $0x40] sm:$0xf]
  %v633 = vld [vmem:[%s3 + $0x44] sm:$0xf]
  %v634 = vld [vmem:[%s3 + $0x48] sm:$0xf]
  %v635 = vld [vmem:[%s3 + $0x4c] sm:$0xf]
  %v636 = vld [vmem:[%s3 + $0x50] sm:$0xf]
  %v637 = vld [vmem:[%s3 + $0x54] sm:$0xf]
  %v638 = vld [vmem:[%s3 + $0x58] sm:$0xf]
  %v639 = vld [vmem:[%s3 + $0x5c] sm:$0xf]
  %v640 = vld [vmem:[%s3 + $0x60] sm:$0xf]
  %v641 = vld [vmem:[%s3 + $0x64] sm:$0xf]
  %v642 = vld [vmem:[%s3 + $0x68] sm:$0xf]
  %v643 = vld [vmem:[%s3 + $0x6c] sm:$0xf]
  %v644 = vld [vmem:[%s3 + $0x70] sm:$0xf]
  %v645 = vld [vmem:[%s3 + $0x74] sm:$0xf]
  %v646 = vld [vmem:[%s3 + $0x78] sm:$0xf]
  %v647 = vld [vmem:[%s3 + $0x7c] sm:$0xf]
  %v680 = vunpack.c.l.b16 %v616
  %v681 = vunpack.c.l.b16 %v617
  %v682 = vunpack.c.l.b16 %v618
  %v683 = vunpack.c.l.b16 %v619
  %v684 = vunpack.c.l.b16 %v620
  %v685 = vunpack.c.l.b16 %v621
  %v686 = vunpack.c.l.b16 %v622
  %v687 = vunpack.c.l.b16 %v623
  %v688 = vunpack.c.l.b16 %v624
  %v689 = vunpack.c.l.b16 %v625
  %v690 = vunpack.c.l.b16 %v626
  %v691 = vunpack.c.l.b16 %v627
  %v692 = vunpack.c.l.b16 %v628
  %v693 = vunpack.c.l.b16 %v629
  %v694 = vunpack.c.l.b16 %v630
  %v695 = vunpack.c.l.b16 %v631
  %v696 = vunpack.c.l.b16 %v632
  %v697 = vunpack.c.l.b16 %v633
  %v698 = vunpack.c.l.b16 %v634
  %v699 = vunpack.c.l.b16 %v635
  %v700 = vunpack.c.l.b16 %v636
  %v701 = vunpack.c.l.b16 %v637
  %v702 = vunpack.c.l.b16 %v638
  %v703 = vunpack.c.l.b16 %v639
  %v704 = vunpack.c.l.b16 %v640
  %v705 = vunpack.c.l.b16 %v641
  %v706 = vunpack.c.l.b16 %v642
  %v707 = vunpack.c.l.b16 %v643
  %v708 = vunpack.c.l.b16 %v644
  %v709 = vunpack.c.l.b16 %v645
  %v710 = vunpack.c.l.b16 %v646
  %v711 = vunpack.c.l.b16 %v647
  %v712 = vpack.c.b16 %v681, %v680
  %v713 = vpack.c.b16 %v683, %v682
  %v714 = vpack.c.b16 %v685, %v684
  %v715 = vpack.c.b16 %v687, %v686
  %v716 = vpack.c.b16 %v689, %v688
  %v717 = vpack.c.b16 %v691, %v690
  %v718 = vpack.c.b16 %v693, %v692
  %v719 = vpack.c.b16 %v695, %v694
  %v720 = vpack.c.b16 %v697, %v696
  %v721 = vpack.c.b16 %v699, %v698
  %v722 = vpack.c.b16 %v701, %v700
  %v723 = vpack.c.b16 %v703, %v702
  %v724 = vpack.c.b16 %v705, %v704
  %v725 = vpack.c.b16 %v707, %v706
  %v726 = vpack.c.b16 %v709, %v708
  %v727 = vpack.c.b16 %v711, %v710
  %744 = vmatprep.subr.bf16.mxu0 0
  %745 = vmatpush1.bf16.msra.mxu0 %v712
  %746 = vmatprep.subr.bf16.mxu0 0
  %747 = vmatpush1.bf16.msra.mxu0 %v713
  %748 = vmatprep.subr.bf16.mxu0 0
  %749 = vmatpush1.bf16.msra.mxu0 %v714
  %750 = vmatprep.subr.bf16.mxu0 0
  %751 = vmatpush1.bf16.msra.mxu0 %v715
  %752 = vmatprep.subr.bf16.mxu0 0
  %753 = vmatpush1.bf16.msra.mxu0 %v716
  %754 = vmatprep.subr.bf16.mxu0 0
  %755 = vmatpush1.bf16.msra.mxu0 %v717
  %756 = vmatprep.subr.bf16.mxu0 0
  %757 = vmatpush1.bf16.msra.mxu0 %v718
  %758 = vmatprep.subr.bf16.mxu0 0
  %759 = vmatpush1.bf16.msra.mxu0 %v719
  %760 = vmatprep.subr.bf16.mxu0 0
  %761 = vmatpush1.bf16.msra.mxu0 %v720
  %762 = vmatprep.subr.bf16.mxu0 0
  %763 = vmatpush1.bf16.msra.mxu0 %v721
  %764 = vmatprep.subr.bf16.mxu0 0
  %765 = vmatpush1.bf16.msra.mxu0 %v722
  %766 = vmatprep.subr.bf16.mxu0 0
  %767 = vmatpush1.bf16.msra.mxu0 %v723
  %768 = vmatprep.subr.bf16.mxu0 0
  %769 = vmatpush1.bf16.msra.mxu0 %v724
  %770 = vmatprep.subr.bf16.mxu0 0
  %771 = vmatpush1.bf16.msra.mxu0 %v725
  %772 = vmatprep.subr.bf16.mxu0 0
  %773 = vmatpush1.bf16.msra.mxu0 %v726
  %774 = vmatprep.subr.bf16.mxu0 0
  %775 = vmatpush1.bf16.msra.mxu0 %v727
  %776 = vmatprep.mubr.bf16.mxu0 %v615
  %777 = vmatmul.mubr.bf16.gmra.mrb[0].mxu0 %v614
  %v778 = vpop.f32.mrb[0].mxu0
  %v779 = vadd.f32 0.0, %v778
  %v780 = vpop.f32.mrb[0].mxu0
  %v781 = vpop.f32.mrb[0].mxu0
  %v782 = vpop.f32.mrb[0].mxu0
  %783 = vdwg.mxu0
  %v784 = vadd.f32 %v613, %v779
  %785 = vst [vmem:[#allocation2] sm:$0xff] %v784
  %s786 = scalar_lea.vmem %s0, 4
  %v787 = vld [vmem:[%s786] sm:$0xf]
  %v788 = vld [vmem:[%s1] sm:$0xff]
  %v789 = vld [vmem:[%s1 + $0x8] sm:$0xff]
  %v790 = vld [vmem:[%s1 + $0x10] sm:$0xff]
  %v791 = vld [vmem:[%s1 + $0x18] sm:$0xff]
  %v792 = vld [vmem:[%s1 + $0x20] sm:$0xff]
  %v793 = vld [vmem:[%s1 + $0x28] sm:$0xff]
  %v794 = vld [vmem:[%s1 + $0x30] sm:$0xff]
  %v795 = vld [vmem:[%s1 + $0x38] sm:$0xff]
  %v796 = vld [vmem:[%s1 + $0x40] sm:$0xff]
  %v797 = vld [vmem:[%s1 + $0x48] sm:$0xff]
  %v798 = vld [vmem:[%s1 + $0x50] sm:$0xff]
  %v799 = vld [vmem:[%s1 + $0x58] sm:$0xff]
  %v800 = vld [vmem:[%s1 + $0x60] sm:$0xff]
  %v801 = vld [vmem:[%s1 + $0x68] sm:$0xff]
  %v802 = vld [vmem:[%s1 + $0x70] sm:$0xff]
  %v803 = vld [vmem:[%s1 + $0x78] sm:$0xff]
  %v804 = vld [vmem:[%s1 + $0x80] sm:$0xff]
  %v805 = vld [vmem:[%s1 + $0x88] sm:$0xff]
  %v806 = vld [vmem:[%s1 + $0x90] sm:$0xff]
  %v807 = vld [vmem:[%s1 + $0x98] sm:$0xff]
  %v808 = vld [vmem:[%s1 + $0xa0] sm:$0xff]
  %v809 = vld [vmem:[%s1 + $0xa8] sm:$0xff]
  %v810 = vld [vmem:[%s1 + $0xb0] sm:$0xff]
  %v811 = vld [vmem:[%s1 + $0xb8] sm:$0xff]
  %v812 = vld [vmem:[%s1 + $0xc0] sm:$0xff]
  %v813 = vld [vmem:[%s1 + $0xc8] sm:$0xff]
  %v814 = vld [vmem:[%s1 + $0xd0] sm:$0xff]
  %v815 = vld [vmem:[%s1 + $0xd8] sm:$0xff]
  %v816 = vld [vmem:[%s1 + $0xe0] sm:$0xff]
  %v817 = vld [vmem:[%s1 + $0xe8] sm:$0xff]
  %v818 = vld [vmem:[%s1 + $0xf0] sm:$0xff]
  %v819 = vld [vmem:[%s1 + $0xf8] sm:$0xff]
  %v820 = vld [vmem:[%s1 + $0x100] sm:$0xff]
  %v821 = vld [vmem:[%s1 + $0x108] sm:$0xff]
  %v822 = vld [vmem:[%s1 + $0x110] sm:$0xff]
  %v823 = vld [vmem:[%s1 + $0x118] sm:$0xff]
  %v824 = vld [vmem:[%s1 + $0x120] sm:$0xff]
  %v825 = vld [vmem:[%s1 + $0x128] sm:$0xff]
  %v826 = vld [vmem:[%s1 + $0x130] sm:$0xff]
  %v827 = vld [vmem:[%s1 + $0x138] sm:$0xff]
  %v828 = vld [vmem:[%s1 + $0x140] sm:$0xff]
  %v829 = vld [vmem:[%s1 + $0x148] sm:$0xff]
  %v830 = vld [vmem:[%s1 + $0x150] sm:$0xff]
  %v831 = vld [vmem:[%s1 + $0x158] sm:$0xff]
  %v832 = vld [vmem:[%s1 + $0x160] sm:$0xff]
  %v833 = vld [vmem:[%s1 + $0x168] sm:$0xff]
  %v834 = vld [vmem:[%s1 + $0x170] sm:$0xff]
  %v835 = vld [vmem:[%s1 + $0x178] sm:$0xff]
  %v836 = vld [vmem:[%s1 + $0x180] sm:$0xff]
  %v837 = vld [vmem:[%s1 + $0x188] sm:$0xff]
  %v838 = vld [vmem:[%s1 + $0x190] sm:$0xff]
  %v839 = vld [vmem:[%s1 + $0x198] sm:$0xff]
  %v840 = vld [vmem:[%s1 + $0x1a0] sm:$0xff]
  %v841 = vld [vmem:[%s1 + $0x1a8] sm:$0xff]
  %v842 = vld [vmem:[%s1 + $0x1b0] sm:$0xff]
  %v843 = vld [vmem:[%s1 + $0x1b8] sm:$0xff]
  %v844 = vld [vmem:[%s1 + $0x1c0] sm:$0xff]
  %v845 = vld [vmem:[%s1 + $0x1c8] sm:$0xff]
  %v846 = vld [vmem:[%s1 + $0x1d0] sm:$0xff]
  %v847 = vld [vmem:[%s1 + $0x1d8] sm:$0xff]
  %v848 = vld [vmem:[%s1 + $0x1e0] sm:$0xff]
  %v849 = vld [vmem:[%s1 + $0x1e8] sm:$0xff]
  %v850 = vld [vmem:[%s1 + $0x1f0] sm:$0xff]
  %v851 = vld [vmem:[%s1 + $0x1f8] sm:$0xff]
  %v916 = vunpack.c.l.b16 %v788
  %v917 = vunpack.c.h.b16 %v788
  %v918 = vunpack.c.l.b16 %v789
  %v919 = vunpack.c.h.b16 %v789
  %v920 = vunpack.c.l.b16 %v790
  %v921 = vunpack.c.h.b16 %v790
  %v922 = vunpack.c.l.b16 %v791
  %v923 = vunpack.c.h.b16 %v791
  %v924 = vunpack.c.l.b16 %v792
  %v925 = vunpack.c.h.b16 %v792
  %v926 = vunpack.c.l.b16 %v793
  %v927 = vunpack.c.h.b16 %v793
  %v928 = vunpack.c.l.b16 %v794
  %v929 = vunpack.c.h.b16 %v794
  %v930 = vunpack.c.l.b16 %v795
  %v931 = vunpack.c.h.b16 %v795
  %v932 = vunpack.c.l.b16 %v796
  %v933 = vunpack.c.h.b16 %v796
  %v934 = vunpack.c.l.b16 %v797
  %v935 = vunpack.c.h.b16 %v797
  %v936 = vunpack.c.l.b16 %v798
  %v937 = vunpack.c.h.b16 %v798
  %v938 = vunpack.c.l.b16 %v799
  %v939 = vunpack.c.h.b16 %v799
  %v940 = vunpack.c.l.b16 %v800
  %v941 = vunpack.c.h.b16 %v800
  %v942 = vunpack.c.l.b16 %v801
  %v943 = vunpack.c.h.b16 %v801
  %v944 = vunpack.c.l.b16 %v802
  %v945 = vunpack.c.h.b16 %v802
  %v946 = vunpack.c.l.b16 %v803
  %v947 = vunpack.c.h.b16 %v803
  %v948 = vunpack.c.l.b16 %v804
  %v949 = vunpack.c.h.b16 %v804
  %v950 = vunpack.c.l.b16 %v805
  %v951 = vunpack.c.h.b16 %v805
  %v952 = vunpack.c.l.b16 %v806
  %v953 = vunpack.c.h.b16 %v806
  %v954 = vunpack.c.l.b16 %v807
  %v955 = vunpack.c.h.b16 %v807
  %v956 = vunpack.c.l.b16 %v808
  %v957 = vunpack.c.h.b16 %v808
  %v958 = vunpack.c.l.b16 %v809
  %v959 = vunpack.c.h.b16 %v809
  %v960 = vunpack.c.l.b16 %v810
  %v961 = vunpack.c.h.b16 %v810
  %v962 = vunpack.c.l.b16 %v811
  %v963 = vunpack.c.h.b16 %v811
  %v964 = vunpack.c.l.b16 %v812
  %v965 = vunpack.c.h.b16 %v812
  %v966 = vunpack.c.l.b16 %v813
  %v967 = vunpack.c.h.b16 %v813
  %v968 = vunpack.c.l.b16 %v814
  %v969 = vunpack.c.h.b16 %v814
  %v970 = vunpack.c.l.b16 %v815
  %v971 = vunpack.c.h.b16 %v815
  %v972 = vunpack.c.l.b16 %v816
  %v973 = vunpack.c.h.b16 %v816
  %v974 = vunpack.c.l.b16 %v817
  %v975 = vunpack.c.h.b16 %v817
  %v976 = vunpack.c.l.b16 %v818
  %v977 = vunpack.c.h.b16 %v818
  %v978 = vunpack.c.l.b16 %v819
  %v979 = vunpack.c.h.b16 %v819
  %v980 = vunpack.c.l.b16 %v820
  %v981 = vunpack.c.h.b16 %v820
  %v982 = vunpack.c.l.b16 %v821
  %v983 = vunpack.c.h.b16 %v821
  %v984 = vunpack.c.l.b16 %v822
  %v985 = vunpack.c.h.b16 %v822
  %v986 = vunpack.c.l.b16 %v823
  %v987 = vunpack.c.h.b16 %v823
  %v988 = vunpack.c.l.b16 %v824
  %v989 = vunpack.c.h.b16 %v824
  %v990 = vunpack.c.l.b16 %v825
  %v991 = vunpack.c.h.b16 %v825
  %v992 = vunpack.c.l.b16 %v826
  %v993 = vunpack.c.h.b16 %v826
  %v994 = vunpack.c.l.b16 %v827
  %v995 = vunpack.c.h.b16 %v827
  %v996 = vunpack.c.l.b16 %v828
  %v997 = vunpack.c.h.b16 %v828
  %v998 = vunpack.c.l.b16 %v829
  %v999 = vunpack.c.h.b16 %v829
  %v1000 = vunpack.c.l.b16 %v830
  %v1001 = vunpack.c.h.b16 %v830
  %v1002 = vunpack.c.l.b16 %v831
  %v1003 = vunpack.c.h.b16 %v831
  %v1004 = vunpack.c.l.b16 %v832
  %v1005 = vunpack.c.h.b16 %v832
  %v1006 = vunpack.c.l.b16 %v833
  %v1007 = vunpack.c.h.b16 %v833
  %v1008 = vunpack.c.l.b16 %v834
  %v1009 = vunpack.c.h.b16 %v834
  %v1010 = vunpack.c.l.b16 %v835
  %v1011 = vunpack.c.h.b16 %v835
  %v1012 = vunpack.c.l.b16 %v836
  %v1013 = vunpack.c.h.b16 %v836
  %v1014 = vunpack.c.l.b16 %v837
  %v1015 = vunpack.c.h.b16 %v837
  %v1016 = vunpack.c.l.b16 %v838
  %v1017 = vunpack.c.h.b16 %v838
  %v1018 = vunpack.c.l.b16 %v839
  %v1019 = vunpack.c.h.b16 %v839
  %v1020 = vunpack.c.l.b16 %v840
  %v1021 = vunpack.c.h.b16 %v840
  %v1022 = vunpack.c.l.b16 %v841
  %v1023 = vunpack.c.h.b16 %v841
  %v1024 = vunpack.c.l.b16 %v842
  %v1025 = vunpack.c.h.b16 %v842
  %v1026 = vunpack.c.l.b16 %v843
  %v1027 = vunpack.c.h.b16 %v843
  %v1028 = vunpack.c.l.b16 %v844
  %v1029 = vunpack.c.h.b16 %v844
  %v1030 = vunpack.c.l.b16 %v845
  %v1031 = vunpack.c.h.b16 %v845
  %v1032 = vunpack.c.l.b16 %v846
  %v1033 = vunpack.c.h.b16 %v846
  %v1034 = vunpack.c.l.b16 %v847
  %v1035 = vunpack.c.h.b16 %v847
  %v1036 = vunpack.c.l.b16 %v848
  %v1037 = vunpack.c.h.b16 %v848
  %v1038 = vunpack.c.l.b16 %v849
  %v1039 = vunpack.c.h.b16 %v849
  %v1040 = vunpack.c.l.b16 %v850
  %v1041 = vunpack.c.h.b16 %v850
  %v1042 = vunpack.c.l.b16 %v851
  %v1043 = vunpack.c.h.b16 %v851
  %v1044 = vpack.c.b16 %v924, %v916
  %v1045 = vpack.c.b16 %v925, %v917
  %v1046 = vpack.c.b16 %v926, %v918
  %v1047 = vpack.c.b16 %v927, %v919
  %v1048 = vpack.c.b16 %v928, %v920
  %v1049 = vpack.c.b16 %v929, %v921
  %v1050 = vpack.c.b16 %v930, %v922
  %v1051 = vpack.c.b16 %v931, %v923
  %v1052 = vpack.c.b16 %v940, %v932
  %v1053 = vpack.c.b16 %v941, %v933
  %v1054 = vpack.c.b16 %v942, %v934
  %v1055 = vpack.c.b16 %v943, %v935
  %v1056 = vpack.c.b16 %v944, %v936
  %v1057 = vpack.c.b16 %v945, %v937
  %v1058 = vpack.c.b16 %v946, %v938
  %v1059 = vpack.c.b16 %v947, %v939
  %v1060 = vpack.c.b16 %v956, %v948
  %v1061 = vpack.c.b16 %v957, %v949
  %v1062 = vpack.c.b16 %v958, %v950
  %v1063 = vpack.c.b16 %v959, %v951
  %v1064 = vpack.c.b16 %v960, %v952
  %v1065 = vpack.c.b16 %v961, %v953
  %v1066 = vpack.c.b16 %v962, %v954
  %v1067 = vpack.c.b16 %v963, %v955
  %v1068 = vpack.c.b16 %v972, %v964
  %v1069 = vpack.c.b16 %v973, %v965
  %v1070 = vpack.c.b16 %v974, %v966
  %v1071 = vpack.c.b16 %v975, %v967
  %v1072 = vpack.c.b16 %v976, %v968
  %v1073 = vpack.c.b16 %v977, %v969
  %v1074 = vpack.c.b16 %v978, %v970
  %v1075 = vpack.c.b16 %v979, %v971
  %v1076 = vpack.c.b16 %v988, %v980
  %v1077 = vpack.c.b16 %v989, %v981
  %v1078 = vpack.c.b16 %v990, %v982
  %v1079 = vpack.c.b16 %v991, %v983
  %v1080 = vpack.c.b16 %v992, %v984
  %v1081 = vpack.c.b16 %v993, %v985
  %v1082 = vpack.c.b16 %v994, %v986
  %v1083 = vpack.c.b16 %v995, %v987
  %v1084 = vpack.c.b16 %v1004, %v996
  %v1085 = vpack.c.b16 %v1005, %v997
  %v1086 = vpack.c.b16 %v1006, %v998
  %v1087 = vpack.c.b16 %v1007, %v999
  %v1088 = vpack.c.b16 %v1008, %v1000
  %v1089 = vpack.c.b16 %v1009, %v1001
  %v1090 = vpack.c.b16 %v1010, %v1002
  %v1091 = vpack.c.b16 %v1011, %v1003
  %v1092 = vpack.c.b16 %v1020, %v1012
  %v1093 = vpack.c.b16 %v1021, %v1013
  %v1094 = vpack.c.b16 %v1022, %v1014
  %v1095 = vpack.c.b16 %v1023, %v1015
  %v1096 = vpack.c.b16 %v1024, %v1016
  %v1097 = vpack.c.b16 %v1025, %v1017
  %v1098 = vpack.c.b16 %v1026, %v1018
  %v1099 = vpack.c.b16 %v1027, %v1019
  %v1100 = vpack.c.b16 %v1036, %v1028
  %v1101 = vpack.c.b16 %v1037, %v1029
  %v1102 = vpack.c.b16 %v1038, %v1030
  %v1103 = vpack.c.b16 %v1039, %v1031
  %v1104 = vpack.c.b16 %v1040, %v1032
  %v1105 = vpack.c.b16 %v1041, %v1033
  %v1106 = vpack.c.b16 %v1042, %v1034
  %v1107 = vpack.c.b16 %v1043, %v1035
  %1172 = vmatprep.subr.bf16.mxu0 %v1045
  %1173 = vmatpush1.bf16.msra.mxu0 %v1044
  %1174 = vmatprep.subr.bf16.mxu0 %v1053
  %1175 = vmatpush1.bf16.msra.mxu0 %v1052
  %1176 = vmatprep.subr.bf16.mxu0 %v1061
  %1177 = vmatpush1.bf16.msra.mxu0 %v1060
  %1178 = vmatprep.subr.bf16.mxu0 %v1069
  %1179 = vmatpush1.bf16.msra.mxu0 %v1068
  %1180 = vmatprep.subr.bf16.mxu0 %v1077
  %1181 = vmatpush1.bf16.msra.mxu0 %v1076
  %1182 = vmatprep.subr.bf16.mxu0 %v1085
  %1183 = vmatpush1.bf16.msra.mxu0 %v1084
  %1184 = vmatprep.subr.bf16.mxu0 %v1093
  %1185 = vmatpush1.bf16.msra.mxu0 %v1092
  %1186 = vmatprep.subr.bf16.mxu0 %v1101
  %1187 = vmatpush1.bf16.msra.mxu0 %v1100
  %1188 = vmatprep.subr.bf16.mxu0 0
  %1189 = vmatpush1.bf16.msra.mxu0 0
  %1190 = vmatprep.subr.bf16.mxu0 0
  %1191 = vmatpush1.bf16.msra.mxu0 0
  %1192 = vmatprep.subr.bf16.mxu0 0
  %1193 = vmatpush1.bf16.msra.mxu0 0
  %1194 = vmatprep.subr.bf16.mxu0 0
  %1195 = vmatpush1.bf16.msra.mxu0 0
  %1196 = vmatprep.subr.bf16.mxu0 0
  %1197 = vmatpush1.bf16.msra.mxu0 0
  %1198 = vmatprep.subr.bf16.mxu0 0
  %1199 = vmatpush1.bf16.msra.mxu0 0
  %1200 = vmatprep.subr.bf16.mxu0 0
  %1201 = vmatpush1.bf16.msra.mxu0 0
  %1202 = vmatprep.subr.bf16.mxu0 0
  %1203 = vmatpush1.bf16.msra.mxu0 0
  %1204 = vmatprep.mubr.bf16.mxu0 0
  %1205 = vmatmul.mubr.bf16.gmra.mrb[0].mxu0 %v787
  %v1206 = vpop.f32.mrb[0].mxu0
  %v1207 = vadd.f32 0.0, %v1206
  %v1208 = vpop.f32.mrb[0].mxu0
  %v1209 = vadd.f32 0.0, %v1208
  %v1210 = vpop.f32.mrb[0].mxu0
  %v1211 = vpop.f32.mrb[0].mxu0
  %1212 = vdwg.mxu0
  %1213 = vmatprep.subr.bf16.mxu0 %v1047
  %1214 = vmatpush1.bf16.msra.mxu0 %v1046
  %1215 = vmatprep.subr.bf16.mxu0 %v1055
  %1216 = vmatpush1.bf16.msra.mxu0 %v1054
  %1217 = vmatprep.subr.bf16.mxu0 %v1063
  %1218 = vmatpush1.bf16.msra.mxu0 %v1062
  %1219 = vmatprep.subr.bf16.mxu0 %v1071
  %1220 = vmatpush1.bf16.msra.mxu0 %v1070
  %1221 = vmatprep.subr.bf16.mxu0 %v1079
  %1222 = vmatpush1.bf16.msra.mxu0 %v1078
  %1223 = vmatprep.subr.bf16.mxu0 %v1087
  %1224 = vmatpush1.bf16.msra.mxu0 %v1086
  %1225 = vmatprep.subr.bf16.mxu0 %v1095
  %1226 = vmatpush1.bf16.msra.mxu0 %v1094
  %1227 = vmatprep.subr.bf16.mxu0 %v1103
  %1228 = vmatpush1.bf16.msra.mxu0 %v1102
  %1229 = vmatprep.subr.bf16.mxu0 0
  %1230 = vmatpush1.bf16.msra.mxu0 0
  %1231 = vmatprep.subr.bf16.mxu0 0
  %1232 = vmatpush1.bf16.msra.mxu0 0
  %1233 = vmatprep.subr.bf16.mxu0 0
  %1234 = vmatpush1.bf16.msra.mxu0 0
  %1235 = vmatprep.subr.bf16.mxu0 0
  %1236 = vmatpush1.bf16.msra.mxu0 0
  %1237 = vmatprep.subr.bf16.mxu0 0
  %1238 = vmatpush1.bf16.msra.mxu0 0
  %1239 = vmatprep.subr.bf16.mxu0 0
  %1240 = vmatpush1.bf16.msra.mxu0 0
  %1241 = vmatprep.subr.bf16.mxu0 0
  %1242 = vmatpush1.bf16.msra.mxu0 0
  %1243 = vmatprep.subr.bf16.mxu0 0
  %1244 = vmatpush1.bf16.msra.mxu0 0
  %1245 = vmatprep.mubr.bf16.mxu0 0
  %1246 = vmatmul.mubr.bf16.gmra.mrb[0].mxu0 %v787
  %v1247 = vpop.f32.mrb[0].mxu0
  %v1248 = vadd.f32 0.0, %v1247
  %v1249 = vpop.f32.mrb[0].mxu0
  %v1250 = vadd.f32 0.0, %v1249
  %v1251 = vpop.f32.mrb[0].mxu0
  %v1252 = vpop.f32.mrb[0].mxu0
  %1253 = vdwg.mxu0
  %1254 = vmatprep.subr.bf16.mxu0 %v1049
  %1255 = vmatpush1.bf16.msra.mxu0 %v1048
  %1256 = vmatprep.subr.bf16.mxu0 %v1057
  %1257 = vmatpush1.bf16.msra.mxu0 %v1056
  %1258 = vmatprep.subr.bf16.mxu0 %v1065
  %1259 = vmatpush1.bf16.msra.mxu0 %v1064
  %1260 = vmatprep.subr.bf16.mxu0 %v1073
  %1261 = vmatpush1.bf16.msra.mxu0 %v1072
  %1262 = vmatprep.subr.bf16.mxu0 %v1081
  %1263 = vmatpush1.bf16.msra.mxu0 %v1080
  %1264 = vmatprep.subr.bf16.mxu0 %v1089
  %1265 = vmatpush1.bf16.msra.mxu0 %v1088
  %1266 = vmatprep.subr.bf16.mxu0 %v1097
  %1267 = vmatpush1.bf16.msra.mxu0 %v1096
  %1268 = vmatprep.subr.bf16.mxu0 %v1105
  %1269 = vmatpush1.bf16.msra.mxu0 %v1104
  %1270 = vmatprep.subr.bf16.mxu0 0
  %1271 = vmatpush1.bf16.msra.mxu0 0
  %1272 = vmatprep.subr.bf16.mxu0 0
  %1273 = vmatpush1.bf16.msra.mxu0 0
  %1274 = vmatprep.subr.bf16.mxu0 0
  %1275 = vmatpush1.bf16.msra.mxu0 0
  %1276 = vmatprep.subr.bf16.mxu0 0
  %1277 = vmatpush1.bf16.msra.mxu0 0
  %1278 = vmatprep.subr.bf16.mxu0 0
  %1279 = vmatpush1.bf16.msra.mxu0 0
  %1280 = vmatprep.subr.bf16.mxu0 0
  %1281 = vmatpush1.bf16.msra.mxu0 0
  %1282 = vmatprep.subr.bf16.mxu0 0
  %1283 = vmatpush1.bf16.msra.mxu0 0
  %1284 = vmatprep.subr.bf16.mxu0 0
  %1285 = vmatpush1.bf16.msra.mxu0 0
  %1286 = vmatprep.mubr.bf16.mxu0 0
  %1287 = vmatmul.mubr.bf16.gmra.mrb[0].mxu0 %v787
  %v1288 = vpop.f32.mrb[0].mxu0
  %v1289 = vadd.f32 0.0, %v1288
  %v1290 = vpop.f32.mrb[0].mxu0
  %v1291 = vadd.f32 0.0, %v1290
  %v1292 = vpop.f32.mrb[0].mxu0
  %v1293 = vpop.f32.mrb[0].mxu0
  %1294 = vdwg.mxu0
  %1295 = vmatprep.subr.bf16.mxu0 %v1051
  %1296 = vmatpush1.bf16.msra.mxu0 %v1050
  %1297 = vmatprep.subr.bf16.mxu0 %v1059
  %1298 = vmatpush1.bf16.msra.mxu0 %v1058
  %1299 = vmatprep.subr.bf16.mxu0 %v1067
  %1300 = vmatpush1.bf16.msra.mxu0 %v1066
  %1301 = vmatprep.subr.bf16.mxu0 %v1075
  %1302 = vmatpush1.bf16.msra.mxu0 %v1074
  %1303 = vmatprep.subr.bf16.mxu0 %v1083
  %1304 = vmatpush1.bf16.msra.mxu0 %v1082
  %1305 = vmatprep.subr.bf16.mxu0 %v1091
  %1306 = vmatpush1.bf16.msra.mxu0 %v1090
  %1307 = vmatprep.subr.bf16.mxu0 %v1099
  %1308 = vmatpush1.bf16.msra.mxu0 %v1098
  %1309 = vmatprep.subr.bf16.mxu0 %v1107
  %1310 = vmatpush1.bf16.msra.mxu0 %v1106
  %1311 = vmatprep.subr.bf16.mxu0 0
  %1312 = vmatpush1.bf16.msra.mxu0 0
  %1313 = vmatprep.subr.bf16.mxu0 0
  %1314 = vmatpush1.bf16.msra.mxu0 0
  %1315 = vmatprep.subr.bf16.mxu0 0
  %1316 = vmatpush1.bf16.msra.mxu0 0
  %1317 = vmatprep.subr.bf16.mxu0 0
  %1318 = vmatpush1.bf16.msra.mxu0 0
  %1319 = vmatprep.subr.bf16.mxu0 0
  %1320 = vmatpush1.bf16.msra.mxu0 0
  %1321 = vmatprep.subr.bf16.mxu0 0
  %1322 = vmatpush1.bf16.msra.mxu0 0
  %1323 = vmatprep.subr.bf16.mxu0 0
  %1324 = vmatpush1.bf16.msra.mxu0 0
  %1325 = vmatprep.subr.bf16.mxu0 0
  %1326 = vmatpush1.bf16.msra.mxu0 0
  %1327 = vmatprep.mubr.bf16.mxu0 0
  %1328 = vmatmul.mubr.bf16.gmra.mrb[0].mxu0 %v787
  %v1329 = vpop.f32.mrb[0].mxu0
  %v1330 = vadd.f32 0.0, %v1329
  %v1331 = vpop.f32.mrb[0].mxu0
  %v1332 = vadd.f32 0.0, %v1331
  %v1333 = vpop.f32.mrb[0].mxu0
  %v1334 = vpop.f32.mrb[0].mxu0
  %1335 = vdwg.mxu0
  %v1336 = vmax.f32 %v1207, %v1289
  %v1337 = vmax.f32 %v1209, %v1291
  %v1338 = vmax.f32 %v1248, %v1330
  %v1339 = vmax.f32 %v1250, %v1332
  %v1340 = vld [vmem:[%s2] sm:$0xf]
  %v1342 = vlaneseq
  %v1343 = vshrl.u32 %v1342, 7
  %v1344 = vsub.s32 0, %v1343
  %v1345 = vrot.slane %v1340, %v1344
  %v1346 = vlaneseq
  %v1347 = vshrl.u32 %v1346, 7
  %v1348 = vsub.s32 1, %v1347
  %v1349 = vrot.slane %v1340, %v1348
  %v1350 = vlaneseq
  %v1351 = vshrl.u32 %v1350, 7
  %v1352 = vsub.s32 2, %v1351
  %v1353 = vrot.slane %v1340, %v1352
  %v1354 = vlaneseq
  %v1355 = vshrl.u32 %v1354, 7
  %v1356 = vsub.s32 3, %v1355
  %v1357 = vrot.slane %v1340, %v1356
  %v1362 = vadd.f32 %v1336, %v1345
  %v1363 = vadd.f32 %v1337, %v1349
  %v1364 = vadd.f32 %v1338, %v1353
  %v1365 = vadd.f32 %v1339, %v1357
  %v1366 = vmax.f32 %v1362, 0.0
  %v1367 = vmax.f32 %v1363, 0.0
  %v1368 = vmax.f32 %v1364, 0.0
  %v1369 = vmax.f32 %v1365, 0.0
  %v1370 = vmax.f32 %v1366, %v1368
  %v1371 = vmax.f32 %v1367, %v1369
  %v1372 = vld [vmem:[#allocation2] sm:$0xff]
  %v1373 = vpack.c.bf16 %v1370, %v1370
  %v1374 = vpack.c.bf16 %v1371, %v1371
  %s1375 = scalar_lea.vmem %s3, 128
  %v1376 = vld [vmem:[%s1375] sm:$0xf]
  %v1377 = vld [vmem:[%s1375 + $0x4] sm:$0xf]
  %v1378 = vld [vmem:[%s1375 + $0x8] sm:$0xf]
  %v1379 = vld [vmem:[%s1375 + $0xc] sm:$0xf]
  %v1380 = vld [vmem:[%s1375 + $0x10] sm:$0xf]
  %v1381 = vld [vmem:[%s1375 + $0x14] sm:$0xf]
  %v1382 = vld [vmem:[%s1375 + $0x18] sm:$0xf]
  %v1383 = vld [vmem:[%s1375 + $0x1c] sm:$0xf]
  %v1384 = vld [vmem:[%s1375 + $0x20] sm:$0xf]
  %v1385 = vld [vmem:[%s1375 + $0x24] sm:$0xf]
  %v1386 = vld [vmem:[%s1375 + $0x28] sm:$0xf]
  %v1387 = vld [vmem:[%s1375 + $0x2c] sm:$0xf]
  %v1388 = vld [vmem:[%s1375 + $0x30] sm:$0xf]
  %v1389 = vld [vmem:[%s1375 + $0x34] sm:$0xf]
  %v1390 = vld [vmem:[%s1375 + $0x38] sm:$0xf]
  %v1391 = vld [vmem:[%s1375 + $0x3c] sm:$0xf]
  %v1392 = vld [vmem:[%s1375 + $0x40] sm:$0xf]
  %v1393 = vld [vmem:[%s1375 + $0x44] sm:$0xf]
  %v1394 = vld [vmem:[%s1375 + $0x48] sm:$0xf]
  %v1395 = vld [vmem:[%s1375 + $0x4c] sm:$0xf]
  %v1396 = vld [vmem:[%s1375 + $0x50] sm:$0xf]
  %v1397 = vld [vmem:[%s1375 + $0x54] sm:$0xf]
  %v1398 = vld [vmem:[%s1375 + $0x58] sm:$0xf]
  %v1399 = vld [vmem:[%s1375 + $0x5c] sm:$0xf]
  %v1400 = vld [vmem:[%s1375 + $0x60] sm:$0xf]
  %v1401 = vld [vmem:[%s1375 + $0x64] sm:$0xf]
  %v1402 = vld [vmem:[%s1375 + $0x68] sm:$0xf]
  %v1403 = vld [vmem:[%s1375 + $0x6c] sm:$0xf]
  %v1404 = vld [vmem:[%s1375 + $0x70] sm:$0xf]
  %v1405 = vld [vmem:[%s1375 + $0x74] sm:$0xf]
  %v1406 = vld [vmem:[%s1375 + $0x78] sm:$0xf]
  %v1407 = vld [vmem:[%s1375 + $0x7c] sm:$0xf]
  %v1440 = vunpack.c.l.b16 %v1376
  %v1441 = vunpack.c.l.b16 %v1377
  %v1442 = vunpack.c.l.b16 %v1378
  %v1443 = vunpack.c.l.b16 %v1379
  %v1444 = vunpack.c.l.b16 %v1380
  %v1445 = vunpack.c.l.b16 %v1381
  %v1446 = vunpack.c.l.b16 %v1382
  %v1447 = vunpack.c.l.b16 %v1383
  %v1448 = vunpack.c.l.b16 %v1384
  %v1449 = vunpack.c.l.b16 %v1385
  %v1450 = vunpack.c.l.b16 %v1386
  %v1451 = vunpack.c.l.b16 %v1387
  %v1452 = vunpack.c.l.b16 %v1388
  %v1453 = vunpack.c.l.b16 %v1389
  %v1454 = vunpack.c.l.b16 %v1390
  %v1455 = vunpack.c.l.b16 %v1391
  %v1456 = vunpack.c.l.b16 %v1392
  %v1457 = vunpack.c.l.b16 %v1393
  %v1458 = vunpack.c.l.b16 %v1394
  %v1459 = vunpack.c.l.b16 %v1395
  %v1460 = vunpack.c.l.b16 %v1396
  %v1461 = vunpack.c.l.b16 %v1397
  %v1462 = vunpack.c.l.b16 %v1398
  %v1463 = vunpack.c.l.b16 %v1399
  %v1464 = vunpack.c.l.b16 %v1400
  %v1465 = vunpack.c.l.b16 %v1401
  %v1466 = vunpack.c.l.b16 %v1402
  %v1467 = vunpack.c.l.b16 %v1403
  %v1468 = vunpack.c.l.b16 %v1404
  %v1469 = vunpack.c.l.b16 %v1405
  %v1470 = vunpack.c.l.b16 %v1406
  %v1471 = vunpack.c.l.b16 %v1407
  %v1472 = vpack.c.b16 %v1441, %v1440
  %v1473 = vpack.c.b16 %v1443, %v1442
  %v1474 = vpack.c.b16 %v1445, %v1444
  %v1475 = vpack.c.b16 %v1447, %v1446
  %v1476 = vpack.c.b16 %v1449, %v1448
  %v1477 = vpack.c.b16 %v1451, %v1450
  %v1478 = vpack.c.b16 %v1453, %v1452
  %v1479 = vpack.c.b16 %v1455, %v1454
  %v1480 = vpack.c.b16 %v1457, %v1456
  %v1481 = vpack.c.b16 %v1459, %v1458
  %v1482 = vpack.c.b16 %v1461, %v1460
  %v1483 = vpack.c.b16 %v1463, %v1462
  %v1484 = vpack.c.b16 %v1465, %v1464
  %v1485 = vpack.c.b16 %v1467, %v1466
  %v1486 = vpack.c.b16 %v1469, %v1468
  %v1487 = vpack.c.b16 %v1471, %v1470
  %1504 = vmatprep.subr.bf16.mxu0 0
  %1505 = vmatpush1.bf16.msra.mxu0 %v1472
  %1506 = vmatprep.subr.bf16.mxu0 0
  %1507 = vmatpush1.bf16.msra.mxu0 %v1473
  %1508 = vmatprep.subr.bf16.mxu0 0
  %1509 = vmatpush1.bf16.msra.mxu0 %v1474
  %1510 = vmatprep.subr.bf16.mxu0 0
  %1511 = vmatpush1.bf16.msra.mxu0 %v1475
  %1512 = vmatprep.subr.bf16.mxu0 0
  %1513 = vmatpush1.bf16.msra.mxu0 %v1476
  %1514 = vmatprep.subr.bf16.mxu0 0
  %1515 = vmatpush1.bf16.msra.mxu0 %v1477
  %1516 = vmatprep.subr.bf16.mxu0 0
  %1517 = vmatpush1.bf16.msra.mxu0 %v1478
  %1518 = vmatprep.subr.bf16.mxu0 0
  %1519 = vmatpush1.bf16.msra.mxu0 %v1479
  %1520 = vmatprep.subr.bf16.mxu0 0
  %1521 = vmatpush1.bf16.msra.mxu0 %v1480
  %1522 = vmatprep.subr.bf16.mxu0 0
  %1523 = vmatpush1.bf16.msra.mxu0 %v1481
  %1524 = vmatprep.subr.bf16.mxu0 0
  %1525 = vmatpush1.bf16.msra.mxu0 %v1482
  %1526 = vmatprep.subr.bf16.mxu0 0
  %1527 = vmatpush1.bf16.msra.mxu0 %v1483
  %1528 = vmatprep.subr.bf16.mxu0 0
  %1529 = vmatpush1.bf16.msra.mxu0 %v1484
  %1530 = vmatprep.subr.bf16.mxu0 0
  %1531 = vmatpush1.bf16.msra.mxu0 %v1485
  %1532 = vmatprep.subr.bf16.mxu0 0
  %1533 = vmatpush1.bf16.msra.mxu0 %v1486
  %1534 = vmatprep.subr.bf16.mxu0 0
  %1535 = vmatpush1.bf16.msra.mxu0 %v1487
  %1536 = vmatprep.mubr.bf16.mxu0 %v1374
  %1537 = vmatmul.mubr.bf16.gmra.mrb[0].mxu0 %v1373
  %v1538 = vpop.f32.mrb[0].mxu0
  %v1539 = vadd.f32 0.0, %v1538
  %v1540 = vpop.f32.mrb[0].mxu0
  %v1541 = vpop.f32.mrb[0].mxu0
  %v1542 = vpop.f32.mrb[0].mxu0
  %1543 = vdwg.mxu0
  %v1544 = vadd.f32 %v1372, %v1539
  %1545 = vst [vmem:[#allocation2] sm:$0xff] %v1544
  %s1546 = scalar_lea.vmem %s0, 8
  %v1547 = vld [vmem:[%s1546] sm:$0xf]
  %v1548 = vld [vmem:[%s1] sm:$0xff]
  %v1549 = vld [vmem:[%s1 + $0x8] sm:$0xff]
  %v1550 = vld [vmem:[%s1 + $0x10] sm:$0xff]
  %v1551 = vld [vmem:[%s1 + $0x18] sm:$0xff]
  %v1552 = vld [vmem:[%s1 + $0x20] sm:$0xff]
  %v1553 = vld [vmem:[%s1 + $0x28] sm:$0xff]
  %v1554 = vld [vmem:[%s1 + $0x30] sm:$0xff]
  %v1555 = vld [vmem:[%s1 + $0x38] sm:$0xff]
  %v1556 = vld [vmem:[%s1 + $0x40] sm:$0xff]
  %v1557 = vld [vmem:[%s1 + $0x48] sm:$0xff]
  %v1558 = vld [vmem:[%s1 + $0x50] sm:$0xff]
  %v1559 = vld [vmem:[%s1 + $0x58] sm:$0xff]
  %v1560 = vld [vmem:[%s1 + $0x60] sm:$0xff]
  %v1561 = vld [vmem:[%s1 + $0x68] sm:$0xff]
  %v1562 = vld [vmem:[%s1 + $0x70] sm:$0xff]
  %v1563 = vld [vmem:[%s1 + $0x78] sm:$0xff]
  %v1564 = vld [vmem:[%s1 + $0x80] sm:$0xff]
  %v1565 = vld [vmem:[%s1 + $0x88] sm:$0xff]
  %v1566 = vld [vmem:[%s1 + $0x90] sm:$0xff]
  %v1567 = vld [vmem:[%s1 + $0x98] sm:$0xff]
  %v1568 = vld [vmem:[%s1 + $0xa0] sm:$0xff]
  %v1569 = vld [vmem:[%s1 + $0xa8] sm:$0xff]
  %v1570 = vld [vmem:[%s1 + $0xb0] sm:$0xff]
  %v1571 = vld [vmem:[%s1 + $0xb8] sm:$0xff]
  %v1572 = vld [vmem:[%s1 + $0xc0] sm:$0xff]
  %v1573 = vld [vmem:[%s1 + $0xc8] sm:$0xff]
  %v1574 = vld [vmem:[%s1 + $0xd0] sm:$0xff]
  %v1575 = vld [vmem:[%s1 + $0xd8] sm:$0xff]
  %v1576 = vld [vmem:[%s1 + $0xe0] sm:$0xff]
  %v1577 = vld [vmem:[%s1 + $0xe8] sm:$0xff]
  %v1578 = vld [vmem:[%s1 + $0xf0] sm:$0xff]
  %v1579 = vld [vmem:[%s1 + $0xf8] sm:$0xff]
  %v1580 = vld [vmem:[%s1 + $0x100] sm:$0xff]
  %v1581 = vld [vmem:[%s1 + $0x108] sm:$0xff]
  %v1582 = vld [vmem:[%s1 + $0x110] sm:$0xff]
  %v1583 = vld [vmem:[%s1 + $0x118] sm:$0xff]
  %v1584 = vld [vmem:[%s1 + $0x120] sm:$0xff]
  %v1585 = vld [vmem:[%s1 + $0x128] sm:$0xff]
  %v1586 = vld [vmem:[%s1 + $0x130] sm:$0xff]
  %v1587 = vld [vmem:[%s1 + $0x138] sm:$0xff]
  %v1588 = vld [vmem:[%s1 + $0x140] sm:$0xff]
  %v1589 = vld [vmem:[%s1 + $0x148] sm:$0xff]
  %v1590 = vld [vmem:[%s1 + $0x150] sm:$0xff]
  %v1591 = vld [vmem:[%s1 + $0x158] sm:$0xff]
  %v1592 = vld [vmem:[%s1 + $0x160] sm:$0xff]
  %v1593 = vld [vmem:[%s1 + $0x168] sm:$0xff]
  %v1594 = vld [vmem:[%s1 + $0x170] sm:$0xff]
  %v1595 = vld [vmem:[%s1 + $0x178] sm:$0xff]
  %v1596 = vld [vmem:[%s1 + $0x180] sm:$0xff]
  %v1597 = vld [vmem:[%s1 + $0x188] sm:$0xff]
  %v1598 = vld [vmem:[%s1 + $0x190] sm:$0xff]
  %v1599 = vld [vmem:[%s1 + $0x198] sm:$0xff]
  %v1600 = vld [vmem:[%s1 + $0x1a0] sm:$0xff]
  %v1601 = vld [vmem:[%s1 + $0x1a8] sm:$0xff]
  %v1602 = vld [vmem:[%s1 + $0x1b0] sm:$0xff]
  %v1603 = vld [vmem:[%s1 + $0x1b8] sm:$0xff]
  %v1604 = vld [vmem:[%s1 + $0x1c0] sm:$0xff]
  %v1605 = vld [vmem:[%s1 + $0x1c8] sm:$0xff]
  %v1606 = vld [vmem:[%s1 + $0x1d0] sm:$0xff]
  %v1607 = vld [vmem:[%s1 + $0x1d8] sm:$0xff]
  %v1608 = vld [vmem:[%s1 + $0x1e0] sm:$0xff]
  %v1609 = vld [vmem:[%s1 + $0x1e8] sm:$0xff]
  %v1610 = vld [vmem:[%s1 + $0x1f0] sm:$0xff]
  %v1611 = vld [vmem:[%s1 + $0x1f8] sm:$0xff]
  %v1676 = vunpack.c.l.b16 %v1548
  %v1677 = vunpack.c.h.b16 %v1548
  %v1678 = vunpack.c.l.b16 %v1549
  %v1679 = vunpack.c.h.b16 %v1549
  %v1680 = vunpack.c.l.b16 %v1550
  %v1681 = vunpack.c.h.b16 %v1550
  %v1682 = vunpack.c.l.b16 %v1551
  %v1683 = vunpack.c.h.b16 %v1551
  %v1684 = vunpack.c.l.b16 %v1552
  %v1685 = vunpack.c.h.b16 %v1552
  %v1686 = vunpack.c.l.b16 %v1553
  %v1687 = vunpack.c.h.b16 %v1553
  %v1688 = vunpack.c.l.b16 %v1554
  %v1689 = vunpack.c.h.b16 %v1554
  %v1690 = vunpack.c.l.b16 %v1555
  %v1691 = vunpack.c.h.b16 %v1555
  %v1692 = vunpack.c.l.b16 %v1556
  %v1693 = vunpack.c.h.b16 %v1556
  %v1694 = vunpack.c.l.b16 %v1557
  %v1695 = vunpack.c.h.b16 %v1557
  %v1696 = vunpack.c.l.b16 %v1558
  %v1697 = vunpack.c.h.b16 %v1558
  %v1698 = vunpack.c.l.b16 %v1559
  %v1699 = vunpack.c.h.b16 %v1559
  %v1700 = vunpack.c.l.b16 %v1560
  %v1701 = vunpack.c.h.b16 %v1560
  %v1702 = vunpack.c.l.b16 %v1561
  %v1703 = vunpack.c.h.b16 %v1561
  %v1704 = vunpack.c.l.b16 %v1562
  %v1705 = vunpack.c.h.b16 %v1562
  %v1706 = vunpack.c.l.b16 %v1563
  %v1707 = vunpack.c.h.b16 %v1563
  %v1708 = vunpack.c.l.b16 %v1564
  %v1709 = vunpack.c.h.b16 %v1564
  %v1710 = vunpack.c.l.b16 %v1565
  %v1711 = vunpack.c.h.b16 %v1565
  %v1712 = vunpack.c.l.b16 %v1566
  %v1713 = vunpack.c.h.b16 %v1566
  %v1714 = vunpack.c.l.b16 %v1567
  %v1715 = vunpack.c.h.b16 %v1567
  %v1716 = vunpack.c.l.b16 %v1568
  %v1717 = vunpack.c.h.b16 %v1568
  %v1718 = vunpack.c.l.b16 %v1569
  %v1719 = vunpack.c.h.b16 %v1569
  %v1720 = vunpack.c.l.b16 %v1570
  %v1721 = vunpack.c.h.b16 %v1570
  %v1722 = vunpack.c.l.b16 %v1571
  %v1723 = vunpack.c.h.b16 %v1571
  %v1724 = vunpack.c.l.b16 %v1572
  %v1725 = vunpack.c.h.b16 %v1572
  %v1726 = vunpack.c.l.b16 %v1573
  %v1727 = vunpack.c.h.b16 %v1573
  %v1728 = vunpack.c.l.b16 %v1574
  %v1729 = vunpack.c.h.b16 %v1574
  %v1730 = vunpack.c.l.b16 %v1575
  %v1731 = vunpack.c.h.b16 %v1575
  %v1732 = vunpack.c.l.b16 %v1576
  %v1733 = vunpack.c.h.b16 %v1576
  %v1734 = vunpack.c.l.b16 %v1577
  %v1735 = vunpack.c.h.b16 %v1577
  %v1736 = vunpack.c.l.b16 %v1578
  %v1737 = vunpack.c.h.b16 %v1578
  %v1738 = vunpack.c.l.b16 %v1579
  %v1739 = vunpack.c.h.b16 %v1579
  %v1740 = vunpack.c.l.b16 %v1580
  %v1741 = vunpack.c.h.b16 %v1580
  %v1742 = vunpack.c.l.b16 %v1581
  %v1743 = vunpack.c.h.b16 %v1581
  %v1744 = vunpack.c.l.b16 %v1582
  %v1745 = vunpack.c.h.b16 %v1582
  %v1746 = vunpack.c.l.b16 %v1583
  %v1747 = vunpack.c.h.b16 %v1583
  %v1748 = vunpack.c.l.b16 %v1584
  %v1749 = vunpack.c.h.b16 %v1584
  %v1750 = vunpack.c.l.b16 %v1585
  %v1751 = vunpack.c.h.b16 %v1585
  %v1752 = vunpack.c.l.b16 %v1586
  %v1753 = vunpack.c.h.b16 %v1586
  %v1754 = vunpack.c.l.b16 %v1587
  %v1755 = vunpack.c.h.b16 %v1587
  %v1756 = vunpack.c.l.b16 %v1588
  %v1757 = vunpack.c.h.b16 %v1588
  %v1758 = vunpack.c.l.b16 %v1589
  %v1759 = vunpack.c.h.b16 %v1589
  %v1760 = vunpack.c.l.b16 %v1590
  %v1761 = vunpack.c.h.b16 %v1590
  %v1762 = vunpack.c.l.b16 %v1591
  %v1763 = vunpack.c.h.b16 %v1591
  %v1764 = vunpack.c.l.b16 %v1592
  %v1765 = vunpack.c.h.b16 %v1592
  %v1766 = vunpack.c.l.b16 %v1593
  %v1767 = vunpack.c.h.b16 %v1593
  %v1768 = vunpack.c.l.b16 %v1594
  %v1769 = vunpack.c.h.b16 %v1594
  %v1770 = vunpack.c.l.b16 %v1595
  %v1771 = vunpack.c.h.b16 %v1595
  %v1772 = vunpack.c.l.b16 %v1596
  %v1773 = vunpack.c.h.b16 %v1596
  %v1774 = vunpack.c.l.b16 %v1597
  %v1775 = vunpack.c.h.b16 %v1597
  %v1776 = vunpack.c.l.b16 %v1598
  %v1777 = vunpack.c.h.b16 %v1598
  %v1778 = vunpack.c.l.b16 %v1599
  %v1779 = vunpack.c.h.b16 %v1599
  %v1780 = vunpack.c.l.b16 %v1600
  %v1781 = vunpack.c.h.b16 %v1600
  %v1782 = vunpack.c.l.b16 %v1601
  %v1783 = vunpack.c.h.b16 %v1601
  %v1784 = vunpack.c.l.b16 %v1602
  %v1785 = vunpack.c.h.b16 %v1602
  %v1786 = vunpack.c.l.b16 %v1603
  %v1787 = vunpack.c.h.b16 %v1603
  %v1788 = vunpack.c.l.b16 %v1604
  %v1789 = vunpack.c.h.b16 %v1604
  %v1790 = vunpack.c.l.b16 %v1605
  %v1791 = vunpack.c.h.b16 %v1605
  %v1792 = vunpack.c.l.b16 %v1606
  %v1793 = vunpack.c.h.b16 %v1606
  %v1794 = vunpack.c.l.b16 %v1607
  %v1795 = vunpack.c.h.b16 %v1607
  %v1796 = vunpack.c.l.b16 %v1608
  %v1797 = vunpack.c.h.b16 %v1608
  %v1798 = vunpack.c.l.b16 %v1609
  %v1799 = vunpack.c.h.b16 %v1609
  %v1800 = vunpack.c.l.b16 %v1610
  %v1801 = vunpack.c.h.b16 %v1610
  %v1802 = vunpack.c.l.b16 %v1611
  %v1803 = vunpack.c.h.b16 %v1611
  %v1804 = vpack.c.b16 %v1684, %v1676
  %v1805 = vpack.c.b16 %v1685, %v1677
  %v1806 = vpack.c.b16 %v1686, %v1678
  %v1807 = vpack.c.b16 %v1687, %v1679
  %v1808 = vpack.c.b16 %v1688, %v1680
  %v1809 = vpack.c.b16 %v1689, %v1681
  %v1810 = vpack.c.b16 %v1690, %v1682
  %v1811 = vpack.c.b16 %v1691, %v1683
  %v1812 = vpack.c.b16 %v1700, %v1692
  %v1813 = vpack.c.b16 %v1701, %v1693
  %v1814 = vpack.c.b16 %v1702, %v1694
  %v1815 = vpack.c.b16 %v1703, %v1695
  %v1816 = vpack.c.b16 %v1704, %v1696
  %v1817 = vpack.c.b16 %v1705, %v1697
  %v1818 = vpack.c.b16 %v1706, %v1698
  %v1819 = vpack.c.b16 %v1707, %v1699
  %v1820 = vpack.c.b16 %v1716, %v1708
  %v1821 = vpack.c.b16 %v1717, %v1709
  %v1822 = vpack.c.b16 %v1718, %v1710
  %v1823 = vpack.c.b16 %v1719, %v1711
  %v1824 = vpack.c.b16 %v1720, %v1712
  %v1825 = vpack.c.b16 %v1721, %v1713
  %v1826 = vpack.c.b16 %v1722, %v1714
  %v1827 = vpack.c.b16 %v1723, %v1715
  %v1828 = vpack.c.b16 %v1732, %v1724
  %v1829 = vpack.c.b16 %v1733, %v1725
  %v1830 = vpack.c.b16 %v1734, %v1726
  %v1831 = vpack.c.b16 %v1735, %v1727
  %v1832 = vpack.c.b16 %v1736, %v1728
  %v1833 = vpack.c.b16 %v1737, %v1729
  %v1834 = vpack.c.b16 %v1738, %v1730
  %v1835 = vpack.c.b16 %v1739, %v1731
  %v1836 = vpack.c.b16 %v1748, %v1740
  %v1837 = vpack.c.b16 %v1749, %v1741
  %v1838 = vpack.c.b16 %v1750, %v1742
  %v1839 = vpack.c.b16 %v1751, %v1743
  %v1840 = vpack.c.b16 %v1752, %v1744
  %v1841 = vpack.c.b16 %v1753, %v1745
  %v1842 = vpack.c.b16 %v1754, %v1746
  %v1843 = vpack.c.b16 %v1755, %v1747
  %v1844 = vpack.c.b16 %v1764, %v1756
  %v1845 = vpack.c.b16 %v1765, %v1757
  %v1846 = vpack.c.b16 %v1766, %v1758
  %v1847 = vpack.c.b16 %v1767, %v1759
  %v1848 = vpack.c.b16 %v1768, %v1760
  %v1849 = vpack.c.b16 %v1769, %v1761
  %v1850 = vpack.c.b16 %v1770, %v1762
  %v1851 = vpack.c.b16 %v1771, %v1763
  %v1852 = vpack.c.b16 %v1780, %v1772
  %v1853 = vpack.c.b16 %v1781, %v1773
  %v1854 = vpack.c.b16 %v1782, %v1774
  %v1855 = vpack.c.b16 %v1783, %v1775
  %v1856 = vpack.c.b16 %v1784, %v1776
  %v1857 = vpack.c.b16 %v1785, %v1777
  %v1858 = vpack.c.b16 %v1786, %v1778
  %v1859 = vpack.c.b16 %v1787, %v1779
  %v1860 = vpack.c.b16 %v1796, %v1788
  %v1861 = vpack.c.b16 %v1797, %v1789
  %v1862 = vpack.c.b16 %v1798, %v1790
  %v1863 = vpack.c.b16 %v1799, %v1791
  %v1864 = vpack.c.b16 %v1800, %v1792
  %v1865 = vpack.c.b16 %v1801, %v1793
  %v1866 = vpack.c.b16 %v1802, %v1794
  %v1867 = vpack.c.b16 %v1803, %v1795
  %1932 = vmatprep.subr.bf16.mxu0 %v1805
  %1933 = vmatpush1.bf16.msra.mxu0 %v1804
  %1934 = vmatprep.subr.bf16.mxu0 %v1813
  %1935 = vmatpush1.bf16.msra.mxu0 %v1812
  %1936 = vmatprep.subr.bf16.mxu0 %v1821
  %1937 = vmatpush1.bf16.msra.mxu0 %v1820
  %1938 = vmatprep.subr.bf16.mxu0 %v1829
  %1939 = vmatpush1.bf16.msra.mxu0 %v1828
  %1940 = vmatprep.subr.bf16.mxu0 %v1837
  %1941 = vmatpush1.bf16.msra.mxu0 %v1836
  %1942 = vmatprep.subr.bf16.mxu0 %v1845
  %1943 = vmatpush1.bf16.msra.mxu0 %v1844
  %1944 = vmatprep.subr.bf16.mxu0 %v1853
  %1945 = vmatpush1.bf16.msra.mxu0 %v1852
  %1946 = vmatprep.subr.bf16.mxu0 %v1861
  %1947 = vmatpush1.bf16.msra.mxu0 %v1860
  %1948 = vmatprep.subr.bf16.mxu0 0
  %1949 = vmatpush1.bf16.msra.mxu0 0
  %1950 = vmatprep.subr.bf16.mxu0 0
  %1951 = vmatpush1.bf16.msra.mxu0 0
  %1952 = vmatprep.subr.bf16.mxu0 0
  %1953 = vmatpush1.bf16.msra.mxu0 0
  %1954 = vmatprep.subr.bf16.mxu0 0
  %1955 = vmatpush1.bf16.msra.mxu0 0
  %1956 = vmatprep.subr.bf16.mxu0 0
  %1957 = vmatpush1.bf16.msra.mxu0 0
  %1958 = vmatprep.subr.bf16.mxu0 0
  %1959 = vmatpush1.bf16.msra.mxu0 0
  %1960 = vmatprep.subr.bf16.mxu0 0
  %1961 = vmatpush1.bf16.msra.mxu0 0
  %1962 = vmatprep.subr.bf16.mxu0 0
  %1963 = vmatpush1.bf16.msra.mxu0 0
  %1964 = vmatprep.mubr.bf16.mxu0 0
  %1965 = vmatmul.mubr.bf16.gmra.mrb[0].mxu0 %v1547
  %v1966 = vpop.f32.mrb[0].mxu0
  %v1967 = vadd.f32 0.0, %v1966
  %v1968 = vpop.f32.mrb[0].mxu0
  %v1969 = vadd.f32 0.0, %v1968
  %v1970 = vpop.f32.mrb[0].mxu0
  %v1971 = vpop.f32.mrb[0].mxu0
  %1972 = vdwg.mxu0
  %1973 = vmatprep.subr.bf16.mxu0 %v1807
  %1974 = vmatpush1.bf16.msra.mxu0 %v1806
  %1975 = vmatprep.subr.bf16.mxu0 %v1815
  %1976 = vmatpush1.bf16.msra.mxu0 %v1814
  %1977 = vmatprep.subr.bf16.mxu0 %v1823
  %1978 = vmatpush1.bf16.msra.mxu0 %v1822
  %1979 = vmatprep.subr.bf16.mxu0 %v1831
  %1980 = vmatpush1.bf16.msra.mxu0 %v1830
  %1981 = vmatprep.subr.bf16.mxu0 %v1839
  %1982 = vmatpush1.bf16.msra.mxu0 %v1838
  %1983 = vmatprep.subr.bf16.mxu0 %v1847
  %1984 = vmatpush1.bf16.msra.mxu0 %v1846
  %1985 = vmatprep.subr.bf16.mxu0 %v1855
  %1986 = vmatpush1.bf16.msra.mxu0 %v1854
  %1987 = vmatprep.subr.bf16.mxu0 %v1863
  %1988 = vmatpush1.bf16.msra.mxu0 %v1862
  %1989 = vmatprep.subr.bf16.mxu0 0
  %1990 = vmatpush1.bf16.msra.mxu0 0
  %1991 = vmatprep.subr.bf16.mxu0 0
  %1992 = vmatpush1.bf16.msra.mxu0 0
  %1993 = vmatprep.subr.bf16.mxu0 0
  %1994 = vmatpush1.bf16.msra.mxu0 0
  %1995 = vmatprep.subr.bf16.mxu0 0
  %1996 = vmatpush1.bf16.msra.mxu0 0
  %1997 = vmatprep.subr.bf16.mxu0 0
  %1998 = vmatpush1.bf16.msra.mxu0 0
  %1999 = vmatprep.subr.bf16.mxu0 0
  %2000 = vmatpush1.bf16.msra.mxu0 0
  %2001 = vmatprep.subr.bf16.mxu0 0
  %2002 = vmatpush1.bf16.msra.mxu0 0
  %2003 = vmatprep.subr.bf16.mxu0 0
  %2004 = vmatpush1.bf16.msra.mxu0 0
  %2005 = vmatprep.mubr.bf16.mxu0 0
  %2006 = vmatmul.mubr.bf16.gmra.mrb[0].mxu0 %v1547
  %v2007 = vpop.f32.mrb[0].mxu0
  %v2008 = vadd.f32 0.0, %v2007
  %v2009 = vpop.f32.mrb[0].mxu0
  %v2010 = vadd.f32 0.0, %v2009
  %v2011 = vpop.f32.mrb[0].mxu0
  %v2012 = vpop.f32.mrb[0].mxu0
  %2013 = vdwg.mxu0
  %2014 = vmatprep.subr.bf16.mxu0 %v1809
  %2015 = vmatpush1.bf16.msra.mxu0 %v1808
  %2016 = vmatprep.subr.bf16.mxu0 %v1817
  %2017 = vmatpush1.bf16.msra.mxu0 %v1816
  %2018 = vmatprep.subr.bf16.mxu0 %v1825
  %2019 = vmatpush1.bf16.msra.mxu0 %v1824
  %2020 = vmatprep.subr.bf16.mxu0 %v1833
  %2021 = vmatpush1.bf16.msra.mxu0 %v1832
  %2022 = vmatprep.subr.bf16.mxu0 %v1841
  %2023 = vmatpush1.bf16.msra.mxu0 %v1840
  %2024 = vmatprep.subr.bf16.mxu0 %v1849
  %2025 = vmatpush1.bf16.msra.mxu0 %v1848
  %2026 = vmatprep.subr.bf16.mxu0 %v1857
  %2027 = vmatpush1.bf16.msra.mxu0 %v1856
  %2028 = vmatprep.subr.bf16.mxu0 %v1865
  %2029 = vmatpush1.bf16.msra.mxu0 %v1864
  %2030 = vmatprep.subr.bf16.mxu0 0
  %2031 = vmatpush1.bf16.msra.mxu0 0
  %2032 = vmatprep.subr.bf16.mxu0 0
  %2033 = vmatpush1.bf16.msra.mxu0 0
  %2034 = vmatprep.subr.bf16.mxu0 0
  %2035 = vmatpush1.bf16.msra.mxu0 0
  %2036 = vmatprep.subr.bf16.mxu0 0
  %2037 = vmatpush1.bf16.msra.mxu0 0
  %2038 = vmatprep.subr.bf16.mxu0 0
  %2039 = vmatpush1.bf16.msra.mxu0 0
  %2040 = vmatprep.subr.bf16.mxu0 0
  %2041 = vmatpush1.bf16.msra.mxu0 0
  %2042 = vmatprep.subr.bf16.mxu0 0
  %2043 = vmatpush1.bf16.msra.mxu0 0
  %2044 = vmatprep.subr.bf16.mxu0 0
  %2045 = vmatpush1.bf16.msra.mxu0 0
  %2046 = vmatprep.mubr.bf16.mxu0 0
  %2047 = vmatmul.mubr.bf16.gmra.mrb[0].mxu0 %v1547
  %v2048 = vpop.f32.mrb[0].mxu0
  %v2049 = vadd.f32 0.0, %v2048
  %v2050 = vpop.f32.mrb[0].mxu0
  %v2051 = vadd.f32 0.0, %v2050
  %v2052 = vpop.f32.mrb[0].mxu0
  %v2053 = vpop.f32.mrb[0].mxu0
  %2054 = vdwg.mxu0
  %2055 = vmatprep.subr.bf16.mxu0 %v1811
  %2056 = vmatpush1.bf16.msra.mxu0 %v1810
  %2057 = vmatprep.subr.bf16.mxu0 %v1819
  %2058 = vmatpush1.bf16.msra.mxu0 %v1818
  %2059 = vmatprep.subr.bf16.mxu0 %v1827
  %2060 = vmatpush1.bf16.msra.mxu0 %v1826
  %2061 = vmatprep.subr.bf16.mxu0 %v1835
  %2062 = vmatpush1.bf16.msra.mxu0 %v1834
  %2063 = vmatprep.subr.bf16.mxu0 %v1843
  %2064 = vmatpush1.bf16.msra.mxu0 %v1842
  %2065 = vmatprep.subr.bf16.mxu0 %v1851
  %2066 = vmatpush1.bf16.msra.mxu0 %v1850
  %2067 = vmatprep.subr.bf16.mxu0 %v1859
  %2068 = vmatpush1.bf16.msra.mxu0 %v1858
  %2069 = vmatprep.subr.bf16.mxu0 %v1867
  %2070 = vmatpush1.bf16.msra.mxu0 %v1866
  %2071 = vmatprep.subr.bf16.mxu0 0
  %2072 = vmatpush1.bf16.msra.mxu0 0
  %2073 = vmatprep.subr.bf16.mxu0 0
  %2074 = vmatpush1.bf16.msra.mxu0 0
  %2075 = vmatprep.subr.bf16.mxu0 0
  %2076 = vmatpush1.bf16.msra.mxu0 0
  %2077 = vmatprep.subr.bf16.mxu0 0
  %2078 = vmatpush1.bf16.msra.mxu0 0
  %2079 = vmatprep.subr.bf16.mxu0 0
  %2080 = vmatpush1.bf16.msra.mxu0 0
  %2081 = vmatprep.subr.bf16.mxu0 0
  %2082 = vmatpush1.bf16.msra.mxu0 0
  %2083 = vmatprep.subr.bf16.mxu0 0
  %2084 = vmatpush1.bf16.msra.mxu0 0
  %2085 = vmatprep.subr.bf16.mxu0 0
  %2086 = vmatpush1.bf16.msra.mxu0 0
  %2087 = vmatprep.mubr.bf16.mxu0 0
  %2088 = vmatmul.mubr.bf16.gmra.mrb[0].mxu0 %v1547
  %v2089 = vpop.f32.mrb[0].mxu0
  %v2090 = vadd.f32 0.0, %v2089
  %v2091 = vpop.f32.mrb[0].mxu0
  %v2092 = vadd.f32 0.0, %v2091
  %v2093 = vpop.f32.mrb[0].mxu0
  %v2094 = vpop.f32.mrb[0].mxu0
  %2095 = vdwg.mxu0
  %v2096 = vmax.f32 %v1967, %v2049
  %v2097 = vmax.f32 %v1969, %v2051
  %v2098 = vmax.f32 %v2008, %v2090
  %v2099 = vmax.f32 %v2010, %v2092
  %v2100 = vld [vmem:[%s2] sm:$0xf]
  %v2102 = vlaneseq
  %v2103 = vshrl.u32 %v2102, 7
  %v2104 = vsub.s32 0, %v2103
  %v2105 = vrot.slane %v2100, %v2104
  %v2106 = vlaneseq
  %v2107 = vshrl.u32 %v2106, 7
  %v2108 = vsub.s32 1, %v2107
  %v2109 = vrot.slane %v2100, %v2108
  %v2110 = vlaneseq
  %v2111 = vshrl.u32 %v2110, 7
  %v2112 = vsub.s32 2, %v2111
  %v2113 = vrot.slane %v2100, %v2112
  %v2114 = vlaneseq
  %v2115 = vshrl.u32 %v2114, 7
  %v2116 = vsub.s32 3, %v2115
  %v2117 = vrot.slane %v2100, %v2116
  %v2122 = vadd.f32 %v2096, %v2105
  %v2123 = vadd.f32 %v2097, %v2109
  %v2124 = vadd.f32 %v2098, %v2113
  %v2125 = vadd.f32 %v2099, %v2117
  %v2126 = vmax.f32 %v2122, 0.0
  %v2127 = vmax.f32 %v2123, 0.0
  %v2128 = vmax.f32 %v2124, 0.0
  %v2129 = vmax.f32 %v2125, 0.0
  %v2130 = vmax.f32 %v2126, %v2128
  %v2131 = vmax.f32 %v2127, %v2129
  %v2132 = vld [vmem:[#allocation2] sm:$0xff]
  %v2133 = vpack.c.bf16 %v2130, %v2130
  %v2134 = vpack.c.bf16 %v2131, %v2131
  %s2135 = scalar_lea.vmem %s3, 256
  %v2136 = vld [vmem:[%s2135] sm:$0xf]
  %v2137 = vld [vmem:[%s2135 + $0x4] sm:$0xf]
  %v2138 = vld [vmem:[%s2135 + $0x8] sm:$0xf]
  %v2139 = vld [vmem:[%s2135 + $0xc] sm:$0xf]
  %v2140 = vld [vmem:[%s2135 + $0x10] sm:$0xf]
  %v2141 = vld [vmem:[%s2135 + $0x14] sm:$0xf]
  %v2142 = vld [vmem:[%s2135 + $0x18] sm:$0xf]
  %v2143 = vld [vmem:[%s2135 + $0x1c] sm:$0xf]
  %v2144 = vld [vmem:[%s2135 + $0x20] sm:$0xf]
  %v2145 = vld [vmem:[%s2135 + $0x24] sm:$0xf]
  %v2146 = vld [vmem:[%s2135 + $0x28] sm:$0xf]
  %v2147 = vld [vmem:[%s2135 + $0x2c] sm:$0xf]
  %v2148 = vld [vmem:[%s2135 + $0x30] sm:$0xf]
  %v2149 = vld [vmem:[%s2135 + $0x34] sm:$0xf]
  %v2150 = vld [vmem:[%s2135 + $0x38] sm:$0xf]
  %v2151 = vld [vmem:[%s2135 + $0x3c] sm:$0xf]
  %v2152 = vld [vmem:[%s2135 + $0x40] sm:$0xf]
  %v2153 = vld [vmem:[%s2135 + $0x44] sm:$0xf]
  %v2154 = vld [vmem:[%s2135 + $0x48] sm:$0xf]
  %v2155 = vld [vmem:[%s2135 + $0x4c] sm:$0xf]
  %v2156 = vld [vmem:[%s2135 + $0x50] sm:$0xf]
  %v2157 = vld [vmem:[%s2135 + $0x54] sm:$0xf]
  %v2158 = vld [vmem:[%s2135 + $0x58] sm:$0xf]
  %v2159 = vld [vmem:[%s2135 + $0x5c] sm:$0xf]
  %v2160 = vld [vmem:[%s2135 + $0x60] sm:$0xf]
  %v2161 = vld [vmem:[%s2135 + $0x64] sm:$0xf]
  %v2162 = vld [vmem:[%s2135 + $0x68] sm:$0xf]
  %v2163 = vld [vmem:[%s2135 + $0x6c] sm:$0xf]
  %v2164 = vld [vmem:[%s2135 + $0x70] sm:$0xf]
  %v2165 = vld [vmem:[%s2135 + $0x74] sm:$0xf]
  %v2166 = vld [vmem:[%s2135 + $0x78] sm:$0xf]
  %v2167 = vld [vmem:[%s2135 + $0x7c] sm:$0xf]
  %v2200 = vunpack.c.l.b16 %v2136
  %v2201 = vunpack.c.l.b16 %v2137
  %v2202 = vunpack.c.l.b16 %v2138
  %v2203 = vunpack.c.l.b16 %v2139
  %v2204 = vunpack.c.l.b16 %v2140
  %v2205 = vunpack.c.l.b16 %v2141
  %v2206 = vunpack.c.l.b16 %v2142
  %v2207 = vunpack.c.l.b16 %v2143
  %v2208 = vunpack.c.l.b16 %v2144
  %v2209 = vunpack.c.l.b16 %v2145
  %v2210 = vunpack.c.l.b16 %v2146
  %v2211 = vunpack.c.l.b16 %v2147
  %v2212 = vunpack.c.l.b16 %v2148
  %v2213 = vunpack.c.l.b16 %v2149
  %v2214 = vunpack.c.l.b16 %v2150
  %v2215 = vunpack.c.l.b16 %v2151
  %v2216 = vunpack.c.l.b16 %v2152
  %v2217 = vunpack.c.l.b16 %v2153
  %v2218 = vunpack.c.l.b16 %v2154
  %v2219 = vunpack.c.l.b16 %v2155
  %v2220 = vunpack.c.l.b16 %v2156
  %v2221 = vunpack.c.l.b16 %v2157
  %v2222 = vunpack.c.l.b16 %v2158
  %v2223 = vunpack.c.l.b16 %v2159
  %v2224 = vunpack.c.l.b16 %v2160
  %v2225 = vunpack.c.l.b16 %v2161
  %v2226 = vunpack.c.l.b16 %v2162
  %v2227 = vunpack.c.l.b16 %v2163
  %v2228 = vunpack.c.l.b16 %v2164
  %v2229 = vunpack.c.l.b16 %v2165
  %v2230 = vunpack.c.l.b16 %v2166
  %v2231 = vunpack.c.l.b16 %v2167
  %v2232 = vpack.c.b16 %v2201, %v2200
  %v2233 = vpack.c.b16 %v2203, %v2202
  %v2234 = vpack.c.b16 %v2205, %v2204
  %v2235 = vpack.c.b16 %v2207, %v2206
  %v2236 = vpack.c.b16 %v2209, %v2208
  %v2237 = vpack.c.b16 %v2211, %v2210
  %v2238 = vpack.c.b16 %v2213, %v2212
  %v2239 = vpack.c.b16 %v2215, %v2214
  %v2240 = vpack.c.b16 %v2217, %v2216
  %v2241 = vpack.c.b16 %v2219, %v2218
  %v2242 = vpack.c.b16 %v2221, %v2220
  %v2243 = vpack.c.b16 %v2223, %v2222
  %v2244 = vpack.c.b16 %v2225, %v2224
  %v2245 = vpack.c.b16 %v2227, %v2226
  %v2246 = vpack.c.b16 %v2229, %v2228
  %v2247 = vpack.c.b16 %v2231, %v2230
  %2264 = vmatprep.subr.bf16.mxu0 0
  %2265 = vmatpush1.bf16.msra.mxu0 %v2232
  %2266 = vmatprep.subr.bf16.mxu0 0
  %2267 = vmatpush1.bf16.msra.mxu0 %v2233
  %2268 = vmatprep.subr.bf16.mxu0 0
  %2269 = vmatpush1.bf16.msra.mxu0 %v2234
  %2270 = vmatprep.subr.bf16.mxu0 0
  %2271 = vmatpush1.bf16.msra.mxu0 %v2235
  %2272 = vmatprep.subr.bf16.mxu0 0
  %2273 = vmatpush1.bf16.msra.mxu0 %v2236
  %2274 = vmatprep.subr.bf16.mxu0 0
  %2275 = vmatpush1.bf16.msra.mxu0 %v2237
  %2276 = vmatprep.subr.bf16.mxu0 0
  %2277 = vmatpush1.bf16.msra.mxu0 %v2238
  %2278 = vmatprep.subr.bf16.mxu0 0
  %2279 = vmatpush1.bf16.msra.mxu0 %v2239
  %2280 = vmatprep.subr.bf16.mxu0 0
  %2281 = vmatpush1.bf16.msra.mxu0 %v2240
  %2282 = vmatprep.subr.bf16.mxu0 0
  %2283 = vmatpush1.bf16.msra.mxu0 %v2241
  %2284 = vmatprep.subr.bf16.mxu0 0
  %2285 = vmatpush1.bf16.msra.mxu0 %v2242
  %2286 = vmatprep.subr.bf16.mxu0 0
  %2287 = vmatpush1.bf16.msra.mxu0 %v2243
  %2288 = vmatprep.subr.bf16.mxu0 0
  %2289 = vmatpush1.bf16.msra.mxu0 %v2244
  %2290 = vmatprep.subr.bf16.mxu0 0
  %2291 = vmatpush1.bf16.msra.mxu0 %v2245
  %2292 = vmatprep.subr.bf16.mxu0 0
  %2293 = vmatpush1.bf16.msra.mxu0 %v2246
  %2294 = vmatprep.subr.bf16.mxu0 0
  %2295 = vmatpush1.bf16.msra.mxu0 %v2247
  %2296 = vmatprep.mubr.bf16.mxu0 %v2134
  %2297 = vmatmul.mubr.bf16.gmra.mrb[0].mxu0 %v2133
  %v2298 = vpop.f32.mrb[0].mxu0
  %v2299 = vadd.f32 0.0, %v2298
  %v2300 = vpop.f32.mrb[0].mxu0
  %v2301 = vpop.f32.mrb[0].mxu0
  %v2302 = vpop.f32.mrb[0].mxu0
  %2303 = vdwg.mxu0
  %v2304 = vadd.f32 %v2132, %v2299
  %2305 = vst [vmem:[#allocation2] sm:$0xff] %v2304
  %s2306 = scalar_lea.vmem %s0, 12
  %v2307 = vld [vmem:[%s2306] sm:$0xf]
  %v2308 = vld [vmem:[%s1] sm:$0xff]
  %v2309 = vld [vmem:[%s1 + $0x8] sm:$0xff]
  %v2310 = vld [vmem:[%s1 + $0x10] sm:$0xff]
  %v2311 = vld [vmem:[%s1 + $0x18] sm:$0xff]
  %v2312 = vld [vmem:[%s1 + $0x20] sm:$0xff]
  %v2313 = vld [vmem:[%s1 + $0x28] sm:$0xff]
  %v2314 = vld [vmem:[%s1 + $0x30] sm:$0xff]
  %v2315 = vld [vmem:[%s1 + $0x38] sm:$0xff]
  %v2316 = vld [vmem:[%s1 + $0x40] sm:$0xff]
  %v2317 = vld [vmem:[%s1 + $0x48] sm:$0xff]
  %v2318 = vld [vmem:[%s1 + $0x50] sm:$0xff]
  %v2319 = vld [vmem:[%s1 + $0x58] sm:$0xff]
  %v2320 = vld [vmem:[%s1 + $0x60] sm:$0xff]
  %v2321 = vld [vmem:[%s1 + $0x68] sm:$0xff]
  %v2322 = vld [vmem:[%s1 + $0x70] sm:$0xff]
  %v2323 = vld [vmem:[%s1 + $0x78] sm:$0xff]
  %v2324 = vld [vmem:[%s1 + $0x80] sm:$0xff]
  %v2325 = vld [vmem:[%s1 + $0x88] sm:$0xff]
  %v2326 = vld [vmem:[%s1 + $0x90] sm:$0xff]
  %v2327 = vld [vmem:[%s1 + $0x98] sm:$0xff]
  %v2328 = vld [vmem:[%s1 + $0xa0] sm:$0xff]
  %v2329 = vld [vmem:[%s1 + $0xa8] sm:$0xff]
  %v2330 = vld [vmem:[%s1 + $0xb0] sm:$0xff]
  %v2331 = vld [vmem:[%s1 + $0xb8] sm:$0xff]
  %v2332 = vld [vmem:[%s1 + $0xc0] sm:$0xff]
  %v2333 = vld [vmem:[%s1 + $0xc8] sm:$0xff]
  %v2334 = vld [vmem:[%s1 + $0xd0] sm:$0xff]
  %v2335 = vld [vmem:[%s1 + $0xd8] sm:$0xff]
  %v2336 = vld [vmem:[%s1 + $0xe0] sm:$0xff]
  %v2337 = vld [vmem:[%s1 + $0xe8] sm:$0xff]
  %v2338 = vld [vmem:[%s1 + $0xf0] sm:$0xff]
  %v2339 = vld [vmem:[%s1 + $0xf8] sm:$0xff]
  %v2340 = vld [vmem:[%s1 + $0x100] sm:$0xff]
  %v2341 = vld [vmem:[%s1 + $0x108] sm:$0xff]
  %v2342 = vld [vmem:[%s1 + $0x110] sm:$0xff]
  %v2343 = vld [vmem:[%s1 + $0x118] sm:$0xff]
  %v2344 = vld [vmem:[%s1 + $0x120] sm:$0xff]
  %v2345 = vld [vmem:[%s1 + $0x128] sm:$0xff]
  %v2346 = vld [vmem:[%s1 + $0x130] sm:$0xff]
  %v2347 = vld [vmem:[%s1 + $0x138] sm:$0xff]
  %v2348 = vld [vmem:[%s1 + $0x140] sm:$0xff]
  %v2349 = vld [vmem:[%s1 + $0x148] sm:$0xff]
  %v2350 = vld [vmem:[%s1 + $0x150] sm:$0xff]
  %v2351 = vld [vmem:[%s1 + $0x158] sm:$0xff]
  %v2352 = vld [vmem:[%s1 + $0x160] sm:$0xff]
  %v2353 = vld [vmem:[%s1 + $0x168] sm:$0xff]
  %v2354 = vld [vmem:[%s1 + $0x170] sm:$0xff]
  %v2355 = vld [vmem:[%s1 + $0x178] sm:$0xff]
  %v2356 = vld [vmem:[%s1 + $0x180] sm:$0xff]
  %v2357 = vld [vmem:[%s1 + $0x188] sm:$0xff]
  %v2358 = vld [vmem:[%s1 + $0x190] sm:$0xff]
  %v2359 = vld [vmem:[%s1 + $0x198] sm:$0xff]
  %v2360 = vld [vmem:[%s1 + $0x1a0] sm:$0xff]
  %v2361 = vld [vmem:[%s1 + $0x1a8] sm:$0xff]
  %v2362 = vld [vmem:[%s1 + $0x1b0] sm:$0xff]
  %v2363 = vld [vmem:[%s1 + $0x1b8] sm:$0xff]
  %v2364 = vld [vmem:[%s1 + $0x1c0] sm:$0xff]
  %v2365 = vld [vmem:[%s1 + $0x1c8] sm:$0xff]
  %v2366 = vld [vmem:[%s1 + $0x1d0] sm:$0xff]
  %v2367 = vld [vmem:[%s1 + $0x1d8] sm:$0xff]
  %v2368 = vld [vmem:[%s1 + $0x1e0] sm:$0xff]
  %v2369 = vld [vmem:[%s1 + $0x1e8] sm:$0xff]
  %v2370 = vld [vmem:[%s1 + $0x1f0] sm:$0xff]
  %v2371 = vld [vmem:[%s1 + $0x1f8] sm:$0xff]
  %v2436 = vunpack.c.l.b16 %v2308
  %v2437 = vunpack.c.h.b16 %v2308
  %v2438 = vunpack.c.l.b16 %v2309
  %v2439 = vunpack.c.h.b16 %v2309
  %v2440 = vunpack.c.l.b16 %v2310
  %v2441 = vunpack.c.h.b16 %v2310
  %v2442 = vunpack.c.l.b16 %v2311
  %v2443 = vunpack.c.h.b16 %v2311
  %v2444 = vunpack.c.l.b16 %v2312
  %v2445 = vunpack.c.h.b16 %v2312
  %v2446 = vunpack.c.l.b16 %v2313
  %v2447 = vunpack.c.h.b16 %v2313
  %v2448 = vunpack.c.l.b16 %v2314
  %v2449 = vunpack.c.h.b16 %v2314
  %v2450 = vunpack.c.l.b16 %v2315
  %v2451 = vunpack.c.h.b16 %v2315
  %v2452 = vunpack.c.l.b16 %v2316
  %v2453 = vunpack.c.h.b16 %v2316
  %v2454 = vunpack.c.l.b16 %v2317
  %v2455 = vunpack.c.h.b16 %v2317
  %v2456 = vunpack.c.l.b16 %v2318
  %v2457 = vunpack.c.h.b16 %v2318
  %v2458 = vunpack.c.l.b16 %v2319
  %v2459 = vunpack.c.h.b16 %v2319
  %v2460 = vunpack.c.l.b16 %v2320
  %v2461 = vunpack.c.h.b16 %v2320
  %v2462 = vunpack.c.l.b16 %v2321
  %v2463 = vunpack.c.h.b16 %v2321
  %v2464 = vunpack.c.l.b16 %v2322
  %v2465 = vunpack.c.h.b16 %v2322
  %v2466 = vunpack.c.l.b16 %v2323
  %v2467 = vunpack.c.h.b16 %v2323
  %v2468 = vunpack.c.l.b16 %v2324
  %v2469 = vunpack.c.h.b16 %v2324
  %v2470 = vunpack.c.l.b16 %v2325
  %v2471 = vunpack.c.h.b16 %v2325
  %v2472 = vunpack.c.l.b16 %v2326
  %v2473 = vunpack.c.h.b16 %v2326
  %v2474 = vunpack.c.l.b16 %v2327
  %v2475 = vunpack.c.h.b16 %v2327
  %v2476 = vunpack.c.l.b16 %v2328
  %v2477 = vunpack.c.h.b16 %v2328
  %v2478 = vunpack.c.l.b16 %v2329
  %v2479 = vunpack.c.h.b16 %v2329
  %v2480 = vunpack.c.l.b16 %v2330
  %v2481 = vunpack.c.h.b16 %v2330
  %v2482 = vunpack.c.l.b16 %v2331
  %v2483 = vunpack.c.h.b16 %v2331
  %v2484 = vunpack.c.l.b16 %v2332
  %v2485 = vunpack.c.h.b16 %v2332
  %v2486 = vunpack.c.l.b16 %v2333
  %v2487 = vunpack.c.h.b16 %v2333
  %v2488 = vunpack.c.l.b16 %v2334
  %v2489 = vunpack.c.h.b16 %v2334
  %v2490 = vunpack.c.l.b16 %v2335
  %v2491 = vunpack.c.h.b16 %v2335
  %v2492 = vunpack.c.l.b16 %v2336
  %v2493 = vunpack.c.h.b16 %v2336
  %v2494 = vunpack.c.l.b16 %v2337
  %v2495 = vunpack.c.h.b16 %v2337
  %v2496 = vunpack.c.l.b16 %v2338
  %v2497 = vunpack.c.h.b16 %v2338
  %v2498 = vunpack.c.l.b16 %v2339
  %v2499 = vunpack.c.h.b16 %v2339
  %v2500 = vunpack.c.l.b16 %v2340
  %v2501 = vunpack.c.h.b16 %v2340
  %v2502 = vunpack.c.l.b16 %v2341
  %v2503 = vunpack.c.h.b16 %v2341
  %v2504 = vunpack.c.l.b16 %v2342
  %v2505 = vunpack.c.h.b16 %v2342
  %v2506 = vunpack.c.l.b16 %v2343
  %v2507 = vunpack.c.h.b16 %v2343
  %v2508 = vunpack.c.l.b16 %v2344
  %v2509 = vunpack.c.h.b16 %v2344
  %v2510 = vunpack.c.l.b16 %v2345
  %v2511 = vunpack.c.h.b16 %v2345
  %v2512 = vunpack.c.l.b16 %v2346
  %v2513 = vunpack.c.h.b16 %v2346
  %v2514 = vunpack.c.l.b16 %v2347
  %v2515 = vunpack.c.h.b16 %v2347
  %v2516 = vunpack.c.l.b16 %v2348
  %v2517 = vunpack.c.h.b16 %v2348
  %v2518 = vunpack.c.l.b16 %v2349
  %v2519 = vunpack.c.h.b16 %v2349
  %v2520 = vunpack.c.l.b16 %v2350
  %v2521 = vunpack.c.h.b16 %v2350
  %v2522 = vunpack.c.l.b16 %v2351
  %v2523 = vunpack.c.h.b16 %v2351
  %v2524 = vunpack.c.l.b16 %v2352
  %v2525 = vunpack.c.h.b16 %v2352
  %v2526 = vunpack.c.l.b16 %v2353
  %v2527 = vunpack.c.h.b16 %v2353
  %v2528 = vunpack.c.l.b16 %v2354
  %v2529 = vunpack.c.h.b16 %v2354
  %v2530 = vunpack.c.l.b16 %v2355
  %v2531 = vunpack.c.h.b16 %v2355
  %v2532 = vunpack.c.l.b16 %v2356
  %v2533 = vunpack.c.h.b16 %v2356
  %v2534 = vunpack.c.l.b16 %v2357
  %v2535 = vunpack.c.h.b16 %v2357
  %v2536 = vunpack.c.l.b16 %v2358
  %v2537 = vunpack.c.h.b16 %v2358
  %v2538 = vunpack.c.l.b16 %v2359
  %v2539 = vunpack.c.h.b16 %v2359
  %v2540 = vunpack.c.l.b16 %v2360
  %v2541 = vunpack.c.h.b16 %v2360
  %v2542 = vunpack.c.l.b16 %v2361
  %v2543 = vunpack.c.h.b16 %v2361
  %v2544 = vunpack.c.l.b16 %v2362
  %v2545 = vunpack.c.h.b16 %v2362
  %v2546 = vunpack.c.l.b16 %v2363
  %v2547 = vunpack.c.h.b16 %v2363
  %v2548 = vunpack.c.l.b16 %v2364
  %v2549 = vunpack.c.h.b16 %v2364
  %v2550 = vunpack.c.l.b16 %v2365
  %v2551 = vunpack.c.h.b16 %v2365
  %v2552 = vunpack.c.l.b16 %v2366
  %v2553 = vunpack.c.h.b16 %v2366
  %v2554 = vunpack.c.l.b16 %v2367
  %v2555 = vunpack.c.h.b16 %v2367
  %v2556 = vunpack.c.l.b16 %v2368
  %v2557 = vunpack.c.h.b16 %v2368
  %v2558 = vunpack.c.l.b16 %v2369
  %v2559 = vunpack.c.h.b16 %v2369
  %v2560 = vunpack.c.l.b16 %v2370
  %v2561 = vunpack.c.h.b16 %v2370
  %v2562 = vunpack.c.l.b16 %v2371
  %v2563 = vunpack.c.h.b16 %v2371
  %v2564 = vpack.c.b16 %v2444, %v2436
  %v2565 = vpack.c.b16 %v2445, %v2437
  %v2566 = vpack.c.b16 %v2446, %v2438
  %v2567 = vpack.c.b16 %v2447, %v2439
  %v2568 = vpack.c.b16 %v2448, %v2440
  %v2569 = vpack.c.b16 %v2449, %v2441
  %v2570 = vpack.c.b16 %v2450, %v2442
  %v2571 = vpack.c.b16 %v2451, %v2443
  %v2572 = vpack.c.b16 %v2460, %v2452
  %v2573 = vpack.c.b16 %v2461, %v2453
  %v2574 = vpack.c.b16 %v2462, %v2454
  %v2575 = vpack.c.b16 %v2463, %v2455
  %v2576 = vpack.c.b16 %v2464, %v2456
  %v2577 = vpack.c.b16 %v2465, %v2457
  %v2578 = vpack.c.b16 %v2466, %v2458
  %v2579 = vpack.c.b16 %v2467, %v2459
  %v2580 = vpack.c.b16 %v2476, %v2468
  %v2581 = vpack.c.b16 %v2477, %v2469
  %v2582 = vpack.c.b16 %v2478, %v2470
  %v2583 = vpack.c.b16 %v2479, %v2471
  %v2584 = vpack.c.b16 %v2480, %v2472
  %v2585 = vpack.c.b16 %v2481, %v2473
  %v2586 = vpack.c.b16 %v2482, %v2474
  %v2587 = vpack.c.b16 %v2483, %v2475
  %v2588 = vpack.c.b16 %v2492, %v2484
  %v2589 = vpack.c.b16 %v2493, %v2485
  %v2590 = vpack.c.b16 %v2494, %v2486
  %v2591 = vpack.c.b16 %v2495, %v2487
  %v2592 = vpack.c.b16 %v2496, %v2488
  %v2593 = vpack.c.b16 %v2497, %v2489
  %v2594 = vpack.c.b16 %v2498, %v2490
  %v2595 = vpack.c.b16 %v2499, %v2491
  %v2596 = vpack.c.b16 %v2508, %v2500
  %v2597 = vpack.c.b16 %v2509, %v2501
  %v2598 = vpack.c.b16 %v2510, %v2502
  %v2599 = vpack.c.b16 %v2511, %v2503
  %v2600 = vpack.c.b16 %v2512, %v2504
  %v2601 = vpack.c.b16 %v2513, %v2505
  %v2602 = vpack.c.b16 %v2514, %v2506
  %v2603 = vpack.c.b16 %v2515, %v2507
  %v2604 = vpack.c.b16 %v2524, %v2516
  %v2605 = vpack.c.b16 %v2525, %v2517
  %v2606 = vpack.c.b16 %v2526, %v2518
  %v2607 = vpack.c.b16 %v2527, %v2519
  %v2608 = vpack.c.b16 %v2528, %v2520
  %v2609 = vpack.c.b16 %v2529, %v2521
  %v2610 = vpack.c.b16 %v2530, %v2522
  %v2611 = vpack.c.b16 %v2531, %v2523
  %v2612 = vpack.c.b16 %v2540, %v2532
  %v2613 = vpack.c.b16 %v2541, %v2533
  %v2614 = vpack.c.b16 %v2542, %v2534
  %v2615 = vpack.c.b16 %v2543, %v2535
  %v2616 = vpack.c.b16 %v2544, %v2536
  %v2617 = vpack.c.b16 %v2545, %v2537
  %v2618 = vpack.c.b16 %v2546, %v2538
  %v2619 = vpack.c.b16 %v2547, %v2539
  %v2620 = vpack.c.b16 %v2556, %v2548
  %v2621 = vpack.c.b16 %v2557, %v2549
  %v2622 = vpack.c.b16 %v2558, %v2550
  %v2623 = vpack.c.b16 %v2559, %v2551
  %v2624 = vpack.c.b16 %v2560, %v2552
  %v2625 = vpack.c.b16 %v2561, %v2553
  %v2626 = vpack.c.b16 %v2562, %v2554
  %v2627 = vpack.c.b16 %v2563, %v2555
  %2692 = vmatprep.subr.bf16.mxu0 %v2565
  %2693 = vmatpush1.bf16.msra.mxu0 %v2564
  %2694 = vmatprep.subr.bf16.mxu0 %v2573
  %2695 = vmatpush1.bf16.msra.mxu0 %v2572
  %2696 = vmatprep.subr.bf16.mxu0 %v2581
  %2697 = vmatpush1.bf16.msra.mxu0 %v2580
  %2698 = vmatprep.subr.bf16.mxu0 %v2589
  %2699 = vmatpush1.bf16.msra.mxu0 %v2588
  %2700 = vmatprep.subr.bf16.mxu0 %v2597
  %2701 = vmatpush1.bf16.msra.mxu0 %v2596
  %2702 = vmatprep.subr.bf16.mxu0 %v2605
  %2703 = vmatpush1.bf16.msra.mxu0 %v2604
  %2704 = vmatprep.subr.bf16.mxu0 %v2613
  %2705 = vmatpush1.bf16.msra.mxu0 %v2612
  %2706 = vmatprep.subr.bf16.mxu0 %v2621
  %2707 = vmatpush1.bf16.msra.mxu0 %v2620
  %2708 = vmatprep.subr.bf16.mxu0 0
  %2709 = vmatpush1.bf16.msra.mxu0 0
  %2710 = vmatprep.subr.bf16.mxu0 0
  %2711 = vmatpush1.bf16.msra.mxu0 0
  %2712 = vmatprep.subr.bf16.mxu0 0
  %2713 = vmatpush1.bf16.msra.mxu0 0
  %2714 = vmatprep.subr.bf16.mxu0 0
  %2715 = vmatpush1.bf16.msra.mxu0 0
  %2716 = vmatprep.subr.bf16.mxu0 0
  %2717 = vmatpush1.bf16.msra.mxu0 0
  %2718 = vmatprep.subr.bf16.mxu0 0
  %2719 = vmatpush1.bf16.msra.mxu0 0
  %2720 = vmatprep.subr.bf16.mxu0 0
  %2721 = vmatpush1.bf16.msra.mxu0 0
  %2722 = vmatprep.subr.bf16.mxu0 0
  %2723 = vmatpush1.bf16.msra.mxu0 0
  %2724 = vmatprep.mubr.bf16.mxu0 0
  %2725 = vmatmul.mubr.bf16.gmra.mrb[0].mxu0 %v2307
  %v2726 = vpop.f32.mrb[0].mxu0
  %v2727 = vadd.f32 0.0, %v2726
  %v2728 = vpop.f32.mrb[0].mxu0
  %v2729 = vadd.f32 0.0, %v2728
  %v2730 = vpop.f32.mrb[0].mxu0
  %v2731 = vpop.f32.mrb[0].mxu0
  %2732 = vdwg.mxu0
  %2733 = vmatprep.subr.bf16.mxu0 %v2567
  %2734 = vmatpush1.bf16.msra.mxu0 %v2566
  %2735 = vmatprep.subr.bf16.mxu0 %v2575
  %2736 = vmatpush1.bf16.msra.mxu0 %v2574
  %2737 = vmatprep.subr.bf16.mxu0 %v2583
  %2738 = vmatpush1.bf16.msra.mxu0 %v2582
  %2739 = vmatprep.subr.bf16.mxu0 %v2591
  %2740 = vmatpush1.bf16.msra.mxu0 %v2590
  %2741 = vmatprep.subr.bf16.mxu0 %v2599
  %2742 = vmatpush1.bf16.msra.mxu0 %v2598
  %2743 = vmatprep.subr.bf16.mxu0 %v2607
  %2744 = vmatpush1.bf16.msra.mxu0 %v2606
  %2745 = vmatprep.subr.bf16.mxu0 %v2615
  %2746 = vmatpush1.bf16.msra.mxu0 %v2614
  %2747 = vmatprep.subr.bf16.mxu0 %v2623
  %2748 = vmatpush1.bf16.msra.mxu0 %v2622
  %2749 = vmatprep.subr.bf16.mxu0 0
  %2750 = vmatpush1.bf16.msra.mxu0 0
  %2751 = vmatprep.subr.bf16.mxu0 0
  %2752 = vmatpush1.bf16.msra.mxu0 0
  %2753 = vmatprep.subr.bf16.mxu0 0
  %2754 = vmatpush1.bf16.msra.mxu0 0
  %2755 = vmatprep.subr.bf16.mxu0 0
  %2756 = vmatpush1.bf16.msra.mxu0 0
  %2757 = vmatprep.subr.bf16.mxu0 0
  %2758 = vmatpush1.bf16.msra.mxu0 0
  %2759 = vmatprep.subr.bf16.mxu0 0
  %2760 = vmatpush1.bf16.msra.mxu0 0
  %2761 = vmatprep.subr.bf16.mxu0 0
  %2762 = vmatpush1.bf16.msra.mxu0 0
  %2763 = vmatprep.subr.bf16.mxu0 0
  %2764 = vmatpush1.bf16.msra.mxu0 0
  %2765 = vmatprep.mubr.bf16.mxu0 0
  %2766 = vmatmul.mubr.bf16.gmra.mrb[0].mxu0 %v2307
  %v2767 = vpop.f32.mrb[0].mxu0
  %v2768 = vadd.f32 0.0, %v2767
  %v2769 = vpop.f32.mrb[0].mxu0
  %v2770 = vadd.f32 0.0, %v2769
  %v2771 = vpop.f32.mrb[0].mxu0
  %v2772 = vpop.f32.mrb[0].mxu0
  %2773 = vdwg.mxu0
  %2774 = vmatprep.subr.bf16.mxu0 %v2569
  %2775 = vmatpush1.bf16.msra.mxu0 %v2568
  %2776 = vmatprep.subr.bf16.mxu0 %v2577
  %2777 = vmatpush1.bf16.msra.mxu0 %v2576
  %2778 = vmatprep.subr.bf16.mxu0 %v2585
  %2779 = vmatpush1.bf16.msra.mxu0 %v2584
  %2780 = vmatprep.subr.bf16.mxu0 %v2593
  %2781 = vmatpush1.bf16.msra.mxu0 %v2592
  %2782 = vmatprep.subr.bf16.mxu0 %v2601
  %2783 = vmatpush1.bf16.msra.mxu0 %v2600
  %2784 = vmatprep.subr.bf16.mxu0 %v2609
  %2785 = vmatpush1.bf16.msra.mxu0 %v2608
  %2786 = vmatprep.subr.bf16.mxu0 %v2617
  %2787 = vmatpush1.bf16.msra.mxu0 %v2616
  %2788 = vmatprep.subr.bf16.mxu0 %v2625
  %2789 = vmatpush1.bf16.msra.mxu0 %v2624
  %2790 = vmatprep.subr.bf16.mxu0 0
  %2791 = vmatpush1.bf16.msra.mxu0 0
  %2792 = vmatprep.subr.bf16.mxu0 0
  %2793 = vmatpush1.bf16.msra.mxu0 0
  %2794 = vmatprep.subr.bf16.mxu0 0
  %2795 = vmatpush1.bf16.msra.mxu0 0
  %2796 = vmatprep.subr.bf16.mxu0 0
  %2797 = vmatpush1.bf16.msra.mxu0 0
  %2798 = vmatprep.subr.bf16.mxu0 0
  %2799 = vmatpush1.bf16.msra.mxu0 0
  %2800 = vmatprep.subr.bf16.mxu0 0
  %2801 = vmatpush1.bf16.msra.mxu0 0
  %2802 = vmatprep.subr.bf16.mxu0 0
  %2803 = vmatpush1.bf16.msra.mxu0 0
  %2804 = vmatprep.subr.bf16.mxu0 0
  %2805 = vmatpush1.bf16.msra.mxu0 0
  %2806 = vmatprep.mubr.bf16.mxu0 0
  %2807 = vmatmul.mubr.bf16.gmra.mrb[0].mxu0 %v2307
  %v2808 = vpop.f32.mrb[0].mxu0
  %v2809 = vadd.f32 0.0, %v2808
  %v2810 = vpop.f32.mrb[0].mxu0
  %v2811 = vadd.f32 0.0, %v2810
  %v2812 = vpop.f32.mrb[0].mxu0
  %v2813 = vpop.f32.mrb[0].mxu0
  %2814 = vdwg.mxu0
  %2815 = vmatprep.subr.bf16.mxu0 %v2571
  %2816 = vmatpush1.bf16.msra.mxu0 %v2570
  %2817 = vmatprep.subr.bf16.mxu0 %v2579
  %2818 = vmatpush1.bf16.msra.mxu0 %v2578
  %2819 = vmatprep.subr.bf16.mxu0 %v2587
  %2820 = vmatpush1.bf16.msra.mxu0 %v2586
  %2821 = vmatprep.subr.bf16.mxu0 %v2595
  %2822 = vmatpush1.bf16.msra.mxu0 %v2594
  %2823 = vmatprep.subr.bf16.mxu0 %v2603
  %2824 = vmatpush1.bf16.msra.mxu0 %v2602
  %2825 = vmatprep.subr.bf16.mxu0 %v2611
  %2826 = vmatpush1.bf16.msra.mxu0 %v2610
  %2827 = vmatprep.subr.bf16.mxu0 %v2619
  %2828 = vmatpush1.bf16.msra.mxu0 %v2618
  %2829 = vmatprep.subr.bf16.mxu0 %v2627
  %2830 = vmatpush1.bf16.msra.mxu0 %v2626
  %2831 = vmatprep.subr.bf16.mxu0 0
  %2832 = vmatpush1.bf16.msra.mxu0 0
  %2833 = vmatprep.subr.bf16.mxu0 0
  %2834 = vmatpush1.bf16.msra.mxu0 0
  %2835 = vmatprep.subr.bf16.mxu0 0
  %2836 = vmatpush1.bf16.msra.mxu0 0
  %2837 = vmatprep.subr.bf16.mxu0 0
  %2838 = vmatpush1.bf16.msra.mxu0 0
  %2839 = vmatprep.subr.bf16.mxu0 0
  %2840 = vmatpush1.bf16.msra.mxu0 0
  %2841 = vmatprep.subr.bf16.mxu0 0
  %2842 = vmatpush1.bf16.msra.mxu0 0
  %2843 = vmatprep.subr.bf16.mxu0 0
  %2844 = vmatpush1.bf16.msra.mxu0 0
  %2845 = vmatprep.subr.bf16.mxu0 0
  %2846 = vmatpush1.bf16.msra.mxu0 0
  %2847 = vmatprep.mubr.bf16.mxu0 0
  %2848 = vmatmul.mubr.bf16.gmra.mrb[0].mxu0 %v2307
  %v2849 = vpop.f32.mrb[0].mxu0
  %v2850 = vadd.f32 0.0, %v2849
  %v2851 = vpop.f32.mrb[0].mxu0
  %v2852 = vadd.f32 0.0, %v2851
  %v2853 = vpop.f32.mrb[0].mxu0
  %v2854 = vpop.f32.mrb[0].mxu0
  %2855 = vdwg.mxu0
  %v2856 = vmax.f32 %v2727, %v2809
  %v2857 = vmax.f32 %v2729, %v2811
  %v2858 = vmax.f32 %v2768, %v2850
  %v2859 = vmax.f32 %v2770, %v2852
  %v2860 = vld [vmem:[%s2] sm:$0xf]
  %v2862 = vlaneseq
  %v2863 = vshrl.u32 %v2862, 7
  %v2864 = vsub.s32 0, %v2863
  %v2865 = vrot.slane %v2860, %v2864
  %v2866 = vlaneseq
  %v2867 = vshrl.u32 %v2866, 7
  %v2868 = vsub.s32 1, %v2867
  %v2869 = vrot.slane %v2860, %v2868
  %v2870 = vlaneseq
  %v2871 = vshrl.u32 %v2870, 7
  %v2872 = vsub.s32 2, %v2871
  %v2873 = vrot.slane %v2860, %v2872
  %v2874 = vlaneseq
  %v2875 = vshrl.u32 %v2874, 7
  %v2876 = vsub.s32 3, %v2875
  %v2877 = vrot.slane %v2860, %v2876
  %v2882 = vadd.f32 %v2856, %v2865
  %v2883 = vadd.f32 %v2857, %v2869
  %v2884 = vadd.f32 %v2858, %v2873
  %v2885 = vadd.f32 %v2859, %v2877
  %v2886 = vmax.f32 %v2882, 0.0
  %v2887 = vmax.f32 %v2883, 0.0
  %v2888 = vmax.f32 %v2884, 0.0
  %v2889 = vmax.f32 %v2885, 0.0
  %v2890 = vmax.f32 %v2886, %v2888
  %v2891 = vmax.f32 %v2887, %v2889
  %v2892 = vld [vmem:[#allocation2] sm:$0xff]
  %v2893 = vpack.c.bf16 %v2890, %v2890
  %v2894 = vpack.c.bf16 %v2891, %v2891
  %s2895 = scalar_lea.vmem %s3, 384
  %v2896 = vld [vmem:[%s2895] sm:$0xf]
  %v2897 = vld [vmem:[%s2895 + $0x4] sm:$0xf]
  %v2898 = vld [vmem:[%s2895 + $0x8] sm:$0xf]
  %v2899 = vld [vmem:[%s2895 + $0xc] sm:$0xf]
  %v2900 = vld [vmem:[%s2895 + $0x10] sm:$0xf]
  %v2901 = vld [vmem:[%s2895 + $0x14] sm:$0xf]
  %v2902 = vld [vmem:[%s2895 + $0x18] sm:$0xf]
  %v2903 = vld [vmem:[%s2895 + $0x1c] sm:$0xf]
  %v2904 = vld [vmem:[%s2895 + $0x20] sm:$0xf]
  %v2905 = vld [vmem:[%s2895 + $0x24] sm:$0xf]
  %v2906 = vld [vmem:[%s2895 + $0x28] sm:$0xf]
  %v2907 = vld [vmem:[%s2895 + $0x2c] sm:$0xf]
  %v2908 = vld [vmem:[%s2895 + $0x30] sm:$0xf]
  %v2909 = vld [vmem:[%s2895 + $0x34] sm:$0xf]
  %v2910 = vld [vmem:[%s2895 + $0x38] sm:$0xf]
  %v2911 = vld [vmem:[%s2895 + $0x3c] sm:$0xf]
  %v2912 = vld [vmem:[%s2895 + $0x40] sm:$0xf]
  %v2913 = vld [vmem:[%s2895 + $0x44] sm:$0xf]
  %v2914 = vld [vmem:[%s2895 + $0x48] sm:$0xf]
  %v2915 = vld [vmem:[%s2895 + $0x4c] sm:$0xf]
  %v2916 = vld [vmem:[%s2895 + $0x50] sm:$0xf]
  %v2917 = vld [vmem:[%s2895 + $0x54] sm:$0xf]
  %v2918 = vld [vmem:[%s2895 + $0x58] sm:$0xf]
  %v2919 = vld [vmem:[%s2895 + $0x5c] sm:$0xf]
  %v2920 = vld [vmem:[%s2895 + $0x60] sm:$0xf]
  %v2921 = vld [vmem:[%s2895 + $0x64] sm:$0xf]
  %v2922 = vld [vmem:[%s2895 + $0x68] sm:$0xf]
  %v2923 = vld [vmem:[%s2895 + $0x6c] sm:$0xf]
  %v2924 = vld [vmem:[%s2895 + $0x70] sm:$0xf]
  %v2925 = vld [vmem:[%s2895 + $0x74] sm:$0xf]
  %v2926 = vld [vmem:[%s2895 + $0x78] sm:$0xf]
  %v2927 = vld [vmem:[%s2895 + $0x7c] sm:$0xf]
  %v2960 = vunpack.c.l.b16 %v2896
  %v2961 = vunpack.c.l.b16 %v2897
  %v2962 = vunpack.c.l.b16 %v2898
  %v2963 = vunpack.c.l.b16 %v2899
  %v2964 = vunpack.c.l.b16 %v2900
  %v2965 = vunpack.c.l.b16 %v2901
  %v2966 = vunpack.c.l.b16 %v2902
  %v2967 = vunpack.c.l.b16 %v2903
  %v2968 = vunpack.c.l.b16 %v2904
  %v2969 = vunpack.c.l.b16 %v2905
  %v2970 = vunpack.c.l.b16 %v2906
  %v2971 = vunpack.c.l.b16 %v2907
  %v2972 = vunpack.c.l.b16 %v2908
  %v2973 = vunpack.c.l.b16 %v2909
  %v2974 = vunpack.c.l.b16 %v2910
  %v2975 = vunpack.c.l.b16 %v2911
  %v2976 = vunpack.c.l.b16 %v2912
  %v2977 = vunpack.c.l.b16 %v2913
  %v2978 = vunpack.c.l.b16 %v2914
  %v2979 = vunpack.c.l.b16 %v2915
  %v2980 = vunpack.c.l.b16 %v2916
  %v2981 = vunpack.c.l.b16 %v2917
  %v2982 = vunpack.c.l.b16 %v2918
  %v2983 = vunpack.c.l.b16 %v2919
  %v2984 = vunpack.c.l.b16 %v2920
  %v2985 = vunpack.c.l.b16 %v2921
  %v2986 = vunpack.c.l.b16 %v2922
  %v2987 = vunpack.c.l.b16 %v2923
  %v2988 = vunpack.c.l.b16 %v2924
  %v2989 = vunpack.c.l.b16 %v2925
  %v2990 = vunpack.c.l.b16 %v2926
  %v2991 = vunpack.c.l.b16 %v2927
  %v2992 = vpack.c.b16 %v2961, %v2960
  %v2993 = vpack.c.b16 %v2963, %v2962
  %v2994 = vpack.c.b16 %v2965, %v2964
  %v2995 = vpack.c.b16 %v2967, %v2966
  %v2996 = vpack.c.b16 %v2969, %v2968
  %v2997 = vpack.c.b16 %v2971, %v2970
  %v2998 = vpack.c.b16 %v2973, %v2972
  %v2999 = vpack.c.b16 %v2975, %v2974
  %v3000 = vpack.c.b16 %v2977, %v2976
  %v3001 = vpack.c.b16 %v2979, %v2978
  %v3002 = vpack.c.b16 %v2981, %v2980
  %v3003 = vpack.c.b16 %v2983, %v2982
  %v3004 = vpack.c.b16 %v2985, %v2984
  %v3005 = vpack.c.b16 %v2987, %v2986
  %v3006 = vpack.c.b16 %v2989, %v2988
  %v3007 = vpack.c.b16 %v2991, %v2990
  %3024 = vmatprep.subr.bf16.mxu0 0
  %3025 = vmatpush1.bf16.msra.mxu0 %v2992
  %3026 = vmatprep.subr.bf16.mxu0 0
  %3027 = vmatpush1.bf16.msra.mxu0 %v2993
  %3028 = vmatprep.subr.bf16.mxu0 0
  %3029 = vmatpush1.bf16.msra.mxu0 %v2994
  %3030 = vmatprep.subr.bf16.mxu0 0
  %3031 = vmatpush1.bf16.msra.mxu0 %v2995
  %3032 = vmatprep.subr.bf16.mxu0 0
  %3033 = vmatpush1.bf16.msra.mxu0 %v2996
  %3034 = vmatprep.subr.bf16.mxu0 0
  %3035 = vmatpush1.bf16.msra.mxu0 %v2997
  %3036 = vmatprep.subr.bf16.mxu0 0
  %3037 = vmatpush1.bf16.msra.mxu0 %v2998
  %3038 = vmatprep.subr.bf16.mxu0 0
  %3039 = vmatpush1.bf16.msra.mxu0 %v2999
  %3040 = vmatprep.subr.bf16.mxu0 0
  %3041 = vmatpush1.bf16.msra.mxu0 %v3000
  %3042 = vmatprep.subr.bf16.mxu0 0
  %3043 = vmatpush1.bf16.msra.mxu0 %v3001
  %3044 = vmatprep.subr.bf16.mxu0 0
  %3045 = vmatpush1.bf16.msra.mxu0 %v3002
  %3046 = vmatprep.subr.bf16.mxu0 0
  %3047 = vmatpush1.bf16.msra.mxu0 %v3003
  %3048 = vmatprep.subr.bf16.mxu0 0
  %3049 = vmatpush1.bf16.msra.mxu0 %v3004
  %3050 = vmatprep.subr.bf16.mxu0 0
  %3051 = vmatpush1.bf16.msra.mxu0 %v3005
  %3052 = vmatprep.subr.bf16.mxu0 0
  %3053 = vmatpush1.bf16.msra.mxu0 %v3006
  %3054 = vmatprep.subr.bf16.mxu0 0
  %3055 = vmatpush1.bf16.msra.mxu0 %v3007
  %3056 = vmatprep.mubr.bf16.mxu0 %v2894
  %3057 = vmatmul.mubr.bf16.gmra.mrb[0].mxu0 %v2893
  %v3058 = vpop.f32.mrb[0].mxu0
  %v3059 = vadd.f32 0.0, %v3058
  %v3060 = vpop.f32.mrb[0].mxu0
  %v3061 = vpop.f32.mrb[0].mxu0
  %v3062 = vpop.f32.mrb[0].mxu0
  %3063 = vdwg.mxu0
  %v3064 = vadd.f32 %v2892, %v3059
  %3065 = vst [vmem:[#allocation2] sm:$0xff] %v3064
  %s3066 = scalar_lea.vmem %s0, 16
  %v3067 = vld [vmem:[%s3066] sm:$0xf]
  %v3068 = vld [vmem:[%s1] sm:$0xff]
  %v3069 = vld [vmem:[%s1 + $0x8] sm:$0xff]
  %v3070 = vld [vmem:[%s1 + $0x10] sm:$0xff]
  %v3071 = vld [vmem:[%s1 + $0x18] sm:$0xff]
  %v3072 = vld [vmem:[%s1 + $0x20] sm:$0xff]
  %v3073 = vld [vmem:[%s1 + $0x28] sm:$0xff]
  %v3074 = vld [vmem:[%s1 + $0x30] sm:$0xff]
  %v3075 = vld [vmem:[%s1 + $0x38] sm:$0xff]
  %v3076 = vld [vmem:[%s1 + $0x40] sm:$0xff]
  %v3077 = vld [vmem:[%s1 + $0x48] sm:$0xff]
  %v3078 = vld [vmem:[%s1 + $0x50] sm:$0xff]
  %v3079 = vld [vmem:[%s1 + $0x58] sm:$0xff]
  %v3080 = vld [vmem:[%s1 + $0x60] sm:$0xff]
  %v3081 = vld [vmem:[%s1 + $0x68] sm:$0xff]
  %v3082 = vld [vmem:[%s1 + $0x70] sm:$0xff]
  %v3083 = vld [vmem:[%s1 + $0x78] sm:$0xff]
  %v3084 = vld [vmem:[%s1 + $0x80] sm:$0xff]
  %v3085 = vld [vmem:[%s1 + $0x88] sm:$0xff]
  %v3086 = vld [vmem:[%s1 + $0x90] sm:$0xff]
  %v3087 = vld [vmem:[%s1 + $0x98] sm:$0xff]
  %v3088 = vld [vmem:[%s1 + $0xa0] sm:$0xff]
  %v3089 = vld [vmem:[%s1 + $0xa8] sm:$0xff]
  %v3090 = vld [vmem:[%s1 + $0xb0] sm:$0xff]
  %v3091 = vld [vmem:[%s1 + $0xb8] sm:$0xff]
  %v3092 = vld [vmem:[%s1 + $0xc0] sm:$0xff]
  %v3093 = vld [vmem:[%s1 + $0xc8] sm:$0xff]
  %v3094 = vld [vmem:[%s1 + $0xd0] sm:$0xff]
  %v3095 = vld [vmem:[%s1 + $0xd8] sm:$0xff]
  %v3096 = vld [vmem:[%s1 + $0xe0] sm:$0xff]
  %v3097 = vld [vmem:[%s1 + $0xe8] sm:$0xff]
  %v3098 = vld [vmem:[%s1 + $0xf0] sm:$0xff]
  %v3099 = vld [vmem:[%s1 + $0xf8] sm:$0xff]
  %v3100 = vld [vmem:[%s1 + $0x100] sm:$0xff]
  %v3101 = vld [vmem:[%s1 + $0x108] sm:$0xff]
  %v3102 = vld [vmem:[%s1 + $0x110] sm:$0xff]
  %v3103 = vld [vmem:[%s1 + $0x118] sm:$0xff]
  %v3104 = vld [vmem:[%s1 + $0x120] sm:$0xff]
  %v3105 = vld [vmem:[%s1 + $0x128] sm:$0xff]
  %v3106 = vld [vmem:[%s1 + $0x130] sm:$0xff]
  %v3107 = vld [vmem:[%s1 + $0x138] sm:$0xff]
  %v3108 = vld [vmem:[%s1 + $0x140] sm:$0xff]
  %v3109 = vld [vmem:[%s1 + $0x148] sm:$0xff]
  %v3110 = vld [vmem:[%s1 + $0x150] sm:$0xff]
  %v3111 = vld [vmem:[%s1 + $0x158] sm:$0xff]
  %v3112 = vld [vmem:[%s1 + $0x160] sm:$0xff]
  %v3113 = vld [vmem:[%s1 + $0x168] sm:$0xff]
  %v3114 = vld [vmem:[%s1 + $0x170] sm:$0xff]
  %v3115 = vld [vmem:[%s1 + $0x178] sm:$0xff]
  %v3116 = vld [vmem:[%s1 + $0x180] sm:$0xff]
  %v3117 = vld [vmem:[%s1 + $0x188] sm:$0xff]
  %v3118 = vld [vmem:[%s1 + $0x190] sm:$0xff]
  %v3119 = vld [vmem:[%s1 + $0x198] sm:$0xff]
  %v3120 = vld [vmem:[%s1 + $0x1a0] sm:$0xff]
  %v3121 = vld [vmem:[%s1 + $0x1a8] sm:$0xff]
  %v3122 = vld [vmem:[%s1 + $0x1b0] sm:$0xff]
  %v3123 = vld [vmem:[%s1 + $0x1b8] sm:$0xff]
  %v3124 = vld [vmem:[%s1 + $0x1c0] sm:$0xff]
  %v3125 = vld [vmem:[%s1 + $0x1c8] sm:$0xff]
  %v3126 = vld [vmem:[%s1 + $0x1d0] sm:$0xff]
  %v3127 = vld [vmem:[%s1 + $0x1d8] sm:$0xff]
  %v3128 = vld [vmem:[%s1 + $0x1e0] sm:$0xff]
  %v3129 = vld [vmem:[%s1 + $0x1e8] sm:$0xff]
  %v3130 = vld [vmem:[%s1 + $0x1f0] sm:$0xff]
  %v3131 = vld [vmem:[%s1 + $0x1f8] sm:$0xff]
  %v3196 = vunpack.c.l.b16 %v3068
  %v3197 = vunpack.c.h.b16 %v3068
  %v3198 = vunpack.c.l.b16 %v3069
  %v3199 = vunpack.c.h.b16 %v3069
  %v3200 = vunpack.c.l.b16 %v3070
  %v3201 = vunpack.c.h.b16 %v3070
  %v3202 = vunpack.c.l.b16 %v3071
  %v3203 = vunpack.c.h.b16 %v3071
  %v3204 = vunpack.c.l.b16 %v3072
  %v3205 = vunpack.c.h.b16 %v3072
  %v3206 = vunpack.c.l.b16 %v3073
  %v3207 = vunpack.c.h.b16 %v3073
  %v3208 = vunpack.c.l.b16 %v3074
  %v3209 = vunpack.c.h.b16 %v3074
  %v3210 = vunpack.c.l.b16 %v3075
  %v3211 = vunpack.c.h.b16 %v3075
  %v3212 = vunpack.c.l.b16 %v3076
  %v3213 = vunpack.c.h.b16 %v3076
  %v3214 = vunpack.c.l.b16 %v3077
  %v3215 = vunpack.c.h.b16 %v3077
  %v3216 = vunpack.c.l.b16 %v3078
  %v3217 = vunpack.c.h.b16 %v3078
  %v3218 = vunpack.c.l.b16 %v3079
  %v3219 = vunpack.c.h.b16 %v3079
  %v3220 = vunpack.c.l.b16 %v3080
  %v3221 = vunpack.c.h.b16 %v3080
  %v3222 = vunpack.c.l.b16 %v3081
  %v3223 = vunpack.c.h.b16 %v3081
  %v3224 = vunpack.c.l.b16 %v3082
  %v3225 = vunpack.c.h.b16 %v3082
  %v3226 = vunpack.c.l.b16 %v3083
  %v3227 = vunpack.c.h.b16 %v3083
  %v3228 = vunpack.c.l.b16 %v3084
  %v3229 = vunpack.c.h.b16 %v3084
  %v3230 = vunpack.c.l.b16 %v3085
  %v3231 = vunpack.c.h.b16 %v3085
  %v3232 = vunpack.c.l.b16 %v3086
  %v3233 = vunpack.c.h.b16 %v3086
  %v3234 = vunpack.c.l.b16 %v3087
  %v3235 = vunpack.c.h.b16 %v3087
  %v3236 = vunpack.c.l.b16 %v3088
  %v3237 = vunpack.c.h.b16 %v3088
  %v3238 = vunpack.c.l.b16 %v3089
  %v3239 = vunpack.c.h.b16 %v3089
  %v3240 = vunpack.c.l.b16 %v3090
  %v3241 = vunpack.c.h.b16 %v3090
  %v3242 = vunpack.c.l.b16 %v3091
  %v3243 = vunpack.c.h.b16 %v3091
  %v3244 = vunpack.c.l.b16 %v3092
  %v3245 = vunpack.c.h.b16 %v3092
  %v3246 = vunpack.c.l.b16 %v3093
  %v3247 = vunpack.c.h.b16 %v3093
  %v3248 = vunpack.c.l.b16 %v3094
  %v3249 = vunpack.c.h.b16 %v3094
  %v3250 = vunpack.c.l.b16 %v3095
  %v3251 = vunpack.c.h.b16 %v3095
  %v3252 = vunpack.c.l.b16 %v3096
  %v3253 = vunpack.c.h.b16 %v3096
  %v3254 = vunpack.c.l.b16 %v3097
  %v3255 = vunpack.c.h.b16 %v3097
  %v3256 = vunpack.c.l.b16 %v3098
  %v3257 = vunpack.c.h.b16 %v3098
  %v3258 = vunpack.c.l.b16 %v3099
  %v3259 = vunpack.c.h.b16 %v3099
  %v3260 = vunpack.c.l.b16 %v3100
  %v3261 = vunpack.c.h.b16 %v3100
  %v3262 = vunpack.c.l.b16 %v3101
  %v3263 = vunpack.c.h.b16 %v3101
  %v3264 = vunpack.c.l.b16 %v3102
  %v3265 = vunpack.c.h.b16 %v3102
  %v3266 = vunpack.c.l.b16 %v3103
  %v3267 = vunpack.c.h.b16 %v3103
  %v3268 = vunpack.c.l.b16 %v3104
  %v3269 = vunpack.c.h.b16 %v3104
  %v3270 = vunpack.c.l.b16 %v3105
  %v3271 = vunpack.c.h.b16 %v3105
  %v3272 = vunpack.c.l.b16 %v3106
  %v3273 = vunpack.c.h.b16 %v3106
  %v3274 = vunpack.c.l.b16 %v3107
  %v3275 = vunpack.c.h.b16 %v3107
  %v3276 = vunpack.c.l.b16 %v3108
  %v3277 = vunpack.c.h.b16 %v3108
  %v3278 = vunpack.c.l.b16 %v3109
  %v3279 = vunpack.c.h.b16 %v3109
  %v3280 = vunpack.c.l.b16 %v3110
  %v3281 = vunpack.c.h.b16 %v3110
  %v3282 = vunpack.c.l.b16 %v3111
  %v3283 = vunpack.c.h.b16 %v3111
  %v3284 = vunpack.c.l.b16 %v3112
  %v3285 = vunpack.c.h.b16 %v3112
  %v3286 = vunpack.c.l.b16 %v3113
  %v3287 = vunpack.c.h.b16 %v3113
  %v3288 = vunpack.c.l.b16 %v3114
  %v3289 = vunpack.c.h.b16 %v3114
  %v3290 = vunpack.c.l.b16 %v3115
  %v3291 = vunpack.c.h.b16 %v3115
  %v3292 = vunpack.c.l.b16 %v3116
  %v3293 = vunpack.c.h.b16 %v3116
  %v3294 = vunpack.c.l.b16 %v3117
  %v3295 = vunpack.c.h.b16 %v3117
  %v3296 = vunpack.c.l.b16 %v3118
  %v3297 = vunpack.c.h.b16 %v3118
  %v3298 = vunpack.c.l.b16 %v3119
  %v3299 = vunpack.c.h.b16 %v3119
  %v3300 = vunpack.c.l.b16 %v3120
  %v3301 = vunpack.c.h.b16 %v3120
  %v3302 = vunpack.c.l.b16 %v3121
  %v3303 = vunpack.c.h.b16 %v3121
  %v3304 = vunpack.c.l.b16 %v3122
  %v3305 = vunpack.c.h.b16 %v3122
  %v3306 = vunpack.c.l.b16 %v3123
  %v3307 = vunpack.c.h.b16 %v3123
  %v3308 = vunpack.c.l.b16 %v3124
  %v3309 = vunpack.c.h.b16 %v3124
  %v3310 = vunpack.c.l.b16 %v3125
  %v3311 = vunpack.c.h.b16 %v3125
  %v3312 = vunpack.c.l.b16 %v3126
  %v3313 = vunpack.c.h.b16 %v3126
  %v3314 = vunpack.c.l.b16 %v3127
  %v3315 = vunpack.c.h.b16 %v3127
  %v3316 = vunpack.c.l.b16 %v3128
  %v3317 = vunpack.c.h.b16 %v3128
  %v3318 = vunpack.c.l.b16 %v3129
  %v3319 = vunpack.c.h.b16 %v3129
  %v3320 = vunpack.c.l.b16 %v3130
  %v3321 = vunpack.c.h.b16 %v3130
  %v3322 = vunpack.c.l.b16 %v3131
  %v3323 = vunpack.c.h.b16 %v3131
  %v3324 = vpack.c.b16 %v3204, %v3196
  %v3325 = vpack.c.b16 %v3205, %v3197
  %v3326 = vpack.c.b16 %v3206, %v3198
  %v3327 = vpack.c.b16 %v3207, %v3199
  %v3328 = vpack.c.b16 %v3208, %v3200
  %v3329 = vpack.c.b16 %v3209, %v3201
  %v3330 = vpack.c.b16 %v3210, %v3202
  %v3331 = vpack.c.b16 %v3211, %v3203
  %v3332 = vpack.c.b16 %v3220, %v3212
  %v3333 = vpack.c.b16 %v3221, %v3213
  %v3334 = vpack.c.b16 %v3222, %v3214
  %v3335 = vpack.c.b16 %v3223, %v3215
  %v3336 = vpack.c.b16 %v3224, %v3216
  %v3337 = vpack.c.b16 %v3225, %v3217
  %v3338 = vpack.c.b16 %v3226, %v3218
  %v3339 = vpack.c.b16 %v3227, %v3219
  %v3340 = vpack.c.b16 %v3236, %v3228
  %v3341 = vpack.c.b16 %v3237, %v3229
  %v3342 = vpack.c.b16 %v3238, %v3230
  %v3343 = vpack.c.b16 %v3239, %v3231
  %v3344 = vpack.c.b16 %v3240, %v3232
  %v3345 = vpack.c.b16 %v3241, %v3233
  %v3346 = vpack.c.b16 %v3242, %v3234
  %v3347 = vpack.c.b16 %v3243, %v3235
  %v3348 = vpack.c.b16 %v3252, %v3244
  %v3349 = vpack.c.b16 %v3253, %v3245
  %v3350 = vpack.c.b16 %v3254, %v3246
  %v3351 = vpack.c.b16 %v3255, %v3247
  %v3352 = vpack.c.b16 %v3256, %v3248
  %v3353 = vpack.c.b16 %v3257, %v3249
  %v3354 = vpack.c.b16 %v3258, %v3250
  %v3355 = vpack.c.b16 %v3259, %v3251
  %v3356 = vpack.c.b16 %v3268, %v3260
  %v3357 = vpack.c.b16 %v3269, %v3261
  %v3358 = vpack.c.b16 %v3270, %v3262
  %v3359 = vpack.c.b16 %v3271, %v3263
  %v3360 = vpack.c.b16 %v3272, %v3264
  %v3361 = vpack.c.b16 %v3273, %v3265
  %v3362 = vpack.c.b16 %v3274, %v3266
  %v3363 = vpack.c.b16 %v3275, %v3267
  %v3364 = vpack.c.b16 %v3284, %v3276
  %v3365 = vpack.c.b16 %v3285, %v3277
  %v3366 = vpack.c.b16 %v3286, %v3278
  %v3367 = vpack.c.b16 %v3287, %v3279
  %v3368 = vpack.c.b16 %v3288, %v3280
  %v3369 = vpack.c.b16 %v3289, %v3281
  %v3370 = vpack.c.b16 %v3290, %v3282
  %v3371 = vpack.c.b16 %v3291, %v3283
  %v3372 = vpack.c.b16 %v3300, %v3292
  %v3373 = vpack.c.b16 %v3301, %v3293
  %v3374 = vpack.c.b16 %v3302, %v3294
  %v3375 = vpack.c.b16 %v3303, %v3295
  %v3376 = vpack.c.b16 %v3304, %v3296
  %v3377 = vpack.c.b16 %v3305, %v3297
  %v3378 = vpack.c.b16 %v3306, %v3298
  %v3379 = vpack.c.b16 %v3307, %v3299
  %v3380 = vpack.c.b16 %v3316, %v3308
  %v3381 = vpack.c.b16 %v3317, %v3309
  %v3382 = vpack.c.b16 %v3318, %v3310
  %v3383 = vpack.c.b16 %v3319, %v3311
  %v3384 = vpack.c.b16 %v3320, %v3312
  %v3385 = vpack.c.b16 %v3321, %v3313
  %v3386 = vpack.c.b16 %v3322, %v3314
  %v3387 = vpack.c.b16 %v3323, %v3315
  %3452 = vmatprep.subr.bf16.mxu0 %v3325
  %3453 = vmatpush1.bf16.msra.mxu0 %v3324
  %3454 = vmatprep.subr.bf16.mxu0 %v3333
  %3455 = vmatpush1.bf16.msra.mxu0 %v3332
  %3456 = vmatprep.subr.bf16.mxu0 %v3341
  %3457 = vmatpush1.bf16.msra.mxu0 %v3340
  %3458 = vmatprep.subr.bf16.mxu0 %v3349
  %3459 = vmatpush1.bf16.msra.mxu0 %v3348
  %3460 = vmatprep.subr.bf16.mxu0 %v3357
  %3461 = vmatpush1.bf16.msra.mxu0 %v3356
  %3462 = vmatprep.subr.bf16.mxu0 %v3365
  %3463 = vmatpush1.bf16.msra.mxu0 %v3364
  %3464 = vmatprep.subr.bf16.mxu0 %v3373
  %3465 = vmatpush1.bf16.msra.mxu0 %v3372
  %3466 = vmatprep.subr.bf16.mxu0 %v3381
  %3467 = vmatpush1.bf16.msra.mxu0 %v3380
  %3468 = vmatprep.subr.bf16.mxu0 0
  %3469 = vmatpush1.bf16.msra.mxu0 0
  %3470 = vmatprep.subr.bf16.mxu0 0
  %3471 = vmatpush1.bf16.msra.mxu0 0
  %3472 = vmatprep.subr.bf16.mxu0 0
  %3473 = vmatpush1.bf16.msra.mxu0 0
  %3474 = vmatprep.subr.bf16.mxu0 0
  %3475 = vmatpush1.bf16.msra.mxu0 0
  %3476 = vmatprep.subr.bf16.mxu0 0
  %3477 = vmatpush1.bf16.msra.mxu0 0
  %3478 = vmatprep.subr.bf16.mxu0 0
  %3479 = vmatpush1.bf16.msra.mxu0 0
  %3480 = vmatprep.subr.bf16.mxu0 0
  %3481 = vmatpush1.bf16.msra.mxu0 0
  %3482 = vmatprep.subr.bf16.mxu0 0
  %3483 = vmatpush1.bf16.msra.mxu0 0
  %3484 = vmatprep.mubr.bf16.mxu0 0
  %3485 = vmatmul.mubr.bf16.gmra.mrb[0].mxu0 %v3067
  %v3486 = vpop.f32.mrb[0].mxu0
  %v3487 = vadd.f32 0.0, %v3486
  %v3488 = vpop.f32.mrb[0].mxu0
  %v3489 = vadd.f32 0.0, %v3488
  %v3490 = vpop.f32.mrb[0].mxu0
  %v3491 = vpop.f32.mrb[0].mxu0
  %3492 = vdwg.mxu0
  %3493 = vmatprep.subr.bf16.mxu0 %v3327
  %3494 = vmatpush1.bf16.msra.mxu0 %v3326
  %3495 = vmatprep.subr.bf16.mxu0 %v3335
  %3496 = vmatpush1.bf16.msra.mxu0 %v3334
  %3497 = vmatprep.subr.bf16.mxu0 %v3343
  %3498 = vmatpush1.bf16.msra.mxu0 %v3342
  %3499 = vmatprep.subr.bf16.mxu0 %v3351
  %3500 = vmatpush1.bf16.msra.mxu0 %v3350
  %3501 = vmatprep.subr.bf16.mxu0 %v3359
  %3502 = vmatpush1.bf16.msra.mxu0 %v3358
  %3503 = vmatprep.subr.bf16.mxu0 %v3367
  %3504 = vmatpush1.bf16.msra.mxu0 %v3366
  %3505 = vmatprep.subr.bf16.mxu0 %v3375
  %3506 = vmatpush1.bf16.msra.mxu0 %v3374
  %3507 = vmatprep.subr.bf16.mxu0 %v3383
  %3508 = vmatpush1.bf16.msra.mxu0 %v3382
  %3509 = vmatprep.subr.bf16.mxu0 0
  %3510 = vmatpush1.bf16.msra.mxu0 0
  %3511 = vmatprep.subr.bf16.mxu0 0
  %3512 = vmatpush1.bf16.msra.mxu0 0
  %3513 = vmatprep.subr.bf16.mxu0 0
  %3514 = vmatpush1.bf16.msra.mxu0 0
  %3515 = vmatprep.subr.bf16.mxu0 0
  %3516 = vmatpush1.bf16.msra.mxu0 0
  %3517 = vmatprep.subr.bf16.mxu0 0
  %3518 = vmatpush1.bf16.msra.mxu0 0
  %3519 = vmatprep.subr.bf16.mxu0 0
  %3520 = vmatpush1.bf16.msra.mxu0 0
  %3521 = vmatprep.subr.bf16.mxu0 0
  %3522 = vmatpush1.bf16.msra.mxu0 0
  %3523 = vmatprep.subr.bf16.mxu0 0
  %3524 = vmatpush1.bf16.msra.mxu0 0
  %3525 = vmatprep.mubr.bf16.mxu0 0
  %3526 = vmatmul.mubr.bf16.gmra.mrb[0].mxu0 %v3067
  %v3527 = vpop.f32.mrb[0].mxu0
  %v3528 = vadd.f32 0.0, %v3527
  %v3529 = vpop.f32.mrb[0].mxu0
  %v3530 = vadd.f32 0.0, %v3529
  %v3531 = vpop.f32.mrb[0].mxu0
  %v3532 = vpop.f32.mrb[0].mxu0
  %3533 = vdwg.mxu0
  %3534 = vmatprep.subr.bf16.mxu0 %v3329
  %3535 = vmatpush1.bf16.msra.mxu0 %v3328
  %3536 = vmatprep.subr.bf16.mxu0 %v3337
  %3537 = vmatpush1.bf16.msra.mxu0 %v3336
  %3538 = vmatprep.subr.bf16.mxu0 %v3345
  %3539 = vmatpush1.bf16.msra.mxu0 %v3344
  %3540 = vmatprep.subr.bf16.mxu0 %v3353
  %3541 = vmatpush1.bf16.msra.mxu0 %v3352
  %3542 = vmatprep.subr.bf16.mxu0 %v3361
  %3543 = vmatpush1.bf16.msra.mxu0 %v3360
  %3544 = vmatprep.subr.bf16.mxu0 %v3369
  %3545 = vmatpush1.bf16.msra.mxu0 %v3368
  %3546 = vmatprep.subr.bf16.mxu0 %v3377
  %3547 = vmatpush1.bf16.msra.mxu0 %v3376
  %3548 = vmatprep.subr.bf16.mxu0 %v3385
  %3549 = vmatpush1.bf16.msra.mxu0 %v3384
  %3550 = vmatprep.subr.bf16.mxu0 0
  %3551 = vmatpush1.bf16.msra.mxu0 0
  %3552 = vmatprep.subr.bf16.mxu0 0
  %3553 = vmatpush1.bf16.msra.mxu0 0
  %3554 = vmatprep.subr.bf16.mxu0 0
  %3555 = vmatpush1.bf16.msra.mxu0 0
  %3556 = vmatprep.subr.bf16.mxu0 0
  %3557 = vmatpush1.bf16.msra.mxu0 0
  %3558 = vmatprep.subr.bf16.mxu0 0
  %3559 = vmatpush1.bf16.msra.mxu0 0
  %3560 = vmatprep.subr.bf16.mxu0 0
  %3561 = vmatpush1.bf16.msra.mxu0 0
  %3562 = vmatprep.subr.bf16.mxu0 0
  %3563 = vmatpush1.bf16.msra.mxu0 0
  %3564 = vmatprep.subr.bf16.mxu0 0
  %3565 = vmatpush1.bf16.msra.mxu0 0
  %3566 = vmatprep.mubr.bf16.mxu0 0
  %3567 = vmatmul.mubr.bf16.gmra.mrb[0].mxu0 %v3067
  %v3568 = vpop.f32.mrb[0].mxu0
  %v3569 = vadd.f32 0.0, %v3568
  %v3570 = vpop.f32.mrb[0].mxu0
  %v3571 = vadd.f32 0.0, %v3570
  %v3572 = vpop.f32.mrb[0].mxu0
  %v3573 = vpop.f32.mrb[0].mxu0
  %3574 = vdwg.mxu0
  %3575 = vmatprep.subr.bf16.mxu0 %v3331
  %3576 = vmatpush1.bf16.msra.mxu0 %v3330
  %3577 = vmatprep.subr.bf16.mxu0 %v3339
  %3578 = vmatpush1.bf16.msra.mxu0 %v3338
  %3579 = vmatprep.subr.bf16.mxu0 %v3347
  %3580 = vmatpush1.bf16.msra.mxu0 %v3346
  %3581 = vmatprep.subr.bf16.mxu0 %v3355
  %3582 = vmatpush1.bf16.msra.mxu0 %v3354
  %3583 = vmatprep.subr.bf16.mxu0 %v3363
  %3584 = vmatpush1.bf16.msra.mxu0 %v3362
  %3585 = vmatprep.subr.bf16.mxu0 %v3371
  %3586 = vmatpush1.bf16.msra.mxu0 %v3370
  %3587 = vmatprep.subr.bf16.mxu0 %v3379
  %3588 = vmatpush1.bf16.msra.mxu0 %v3378
  %3589 = vmatprep.subr.bf16.mxu0 %v3387
  %3590 = vmatpush1.bf16.msra.mxu0 %v3386
  %3591 = vmatprep.subr.bf16.mxu0 0
  %3592 = vmatpush1.bf16.msra.mxu0 0
  %3593 = vmatprep.subr.bf16.mxu0 0
  %3594 = vmatpush1.bf16.msra.mxu0 0
  %3595 = vmatprep.subr.bf16.mxu0 0
  %3596 = vmatpush1.bf16.msra.mxu0 0
  %3597 = vmatprep.subr.bf16.mxu0 0
  %3598 = vmatpush1.bf16.msra.mxu0 0
  %3599 = vmatprep.subr.bf16.mxu0 0
  %3600 = vmatpush1.bf16.msra.mxu0 0
  %3601 = vmatprep.subr.bf16.mxu0 0
  %3602 = vmatpush1.bf16.msra.mxu0 0
  %3603 = vmatprep.subr.bf16.mxu0 0
  %3604 = vmatpush1.bf16.msra.mxu0 0
  %3605 = vmatprep.subr.bf16.mxu0 0
  %3606 = vmatpush1.bf16.msra.mxu0 0
  %3607 = vmatprep.mubr.bf16.mxu0 0
  %3608 = vmatmul.mubr.bf16.gmra.mrb[0].mxu0 %v3067
  %v3609 = vpop.f32.mrb[0].mxu0
  %v3610 = vadd.f32 0.0, %v3609
  %v3611 = vpop.f32.mrb[0].mxu0
  %v3612 = vadd.f32 0.0, %v3611
  %v3613 = vpop.f32.mrb[0].mxu0
  %v3614 = vpop.f32.mrb[0].mxu0
  %3615 = vdwg.mxu0
  %v3616 = vmax.f32 %v3487, %v3569
  %v3617 = vmax.f32 %v3489, %v3571
  %v3618 = vmax.f32 %v3528, %v3610
  %v3619 = vmax.f32 %v3530, %v3612
  %v3620 = vld [vmem:[%s2] sm:$0xf]
  %v3622 = vlaneseq
  %v3623 = vshrl.u32 %v3622, 7
  %v3624 = vsub.s32 0, %v3623
  %v3625 = vrot.slane %v3620, %v3624
  %v3626 = vlaneseq
  %v3627 = vshrl.u32 %v3626, 7
  %v3628 = vsub.s32 1, %v3627
  %v3629 = vrot.slane %v3620, %v3628
  %v3630 = vlaneseq
  %v3631 = vshrl.u32 %v3630, 7
  %v3632 = vsub.s32 2, %v3631
  %v3633 = vrot.slane %v3620, %v3632
  %v3634 = vlaneseq
  %v3635 = vshrl.u32 %v3634, 7
  %v3636 = vsub.s32 3, %v3635
  %v3637 = vrot.slane %v3620, %v3636
  %v3642 = vadd.f32 %v3616, %v3625
  %v3643 = vadd.f32 %v3617, %v3629
  %v3644 = vadd.f32 %v3618, %v3633
  %v3645 = vadd.f32 %v3619, %v3637
  %v3646 = vmax.f32 %v3642, 0.0
  %v3647 = vmax.f32 %v3643, 0.0
  %v3648 = vmax.f32 %v3644, 0.0
  %v3649 = vmax.f32 %v3645, 0.0
  %v3650 = vmax.f32 %v3646, %v3648
  %v3651 = vmax.f32 %v3647, %v3649
  %v3652 = vld [vmem:[#allocation2] sm:$0xff]
  %v3653 = vpack.c.bf16 %v3650, %v3650
  %v3654 = vpack.c.bf16 %v3651, %v3651
  %s3655 = scalar_lea.vmem %s3, 512
  %v3656 = vld [vmem:[%s3655] sm:$0xf]
  %v3657 = vld [vmem:[%s3655 + $0x4] sm:$0xf]
  %v3658 = vld [vmem:[%s3655 + $0x8] sm:$0xf]
  %v3659 = vld [vmem:[%s3655 + $0xc] sm:$0xf]
  %v3660 = vld [vmem:[%s3655 + $0x10] sm:$0xf]
  %v3661 = vld [vmem:[%s3655 + $0x14] sm:$0xf]
  %v3662 = vld [vmem:[%s3655 + $0x18] sm:$0xf]
  %v3663 = vld [vmem:[%s3655 + $0x1c] sm:$0xf]
  %v3664 = vld [vmem:[%s3655 + $0x20] sm:$0xf]
  %v3665 = vld [vmem:[%s3655 + $0x24] sm:$0xf]
  %v3666 = vld [vmem:[%s3655 + $0x28] sm:$0xf]
  %v3667 = vld [vmem:[%s3655 + $0x2c] sm:$0xf]
  %v3668 = vld [vmem:[%s3655 + $0x30] sm:$0xf]
  %v3669 = vld [vmem:[%s3655 + $0x34] sm:$0xf]
  %v3670 = vld [vmem:[%s3655 + $0x38] sm:$0xf]
  %v3671 = vld [vmem:[%s3655 + $0x3c] sm:$0xf]
  %v3672 = vld [vmem:[%s3655 + $0x40] sm:$0xf]
  %v3673 = vld [vmem:[%s3655 + $0x44] sm:$0xf]
  %v3674 = vld [vmem:[%s3655 + $0x48] sm:$0xf]
  %v3675 = vld [vmem:[%s3655 + $0x4c] sm:$0xf]
  %v3676 = vld [vmem:[%s3655 + $0x50] sm:$0xf]
  %v3677 = vld [vmem:[%s3655 + $0x54] sm:$0xf]
  %v3678 = vld [vmem:[%s3655 + $0x58] sm:$0xf]
  %v3679 = vld [vmem:[%s3655 + $0x5c] sm:$0xf]
  %v3680 = vld [vmem:[%s3655 + $0x60] sm:$0xf]
  %v3681 = vld [vmem:[%s3655 + $0x64] sm:$0xf]
  %v3682 = vld [vmem:[%s3655 + $0x68] sm:$0xf]
  %v3683 = vld [vmem:[%s3655 + $0x6c] sm:$0xf]
  %v3684 = vld [vmem:[%s3655 + $0x70] sm:$0xf]
  %v3685 = vld [vmem:[%s3655 + $0x74] sm:$0xf]
  %v3686 = vld [vmem:[%s3655 + $0x78] sm:$0xf]
  %v3687 = vld [vmem:[%s3655 + $0x7c] sm:$0xf]
  %v3720 = vunpack.c.l.b16 %v3656
  %v3721 = vunpack.c.l.b16 %v3657
  %v3722 = vunpack.c.l.b16 %v3658
  %v3723 = vunpack.c.l.b16 %v3659
  %v3724 = vunpack.c.l.b16 %v3660
  %v3725 = vunpack.c.l.b16 %v3661
  %v3726 = vunpack.c.l.b16 %v3662
  %v3727 = vunpack.c.l.b16 %v3663
  %v3728 = vunpack.c.l.b16 %v3664
  %v3729 = vunpack.c.l.b16 %v3665
  %v3730 = vunpack.c.l.b16 %v3666
  %v3731 = vunpack.c.l.b16 %v3667
  %v3732 = vunpack.c.l.b16 %v3668
  %v3733 = vunpack.c.l.b16 %v3669
  %v3734 = vunpack.c.l.b16 %v3670
  %v3735 = vunpack.c.l.b16 %v3671
  %v3736 = vunpack.c.l.b16 %v3672
  %v3737 = vunpack.c.l.b16 %v3673
  %v3738 = vunpack.c.l.b16 %v3674
  %v3739 = vunpack.c.l.b16 %v3675
  %v3740 = vunpack.c.l.b16 %v3676
  %v3741 = vunpack.c.l.b16 %v3677
  %v3742 = vunpack.c.l.b16 %v3678
  %v3743 = vunpack.c.l.b16 %v3679
  %v3744 = vunpack.c.l.b16 %v3680
  %v3745 = vunpack.c.l.b16 %v3681
  %v3746 = vunpack.c.l.b16 %v3682
  %v3747 = vunpack.c.l.b16 %v3683
  %v3748 = vunpack.c.l.b16 %v3684
  %v3749 = vunpack.c.l.b16 %v3685
  %v3750 = vunpack.c.l.b16 %v3686
  %v3751 = vunpack.c.l.b16 %v3687
  %v3752 = vpack.c.b16 %v3721, %v3720
  %v3753 = vpack.c.b16 %v3723, %v3722
  %v3754 = vpack.c.b16 %v3725, %v3724
  %v3755 = vpack.c.b16 %v3727, %v3726
  %v3756 = vpack.c.b16 %v3729, %v3728
  %v3757 = vpack.c.b16 %v3731, %v3730
  %v3758 = vpack.c.b16 %v3733, %v3732
  %v3759 = vpack.c.b16 %v3735, %v3734
  %v3760 = vpack.c.b16 %v3737, %v3736
  %v3761 = vpack.c.b16 %v3739, %v3738
  %v3762 = vpack.c.b16 %v3741, %v3740
  %v3763 = vpack.c.b16 %v3743, %v3742
  %v3764 = vpack.c.b16 %v3745, %v3744
  %v3765 = vpack.c.b16 %v3747, %v3746
  %v3766 = vpack.c.b16 %v3749, %v3748
  %v3767 = vpack.c.b16 %v3751, %v3750
  %3784 = vmatprep.subr.bf16.mxu0 0
  %3785 = vmatpush1.bf16.msra.mxu0 %v3752
  %3786 = vmatprep.subr.bf16.mxu0 0
  %3787 = vmatpush1.bf16.msra.mxu0 %v3753
  %3788 = vmatprep.subr.bf16.mxu0 0
  %3789 = vmatpush1.bf16.msra.mxu0 %v3754
  %3790 = vmatprep.subr.bf16.mxu0 0
  %3791 = vmatpush1.bf16.msra.mxu0 %v3755
  %3792 = vmatprep.subr.bf16.mxu0 0
  %3793 = vmatpush1.bf16.msra.mxu0 %v3756
  %3794 = vmatprep.subr.bf16.mxu0 0
  %3795 = vmatpush1.bf16.msra.mxu0 %v3757
  %3796 = vmatprep.subr.bf16.mxu0 0
  %3797 = vmatpush1.bf16.msra.mxu0 %v3758
  %3798 = vmatprep.subr.bf16.mxu0 0
  %3799 = vmatpush1.bf16.msra.mxu0 %v3759
  %3800 = vmatprep.subr.bf16.mxu0 0
  %3801 = vmatpush1.bf16.msra.mxu0 %v3760
  %3802 = vmatprep.subr.bf16.mxu0 0
  %3803 = vmatpush1.bf16.msra.mxu0 %v3761
  %3804 = vmatprep.subr.bf16.mxu0 0
  %3805 = vmatpush1.bf16.msra.mxu0 %v3762
  %3806 = vmatprep.subr.bf16.mxu0 0
  %3807 = vmatpush1.bf16.msra.mxu0 %v3763
  %3808 = vmatprep.subr.bf16.mxu0 0
  %3809 = vmatpush1.bf16.msra.mxu0 %v3764
  %3810 = vmatprep.subr.bf16.mxu0 0
  %3811 = vmatpush1.bf16.msra.mxu0 %v3765
  %3812 = vmatprep.subr.bf16.mxu0 0
  %3813 = vmatpush1.bf16.msra.mxu0 %v3766
  %3814 = vmatprep.subr.bf16.mxu0 0
  %3815 = vmatpush1.bf16.msra.mxu0 %v3767
  %3816 = vmatprep.mubr.bf16.mxu0 %v3654
  %3817 = vmatmul.mubr.bf16.gmra.mrb[0].mxu0 %v3653
  %v3818 = vpop.f32.mrb[0].mxu0
  %v3819 = vadd.f32 0.0, %v3818
  %v3820 = vpop.f32.mrb[0].mxu0
  %v3821 = vpop.f32.mrb[0].mxu0
  %v3822 = vpop.f32.mrb[0].mxu0
  %3823 = vdwg.mxu0
  %v3824 = vadd.f32 %v3652, %v3819
  %3825 = vst [vmem:[#allocation2] sm:$0xff] %v3824
  %s3826 = scalar_lea.vmem %s0, 20
  %v3827 = vld [vmem:[%s3826] sm:$0xf]
  %v3828 = vld [vmem:[%s1] sm:$0xff]
  %v3829 = vld [vmem:[%s1 + $0x8] sm:$0xff]
  %v3830 = vld [vmem:[%s1 + $0x10] sm:$0xff]
  %v3831 = vld [vmem:[%s1 + $0x18] sm:$0xff]
  %v3832 = vld [vmem:[%s1 + $0x20] sm:$0xff]
  %v3833 = vld [vmem:[%s1 + $0x28] sm:$0xff]
  %v3834 = vld [vmem:[%s1 + $0x30] sm:$0xff]
  %v3835 = vld [vmem:[%s1 + $0x38] sm:$0xff]
  %v3836 = vld [vmem:[%s1 + $0x40] sm:$0xff]
  %v3837 = vld [vmem:[%s1 + $0x48] sm:$0xff]
  %v3838 = vld [vmem:[%s1 + $0x50] sm:$0xff]
  %v3839 = vld [vmem:[%s1 + $0x58] sm:$0xff]
  %v3840 = vld [vmem:[%s1 + $0x60] sm:$0xff]
  %v3841 = vld [vmem:[%s1 + $0x68] sm:$0xff]
  %v3842 = vld [vmem:[%s1 + $0x70] sm:$0xff]
  %v3843 = vld [vmem:[%s1 + $0x78] sm:$0xff]
  %v3844 = vld [vmem:[%s1 + $0x80] sm:$0xff]
  %v3845 = vld [vmem:[%s1 + $0x88] sm:$0xff]
  %v3846 = vld [vmem:[%s1 + $0x90] sm:$0xff]
  %v3847 = vld [vmem:[%s1 + $0x98] sm:$0xff]
  %v3848 = vld [vmem:[%s1 + $0xa0] sm:$0xff]
  %v3849 = vld [vmem:[%s1 + $0xa8] sm:$0xff]
  %v3850 = vld [vmem:[%s1 + $0xb0] sm:$0xff]
  %v3851 = vld [vmem:[%s1 + $0xb8] sm:$0xff]
  %v3852 = vld [vmem:[%s1 + $0xc0] sm:$0xff]
  %v3853 = vld [vmem:[%s1 + $0xc8] sm:$0xff]
  %v3854 = vld [vmem:[%s1 + $0xd0] sm:$0xff]
  %v3855 = vld [vmem:[%s1 + $0xd8] sm:$0xff]
  %v3856 = vld [vmem:[%s1 + $0xe0] sm:$0xff]
  %v3857 = vld [vmem:[%s1 + $0xe8] sm:$0xff]
  %v3858 = vld [vmem:[%s1 + $0xf0] sm:$0xff]
  %v3859 = vld [vmem:[%s1 + $0xf8] sm:$0xff]
  %v3860 = vld [vmem:[%s1 + $0x100] sm:$0xff]
  %v3861 = vld [vmem:[%s1 + $0x108] sm:$0xff]
  %v3862 = vld [vmem:[%s1 + $0x110] sm:$0xff]
  %v3863 = vld [vmem:[%s1 + $0x118] sm:$0xff]
  %v3864 = vld [vmem:[%s1 + $0x120] sm:$0xff]
  %v3865 = vld [vmem:[%s1 + $0x128] sm:$0xff]
  %v3866 = vld [vmem:[%s1 + $0x130] sm:$0xff]
  %v3867 = vld [vmem:[%s1 + $0x138] sm:$0xff]
  %v3868 = vld [vmem:[%s1 + $0x140] sm:$0xff]
  %v3869 = vld [vmem:[%s1 + $0x148] sm:$0xff]
  %v3870 = vld [vmem:[%s1 + $0x150] sm:$0xff]
  %v3871 = vld [vmem:[%s1 + $0x158] sm:$0xff]
  %v3872 = vld [vmem:[%s1 + $0x160] sm:$0xff]
  %v3873 = vld [vmem:[%s1 + $0x168] sm:$0xff]
  %v3874 = vld [vmem:[%s1 + $0x170] sm:$0xff]
  %v3875 = vld [vmem:[%s1 + $0x178] sm:$0xff]
  %v3876 = vld [vmem:[%s1 + $0x180] sm:$0xff]
  %v3877 = vld [vmem:[%s1 + $0x188] sm:$0xff]
  %v3878 = vld [vmem:[%s1 + $0x190] sm:$0xff]
  %v3879 = vld [vmem:[%s1 + $0x198] sm:$0xff]
  %v3880 = vld [vmem:[%s1 + $0x1a0] sm:$0xff]
  %v3881 = vld [vmem:[%s1 + $0x1a8] sm:$0xff]
  %v3882 = vld [vmem:[%s1 + $0x1b0] sm:$0xff]
  %v3883 = vld [vmem:[%s1 + $0x1b8] sm:$0xff]
  %v3884 = vld [vmem:[%s1 + $0x1c0] sm:$0xff]
  %v3885 = vld [vmem:[%s1 + $0x1c8] sm:$0xff]
  %v3886 = vld [vmem:[%s1 + $0x1d0] sm:$0xff]
  %v3887 = vld [vmem:[%s1 + $0x1d8] sm:$0xff]
  %v3888 = vld [vmem:[%s1 + $0x1e0] sm:$0xff]
  %v3889 = vld [vmem:[%s1 + $0x1e8] sm:$0xff]
  %v3890 = vld [vmem:[%s1 + $0x1f0] sm:$0xff]
  %v3891 = vld [vmem:[%s1 + $0x1f8] sm:$0xff]
  %v3956 = vunpack.c.l.b16 %v3828
  %v3957 = vunpack.c.h.b16 %v3828
  %v3958 = vunpack.c.l.b16 %v3829
  %v3959 = vunpack.c.h.b16 %v3829
  %v3960 = vunpack.c.l.b16 %v3830
  %v3961 = vunpack.c.h.b16 %v3830
  %v3962 = vunpack.c.l.b16 %v3831
  %v3963 = vunpack.c.h.b16 %v3831
  %v3964 = vunpack.c.l.b16 %v3832
  %v3965 = vunpack.c.h.b16 %v3832
  %v3966 = vunpack.c.l.b16 %v3833
  %v3967 = vunpack.c.h.b16 %v3833
  %v3968 = vunpack.c.l.b16 %v3834
  %v3969 = vunpack.c.h.b16 %v3834
  %v3970 = vunpack.c.l.b16 %v3835
  %v3971 = vunpack.c.h.b16 %v3835
  %v3972 = vunpack.c.l.b16 %v3836
  %v3973 = vunpack.c.h.b16 %v3836
  %v3974 = vunpack.c.l.b16 %v3837
  %v3975 = vunpack.c.h.b16 %v3837
  %v3976 = vunpack.c.l.b16 %v3838
  %v3977 = vunpack.c.h.b16 %v3838
  %v3978 = vunpack.c.l.b16 %v3839
  %v3979 = vunpack.c.h.b16 %v3839
  %v3980 = vunpack.c.l.b16 %v3840
  %v3981 = vunpack.c.h.b16 %v3840
  %v3982 = vunpack.c.l.b16 %v3841
  %v3983 = vunpack.c.h.b16 %v3841
  %v3984 = vunpack.c.l.b16 %v3842
  %v3985 = vunpack.c.h.b16 %v3842
  %v3986 = vunpack.c.l.b16 %v3843
  %v3987 = vunpack.c.h.b16 %v3843
  %v3988 = vunpack.c.l.b16 %v3844
  %v3989 = vunpack.c.h.b16 %v3844
  %v3990 = vunpack.c.l.b16 %v3845
  %v3991 = vunpack.c.h.b16 %v3845
  %v3992 = vunpack.c.l.b16 %v3846
  %v3993 = vunpack.c.h.b16 %v3846
  %v3994 = vunpack.c.l.b16 %v3847
  %v3995 = vunpack.c.h.b16 %v3847
  %v3996 = vunpack.c.l.b16 %v3848
  %v3997 = vunpack.c.h.b16 %v3848
  %v3998 = vunpack.c.l.b16 %v3849
  %v3999 = vunpack.c.h.b16 %v3849
  %v4000 = vunpack.c.l.b16 %v3850
  %v4001 = vunpack.c.h.b16 %v3850
  %v4002 = vunpack.c.l.b16 %v3851
  %v4003 = vunpack.c.h.b16 %v3851
  %v4004 = vunpack.c.l.b16 %v3852
  %v4005 = vunpack.c.h.b16 %v3852
  %v4006 = vunpack.c.l.b16 %v3853
  %v4007 = vunpack.c.h.b16 %v3853
  %v4008 = vunpack.c.l.b16 %v3854
  %v4009 = vunpack.c.h.b16 %v3854
  %v4010 = vunpack.c.l.b16 %v3855
  %v4011 = vunpack.c.h.b16 %v3855
  %v4012 = vunpack.c.l.b16 %v3856
  %v4013 = vunpack.c.h.b16 %v3856
  %v4014 = vunpack.c.l.b16 %v3857
  %v4015 = vunpack.c.h.b16 %v3857
  %v4016 = vunpack.c.l.b16 %v3858
  %v4017 = vunpack.c.h.b16 %v3858
  %v4018 = vunpack.c.l.b16 %v3859
  %v4019 = vunpack.c.h.b16 %v3859
  %v4020 = vunpack.c.l.b16 %v3860
  %v4021 = vunpack.c.h.b16 %v3860
  %v4022 = vunpack.c.l.b16 %v3861
  %v4023 = vunpack.c.h.b16 %v3861
  %v4024 = vunpack.c.l.b16 %v3862
  %v4025 = vunpack.c.h.b16 %v3862
  %v4026 = vunpack.c.l.b16 %v3863
  %v4027 = vunpack.c.h.b16 %v3863
  %v4028 = vunpack.c.l.b16 %v3864
  %v4029 = vunpack.c.h.b16 %v3864
  %v4030 = vunpack.c.l.b16 %v3865
  %v4031 = vunpack.c.h.b16 %v3865
  %v4032 = vunpack.c.l.b16 %v3866
  %v4033 = vunpack.c.h.b16 %v3866
  %v4034 = vunpack.c.l.b16 %v3867
  %v4035 = vunpack.c.h.b16 %v3867
  %v4036 = vunpack.c.l.b16 %v3868
  %v4037 = vunpack.c.h.b16 %v3868
  %v4038 = vunpack.c.l.b16 %v3869
  %v4039 = vunpack.c.h.b16 %v3869
  %v4040 = vunpack.c.l.b16 %v3870
  %v4041 = vunpack.c.h.b16 %v3870
  %v4042 = vunpack.c.l.b16 %v3871
  %v4043 = vunpack.c.h.b16 %v3871
  %v4044 = vunpack.c.l.b16 %v3872
  %v4045 = vunpack.c.h.b16 %v3872
  %v4046 = vunpack.c.l.b16 %v3873
  %v4047 = vunpack.c.h.b16 %v3873
  %v4048 = vunpack.c.l.b16 %v3874
  %v4049 = vunpack.c.h.b16 %v3874
  %v4050 = vunpack.c.l.b16 %v3875
  %v4051 = vunpack.c.h.b16 %v3875
  %v4052 = vunpack.c.l.b16 %v3876
  %v4053 = vunpack.c.h.b16 %v3876
  %v4054 = vunpack.c.l.b16 %v3877
  %v4055 = vunpack.c.h.b16 %v3877
  %v4056 = vunpack.c.l.b16 %v3878
  %v4057 = vunpack.c.h.b16 %v3878
  %v4058 = vunpack.c.l.b16 %v3879
  %v4059 = vunpack.c.h.b16 %v3879
  %v4060 = vunpack.c.l.b16 %v3880
  %v4061 = vunpack.c.h.b16 %v3880
  %v4062 = vunpack.c.l.b16 %v3881
  %v4063 = vunpack.c.h.b16 %v3881
  %v4064 = vunpack.c.l.b16 %v3882
  %v4065 = vunpack.c.h.b16 %v3882
  %v4066 = vunpack.c.l.b16 %v3883
  %v4067 = vunpack.c.h.b16 %v3883
  %v4068 = vunpack.c.l.b16 %v3884
  %v4069 = vunpack.c.h.b16 %v3884
  %v4070 = vunpack.c.l.b16 %v3885
  %v4071 = vunpack.c.h.b16 %v3885
  %v4072 = vunpack.c.l.b16 %v3886
  %v4073 = vunpack.c.h.b16 %v3886
  %v4074 = vunpack.c.l.b16 %v3887
  %v4075 = vunpack.c.h.b16 %v3887
  %v4076 = vunpack.c.l.b16 %v3888
  %v4077 = vunpack.c.h.b16 %v3888
  %v4078 = vunpack.c.l.b16 %v3889
  %v4079 = vunpack.c.h.b16 %v3889
  %v4080 = vunpack.c.l.b16 %v3890
  %v4081 = vunpack.c.h.b16 %v3890
  %v4082 = vunpack.c.l.b16 %v3891
  %v4083 = vunpack.c.h.b16 %v3891
  %v4084 = vpack.c.b16 %v3964, %v3956
  %v4085 = vpack.c.b16 %v3965, %v3957
  %v4086 = vpack.c.b16 %v3966, %v3958
  %v4087 = vpack.c.b16 %v3967, %v3959
  %v4088 = vpack.c.b16 %v3968, %v3960
  %v4089 = vpack.c.b16 %v3969, %v3961
  %v4090 = vpack.c.b16 %v3970, %v3962
  %v4091 = vpack.c.b16 %v3971, %v3963
  %v4092 = vpack.c.b16 %v3980, %v3972
  %v4093 = vpack.c.b16 %v3981, %v3973
  %v4094 = vpack.c.b16 %v3982, %v3974
  %v4095 = vpack.c.b16 %v3983, %v3975
  %v4096 = vpack.c.b16 %v3984, %v3976
  %v4097 = vpack.c.b16 %v3985, %v3977
  %v4098 = vpack.c.b16 %v3986, %v3978
  %v4099 = vpack.c.b16 %v3987, %v3979
  %v4100 = vpack.c.b16 %v3996, %v3988
  %v4101 = vpack.c.b16 %v3997, %v3989
  %v4102 = vpack.c.b16 %v3998, %v3990
  %v4103 = vpack.c.b16 %v3999, %v3991
  %v4104 = vpack.c.b16 %v4000, %v3992
  %v4105 = vpack.c.b16 %v4001, %v3993
  %v4106 = vpack.c.b16 %v4002, %v3994
  %v4107 = vpack.c.b16 %v4003, %v3995
  %v4108 = vpack.c.b16 %v4012, %v4004
  %v4109 = vpack.c.b16 %v4013, %v4005
  %v4110 = vpack.c.b16 %v4014, %v4006
  %v4111 = vpack.c.b16 %v4015, %v4007
  %v4112 = vpack.c.b16 %v4016, %v4008
  %v4113 = vpack.c.b16 %v4017, %v4009
  %v4114 = vpack.c.b16 %v4018, %v4010
  %v4115 = vpack.c.b16 %v4019, %v4011
  %v4116 = vpack.c.b16 %v4028, %v4020
  %v4117 = vpack.c.b16 %v4029, %v4021
  %v4118 = vpack.c.b16 %v4030, %v4022
  %v4119 = vpack.c.b16 %v4031, %v4023
  %v4120 = vpack.c.b16 %v4032, %v4024
  %v4121 = vpack.c.b16 %v4033, %v4025
  %v4122 = vpack.c.b16 %v4034, %v4026
  %v4123 = vpack.c.b16 %v4035, %v4027
  %v4124 = vpack.c.b16 %v4044, %v4036
  %v4125 = vpack.c.b16 %v4045, %v4037
  %v4126 = vpack.c.b16 %v4046, %v4038
  %v4127 = vpack.c.b16 %v4047, %v4039
  %v4128 = vpack.c.b16 %v4048, %v4040
  %v4129 = vpack.c.b16 %v4049, %v4041
  %v4130 = vpack.c.b16 %v4050, %v4042
  %v4131 = vpack.c.b16 %v4051, %v4043
  %v4132 = vpack.c.b16 %v4060, %v4052
  %v4133 = vpack.c.b16 %v4061, %v4053
  %v4134 = vpack.c.b16 %v4062, %v4054
  %v4135 = vpack.c.b16 %v4063, %v4055
  %v4136 = vpack.c.b16 %v4064, %v4056
  %v4137 = vpack.c.b16 %v4065, %v4057
  %v4138 = vpack.c.b16 %v4066, %v4058
  %v4139 = vpack.c.b16 %v4067, %v4059
  %v4140 = vpack.c.b16 %v4076, %v4068
  %v4141 = vpack.c.b16 %v4077, %v4069
  %v4142 = vpack.c.b16 %v4078, %v4070
  %v4143 = vpack.c.b16 %v4079, %v4071
  %v4144 = vpack.c.b16 %v4080, %v4072
  %v4145 = vpack.c.b16 %v4081, %v4073
  %v4146 = vpack.c.b16 %v4082, %v4074
  %v4147 = vpack.c.b16 %v4083, %v4075
  %4212 = vmatprep.subr.bf16.mxu0 %v4085
  %4213 = vmatpush1.bf16.msra.mxu0 %v4084
  %4214 = vmatprep.subr.bf16.mxu0 %v4093
  %4215 = vmatpush1.bf16.msra.mxu0 %v4092
  %4216 = vmatprep.subr.bf16.mxu0 %v4101
  %4217 = vmatpush1.bf16.msra.mxu0 %v4100
  %4218 = vmatprep.subr.bf16.mxu0 %v4109
  %4219 = vmatpush1.bf16.msra.mxu0 %v4108
  %4220 = vmatprep.subr.bf16.mxu0 %v4117
  %4221 = vmatpush1.bf16.msra.mxu0 %v4116
  %4222 = vmatprep.subr.bf16.mxu0 %v4125
  %4223 = vmatpush1.bf16.msra.mxu0 %v4124
  %4224 = vmatprep.subr.bf16.mxu0 %v4133
  %4225 = vmatpush1.bf16.msra.mxu0 %v4132
  %4226 = vmatprep.subr.bf16.mxu0 %v4141
  %4227 = vmatpush1.bf16.msra.mxu0 %v4140
  %4228 = vmatprep.subr.bf16.mxu0 0
  %4229 = vmatpush1.bf16.msra.mxu0 0
  %4230 = vmatprep.subr.bf16.mxu0 0
  %4231 = vmatpush1.bf16.msra.mxu0 0
  %4232 = vmatprep.subr.bf16.mxu0 0
  %4233 = vmatpush1.bf16.msra.mxu0 0
  %4234 = vmatprep.subr.bf16.mxu0 0
  %4235 = vmatpush1.bf16.msra.mxu0 0
  %4236 = vmatprep.subr.bf16.mxu0 0
  %4237 = vmatpush1.bf16.msra.mxu0 0
  %4238 = vmatprep.subr.bf16.mxu0 0
  %4239 = vmatpush1.bf16.msra.mxu0 0
  %4240 = vmatprep.subr.bf16.mxu0 0
  %4241 = vmatpush1.bf16.msra.mxu0 0
  %4242 = vmatprep.subr.bf16.mxu0 0
  %4243 = vmatpush1.bf16.msra.mxu0 0
  %4244 = vmatprep.mubr.bf16.mxu0 0
  %4245 = vmatmul.mubr.bf16.gmra.mrb[0].mxu0 %v3827
  %v4246 = vpop.f32.mrb[0].mxu0
  %v4247 = vadd.f32 0.0, %v4246
  %v4248 = vpop.f32.mrb[0].mxu0
  %v4249 = vadd.f32 0.0, %v4248
  %v4250 = vpop.f32.mrb[0].mxu0
  %v4251 = vpop.f32.mrb[0].mxu0
  %4252 = vdwg.mxu0
  %4253 = vmatprep.subr.bf16.mxu0 %v4087
  %4254 = vmatpush1.bf16.msra.mxu0 %v4086
  %4255 = vmatprep.subr.bf16.mxu0 %v4095
  %4256 = vmatpush1.bf16.msra.mxu0 %v4094
  %4257 = vmatprep.subr.bf16.mxu0 %v4103
  %4258 = vmatpush1.bf16.msra.mxu0 %v4102
  %4259 = vmatprep.subr.bf16.mxu0 %v4111
  %4260 = vmatpush1.bf16.msra.mxu0 %v4110
  %4261 = vmatprep.subr.bf16.mxu0 %v4119
  %4262 = vmatpush1.bf16.msra.mxu0 %v4118
  %4263 = vmatprep.subr.bf16.mxu0 %v4127
  %4264 = vmatpush1.bf16.msra.mxu0 %v4126
  %4265 = vmatprep.subr.bf16.mxu0 %v4135
  %4266 = vmatpush1.bf16.msra.mxu0 %v4134
  %4267 = vmatprep.subr.bf16.mxu0 %v4143
  %4268 = vmatpush1.bf16.msra.mxu0 %v4142
  %4269 = vmatprep.subr.bf16.mxu0 0
  %4270 = vmatpush1.bf16.msra.mxu0 0
  %4271 = vmatprep.subr.bf16.mxu0 0
  %4272 = vmatpush1.bf16.msra.mxu0 0
  %4273 = vmatprep.subr.bf16.mxu0 0
  %4274 = vmatpush1.bf16.msra.mxu0 0
  %4275 = vmatprep.subr.bf16.mxu0 0
  %4276 = vmatpush1.bf16.msra.mxu0 0
  %4277 = vmatprep.subr.bf16.mxu0 0
  %4278 = vmatpush1.bf16.msra.mxu0 0
  %4279 = vmatprep.subr.bf16.mxu0 0
  %4280 = vmatpush1.bf16.msra.mxu0 0
  %4281 = vmatprep.subr.bf16.mxu0 0
  %4282 = vmatpush1.bf16.msra.mxu0 0
  %4283 = vmatprep.subr.bf16.mxu0 0
  %4284 = vmatpush1.bf16.msra.mxu0 0
  %4285 = vmatprep.mubr.bf16.mxu0 0
  %4286 = vmatmul.mubr.bf16.gmra.mrb[0].mxu0 %v3827
  %v4287 = vpop.f32.mrb[0].mxu0
  %v4288 = vadd.f32 0.0, %v4287
  %v4289 = vpop.f32.mrb[0].mxu0
  %v4290 = vadd.f32 0.0, %v4289
  %v4291 = vpop.f32.mrb[0].mxu0
  %v4292 = vpop.f32.mrb[0].mxu0
  %4293 = vdwg.mxu0
  %4294 = vmatprep.subr.bf16.mxu0 %v4089
  %4295 = vmatpush1.bf16.msra.mxu0 %v4088
  %4296 = vmatprep.subr.bf16.mxu0 %v4097
  %4297 = vmatpush1.bf16.msra.mxu0 %v4096
  %4298 = vmatprep.subr.bf16.mxu0 %v4105
  %4299 = vmatpush1.bf16.msra.mxu0 %v4104
  %4300 = vmatprep.subr.bf16.mxu0 %v4113
  %4301 = vmatpush1.bf16.msra.mxu0 %v4112
  %4302 = vmatprep.subr.bf16.mxu0 %v4121
  %4303 = vmatpush1.bf16.msra.mxu0 %v4120
  %4304 = vmatprep.subr.bf16.mxu0 %v4129
  %4305 = vmatpush1.bf16.msra.mxu0 %v4128
  %4306 = vmatprep.subr.bf16.mxu0 %v4137
  %4307 = vmatpush1.bf16.msra.mxu0 %v4136
  %4308 = vmatprep.subr.bf16.mxu0 %v4145
  %4309 = vmatpush1.bf16.msra.mxu0 %v4144
  %4310 = vmatprep.subr.bf16.mxu0 0
  %4311 = vmatpush1.bf16.msra.mxu0 0
  %4312 = vmatprep.subr.bf16.mxu0 0
  %4313 = vmatpush1.bf16.msra.mxu0 0
  %4314 = vmatprep.subr.bf16.mxu0 0
  %4315 = vmatpush1.bf16.msra.mxu0 0
  %4316 = vmatprep.subr.bf16.mxu0 0
  %4317 = vmatpush1.bf16.msra.mxu0 0
  %4318 = vmatprep.subr.bf16.mxu0 0
  %4319 = vmatpush1.bf16.msra.mxu0 0
  %4320 = vmatprep.subr.bf16.mxu0 0
  %4321 = vmatpush1.bf16.msra.mxu0 0
  %4322 = vmatprep.subr.bf16.mxu0 0
  %4323 = vmatpush1.bf16.msra.mxu0 0
  %4324 = vmatprep.subr.bf16.mxu0 0
  %4325 = vmatpush1.bf16.msra.mxu0 0
  %4326 = vmatprep.mubr.bf16.mxu0 0
  %4327 = vmatmul.mubr.bf16.gmra.mrb[0].mxu0 %v3827
  %v4328 = vpop.f32.mrb[0].mxu0
  %v4329 = vadd.f32 0.0, %v4328
  %v4330 = vpop.f32.mrb[0].mxu0
  %v4331 = vadd.f32 0.0, %v4330
  %v4332 = vpop.f32.mrb[0].mxu0
  %v4333 = vpop.f32.mrb[0].mxu0
  %4334 = vdwg.mxu0
  %4335 = vmatprep.subr.bf16.mxu0 %v4091
  %4336 = vmatpush1.bf16.msra.mxu0 %v4090
  %4337 = vmatprep.subr.bf16.mxu0 %v4099
  %4338 = vmatpush1.bf16.msra.mxu0 %v4098
  %4339 = vmatprep.subr.bf16.mxu0 %v4107
  %4340 = vmatpush1.bf16.msra.mxu0 %v4106
  %4341 = vmatprep.subr.bf16.mxu0 %v4115
  %4342 = vmatpush1.bf16.msra.mxu0 %v4114
  %4343 = vmatprep.subr.bf16.mxu0 %v4123
  %4344 = vmatpush1.bf16.msra.mxu0 %v4122
  %4345 = vmatprep.subr.bf16.mxu0 %v4131
  %4346 = vmatpush1.bf16.msra.mxu0 %v4130
  %4347 = vmatprep.subr.bf16.mxu0 %v4139
  %4348 = vmatpush1.bf16.msra.mxu0 %v4138
  %4349 = vmatprep.subr.bf16.mxu0 %v4147
  %4350 = vmatpush1.bf16.msra.mxu0 %v4146
  %4351 = vmatprep.subr.bf16.mxu0 0
  %4352 = vmatpush1.bf16.msra.mxu0 0
  %4353 = vmatprep.subr.bf16.mxu0 0
  %4354 = vmatpush1.bf16.msra.mxu0 0
  %4355 = vmatprep.subr.bf16.mxu0 0
  %4356 = vmatpush1.bf16.msra.mxu0 0
  %4357 = vmatprep.subr.bf16.mxu0 0
  %4358 = vmatpush1.bf16.msra.mxu0 0
  %4359 = vmatprep.subr.bf16.mxu0 0
  %4360 = vmatpush1.bf16.msra.mxu0 0
  %4361 = vmatprep.subr.bf16.mxu0 0
  %4362 = vmatpush1.bf16.msra.mxu0 0
  %4363 = vmatprep.subr.bf16.mxu0 0
  %4364 = vmatpush1.bf16.msra.mxu0 0
  %4365 = vmatprep.subr.bf16.mxu0 0
  %4366 = vmatpush1.bf16.msra.mxu0 0
  %4367 = vmatprep.mubr.bf16.mxu0 0
  %4368 = vmatmul.mubr.bf16.gmra.mrb[0].mxu0 %v3827
  %v4369 = vpop.f32.mrb[0].mxu0
  %v4370 = vadd.f32 0.0, %v4369
  %v4371 = vpop.f32.mrb[0].mxu0
  %v4372 = vadd.f32 0.0, %v4371
  %v4373 = vpop.f32.mrb[0].mxu0
  %v4374 = vpop.f32.mrb[0].mxu0
  %4375 = vdwg.mxu0
  %v4376 = vmax.f32 %v4247, %v4329
  %v4377 = vmax.f32 %v4249, %v4331
  %v4378 = vmax.f32 %v4288, %v4370
  %v4379 = vmax.f32 %v4290, %v4372
  %v4380 = vld [vmem:[%s2] sm:$0xf]
  %v4382 = vlaneseq
  %v4383 = vshrl.u32 %v4382, 7
  %v4384 = vsub.s32 0, %v4383
  %v4385 = vrot.slane %v4380, %v4384
  %v4386 = vlaneseq
  %v4387 = vshrl.u32 %v4386, 7
  %v4388 = vsub.s32 1, %v4387
  %v4389 = vrot.slane %v4380, %v4388
  %v4390 = vlaneseq
  %v4391 = vshrl.u32 %v4390, 7
  %v4392 = vsub.s32 2, %v4391
  %v4393 = vrot.slane %v4380, %v4392
  %v4394 = vlaneseq
  %v4395 = vshrl.u32 %v4394, 7
  %v4396 = vsub.s32 3, %v4395
  %v4397 = vrot.slane %v4380, %v4396
  %v4402 = vadd.f32 %v4376, %v4385
  %v4403 = vadd.f32 %v4377, %v4389
  %v4404 = vadd.f32 %v4378, %v4393
  %v4405 = vadd.f32 %v4379, %v4397
  %v4406 = vmax.f32 %v4402, 0.0
  %v4407 = vmax.f32 %v4403, 0.0
  %v4408 = vmax.f32 %v4404, 0.0
  %v4409 = vmax.f32 %v4405, 0.0
  %v4410 = vmax.f32 %v4406, %v4408
  %v4411 = vmax.f32 %v4407, %v4409
  %v4412 = vld [vmem:[#allocation2] sm:$0xff]
  %v4413 = vpack.c.bf16 %v4410, %v4410
  %v4414 = vpack.c.bf16 %v4411, %v4411
  %s4415 = scalar_lea.vmem %s3, 640
  %v4416 = vld [vmem:[%s4415] sm:$0xf]
  %v4417 = vld [vmem:[%s4415 + $0x4] sm:$0xf]
  %v4418 = vld [vmem:[%s4415 + $0x8] sm:$0xf]
  %v4419 = vld [vmem:[%s4415 + $0xc] sm:$0xf]
  %v4420 = vld [vmem:[%s4415 + $0x10] sm:$0xf]
  %v4421 = vld [vmem:[%s4415 + $0x14] sm:$0xf]
  %v4422 = vld [vmem:[%s4415 + $0x18] sm:$0xf]
  %v4423 = vld [vmem:[%s4415 + $0x1c] sm:$0xf]
  %v4424 = vld [vmem:[%s4415 + $0x20] sm:$0xf]
  %v4425 = vld [vmem:[%s4415 + $0x24] sm:$0xf]
  %v4426 = vld [vmem:[%s4415 + $0x28] sm:$0xf]
  %v4427 = vld [vmem:[%s4415 + $0x2c] sm:$0xf]
  %v4428 = vld [vmem:[%s4415 + $0x30] sm:$0xf]
  %v4429 = vld [vmem:[%s4415 + $0x34] sm:$0xf]
  %v4430 = vld [vmem:[%s4415 + $0x38] sm:$0xf]
  %v4431 = vld [vmem:[%s4415 + $0x3c] sm:$0xf]
  %v4432 = vld [vmem:[%s4415 + $0x40] sm:$0xf]
  %v4433 = vld [vmem:[%s4415 + $0x44] sm:$0xf]
  %v4434 = vld [vmem:[%s4415 + $0x48] sm:$0xf]
  %v4435 = vld [vmem:[%s4415 + $0x4c] sm:$0xf]
  %v4436 = vld [vmem:[%s4415 + $0x50] sm:$0xf]
  %v4437 = vld [vmem:[%s4415 + $0x54] sm:$0xf]
  %v4438 = vld [vmem:[%s4415 + $0x58] sm:$0xf]
  %v4439 = vld [vmem:[%s4415 + $0x5c] sm:$0xf]
  %v4440 = vld [vmem:[%s4415 + $0x60] sm:$0xf]
  %v4441 = vld [vmem:[%s4415 + $0x64] sm:$0xf]
  %v4442 = vld [vmem:[%s4415 + $0x68] sm:$0xf]
  %v4443 = vld [vmem:[%s4415 + $0x6c] sm:$0xf]
  %v4444 = vld [vmem:[%s4415 + $0x70] sm:$0xf]
  %v4445 = vld [vmem:[%s4415 + $0x74] sm:$0xf]
  %v4446 = vld [vmem:[%s4415 + $0x78] sm:$0xf]
  %v4447 = vld [vmem:[%s4415 + $0x7c] sm:$0xf]
  %v4480 = vunpack.c.l.b16 %v4416
  %v4481 = vunpack.c.l.b16 %v4417
  %v4482 = vunpack.c.l.b16 %v4418
  %v4483 = vunpack.c.l.b16 %v4419
  %v4484 = vunpack.c.l.b16 %v4420
  %v4485 = vunpack.c.l.b16 %v4421
  %v4486 = vunpack.c.l.b16 %v4422
  %v4487 = vunpack.c.l.b16 %v4423
  %v4488 = vunpack.c.l.b16 %v4424
  %v4489 = vunpack.c.l.b16 %v4425
  %v4490 = vunpack.c.l.b16 %v4426
  %v4491 = vunpack.c.l.b16 %v4427
  %v4492 = vunpack.c.l.b16 %v4428
  %v4493 = vunpack.c.l.b16 %v4429
  %v4494 = vunpack.c.l.b16 %v4430
  %v4495 = vunpack.c.l.b16 %v4431
  %v4496 = vunpack.c.l.b16 %v4432
  %v4497 = vunpack.c.l.b16 %v4433
  %v4498 = vunpack.c.l.b16 %v4434
  %v4499 = vunpack.c.l.b16 %v4435
  %v4500 = vunpack.c.l.b16 %v4436
  %v4501 = vunpack.c.l.b16 %v4437
  %v4502 = vunpack.c.l.b16 %v4438
  %v4503 = vunpack.c.l.b16 %v4439
  %v4504 = vunpack.c.l.b16 %v4440
  %v4505 = vunpack.c.l.b16 %v4441
  %v4506 = vunpack.c.l.b16 %v4442
  %v4507 = vunpack.c.l.b16 %v4443
  %v4508 = vunpack.c.l.b16 %v4444
  %v4509 = vunpack.c.l.b16 %v4445
  %v4510 = vunpack.c.l.b16 %v4446
  %v4511 = vunpack.c.l.b16 %v4447
  %v4512 = vpack.c.b16 %v4481, %v4480
  %v4513 = vpack.c.b16 %v4483, %v4482
  %v4514 = vpack.c.b16 %v4485, %v4484
  %v4515 = vpack.c.b16 %v4487, %v4486
  %v4516 = vpack.c.b16 %v4489, %v4488
  %v4517 = vpack.c.b16 %v4491, %v4490
  %v4518 = vpack.c.b16 %v4493, %v4492
  %v4519 = vpack.c.b16 %v4495, %v4494
  %v4520 = vpack.c.b16 %v4497, %v4496
  %v4521 = vpack.c.b16 %v4499, %v4498
  %v4522 = vpack.c.b16 %v4501, %v4500
  %v4523 = vpack.c.b16 %v4503, %v4502
  %v4524 = vpack.c.b16 %v4505, %v4504
  %v4525 = vpack.c.b16 %v4507, %v4506
  %v4526 = vpack.c.b16 %v4509, %v4508
  %v4527 = vpack.c.b16 %v4511, %v4510
  %4544 = vmatprep.subr.bf16.mxu0 0
  %4545 = vmatpush1.bf16.msra.mxu0 %v4512
  %4546 = vmatprep.subr.bf16.mxu0 0
  %4547 = vmatpush1.bf16.msra.mxu0 %v4513
  %4548 = vmatprep.subr.bf16.mxu0 0
  %4549 = vmatpush1.bf16.msra.mxu0 %v4514
  %4550 = vmatprep.subr.bf16.mxu0 0
  %4551 = vmatpush1.bf16.msra.mxu0 %v4515
  %4552 = vmatprep.subr.bf16.mxu0 0
  %4553 = vmatpush1.bf16.msra.mxu0 %v4516
  %4554 = vmatprep.subr.bf16.mxu0 0
  %4555 = vmatpush1.bf16.msra.mxu0 %v4517
  %4556 = vmatprep.subr.bf16.mxu0 0
  %4557 = vmatpush1.bf16.msra.mxu0 %v4518
  %4558 = vmatprep.subr.bf16.mxu0 0
  %4559 = vmatpush1.bf16.msra.mxu0 %v4519
  %4560 = vmatprep.subr.bf16.mxu0 0
  %4561 = vmatpush1.bf16.msra.mxu0 %v4520
  %4562 = vmatprep.subr.bf16.mxu0 0
  %4563 = vmatpush1.bf16.msra.mxu0 %v4521
  %4564 = vmatprep.subr.bf16.mxu0 0
  %4565 = vmatpush1.bf16.msra.mxu0 %v4522
  %4566 = vmatprep.subr.bf16.mxu0 0
  %4567 = vmatpush1.bf16.msra.mxu0 %v4523
  %4568 = vmatprep.subr.bf16.mxu0 0
  %4569 = vmatpush1.bf16.msra.mxu0 %v4524
  %4570 = vmatprep.subr.bf16.mxu0 0
  %4571 = vmatpush1.bf16.msra.mxu0 %v4525
  %4572 = vmatprep.subr.bf16.mxu0 0
  %4573 = vmatpush1.bf16.msra.mxu0 %v4526
  %4574 = vmatprep.subr.bf16.mxu0 0
  %4575 = vmatpush1.bf16.msra.mxu0 %v4527
  %4576 = vmatprep.mubr.bf16.mxu0 %v4414
  %4577 = vmatmul.mubr.bf16.gmra.mrb[0].mxu0 %v4413
  %v4578 = vpop.f32.mrb[0].mxu0
  %v4579 = vadd.f32 0.0, %v4578
  %v4580 = vpop.f32.mrb[0].mxu0
  %v4581 = vpop.f32.mrb[0].mxu0
  %v4582 = vpop.f32.mrb[0].mxu0
  %4583 = vdwg.mxu0
  %v4584 = vadd.f32 %v4412, %v4579
  %4585 = vst [vmem:[#allocation2] sm:$0xff] %v4584
  %s4586 = scalar_lea.vmem %s0, 24
  %v4587 = vld [vmem:[%s4586] sm:$0xf]
  %v4588 = vld [vmem:[%s1] sm:$0xff]
  %v4589 = vld [vmem:[%s1 + $0x8] sm:$0xff]
  %v4590 = vld [vmem:[%s1 + $0x10] sm:$0xff]
  %v4591 = vld [vmem:[%s1 + $0x18] sm:$0xff]
  %v4592 = vld [vmem:[%s1 + $0x20] sm:$0xff]
  %v4593 = vld [vmem:[%s1 + $0x28] sm:$0xff]
  %v4594 = vld [vmem:[%s1 + $0x30] sm:$0xff]
  %v4595 = vld [vmem:[%s1 + $0x38] sm:$0xff]
  %v4596 = vld [vmem:[%s1 + $0x40] sm:$0xff]
  %v4597 = vld [vmem:[%s1 + $0x48] sm:$0xff]
  %v4598 = vld [vmem:[%s1 + $0x50] sm:$0xff]
  %v4599 = vld [vmem:[%s1 + $0x58] sm:$0xff]
  %v4600 = vld [vmem:[%s1 + $0x60] sm:$0xff]
  %v4601 = vld [vmem:[%s1 + $0x68] sm:$0xff]
  %v4602 = vld [vmem:[%s1 + $0x70] sm:$0xff]
  %v4603 = vld [vmem:[%s1 + $0x78] sm:$0xff]
  %v4604 = vld [vmem:[%s1 + $0x80] sm:$0xff]
  %v4605 = vld [vmem:[%s1 + $0x88] sm:$0xff]
  %v4606 = vld [vmem:[%s1 + $0x90] sm:$0xff]
  %v4607 = vld [vmem:[%s1 + $0x98] sm:$0xff]
  %v4608 = vld [vmem:[%s1 + $0xa0] sm:$0xff]
  %v4609 = vld [vmem:[%s1 + $0xa8] sm:$0xff]
  %v4610 = vld [vmem:[%s1 + $0xb0] sm:$0xff]
  %v4611 = vld [vmem:[%s1 + $0xb8] sm:$0xff]
  %v4612 = vld [vmem:[%s1 + $0xc0] sm:$0xff]
  %v4613 = vld [vmem:[%s1 + $0xc8] sm:$0xff]
  %v4614 = vld [vmem:[%s1 + $0xd0] sm:$0xff]
  %v4615 = vld [vmem:[%s1 + $0xd8] sm:$0xff]
  %v4616 = vld [vmem:[%s1 + $0xe0] sm:$0xff]
  %v4617 = vld [vmem:[%s1 + $0xe8] sm:$0xff]
  %v4618 = vld [vmem:[%s1 + $0xf0] sm:$0xff]
  %v4619 = vld [vmem:[%s1 + $0xf8] sm:$0xff]
  %v4620 = vld [vmem:[%s1 + $0x100] sm:$0xff]
  %v4621 = vld [vmem:[%s1 + $0x108] sm:$0xff]
  %v4622 = vld [vmem:[%s1 + $0x110] sm:$0xff]
  %v4623 = vld [vmem:[%s1 + $0x118] sm:$0xff]
  %v4624 = vld [vmem:[%s1 + $0x120] sm:$0xff]
  %v4625 = vld [vmem:[%s1 + $0x128] sm:$0xff]
  %v4626 = vld [vmem:[%s1 + $0x130] sm:$0xff]
  %v4627 = vld [vmem:[%s1 + $0x138] sm:$0xff]
  %v4628 = vld [vmem:[%s1 + $0x140] sm:$0xff]
  %v4629 = vld [vmem:[%s1 + $0x148] sm:$0xff]
  %v4630 = vld [vmem:[%s1 + $0x150] sm:$0xff]
  %v4631 = vld [vmem:[%s1 + $0x158] sm:$0xff]
  %v4632 = vld [vmem:[%s1 + $0x160] sm:$0xff]
  %v4633 = vld [vmem:[%s1 + $0x168] sm:$0xff]
  %v4634 = vld [vmem:[%s1 + $0x170] sm:$0xff]
  %v4635 = vld [vmem:[%s1 + $0x178] sm:$0xff]
  %v4636 = vld [vmem:[%s1 + $0x180] sm:$0xff]
  %v4637 = vld [vmem:[%s1 + $0x188] sm:$0xff]
  %v4638 = vld [vmem:[%s1 + $0x190] sm:$0xff]
  %v4639 = vld [vmem:[%s1 + $0x198] sm:$0xff]
  %v4640 = vld [vmem:[%s1 + $0x1a0] sm:$0xff]
  %v4641 = vld [vmem:[%s1 + $0x1a8] sm:$0xff]
  %v4642 = vld [vmem:[%s1 + $0x1b0] sm:$0xff]
  %v4643 = vld [vmem:[%s1 + $0x1b8] sm:$0xff]
  %v4644 = vld [vmem:[%s1 + $0x1c0] sm:$0xff]
  %v4645 = vld [vmem:[%s1 + $0x1c8] sm:$0xff]
  %v4646 = vld [vmem:[%s1 + $0x1d0] sm:$0xff]
  %v4647 = vld [vmem:[%s1 + $0x1d8] sm:$0xff]
  %v4648 = vld [vmem:[%s1 + $0x1e0] sm:$0xff]
  %v4649 = vld [vmem:[%s1 + $0x1e8] sm:$0xff]
  %v4650 = vld [vmem:[%s1 + $0x1f0] sm:$0xff]
  %v4651 = vld [vmem:[%s1 + $0x1f8] sm:$0xff]
  %v4716 = vunpack.c.l.b16 %v4588
  %v4717 = vunpack.c.h.b16 %v4588
  %v4718 = vunpack.c.l.b16 %v4589
  %v4719 = vunpack.c.h.b16 %v4589
  %v4720 = vunpack.c.l.b16 %v4590
  %v4721 = vunpack.c.h.b16 %v4590
  %v4722 = vunpack.c.l.b16 %v4591
  %v4723 = vunpack.c.h.b16 %v4591
  %v4724 = vunpack.c.l.b16 %v4592
  %v4725 = vunpack.c.h.b16 %v4592
  %v4726 = vunpack.c.l.b16 %v4593
  %v4727 = vunpack.c.h.b16 %v4593
  %v4728 = vunpack.c.l.b16 %v4594
  %v4729 = vunpack.c.h.b16 %v4594
  %v4730 = vunpack.c.l.b16 %v4595
  %v4731 = vunpack.c.h.b16 %v4595
  %v4732 = vunpack.c.l.b16 %v4596
  %v4733 = vunpack.c.h.b16 %v4596
  %v4734 = vunpack.c.l.b16 %v4597
  %v4735 = vunpack.c.h.b16 %v4597
  %v4736 = vunpack.c.l.b16 %v4598
  %v4737 = vunpack.c.h.b16 %v4598
  %v4738 = vunpack.c.l.b16 %v4599
  %v4739 = vunpack.c.h.b16 %v4599
  %v4740 = vunpack.c.l.b16 %v4600
  %v4741 = vunpack.c.h.b16 %v4600
  %v4742 = vunpack.c.l.b16 %v4601
  %v4743 = vunpack.c.h.b16 %v4601
  %v4744 = vunpack.c.l.b16 %v4602
  %v4745 = vunpack.c.h.b16 %v4602
  %v4746 = vunpack.c.l.b16 %v4603
  %v4747 = vunpack.c.h.b16 %v4603
  %v4748 = vunpack.c.l.b16 %v4604
  %v4749 = vunpack.c.h.b16 %v4604
  %v4750 = vunpack.c.l.b16 %v4605
  %v4751 = vunpack.c.h.b16 %v4605
  %v4752 = vunpack.c.l.b16 %v4606
  %v4753 = vunpack.c.h.b16 %v4606
  %v4754 = vunpack.c.l.b16 %v4607
  %v4755 = vunpack.c.h.b16 %v4607
  %v4756 = vunpack.c.l.b16 %v4608
  %v4757 = vunpack.c.h.b16 %v4608
  %v4758 = vunpack.c.l.b16 %v4609
  %v4759 = vunpack.c.h.b16 %v4609
  %v4760 = vunpack.c.l.b16 %v4610
  %v4761 = vunpack.c.h.b16 %v4610
  %v4762 = vunpack.c.l.b16 %v4611
  %v4763 = vunpack.c.h.b16 %v4611
  %v4764 = vunpack.c.l.b16 %v4612
  %v4765 = vunpack.c.h.b16 %v4612
  %v4766 = vunpack.c.l.b16 %v4613
  %v4767 = vunpack.c.h.b16 %v4613
  %v4768 = vunpack.c.l.b16 %v4614
  %v4769 = vunpack.c.h.b16 %v4614
  %v4770 = vunpack.c.l.b16 %v4615
  %v4771 = vunpack.c.h.b16 %v4615
  %v4772 = vunpack.c.l.b16 %v4616
  %v4773 = vunpack.c.h.b16 %v4616
  %v4774 = vunpack.c.l.b16 %v4617
  %v4775 = vunpack.c.h.b16 %v4617
  %v4776 = vunpack.c.l.b16 %v4618
  %v4777 = vunpack.c.h.b16 %v4618
  %v4778 = vunpack.c.l.b16 %v4619
  %v4779 = vunpack.c.h.b16 %v4619
  %v4780 = vunpack.c.l.b16 %v4620
  %v4781 = vunpack.c.h.b16 %v4620
  %v4782 = vunpack.c.l.b16 %v4621
  %v4783 = vunpack.c.h.b16 %v4621
  %v4784 = vunpack.c.l.b16 %v4622
  %v4785 = vunpack.c.h.b16 %v4622
  %v4786 = vunpack.c.l.b16 %v4623
  %v4787 = vunpack.c.h.b16 %v4623
  %v4788 = vunpack.c.l.b16 %v4624
  %v4789 = vunpack.c.h.b16 %v4624
  %v4790 = vunpack.c.l.b16 %v4625
  %v4791 = vunpack.c.h.b16 %v4625
  %v4792 = vunpack.c.l.b16 %v4626
  %v4793 = vunpack.c.h.b16 %v4626
  %v4794 = vunpack.c.l.b16 %v4627
  %v4795 = vunpack.c.h.b16 %v4627
  %v4796 = vunpack.c.l.b16 %v4628
  %v4797 = vunpack.c.h.b16 %v4628
  %v4798 = vunpack.c.l.b16 %v4629
  %v4799 = vunpack.c.h.b16 %v4629
  %v4800 = vunpack.c.l.b16 %v4630
  %v4801 = vunpack.c.h.b16 %v4630
  %v4802 = vunpack.c.l.b16 %v4631
  %v4803 = vunpack.c.h.b16 %v4631
  %v4804 = vunpack.c.l.b16 %v4632
  %v4805 = vunpack.c.h.b16 %v4632
  %v4806 = vunpack.c.l.b16 %v4633
  %v4807 = vunpack.c.h.b16 %v4633
  %v4808 = vunpack.c.l.b16 %v4634
  %v4809 = vunpack.c.h.b16 %v4634
  %v4810 = vunpack.c.l.b16 %v4635
  %v4811 = vunpack.c.h.b16 %v4635
  %v4812 = vunpack.c.l.b16 %v4636
  %v4813 = vunpack.c.h.b16 %v4636
  %v4814 = vunpack.c.l.b16 %v4637
  %v4815 = vunpack.c.h.b16 %v4637
  %v4816 = vunpack.c.l.b16 %v4638
  %v4817 = vunpack.c.h.b16 %v4638
  %v4818 = vunpack.c.l.b16 %v4639
  %v4819 = vunpack.c.h.b16 %v4639
  %v4820 = vunpack.c.l.b16 %v4640
  %v4821 = vunpack.c.h.b16 %v4640
  %v4822 = vunpack.c.l.b16 %v4641
  %v4823 = vunpack.c.h.b16 %v4641
  %v4824 = vunpack.c.l.b16 %v4642
  %v4825 = vunpack.c.h.b16 %v4642
  %v4826 = vunpack.c.l.b16 %v4643
  %v4827 = vunpack.c.h.b16 %v4643
  %v4828 = vunpack.c.l.b16 %v4644
  %v4829 = vunpack.c.h.b16 %v4644
  %v4830 = vunpack.c.l.b16 %v4645
  %v4831 = vunpack.c.h.b16 %v4645
  %v4832 = vunpack.c.l.b16 %v4646
  %v4833 = vunpack.c.h.b16 %v4646
  %v4834 = vunpack.c.l.b16 %v4647
  %v4835 = vunpack.c.h.b16 %v4647
  %v4836 = vunpack.c.l.b16 %v4648
  %v4837 = vunpack.c.h.b16 %v4648
  %v4838 = vunpack.c.l.b16 %v4649
  %v4839 = vunpack.c.h.b16 %v4649
  %v4840 = vunpack.c.l.b16 %v4650
  %v4841 = vunpack.c.h.b16 %v4650
  %v4842 = vunpack.c.l.b16 %v4651
  %v4843 = vunpack.c.h.b16 %v4651
  %v4844 = vpack.c.b16 %v4724, %v4716
  %v4845 = vpack.c.b16 %v4725, %v4717
  %v4846 = vpack.c.b16 %v4726, %v4718
  %v4847 = vpack.c.b16 %v4727, %v4719
  %v4848 = vpack.c.b16 %v4728, %v4720
  %v4849 = vpack.c.b16 %v4729, %v4721
  %v4850 = vpack.c.b16 %v4730, %v4722
  %v4851 = vpack.c.b16 %v4731, %v4723
  %v4852 = vpack.c.b16 %v4740, %v4732
  %v4853 = vpack.c.b16 %v4741, %v4733
  %v4854 = vpack.c.b16 %v4742, %v4734
  %v4855 = vpack.c.b16 %v4743, %v4735
  %v4856 = vpack.c.b16 %v4744, %v4736
  %v4857 = vpack.c.b16 %v4745, %v4737
  %v4858 = vpack.c.b16 %v4746, %v4738
  %v4859 = vpack.c.b16 %v4747, %v4739
  %v4860 = vpack.c.b16 %v4756, %v4748
  %v4861 = vpack.c.b16 %v4757, %v4749
  %v4862 = vpack.c.b16 %v4758, %v4750
  %v4863 = vpack.c.b16 %v4759, %v4751
  %v4864 = vpack.c.b16 %v4760, %v4752
  %v4865 = vpack.c.b16 %v4761, %v4753
  %v4866 = vpack.c.b16 %v4762, %v4754
  %v4867 = vpack.c.b16 %v4763, %v4755
  %v4868 = vpack.c.b16 %v4772, %v4764
  %v4869 = vpack.c.b16 %v4773, %v4765
  %v4870 = vpack.c.b16 %v4774, %v4766
  %v4871 = vpack.c.b16 %v4775, %v4767
  %v4872 = vpack.c.b16 %v4776, %v4768
  %v4873 = vpack.c.b16 %v4777, %v4769
  %v4874 = vpack.c.b16 %v4778, %v4770
  %v4875 = vpack.c.b16 %v4779, %v4771
  %v4876 = vpack.c.b16 %v4788, %v4780
  %v4877 = vpack.c.b16 %v4789, %v4781
  %v4878 = vpack.c.b16 %v4790, %v4782
  %v4879 = vpack.c.b16 %v4791, %v4783
  %v4880 = vpack.c.b16 %v4792, %v4784
  %v4881 = vpack.c.b16 %v4793, %v4785
  %v4882 = vpack.c.b16 %v4794, %v4786
  %v4883 = vpack.c.b16 %v4795, %v4787
  %v4884 = vpack.c.b16 %v4804, %v4796
  %v4885 = vpack.c.b16 %v4805, %v4797
  %v4886 = vpack.c.b16 %v4806, %v4798
  %v4887 = vpack.c.b16 %v4807, %v4799
  %v4888 = vpack.c.b16 %v4808, %v4800
  %v4889 = vpack.c.b16 %v4809, %v4801
  %v4890 = vpack.c.b16 %v4810, %v4802
  %v4891 = vpack.c.b16 %v4811, %v4803
  %v4892 = vpack.c.b16 %v4820, %v4812
  %v4893 = vpack.c.b16 %v4821, %v4813
  %v4894 = vpack.c.b16 %v4822, %v4814
  %v4895 = vpack.c.b16 %v4823, %v4815
  %v4896 = vpack.c.b16 %v4824, %v4816
  %v4897 = vpack.c.b16 %v4825, %v4817
  %v4898 = vpack.c.b16 %v4826, %v4818
  %v4899 = vpack.c.b16 %v4827, %v4819
  %v4900 = vpack.c.b16 %v4836, %v4828
  %v4901 = vpack.c.b16 %v4837, %v4829
  %v4902 = vpack.c.b16 %v4838, %v4830
  %v4903 = vpack.c.b16 %v4839, %v4831
  %v4904 = vpack.c.b16 %v4840, %v4832
  %v4905 = vpack.c.b16 %v4841, %v4833
  %v4906 = vpack.c.b16 %v4842, %v4834
  %v4907 = vpack.c.b16 %v4843, %v4835
  %4972 = vmatprep.subr.bf16.mxu0 %v4845
  %4973 = vmatpush1.bf16.msra.mxu0 %v4844
  %4974 = vmatprep.subr.bf16.mxu0 %v4853
  %4975 = vmatpush1.bf16.msra.mxu0 %v4852
  %4976 = vmatprep.subr.bf16.mxu0 %v4861
  %4977 = vmatpush1.bf16.msra.mxu0 %v4860
  %4978 = vmatprep.subr.bf16.mxu0 %v4869
  %4979 = vmatpush1.bf16.msra.mxu0 %v4868
  %4980 = vmatprep.subr.bf16.mxu0 %v4877
  %4981 = vmatpush1.bf16.msra.mxu0 %v4876
  %4982 = vmatprep.subr.bf16.mxu0 %v4885
  %4983 = vmatpush1.bf16.msra.mxu0 %v4884
  %4984 = vmatprep.subr.bf16.mxu0 %v4893
  %4985 = vmatpush1.bf16.msra.mxu0 %v4892
  %4986 = vmatprep.subr.bf16.mxu0 %v4901
  %4987 = vmatpush1.bf16.msra.mxu0 %v4900
  %4988 = vmatprep.subr.bf16.mxu0 0
  %4989 = vmatpush1.bf16.msra.mxu0 0
  %4990 = vmatprep.subr.bf16.mxu0 0
  %4991 = vmatpush1.bf16.msra.mxu0 0
  %4992 = vmatprep.subr.bf16.mxu0 0
  %4993 = vmatpush1.bf16.msra.mxu0 0
  %4994 = vmatprep.subr.bf16.mxu0 0
  %4995 = vmatpush1.bf16.msra.mxu0 0
  %4996 = vmatprep.subr.bf16.mxu0 0
  %4997 = vmatpush1.bf16.msra.mxu0 0
  %4998 = vmatprep.subr.bf16.mxu0 0
  %4999 = vmatpush1.bf16.msra.mxu0 0
  %5000 = vmatprep.subr.bf16.mxu0 0
  %5001 = vmatpush1.bf16.msra.mxu0 0
  %5002 = vmatprep.subr.bf16.mxu0 0
  %5003 = vmatpush1.bf16.msra.mxu0 0
  %5004 = vmatprep.mubr.bf16.mxu0 0
  %5005 = vmatmul.mubr.bf16.gmra.mrb[0].mxu0 %v4587
  %v5006 = vpop.f32.mrb[0].mxu0
  %v5007 = vadd.f32 0.0, %v5006
  %v5008 = vpop.f32.mrb[0].mxu0
  %v5009 = vadd.f32 0.0, %v5008
  %v5010 = vpop.f32.mrb[0].mxu0
  %v5011 = vpop.f32.mrb[0].mxu0
  %5012 = vdwg.mxu0
  %5013 = vmatprep.subr.bf16.mxu0 %v4847
  %5014 = vmatpush1.bf16.msra.mxu0 %v4846
  %5015 = vmatprep.subr.bf16.mxu0 %v4855
  %5016 = vmatpush1.bf16.msra.mxu0 %v4854
  %5017 = vmatprep.subr.bf16.mxu0 %v4863
  %5018 = vmatpush1.bf16.msra.mxu0 %v4862
  %5019 = vmatprep.subr.bf16.mxu0 %v4871
  %5020 = vmatpush1.bf16.msra.mxu0 %v4870
  %5021 = vmatprep.subr.bf16.mxu0 %v4879
  %5022 = vmatpush1.bf16.msra.mxu0 %v4878
  %5023 = vmatprep.subr.bf16.mxu0 %v4887
  %5024 = vmatpush1.bf16.msra.mxu0 %v4886
  %5025 = vmatprep.subr.bf16.mxu0 %v4895
  %5026 = vmatpush1.bf16.msra.mxu0 %v4894
  %5027 = vmatprep.subr.bf16.mxu0 %v4903
  %5028 = vmatpush1.bf16.msra.mxu0 %v4902
  %5029 = vmatprep.subr.bf16.mxu0 0
  %5030 = vmatpush1.bf16.msra.mxu0 0
  %5031 = vmatprep.subr.bf16.mxu0 0
  %5032 = vmatpush1.bf16.msra.mxu0 0
  %5033 = vmatprep.subr.bf16.mxu0 0
  %5034 = vmatpush1.bf16.msra.mxu0 0
  %5035 = vmatprep.subr.bf16.mxu0 0
  %5036 = vmatpush1.bf16.msra.mxu0 0
  %5037 = vmatprep.subr.bf16.mxu0 0
  %5038 = vmatpush1.bf16.msra.mxu0 0
  %5039 = vmatprep.subr.bf16.mxu0 0
  %5040 = vmatpush1.bf16.msra.mxu0 0
  %5041 = vmatprep.subr.bf16.mxu0 0
  %5042 = vmatpush1.bf16.msra.mxu0 0
  %5043 = vmatprep.subr.bf16.mxu0 0
  %5044 = vmatpush1.bf16.msra.mxu0 0
  %5045 = vmatprep.mubr.bf16.mxu0 0
  %5046 = vmatmul.mubr.bf16.gmra.mrb[0].mxu0 %v4587
  %v5047 = vpop.f32.mrb[0].mxu0
  %v5048 = vadd.f32 0.0, %v5047
  %v5049 = vpop.f32.mrb[0].mxu0
  %v5050 = vadd.f32 0.0, %v5049
  %v5051 = vpop.f32.mrb[0].mxu0
  %v5052 = vpop.f32.mrb[0].mxu0
  %5053 = vdwg.mxu0
  %5054 = vmatprep.subr.bf16.mxu0 %v4849
  %5055 = vmatpush1.bf16.msra.mxu0 %v4848
  %5056 = vmatprep.subr.bf16.mxu0 %v4857
  %5057 = vmatpush1.bf16.msra.mxu0 %v4856
  %5058 = vmatprep.subr.bf16.mxu0 %v4865
  %5059 = vmatpush1.bf16.msra.mxu0 %v4864
  %5060 = vmatprep.subr.bf16.mxu0 %v4873
  %5061 = vmatpush1.bf16.msra.mxu0 %v4872
  %5062 = vmatprep.subr.bf16.mxu0 %v4881
  %5063 = vmatpush1.bf16.msra.mxu0 %v4880
  %5064 = vmatprep.subr.bf16.mxu0 %v4889
  %5065 = vmatpush1.bf16.msra.mxu0 %v4888
  %5066 = vmatprep.subr.bf16.mxu0 %v4897
  %5067 = vmatpush1.bf16.msra.mxu0 %v4896
  %5068 = vmatprep.subr.bf16.mxu0 %v4905
  %5069 = vmatpush1.bf16.msra.mxu0 %v4904
  %5070 = vmatprep.subr.bf16.mxu0 0
  %5071 = vmatpush1.bf16.msra.mxu0 0
  %5072 = vmatprep.subr.bf16.mxu0 0
  %5073 = vmatpush1.bf16.msra.mxu0 0
  %5074 = vmatprep.subr.bf16.mxu0 0
  %5075 = vmatpush1.bf16.msra.mxu0 0
  %5076 = vmatprep.subr.bf16.mxu0 0
  %5077 = vmatpush1.bf16.msra.mxu0 0
  %5078 = vmatprep.subr.bf16.mxu0 0
  %5079 = vmatpush1.bf16.msra.mxu0 0
  %5080 = vmatprep.subr.bf16.mxu0 0
  %5081 = vmatpush1.bf16.msra.mxu0 0
  %5082 = vmatprep.subr.bf16.mxu0 0
  %5083 = vmatpush1.bf16.msra.mxu0 0
  %5084 = vmatprep.subr.bf16.mxu0 0
  %5085 = vmatpush1.bf16.msra.mxu0 0
  %5086 = vmatprep.mubr.bf16.mxu0 0
  %5087 = vmatmul.mubr.bf16.gmra.mrb[0].mxu0 %v4587
  %v5088 = vpop.f32.mrb[0].mxu0
  %v5089 = vadd.f32 0.0, %v5088
  %v5090 = vpop.f32.mrb[0].mxu0
  %v5091 = vadd.f32 0.0, %v5090
  %v5092 = vpop.f32.mrb[0].mxu0
  %v5093 = vpop.f32.mrb[0].mxu0
  %5094 = vdwg.mxu0
  %5095 = vmatprep.subr.bf16.mxu0 %v4851
  %5096 = vmatpush1.bf16.msra.mxu0 %v4850
  %5097 = vmatprep.subr.bf16.mxu0 %v4859
  %5098 = vmatpush1.bf16.msra.mxu0 %v4858
  %5099 = vmatprep.subr.bf16.mxu0 %v4867
  %5100 = vmatpush1.bf16.msra.mxu0 %v4866
  %5101 = vmatprep.subr.bf16.mxu0 %v4875
  %5102 = vmatpush1.bf16.msra.mxu0 %v4874
  %5103 = vmatprep.subr.bf16.mxu0 %v4883
  %5104 = vmatpush1.bf16.msra.mxu0 %v4882
  %5105 = vmatprep.subr.bf16.mxu0 %v4891
  %5106 = vmatpush1.bf16.msra.mxu0 %v4890
  %5107 = vmatprep.subr.bf16.mxu0 %v4899
  %5108 = vmatpush1.bf16.msra.mxu0 %v4898
  %5109 = vmatprep.subr.bf16.mxu0 %v4907
  %5110 = vmatpush1.bf16.msra.mxu0 %v4906
  %5111 = vmatprep.subr.bf16.mxu0 0
  %5112 = vmatpush1.bf16.msra.mxu0 0
  %5113 = vmatprep.subr.bf16.mxu0 0
  %5114 = vmatpush1.bf16.msra.mxu0 0
  %5115 = vmatprep.subr.bf16.mxu0 0
  %5116 = vmatpush1.bf16.msra.mxu0 0
  %5117 = vmatprep.subr.bf16.mxu0 0
  %5118 = vmatpush1.bf16.msra.mxu0 0
  %5119 = vmatprep.subr.bf16.mxu0 0
  %5120 = vmatpush1.bf16.msra.mxu0 0
  %5121 = vmatprep.subr.bf16.mxu0 0
  %5122 = vmatpush1.bf16.msra.mxu0 0
  %5123 = vmatprep.subr.bf16.mxu0 0
  %5124 = vmatpush1.bf16.msra.mxu0 0
  %5125 = vmatprep.subr.bf16.mxu0 0
  %5126 = vmatpush1.bf16.msra.mxu0 0
  %5127 = vmatprep.mubr.bf16.mxu0 0
  %5128 = vmatmul.mubr.bf16.gmra.mrb[0].mxu0 %v4587
  %v5129 = vpop.f32.mrb[0].mxu0
  %v5130 = vadd.f32 0.0, %v5129
  %v5131 = vpop.f32.mrb[0].mxu0
  %v5132 = vadd.f32 0.0, %v5131
  %v5133 = vpop.f32.mrb[0].mxu0
  %v5134 = vpop.f32.mrb[0].mxu0
  %5135 = vdwg.mxu0
  %v5136 = vmax.f32 %v5007, %v5089
  %v5137 = vmax.f32 %v5009, %v5091
  %v5138 = vmax.f32 %v5048, %v5130
  %v5139 = vmax.f32 %v5050, %v5132
  %v5140 = vld [vmem:[%s2] sm:$0xf]
  %v5142 = vlaneseq
  %v5143 = vshrl.u32 %v5142, 7
  %v5144 = vsub.s32 0, %v5143
  %v5145 = vrot.slane %v5140, %v5144
  %v5146 = vlaneseq
  %v5147 = vshrl.u32 %v5146, 7
  %v5148 = vsub.s32 1, %v5147
  %v5149 = vrot.slane %v5140, %v5148
  %v5150 = vlaneseq
  %v5151 = vshrl.u32 %v5150, 7
  %v5152 = vsub.s32 2, %v5151
  %v5153 = vrot.slane %v5140, %v5152
  %v5154 = vlaneseq
  %v5155 = vshrl.u32 %v5154, 7
  %v5156 = vsub.s32 3, %v5155
  %v5157 = vrot.slane %v5140, %v5156
  %v5162 = vadd.f32 %v5136, %v5145
  %v5163 = vadd.f32 %v5137, %v5149
  %v5164 = vadd.f32 %v5138, %v5153
  %v5165 = vadd.f32 %v5139, %v5157
  %v5166 = vmax.f32 %v5162, 0.0
  %v5167 = vmax.f32 %v5163, 0.0
  %v5168 = vmax.f32 %v5164, 0.0
  %v5169 = vmax.f32 %v5165, 0.0
  %v5170 = vmax.f32 %v5166, %v5168
  %v5171 = vmax.f32 %v5167, %v5169
  %v5172 = vld [vmem:[#allocation2] sm:$0xff]
  %v5173 = vpack.c.bf16 %v5170, %v5170
  %v5174 = vpack.c.bf16 %v5171, %v5171
  %s5175 = scalar_lea.vmem %s3, 768
  %v5176 = vld [vmem:[%s5175] sm:$0xf]
  %v5177 = vld [vmem:[%s5175 + $0x4] sm:$0xf]
  %v5178 = vld [vmem:[%s5175 + $0x8] sm:$0xf]
  %v5179 = vld [vmem:[%s5175 + $0xc] sm:$0xf]
  %v5180 = vld [vmem:[%s5175 + $0x10] sm:$0xf]
  %v5181 = vld [vmem:[%s5175 + $0x14] sm:$0xf]
  %v5182 = vld [vmem:[%s5175 + $0x18] sm:$0xf]
  %v5183 = vld [vmem:[%s5175 + $0x1c] sm:$0xf]
  %v5184 = vld [vmem:[%s5175 + $0x20] sm:$0xf]
  %v5185 = vld [vmem:[%s5175 + $0x24] sm:$0xf]
  %v5186 = vld [vmem:[%s5175 + $0x28] sm:$0xf]
  %v5187 = vld [vmem:[%s5175 + $0x2c] sm:$0xf]
  %v5188 = vld [vmem:[%s5175 + $0x30] sm:$0xf]
  %v5189 = vld [vmem:[%s5175 + $0x34] sm:$0xf]
  %v5190 = vld [vmem:[%s5175 + $0x38] sm:$0xf]
  %v5191 = vld [vmem:[%s5175 + $0x3c] sm:$0xf]
  %v5192 = vld [vmem:[%s5175 + $0x40] sm:$0xf]
  %v5193 = vld [vmem:[%s5175 + $0x44] sm:$0xf]
  %v5194 = vld [vmem:[%s5175 + $0x48] sm:$0xf]
  %v5195 = vld [vmem:[%s5175 + $0x4c] sm:$0xf]
  %v5196 = vld [vmem:[%s5175 + $0x50] sm:$0xf]
  %v5197 = vld [vmem:[%s5175 + $0x54] sm:$0xf]
  %v5198 = vld [vmem:[%s5175 + $0x58] sm:$0xf]
  %v5199 = vld [vmem:[%s5175 + $0x5c] sm:$0xf]
  %v5200 = vld [vmem:[%s5175 + $0x60] sm:$0xf]
  %v5201 = vld [vmem:[%s5175 + $0x64] sm:$0xf]
  %v5202 = vld [vmem:[%s5175 + $0x68] sm:$0xf]
  %v5203 = vld [vmem:[%s5175 + $0x6c] sm:$0xf]
  %v5204 = vld [vmem:[%s5175 + $0x70] sm:$0xf]
  %v5205 = vld [vmem:[%s5175 + $0x74] sm:$0xf]
  %v5206 = vld [vmem:[%s5175 + $0x78] sm:$0xf]
  %v5207 = vld [vmem:[%s5175 + $0x7c] sm:$0xf]
  %v5240 = vunpack.c.l.b16 %v5176
  %v5241 = vunpack.c.l.b16 %v5177
  %v5242 = vunpack.c.l.b16 %v5178
  %v5243 = vunpack.c.l.b16 %v5179
  %v5244 = vunpack.c.l.b16 %v5180
  %v5245 = vunpack.c.l.b16 %v5181
  %v5246 = vunpack.c.l.b16 %v5182
  %v5247 = vunpack.c.l.b16 %v5183
  %v5248 = vunpack.c.l.b16 %v5184
  %v5249 = vunpack.c.l.b16 %v5185
  %v5250 = vunpack.c.l.b16 %v5186
  %v5251 = vunpack.c.l.b16 %v5187
  %v5252 = vunpack.c.l.b16 %v5188
  %v5253 = vunpack.c.l.b16 %v5189
  %v5254 = vunpack.c.l.b16 %v5190
  %v5255 = vunpack.c.l.b16 %v5191
  %v5256 = vunpack.c.l.b16 %v5192
  %v5257 = vunpack.c.l.b16 %v5193
  %v5258 = vunpack.c.l.b16 %v5194
  %v5259 = vunpack.c.l.b16 %v5195
  %v5260 = vunpack.c.l.b16 %v5196
  %v5261 = vunpack.c.l.b16 %v5197
  %v5262 = vunpack.c.l.b16 %v5198
  %v5263 = vunpack.c.l.b16 %v5199
  %v5264 = vunpack.c.l.b16 %v5200
  %v5265 = vunpack.c.l.b16 %v5201
  %v5266 = vunpack.c.l.b16 %v5202
  %v5267 = vunpack.c.l.b16 %v5203
  %v5268 = vunpack.c.l.b16 %v5204
  %v5269 = vunpack.c.l.b16 %v5205
  %v5270 = vunpack.c.l.b16 %v5206
  %v5271 = vunpack.c.l.b16 %v5207
  %v5272 = vpack.c.b16 %v5241, %v5240
  %v5273 = vpack.c.b16 %v5243, %v5242
  %v5274 = vpack.c.b16 %v5245, %v5244
  %v5275 = vpack.c.b16 %v5247, %v5246
  %v5276 = vpack.c.b16 %v5249, %v5248
  %v5277 = vpack.c.b16 %v5251, %v5250
  %v5278 = vpack.c.b16 %v5253, %v5252
  %v5279 = vpack.c.b16 %v5255, %v5254
  %v5280 = vpack.c.b16 %v5257, %v5256
  %v5281 = vpack.c.b16 %v5259, %v5258
  %v5282 = vpack.c.b16 %v5261, %v5260
  %v5283 = vpack.c.b16 %v5263, %v5262
  %v5284 = vpack.c.b16 %v5265, %v5264
  %v5285 = vpack.c.b16 %v5267, %v5266
  %v5286 = vpack.c.b16 %v5269, %v5268
  %v5287 = vpack.c.b16 %v5271, %v5270
  %5304 = vmatprep.subr.bf16.mxu0 0
  %5305 = vmatpush1.bf16.msra.mxu0 %v5272
  %5306 = vmatprep.subr.bf16.mxu0 0
  %5307 = vmatpush1.bf16.msra.mxu0 %v5273
  %5308 = vmatprep.subr.bf16.mxu0 0
  %5309 = vmatpush1.bf16.msra.mxu0 %v5274
  %5310 = vmatprep.subr.bf16.mxu0 0
  %5311 = vmatpush1.bf16.msra.mxu0 %v5275
  %5312 = vmatprep.subr.bf16.mxu0 0
  %5313 = vmatpush1.bf16.msra.mxu0 %v5276
  %5314 = vmatprep.subr.bf16.mxu0 0
  %5315 = vmatpush1.bf16.msra.mxu0 %v5277
  %5316 = vmatprep.subr.bf16.mxu0 0
  %5317 = vmatpush1.bf16.msra.mxu0 %v5278
  %5318 = vmatprep.subr.bf16.mxu0 0
  %5319 = vmatpush1.bf16.msra.mxu0 %v5279
  %5320 = vmatprep.subr.bf16.mxu0 0
  %5321 = vmatpush1.bf16.msra.mxu0 %v5280
  %5322 = vmatprep.subr.bf16.mxu0 0
  %5323 = vmatpush1.bf16.msra.mxu0 %v5281
  %5324 = vmatprep.subr.bf16.mxu0 0
  %5325 = vmatpush1.bf16.msra.mxu0 %v5282
  %5326 = vmatprep.subr.bf16.mxu0 0
  %5327 = vmatpush1.bf16.msra.mxu0 %v5283
  %5328 = vmatprep.subr.bf16.mxu0 0
  %5329 = vmatpush1.bf16.msra.mxu0 %v5284
  %5330 = vmatprep.subr.bf16.mxu0 0
  %5331 = vmatpush1.bf16.msra.mxu0 %v5285
  %5332 = vmatprep.subr.bf16.mxu0 0
  %5333 = vmatpush1.bf16.msra.mxu0 %v5286
  %5334 = vmatprep.subr.bf16.mxu0 0
  %5335 = vmatpush1.bf16.msra.mxu0 %v5287
  %5336 = vmatprep.mubr.bf16.mxu0 %v5174
  %5337 = vmatmul.mubr.bf16.gmra.mrb[0].mxu0 %v5173
  %v5338 = vpop.f32.mrb[0].mxu0
  %v5339 = vadd.f32 0.0, %v5338
  %v5340 = vpop.f32.mrb[0].mxu0
  %v5341 = vpop.f32.mrb[0].mxu0
  %v5342 = vpop.f32.mrb[0].mxu0
  %5343 = vdwg.mxu0
  %v5344 = vadd.f32 %v5172, %v5339
  %5345 = vst [vmem:[#allocation2] sm:$0xff] %v5344
  %s5346 = scalar_lea.vmem %s0, 28
  %v5347 = vld [vmem:[%s5346] sm:$0xf]
  %v5348 = vld [vmem:[%s1] sm:$0xff]
  %v5349 = vld [vmem:[%s1 + $0x8] sm:$0xff]
  %v5350 = vld [vmem:[%s1 + $0x10] sm:$0xff]
  %v5351 = vld [vmem:[%s1 + $0x18] sm:$0xff]
  %v5352 = vld [vmem:[%s1 + $0x20] sm:$0xff]
  %v5353 = vld [vmem:[%s1 + $0x28] sm:$0xff]
  %v5354 = vld [vmem:[%s1 + $0x30] sm:$0xff]
  %v5355 = vld [vmem:[%s1 + $0x38] sm:$0xff]
  %v5356 = vld [vmem:[%s1 + $0x40] sm:$0xff]
  %v5357 = vld [vmem:[%s1 + $0x48] sm:$0xff]
  %v5358 = vld [vmem:[%s1 + $0x50] sm:$0xff]
  %v5359 = vld [vmem:[%s1 + $0x58] sm:$0xff]
  %v5360 = vld [vmem:[%s1 + $0x60] sm:$0xff]
  %v5361 = vld [vmem:[%s1 + $0x68] sm:$0xff]
  %v5362 = vld [vmem:[%s1 + $0x70] sm:$0xff]
  %v5363 = vld [vmem:[%s1 + $0x78] sm:$0xff]
  %v5364 = vld [vmem:[%s1 + $0x80] sm:$0xff]
  %v5365 = vld [vmem:[%s1 + $0x88] sm:$0xff]
  %v5366 = vld [vmem:[%s1 + $0x90] sm:$0xff]
  %v5367 = vld [vmem:[%s1 + $0x98] sm:$0xff]
  %v5368 = vld [vmem:[%s1 + $0xa0] sm:$0xff]
  %v5369 = vld [vmem:[%s1 + $0xa8] sm:$0xff]
  %v5370 = vld [vmem:[%s1 + $0xb0] sm:$0xff]
  %v5371 = vld [vmem:[%s1 + $0xb8] sm:$0xff]
  %v5372 = vld [vmem:[%s1 + $0xc0] sm:$0xff]
  %v5373 = vld [vmem:[%s1 + $0xc8] sm:$0xff]
  %v5374 = vld [vmem:[%s1 + $0xd0] sm:$0xff]
  %v5375 = vld [vmem:[%s1 + $0xd8] sm:$0xff]
  %v5376 = vld [vmem:[%s1 + $0xe0] sm:$0xff]
  %v5377 = vld [vmem:[%s1 + $0xe8] sm:$0xff]
  %v5378 = vld [vmem:[%s1 + $0xf0] sm:$0xff]
  %v5379 = vld [vmem:[%s1 + $0xf8] sm:$0xff]
  %v5380 = vld [vmem:[%s1 + $0x100] sm:$0xff]
  %v5381 = vld [vmem:[%s1 + $0x108] sm:$0xff]
  %v5382 = vld [vmem:[%s1 + $0x110] sm:$0xff]
  %v5383 = vld [vmem:[%s1 + $0x118] sm:$0xff]
  %v5384 = vld [vmem:[%s1 + $0x120] sm:$0xff]
  %v5385 = vld [vmem:[%s1 + $0x128] sm:$0xff]
  %v5386 = vld [vmem:[%s1 + $0x130] sm:$0xff]
  %v5387 = vld [vmem:[%s1 + $0x138] sm:$0xff]
  %v5388 = vld [vmem:[%s1 + $0x140] sm:$0xff]
  %v5389 = vld [vmem:[%s1 + $0x148] sm:$0xff]
  %v5390 = vld [vmem:[%s1 + $0x150] sm:$0xff]
  %v5391 = vld [vmem:[%s1 + $0x158] sm:$0xff]
  %v5392 = vld [vmem:[%s1 + $0x160] sm:$0xff]
  %v5393 = vld [vmem:[%s1 + $0x168] sm:$0xff]
  %v5394 = vld [vmem:[%s1 + $0x170] sm:$0xff]
  %v5395 = vld [vmem:[%s1 + $0x178] sm:$0xff]
  %v5396 = vld [vmem:[%s1 + $0x180] sm:$0xff]
  %v5397 = vld [vmem:[%s1 + $0x188] sm:$0xff]
  %v5398 = vld [vmem:[%s1 + $0x190] sm:$0xff]
  %v5399 = vld [vmem:[%s1 + $0x198] sm:$0xff]
  %v5400 = vld [vmem:[%s1 + $0x1a0] sm:$0xff]
  %v5401 = vld [vmem:[%s1 + $0x1a8] sm:$0xff]
  %v5402 = vld [vmem:[%s1 + $0x1b0] sm:$0xff]
  %v5403 = vld [vmem:[%s1 + $0x1b8] sm:$0xff]
  %v5404 = vld [vmem:[%s1 + $0x1c0] sm:$0xff]
  %v5405 = vld [vmem:[%s1 + $0x1c8] sm:$0xff]
  %v5406 = vld [vmem:[%s1 + $0x1d0] sm:$0xff]
  %v5407 = vld [vmem:[%s1 + $0x1d8] sm:$0xff]
  %v5408 = vld [vmem:[%s1 + $0x1e0] sm:$0xff]
  %v5409 = vld [vmem:[%s1 + $0x1e8] sm:$0xff]
  %v5410 = vld [vmem:[%s1 + $0x1f0] sm:$0xff]
  %v5411 = vld [vmem:[%s1 + $0x1f8] sm:$0xff]
  %v5476 = vunpack.c.l.b16 %v5348
  %v5477 = vunpack.c.h.b16 %v5348
  %v5478 = vunpack.c.l.b16 %v5349
  %v5479 = vunpack.c.h.b16 %v5349
  %v5480 = vunpack.c.l.b16 %v5350
  %v5481 = vunpack.c.h.b16 %v5350
  %v5482 = vunpack.c.l.b16 %v5351
  %v5483 = vunpack.c.h.b16 %v5351
  %v5484 = vunpack.c.l.b16 %v5352
  %v5485 = vunpack.c.h.b16 %v5352
  %v5486 = vunpack.c.l.b16 %v5353
  %v5487 = vunpack.c.h.b16 %v5353
  %v5488 = vunpack.c.l.b16 %v5354
  %v5489 = vunpack.c.h.b16 %v5354
  %v5490 = vunpack.c.l.b16 %v5355
  %v5491 = vunpack.c.h.b16 %v5355
  %v5492 = vunpack.c.l.b16 %v5356
  %v5493 = vunpack.c.h.b16 %v5356
  %v5494 = vunpack.c.l.b16 %v5357
  %v5495 = vunpack.c.h.b16 %v5357
  %v5496 = vunpack.c.l.b16 %v5358
  %v5497 = vunpack.c.h.b16 %v5358
  %v5498 = vunpack.c.l.b16 %v5359
  %v5499 = vunpack.c.h.b16 %v5359
  %v5500 = vunpack.c.l.b16 %v5360
  %v5501 = vunpack.c.h.b16 %v5360
  %v5502 = vunpack.c.l.b16 %v5361
  %v5503 = vunpack.c.h.b16 %v5361
  %v5504 = vunpack.c.l.b16 %v5362
  %v5505 = vunpack.c.h.b16 %v5362
  %v5506 = vunpack.c.l.b16 %v5363
  %v5507 = vunpack.c.h.b16 %v5363
  %v5508 = vunpack.c.l.b16 %v5364
  %v5509 = vunpack.c.h.b16 %v5364
  %v5510 = vunpack.c.l.b16 %v5365
  %v5511 = vunpack.c.h.b16 %v5365
  %v5512 = vunpack.c.l.b16 %v5366
  %v5513 = vunpack.c.h.b16 %v5366
  %v5514 = vunpack.c.l.b16 %v5367
  %v5515 = vunpack.c.h.b16 %v5367
  %v5516 = vunpack.c.l.b16 %v5368
  %v5517 = vunpack.c.h.b16 %v5368
  %v5518 = vunpack.c.l.b16 %v5369
  %v5519 = vunpack.c.h.b16 %v5369
  %v5520 = vunpack.c.l.b16 %v5370
  %v5521 = vunpack.c.h.b16 %v5370
  %v5522 = vunpack.c.l.b16 %v5371
  %v5523 = vunpack.c.h.b16 %v5371
  %v5524 = vunpack.c.l.b16 %v5372
  %v5525 = vunpack.c.h.b16 %v5372
  %v5526 = vunpack.c.l.b16 %v5373
  %v5527 = vunpack.c.h.b16 %v5373
  %v5528 = vunpack.c.l.b16 %v5374
  %v5529 = vunpack.c.h.b16 %v5374
  %v5530 = vunpack.c.l.b16 %v5375
  %v5531 = vunpack.c.h.b16 %v5375
  %v5532 = vunpack.c.l.b16 %v5376
  %v5533 = vunpack.c.h.b16 %v5376
  %v5534 = vunpack.c.l.b16 %v5377
  %v5535 = vunpack.c.h.b16 %v5377
  %v5536 = vunpack.c.l.b16 %v5378
  %v5537 = vunpack.c.h.b16 %v5378
  %v5538 = vunpack.c.l.b16 %v5379
  %v5539 = vunpack.c.h.b16 %v5379
  %v5540 = vunpack.c.l.b16 %v5380
  %v5541 = vunpack.c.h.b16 %v5380
  %v5542 = vunpack.c.l.b16 %v5381
  %v5543 = vunpack.c.h.b16 %v5381
  %v5544 = vunpack.c.l.b16 %v5382
  %v5545 = vunpack.c.h.b16 %v5382
  %v5546 = vunpack.c.l.b16 %v5383
  %v5547 = vunpack.c.h.b16 %v5383
  %v5548 = vunpack.c.l.b16 %v5384
  %v5549 = vunpack.c.h.b16 %v5384
  %v5550 = vunpack.c.l.b16 %v5385
  %v5551 = vunpack.c.h.b16 %v5385
  %v5552 = vunpack.c.l.b16 %v5386
  %v5553 = vunpack.c.h.b16 %v5386
  %v5554 = vunpack.c.l.b16 %v5387
  %v5555 = vunpack.c.h.b16 %v5387
  %v5556 = vunpack.c.l.b16 %v5388
  %v5557 = vunpack.c.h.b16 %v5388
  %v5558 = vunpack.c.l.b16 %v5389
  %v5559 = vunpack.c.h.b16 %v5389
  %v5560 = vunpack.c.l.b16 %v5390
  %v5561 = vunpack.c.h.b16 %v5390
  %v5562 = vunpack.c.l.b16 %v5391
  %v5563 = vunpack.c.h.b16 %v5391
  %v5564 = vunpack.c.l.b16 %v5392
  %v5565 = vunpack.c.h.b16 %v5392
  %v5566 = vunpack.c.l.b16 %v5393
  %v5567 = vunpack.c.h.b16 %v5393
  %v5568 = vunpack.c.l.b16 %v5394
  %v5569 = vunpack.c.h.b16 %v5394
  %v5570 = vunpack.c.l.b16 %v5395
  %v5571 = vunpack.c.h.b16 %v5395
  %v5572 = vunpack.c.l.b16 %v5396
  %v5573 = vunpack.c.h.b16 %v5396
  %v5574 = vunpack.c.l.b16 %v5397
  %v5575 = vunpack.c.h.b16 %v5397
  %v5576 = vunpack.c.l.b16 %v5398
  %v5577 = vunpack.c.h.b16 %v5398
  %v5578 = vunpack.c.l.b16 %v5399
  %v5579 = vunpack.c.h.b16 %v5399
  %v5580 = vunpack.c.l.b16 %v5400
  %v5581 = vunpack.c.h.b16 %v5400
  %v5582 = vunpack.c.l.b16 %v5401
  %v5583 = vunpack.c.h.b16 %v5401
  %v5584 = vunpack.c.l.b16 %v5402
  %v5585 = vunpack.c.h.b16 %v5402
  %v5586 = vunpack.c.l.b16 %v5403
  %v5587 = vunpack.c.h.b16 %v5403
  %v5588 = vunpack.c.l.b16 %v5404
  %v5589 = vunpack.c.h.b16 %v5404
  %v5590 = vunpack.c.l.b16 %v5405
  %v5591 = vunpack.c.h.b16 %v5405
  %v5592 = vunpack.c.l.b16 %v5406
  %v5593 = vunpack.c.h.b16 %v5406
  %v5594 = vunpack.c.l.b16 %v5407
  %v5595 = vunpack.c.h.b16 %v5407
  %v5596 = vunpack.c.l.b16 %v5408
  %v5597 = vunpack.c.h.b16 %v5408
  %v5598 = vunpack.c.l.b16 %v5409
  %v5599 = vunpack.c.h.b16 %v5409
  %v5600 = vunpack.c.l.b16 %v5410
  %v5601 = vunpack.c.h.b16 %v5410
  %v5602 = vunpack.c.l.b16 %v5411
  %v5603 = vunpack.c.h.b16 %v5411
  %v5604 = vpack.c.b16 %v5484, %v5476
  %v5605 = vpack.c.b16 %v5485, %v5477
  %v5606 = vpack.c.b16 %v5486, %v5478
  %v5607 = vpack.c.b16 %v5487, %v5479
  %v5608 = vpack.c.b16 %v5488, %v5480
  %v5609 = vpack.c.b16 %v5489, %v5481
  %v5610 = vpack.c.b16 %v5490, %v5482
  %v5611 = vpack.c.b16 %v5491, %v5483
  %v5612 = vpack.c.b16 %v5500, %v5492
  %v5613 = vpack.c.b16 %v5501, %v5493
  %v5614 = vpack.c.b16 %v5502, %v5494
  %v5615 = vpack.c.b16 %v5503, %v5495
  %v5616 = vpack.c.b16 %v5504, %v5496
  %v5617 = vpack.c.b16 %v5505, %v5497
  %v5618 = vpack.c.b16 %v5506, %v5498
  %v5619 = vpack.c.b16 %v5507, %v5499
  %v5620 = vpack.c.b16 %v5516, %v5508
  %v5621 = vpack.c.b16 %v5517, %v5509
  %v5622 = vpack.c.b16 %v5518, %v5510
  %v5623 = vpack.c.b16 %v5519, %v5511
  %v5624 = vpack.c.b16 %v5520, %v5512
  %v5625 = vpack.c.b16 %v5521, %v5513
  %v5626 = vpack.c.b16 %v5522, %v5514
  %v5627 = vpack.c.b16 %v5523, %v5515
  %v5628 = vpack.c.b16 %v5532, %v5524
  %v5629 = vpack.c.b16 %v5533, %v5525
  %v5630 = vpack.c.b16 %v5534, %v5526
  %v5631 = vpack.c.b16 %v5535, %v5527
  %v5632 = vpack.c.b16 %v5536, %v5528
  %v5633 = vpack.c.b16 %v5537, %v5529
  %v5634 = vpack.c.b16 %v5538, %v5530
  %v5635 = vpack.c.b16 %v5539, %v5531
  %v5636 = vpack.c.b16 %v5548, %v5540
  %v5637 = vpack.c.b16 %v5549, %v5541
  %v5638 = vpack.c.b16 %v5550, %v5542
  %v5639 = vpack.c.b16 %v5551, %v5543
  %v5640 = vpack.c.b16 %v5552, %v5544
  %v5641 = vpack.c.b16 %v5553, %v5545
  %v5642 = vpack.c.b16 %v5554, %v5546
  %v5643 = vpack.c.b16 %v5555, %v5547
  %v5644 = vpack.c.b16 %v5564, %v5556
  %v5645 = vpack.c.b16 %v5565, %v5557
  %v5646 = vpack.c.b16 %v5566, %v5558
  %v5647 = vpack.c.b16 %v5567, %v5559
  %v5648 = vpack.c.b16 %v5568, %v5560
  %v5649 = vpack.c.b16 %v5569, %v5561
  %v5650 = vpack.c.b16 %v5570, %v5562
  %v5651 = vpack.c.b16 %v5571, %v5563
  %v5652 = vpack.c.b16 %v5580, %v5572
  %v5653 = vpack.c.b16 %v5581, %v5573
  %v5654 = vpack.c.b16 %v5582, %v5574
  %v5655 = vpack.c.b16 %v5583, %v5575
  %v5656 = vpack.c.b16 %v5584, %v5576
  %v5657 = vpack.c.b16 %v5585, %v5577
  %v5658 = vpack.c.b16 %v5586, %v5578
  %v5659 = vpack.c.b16 %v5587, %v5579
  %v5660 = vpack.c.b16 %v5596, %v5588
  %v5661 = vpack.c.b16 %v5597, %v5589
  %v5662 = vpack.c.b16 %v5598, %v5590
  %v5663 = vpack.c.b16 %v5599, %v5591
  %v5664 = vpack.c.b16 %v5600, %v5592
  %v5665 = vpack.c.b16 %v5601, %v5593
  %v5666 = vpack.c.b16 %v5602, %v5594
  %v5667 = vpack.c.b16 %v5603, %v5595
  %5732 = vmatprep.subr.bf16.mxu0 %v5605
  %5733 = vmatpush1.bf16.msra.mxu0 %v5604
  %5734 = vmatprep.subr.bf16.mxu0 %v5613
  %5735 = vmatpush1.bf16.msra.mxu0 %v5612
  %5736 = vmatprep.subr.bf16.mxu0 %v5621
  %5737 = vmatpush1.bf16.msra.mxu0 %v5620
  %5738 = vmatprep.subr.bf16.mxu0 %v5629
  %5739 = vmatpush1.bf16.msra.mxu0 %v5628
  %5740 = vmatprep.subr.bf16.mxu0 %v5637
  %5741 = vmatpush1.bf16.msra.mxu0 %v5636
  %5742 = vmatprep.subr.bf16.mxu0 %v5645
  %5743 = vmatpush1.bf16.msra.mxu0 %v5644
  %5744 = vmatprep.subr.bf16.mxu0 %v5653
  %5745 = vmatpush1.bf16.msra.mxu0 %v5652
  %5746 = vmatprep.subr.bf16.mxu0 %v5661
  %5747 = vmatpush1.bf16.msra.mxu0 %v5660
  %5748 = vmatprep.subr.bf16.mxu0 0
  %5749 = vmatpush1.bf16.msra.mxu0 0
  %5750 = vmatprep.subr.bf16.mxu0 0
  %5751 = vmatpush1.bf16.msra.mxu0 0
  %5752 = vmatprep.subr.bf16.mxu0 0
  %5753 = vmatpush1.bf16.msra.mxu0 0
  %5754 = vmatprep.subr.bf16.mxu0 0
  %5755 = vmatpush1.bf16.msra.mxu0 0
  %5756 = vmatprep.subr.bf16.mxu0 0
  %5757 = vmatpush1.bf16.msra.mxu0 0
  %5758 = vmatprep.subr.bf16.mxu0 0
  %5759 = vmatpush1.bf16.msra.mxu0 0
  %5760 = vmatprep.subr.bf16.mxu0 0
  %5761 = vmatpush1.bf16.msra.mxu0 0
  %5762 = vmatprep.subr.bf16.mxu0 0
  %5763 = vmatpush1.bf16.msra.mxu0 0
  %5764 = vmatprep.mubr.bf16.mxu0 0
  %5765 = vmatmul.mubr.bf16.gmra.mrb[0].mxu0 %v5347
  %v5766 = vpop.f32.mrb[0].mxu0
  %v5767 = vadd.f32 0.0, %v5766
  %v5768 = vpop.f32.mrb[0].mxu0
  %v5769 = vadd.f32 0.0, %v5768
  %v5770 = vpop.f32.mrb[0].mxu0
  %v5771 = vpop.f32.mrb[0].mxu0
  %5772 = vdwg.mxu0
  %5773 = vmatprep.subr.bf16.mxu0 %v5607
  %5774 = vmatpush1.bf16.msra.mxu0 %v5606
  %5775 = vmatprep.subr.bf16.mxu0 %v5615
  %5776 = vmatpush1.bf16.msra.mxu0 %v5614
  %5777 = vmatprep.subr.bf16.mxu0 %v5623
  %5778 = vmatpush1.bf16.msra.mxu0 %v5622
  %5779 = vmatprep.subr.bf16.mxu0 %v5631
  %5780 = vmatpush1.bf16.msra.mxu0 %v5630
  %5781 = vmatprep.subr.bf16.mxu0 %v5639
  %5782 = vmatpush1.bf16.msra.mxu0 %v5638
  %5783 = vmatprep.subr.bf16.mxu0 %v5647
  %5784 = vmatpush1.bf16.msra.mxu0 %v5646
  %5785 = vmatprep.subr.bf16.mxu0 %v5655
  %5786 = vmatpush1.bf16.msra.mxu0 %v5654
  %5787 = vmatprep.subr.bf16.mxu0 %v5663
  %5788 = vmatpush1.bf16.msra.mxu0 %v5662
  %5789 = vmatprep.subr.bf16.mxu0 0
  %5790 = vmatpush1.bf16.msra.mxu0 0
  %5791 = vmatprep.subr.bf16.mxu0 0
  %5792 = vmatpush1.bf16.msra.mxu0 0
  %5793 = vmatprep.subr.bf16.mxu0 0
  %5794 = vmatpush1.bf16.msra.mxu0 0
  %5795 = vmatprep.subr.bf16.mxu0 0
  %5796 = vmatpush1.bf16.msra.mxu0 0
  %5797 = vmatprep.subr.bf16.mxu0 0
  %5798 = vmatpush1.bf16.msra.mxu0 0
  %5799 = vmatprep.subr.bf16.mxu0 0
  %5800 = vmatpush1.bf16.msra.mxu0 0
  %5801 = vmatprep.subr.bf16.mxu0 0
  %5802 = vmatpush1.bf16.msra.mxu0 0
  %5803 = vmatprep.subr.bf16.mxu0 0
  %5804 = vmatpush1.bf16.msra.mxu0 0
  %5805 = vmatprep.mubr.bf16.mxu0 0
  %5806 = vmatmul.mubr.bf16.gmra.mrb[0].mxu0 %v5347
  %v5807 = vpop.f32.mrb[0].mxu0
  %v5808 = vadd.f32 0.0, %v5807
  %v5809 = vpop.f32.mrb[0].mxu0
  %v5810 = vadd.f32 0.0, %v5809
  %v5811 = vpop.f32.mrb[0].mxu0
  %v5812 = vpop.f32.mrb[0].mxu0
  %5813 = vdwg.mxu0
  %5814 = vmatprep.subr.bf16.mxu0 %v5609
  %5815 = vmatpush1.bf16.msra.mxu0 %v5608
  %5816 = vmatprep.subr.bf16.mxu0 %v5617
  %5817 = vmatpush1.bf16.msra.mxu0 %v5616
  %5818 = vmatprep.subr.bf16.mxu0 %v5625
  %5819 = vmatpush1.bf16.msra.mxu0 %v5624
  %5820 = vmatprep.subr.bf16.mxu0 %v5633
  %5821 = vmatpush1.bf16.msra.mxu0 %v5632
  %5822 = vmatprep.subr.bf16.mxu0 %v5641
  %5823 = vmatpush1.bf16.msra.mxu0 %v5640
  %5824 = vmatprep.subr.bf16.mxu0 %v5649
  %5825 = vmatpush1.bf16.msra.mxu0 %v5648
  %5826 = vmatprep.subr.bf16.mxu0 %v5657
  %5827 = vmatpush1.bf16.msra.mxu0 %v5656
  %5828 = vmatprep.subr.bf16.mxu0 %v5665
  %5829 = vmatpush1.bf16.msra.mxu0 %v5664
  %5830 = vmatprep.subr.bf16.mxu0 0
  %5831 = vmatpush1.bf16.msra.mxu0 0
  %5832 = vmatprep.subr.bf16.mxu0 0
  %5833 = vmatpush1.bf16.msra.mxu0 0
  %5834 = vmatprep.subr.bf16.mxu0 0
  %5835 = vmatpush1.bf16.msra.mxu0 0
  %5836 = vmatprep.subr.bf16.mxu0 0
  %5837 = vmatpush1.bf16.msra.mxu0 0
  %5838 = vmatprep.subr.bf16.mxu0 0
  %5839 = vmatpush1.bf16.msra.mxu0 0
  %5840 = vmatprep.subr.bf16.mxu0 0
  %5841 = vmatpush1.bf16.msra.mxu0 0
  %5842 = vmatprep.subr.bf16.mxu0 0
  %5843 = vmatpush1.bf16.msra.mxu0 0
  %5844 = vmatprep.subr.bf16.mxu0 0
  %5845 = vmatpush1.bf16.msra.mxu0 0
  %5846 = vmatprep.mubr.bf16.mxu0 0
  %5847 = vmatmul.mubr.bf16.gmra.mrb[0].mxu0 %v5347
  %v5848 = vpop.f32.mrb[0].mxu0
  %v5849 = vadd.f32 0.0, %v5848
  %v5850 = vpop.f32.mrb[0].mxu0
  %v5851 = vadd.f32 0.0, %v5850
  %v5852 = vpop.f32.mrb[0].mxu0
  %v5853 = vpop.f32.mrb[0].mxu0
  %5854 = vdwg.mxu0
  %5855 = vmatprep.subr.bf16.mxu0 %v5611
  %5856 = vmatpush1.bf16.msra.mxu0 %v5610
  %5857 = vmatprep.subr.bf16.mxu0 %v5619
  %5858 = vmatpush1.bf16.msra.mxu0 %v5618
  %5859 = vmatprep.subr.bf16.mxu0 %v5627
  %5860 = vmatpush1.bf16.msra.mxu0 %v5626
  %5861 = vmatprep.subr.bf16.mxu0 %v5635
  %5862 = vmatpush1.bf16.msra.mxu0 %v5634
  %5863 = vmatprep.subr.bf16.mxu0 %v5643
  %5864 = vmatpush1.bf16.msra.mxu0 %v5642
  %5865 = vmatprep.subr.bf16.mxu0 %v5651
  %5866 = vmatpush1.bf16.msra.mxu0 %v5650
  %5867 = vmatprep.subr.bf16.mxu0 %v5659
  %5868 = vmatpush1.bf16.msra.mxu0 %v5658
  %5869 = vmatprep.subr.bf16.mxu0 %v5667
  %5870 = vmatpush1.bf16.msra.mxu0 %v5666
  %5871 = vmatprep.subr.bf16.mxu0 0
  %5872 = vmatpush1.bf16.msra.mxu0 0
  %5873 = vmatprep.subr.bf16.mxu0 0
  %5874 = vmatpush1.bf16.msra.mxu0 0
  %5875 = vmatprep.subr.bf16.mxu0 0
  %5876 = vmatpush1.bf16.msra.mxu0 0
  %5877 = vmatprep.subr.bf16.mxu0 0
  %5878 = vmatpush1.bf16.msra.mxu0 0
  %5879 = vmatprep.subr.bf16.mxu0 0
  %5880 = vmatpush1.bf16.msra.mxu0 0
  %5881 = vmatprep.subr.bf16.mxu0 0
  %5882 = vmatpush1.bf16.msra.mxu0 0
  %5883 = vmatprep.subr.bf16.mxu0 0
  %5884 = vmatpush1.bf16.msra.mxu0 0
  %5885 = vmatprep.subr.bf16.mxu0 0
  %5886 = vmatpush1.bf16.msra.mxu0 0
  %5887 = vmatprep.mubr.bf16.mxu0 0
  %5888 = vmatmul.mubr.bf16.gmra.mrb[0].mxu0 %v5347
  %v5889 = vpop.f32.mrb[0].mxu0
  %v5890 = vadd.f32 0.0, %v5889
  %v5891 = vpop.f32.mrb[0].mxu0
  %v5892 = vadd.f32 0.0, %v5891
  %v5893 = vpop.f32.mrb[0].mxu0
  %v5894 = vpop.f32.mrb[0].mxu0
  %5895 = vdwg.mxu0
  %v5896 = vmax.f32 %v5767, %v5849
  %v5897 = vmax.f32 %v5769, %v5851
  %v5898 = vmax.f32 %v5808, %v5890
  %v5899 = vmax.f32 %v5810, %v5892
  %v5900 = vld [vmem:[%s2] sm:$0xf]
  %v5902 = vlaneseq
  %v5903 = vshrl.u32 %v5902, 7
  %v5904 = vsub.s32 0, %v5903
  %v5905 = vrot.slane %v5900, %v5904
  %v5906 = vlaneseq
  %v5907 = vshrl.u32 %v5906, 7
  %v5908 = vsub.s32 1, %v5907
  %v5909 = vrot.slane %v5900, %v5908
  %v5910 = vlaneseq
  %v5911 = vshrl.u32 %v5910, 7
  %v5912 = vsub.s32 2, %v5911
  %v5913 = vrot.slane %v5900, %v5912
  %v5914 = vlaneseq
  %v5915 = vshrl.u32 %v5914, 7
  %v5916 = vsub.s32 3, %v5915
  %v5917 = vrot.slane %v5900, %v5916
  %v5922 = vadd.f32 %v5896, %v5905
  %v5923 = vadd.f32 %v5897, %v5909
  %v5924 = vadd.f32 %v5898, %v5913
  %v5925 = vadd.f32 %v5899, %v5917
  %v5926 = vmax.f32 %v5922, 0.0
  %v5927 = vmax.f32 %v5923, 0.0
  %v5928 = vmax.f32 %v5924, 0.0
  %v5929 = vmax.f32 %v5925, 0.0
  %v5930 = vmax.f32 %v5926, %v5928
  %v5931 = vmax.f32 %v5927, %v5929
  %v5932 = vld [vmem:[#allocation2] sm:$0xff]
  %v5933 = vpack.c.bf16 %v5930, %v5930
  %v5934 = vpack.c.bf16 %v5931, %v5931
  %s5935 = scalar_lea.vmem %s3, 896
  %v5936 = vld [vmem:[%s5935] sm:$0xf]
  %v5937 = vld [vmem:[%s5935 + $0x4] sm:$0xf]
  %v5938 = vld [vmem:[%s5935 + $0x8] sm:$0xf]
  %v5939 = vld [vmem:[%s5935 + $0xc] sm:$0xf]
  %v5940 = vld [vmem:[%s5935 + $0x10] sm:$0xf]
  %v5941 = vld [vmem:[%s5935 + $0x14] sm:$0xf]
  %v5942 = vld [vmem:[%s5935 + $0x18] sm:$0xf]
  %v5943 = vld [vmem:[%s5935 + $0x1c] sm:$0xf]
  %v5944 = vld [vmem:[%s5935 + $0x20] sm:$0xf]
  %v5945 = vld [vmem:[%s5935 + $0x24] sm:$0xf]
  %v5946 = vld [vmem:[%s5935 + $0x28] sm:$0xf]
  %v5947 = vld [vmem:[%s5935 + $0x2c] sm:$0xf]
  %v5948 = vld [vmem:[%s5935 + $0x30] sm:$0xf]
  %v5949 = vld [vmem:[%s5935 + $0x34] sm:$0xf]
  %v5950 = vld [vmem:[%s5935 + $0x38] sm:$0xf]
  %v5951 = vld [vmem:[%s5935 + $0x3c] sm:$0xf]
  %v5952 = vld [vmem:[%s5935 + $0x40] sm:$0xf]
  %v5953 = vld [vmem:[%s5935 + $0x44] sm:$0xf]
  %v5954 = vld [vmem:[%s5935 + $0x48] sm:$0xf]
  %v5955 = vld [vmem:[%s5935 + $0x4c] sm:$0xf]
  %v5956 = vld [vmem:[%s5935 + $0x50] sm:$0xf]
  %v5957 = vld [vmem:[%s5935 + $0x54] sm:$0xf]
  %v5958 = vld [vmem:[%s5935 + $0x58] sm:$0xf]
  %v5959 = vld [vmem:[%s5935 + $0x5c] sm:$0xf]
  %v5960 = vld [vmem:[%s5935 + $0x60] sm:$0xf]
  %v5961 = vld [vmem:[%s5935 + $0x64] sm:$0xf]
  %v5962 = vld [vmem:[%s5935 + $0x68] sm:$0xf]
  %v5963 = vld [vmem:[%s5935 + $0x6c] sm:$0xf]
  %v5964 = vld [vmem:[%s5935 + $0x70] sm:$0xf]
  %v5965 = vld [vmem:[%s5935 + $0x74] sm:$0xf]
  %v5966 = vld [vmem:[%s5935 + $0x78] sm:$0xf]
  %v5967 = vld [vmem:[%s5935 + $0x7c] sm:$0xf]
  %v6000 = vunpack.c.l.b16 %v5936
  %v6001 = vunpack.c.l.b16 %v5937
  %v6002 = vunpack.c.l.b16 %v5938
  %v6003 = vunpack.c.l.b16 %v5939
  %v6004 = vunpack.c.l.b16 %v5940
  %v6005 = vunpack.c.l.b16 %v5941
  %v6006 = vunpack.c.l.b16 %v5942
  %v6007 = vunpack.c.l.b16 %v5943
  %v6008 = vunpack.c.l.b16 %v5944
  %v6009 = vunpack.c.l.b16 %v5945
  %v6010 = vunpack.c.l.b16 %v5946
  %v6011 = vunpack.c.l.b16 %v5947
  %v6012 = vunpack.c.l.b16 %v5948
  %v6013 = vunpack.c.l.b16 %v5949
  %v6014 = vunpack.c.l.b16 %v5950
  %v6015 = vunpack.c.l.b16 %v5951
  %v6016 = vunpack.c.l.b16 %v5952
  %v6017 = vunpack.c.l.b16 %v5953
  %v6018 = vunpack.c.l.b16 %v5954
  %v6019 = vunpack.c.l.b16 %v5955
  %v6020 = vunpack.c.l.b16 %v5956
  %v6021 = vunpack.c.l.b16 %v5957
  %v6022 = vunpack.c.l.b16 %v5958
  %v6023 = vunpack.c.l.b16 %v5959
  %v6024 = vunpack.c.l.b16 %v5960
  %v6025 = vunpack.c.l.b16 %v5961
  %v6026 = vunpack.c.l.b16 %v5962
  %v6027 = vunpack.c.l.b16 %v5963
  %v6028 = vunpack.c.l.b16 %v5964
  %v6029 = vunpack.c.l.b16 %v5965
  %v6030 = vunpack.c.l.b16 %v5966
  %v6031 = vunpack.c.l.b16 %v5967
  %v6032 = vpack.c.b16 %v6001, %v6000
  %v6033 = vpack.c.b16 %v6003, %v6002
  %v6034 = vpack.c.b16 %v6005, %v6004
  %v6035 = vpack.c.b16 %v6007, %v6006
  %v6036 = vpack.c.b16 %v6009, %v6008
  %v6037 = vpack.c.b16 %v6011, %v6010
  %v6038 = vpack.c.b16 %v6013, %v6012
  %v6039 = vpack.c.b16 %v6015, %v6014
  %v6040 = vpack.c.b16 %v6017, %v6016
  %v6041 = vpack.c.b16 %v6019, %v6018
  %v6042 = vpack.c.b16 %v6021, %v6020
  %v6043 = vpack.c.b16 %v6023, %v6022
  %v6044 = vpack.c.b16 %v6025, %v6024
  %v6045 = vpack.c.b16 %v6027, %v6026
  %v6046 = vpack.c.b16 %v6029, %v6028
  %v6047 = vpack.c.b16 %v6031, %v6030
  %6064 = vmatprep.subr.bf16.mxu0 0
  %6065 = vmatpush1.bf16.msra.mxu0 %v6032
  %6066 = vmatprep.subr.bf16.mxu0 0
  %6067 = vmatpush1.bf16.msra.mxu0 %v6033
  %6068 = vmatprep.subr.bf16.mxu0 0
  %6069 = vmatpush1.bf16.msra.mxu0 %v6034
  %6070 = vmatprep.subr.bf16.mxu0 0
  %6071 = vmatpush1.bf16.msra.mxu0 %v6035
  %6072 = vmatprep.subr.bf16.mxu0 0
  %6073 = vmatpush1.bf16.msra.mxu0 %v6036
  %6074 = vmatprep.subr.bf16.mxu0 0
  %6075 = vmatpush1.bf16.msra.mxu0 %v6037
  %6076 = vmatprep.subr.bf16.mxu0 0
  %6077 = vmatpush1.bf16.msra.mxu0 %v6038
  %6078 = vmatprep.subr.bf16.mxu0 0
  %6079 = vmatpush1.bf16.msra.mxu0 %v6039
  %6080 = vmatprep.subr.bf16.mxu0 0
  %6081 = vmatpush1.bf16.msra.mxu0 %v6040
  %6082 = vmatprep.subr.bf16.mxu0 0
  %6083 = vmatpush1.bf16.msra.mxu0 %v6041
  %6084 = vmatprep.subr.bf16.mxu0 0
  %6085 = vmatpush1.bf16.msra.mxu0 %v6042
  %6086 = vmatprep.subr.bf16.mxu0 0
  %6087 = vmatpush1.bf16.msra.mxu0 %v6043
  %6088 = vmatprep.subr.bf16.mxu0 0
  %6089 = vmatpush1.bf16.msra.mxu0 %v6044
  %6090 = vmatprep.subr.bf16.mxu0 0
  %6091 = vmatpush1.bf16.msra.mxu0 %v6045
  %6092 = vmatprep.subr.bf16.mxu0 0
  %6093 = vmatpush1.bf16.msra.mxu0 %v6046
  %6094 = vmatprep.subr.bf16.mxu0 0
  %6095 = vmatpush1.bf16.msra.mxu0 %v6047
  %6096 = vmatprep.mubr.bf16.mxu0 %v5934
  %6097 = vmatmul.mubr.bf16.gmra.mrb[0].mxu0 %v5933
  %v6098 = vpop.f32.mrb[0].mxu0
  %v6099 = vadd.f32 0.0, %v6098
  %v6100 = vpop.f32.mrb[0].mxu0
  %v6101 = vpop.f32.mrb[0].mxu0
  %v6102 = vpop.f32.mrb[0].mxu0
  %6103 = vdwg.mxu0
  %v6104 = vadd.f32 %v5932, %v6099
  %6105 = vst [vmem:[#allocation2] sm:$0xff] %v6104
  %s6106 = scalar_lea.vmem %s0, 32
  %v6107 = vld [vmem:[%s6106] sm:$0xf]
  %v6108 = vld [vmem:[%s1] sm:$0xff]
  %v6109 = vld [vmem:[%s1 + $0x8] sm:$0xff]
  %v6110 = vld [vmem:[%s1 + $0x10] sm:$0xff]
  %v6111 = vld [vmem:[%s1 + $0x18] sm:$0xff]
  %v6112 = vld [vmem:[%s1 + $0x20] sm:$0xff]
  %v6113 = vld [vmem:[%s1 + $0x28] sm:$0xff]
  %v6114 = vld [vmem:[%s1 + $0x30] sm:$0xff]
  %v6115 = vld [vmem:[%s1 + $0x38] sm:$0xff]
  %v6116 = vld [vmem:[%s1 + $0x40] sm:$0xff]
  %v6117 = vld [vmem:[%s1 + $0x48] sm:$0xff]
  %v6118 = vld [vmem:[%s1 + $0x50] sm:$0xff]
  %v6119 = vld [vmem:[%s1 + $0x58] sm:$0xff]
  %v6120 = vld [vmem:[%s1 + $0x60] sm:$0xff]
  %v6121 = vld [vmem:[%s1 + $0x68] sm:$0xff]
  %v6122 = vld [vmem:[%s1 + $0x70] sm:$0xff]
  %v6123 = vld [vmem:[%s1 + $0x78] sm:$0xff]
  %v6124 = vld [vmem:[%s1 + $0x80] sm:$0xff]
  %v6125 = vld [vmem:[%s1 + $0x88] sm:$0xff]
  %v6126 = vld [vmem:[%s1 + $0x90] sm:$0xff]
  %v6127 = vld [vmem:[%s1 + $0x98] sm:$0xff]
  %v6128 = vld [vmem:[%s1 + $0xa0] sm:$0xff]
  %v6129 = vld [vmem:[%s1 + $0xa8] sm:$0xff]
  %v6130 = vld [vmem:[%s1 + $0xb0] sm:$0xff]
  %v6131 = vld [vmem:[%s1 + $0xb8] sm:$0xff]
  %v6132 = vld [vmem:[%s1 + $0xc0] sm:$0xff]
  %v6133 = vld [vmem:[%s1 + $0xc8] sm:$0xff]
  %v6134 = vld [vmem:[%s1 + $0xd0] sm:$0xff]
  %v6135 = vld [vmem:[%s1 + $0xd8] sm:$0xff]
  %v6136 = vld [vmem:[%s1 + $0xe0] sm:$0xff]
  %v6137 = vld [vmem:[%s1 + $0xe8] sm:$0xff]
  %v6138 = vld [vmem:[%s1 + $0xf0] sm:$0xff]
  %v6139 = vld [vmem:[%s1 + $0xf8] sm:$0xff]
  %v6140 = vld [vmem:[%s1 + $0x100] sm:$0xff]
  %v6141 = vld [vmem:[%s1 + $0x108] sm:$0xff]
  %v6142 = vld [vmem:[%s1 + $0x110] sm:$0xff]
  %v6143 = vld [vmem:[%s1 + $0x118] sm:$0xff]
  %v6144 = vld [vmem:[%s1 + $0x120] sm:$0xff]
  %v6145 = vld [vmem:[%s1 + $0x128] sm:$0xff]
  %v6146 = vld [vmem:[%s1 + $0x130] sm:$0xff]
  %v6147 = vld [vmem:[%s1 + $0x138] sm:$0xff]
  %v6148 = vld [vmem:[%s1 + $0x140] sm:$0xff]
  %v6149 = vld [vmem:[%s1 + $0x148] sm:$0xff]
  %v6150 = vld [vmem:[%s1 + $0x150] sm:$0xff]
  %v6151 = vld [vmem:[%s1 + $0x158] sm:$0xff]
  %v6152 = vld [vmem:[%s1 + $0x160] sm:$0xff]
  %v6153 = vld [vmem:[%s1 + $0x168] sm:$0xff]
  %v6154 = vld [vmem:[%s1 + $0x170] sm:$0xff]
  %v6155 = vld [vmem:[%s1 + $0x178] sm:$0xff]
  %v6156 = vld [vmem:[%s1 + $0x180] sm:$0xff]
  %v6157 = vld [vmem:[%s1 + $0x188] sm:$0xff]
  %v6158 = vld [vmem:[%s1 + $0x190] sm:$0xff]
  %v6159 = vld [vmem:[%s1 + $0x198] sm:$0xff]
  %v6160 = vld [vmem:[%s1 + $0x1a0] sm:$0xff]
  %v6161 = vld [vmem:[%s1 + $0x1a8] sm:$0xff]
  %v6162 = vld [vmem:[%s1 + $0x1b0] sm:$0xff]
  %v6163 = vld [vmem:[%s1 + $0x1b8] sm:$0xff]
  %v6164 = vld [vmem:[%s1 + $0x1c0] sm:$0xff]
  %v6165 = vld [vmem:[%s1 + $0x1c8] sm:$0xff]
  %v6166 = vld [vmem:[%s1 + $0x1d0] sm:$0xff]
  %v6167 = vld [vmem:[%s1 + $0x1d8] sm:$0xff]
  %v6168 = vld [vmem:[%s1 + $0x1e0] sm:$0xff]
  %v6169 = vld [vmem:[%s1 + $0x1e8] sm:$0xff]
  %v6170 = vld [vmem:[%s1 + $0x1f0] sm:$0xff]
  %v6171 = vld [vmem:[%s1 + $0x1f8] sm:$0xff]
  %v6236 = vunpack.c.l.b16 %v6108
  %v6237 = vunpack.c.h.b16 %v6108
  %v6238 = vunpack.c.l.b16 %v6109
  %v6239 = vunpack.c.h.b16 %v6109
  %v6240 = vunpack.c.l.b16 %v6110
  %v6241 = vunpack.c.h.b16 %v6110
  %v6242 = vunpack.c.l.b16 %v6111
  %v6243 = vunpack.c.h.b16 %v6111
  %v6244 = vunpack.c.l.b16 %v6112
  %v6245 = vunpack.c.h.b16 %v6112
  %v6246 = vunpack.c.l.b16 %v6113
  %v6247 = vunpack.c.h.b16 %v6113
  %v6248 = vunpack.c.l.b16 %v6114
  %v6249 = vunpack.c.h.b16 %v6114
  %v6250 = vunpack.c.l.b16 %v6115
  %v6251 = vunpack.c.h.b16 %v6115
  %v6252 = vunpack.c.l.b16 %v6116
  %v6253 = vunpack.c.h.b16 %v6116
  %v6254 = vunpack.c.l.b16 %v6117
  %v6255 = vunpack.c.h.b16 %v6117
  %v6256 = vunpack.c.l.b16 %v6118
  %v6257 = vunpack.c.h.b16 %v6118
  %v6258 = vunpack.c.l.b16 %v6119
  %v6259 = vunpack.c.h.b16 %v6119
  %v6260 = vunpack.c.l.b16 %v6120
  %v6261 = vunpack.c.h.b16 %v6120
  %v6262 = vunpack.c.l.b16 %v6121
  %v6263 = vunpack.c.h.b16 %v6121
  %v6264 = vunpack.c.l.b16 %v6122
  %v6265 = vunpack.c.h.b16 %v6122
  %v6266 = vunpack.c.l.b16 %v6123
  %v6267 = vunpack.c.h.b16 %v6123
  %v6268 = vunpack.c.l.b16 %v6124
  %v6269 = vunpack.c.h.b16 %v6124
  %v6270 = vunpack.c.l.b16 %v6125
  %v6271 = vunpack.c.h.b16 %v6125
  %v6272 = vunpack.c.l.b16 %v6126
  %v6273 = vunpack.c.h.b16 %v6126
  %v6274 = vunpack.c.l.b16 %v6127
  %v6275 = vunpack.c.h.b16 %v6127
  %v6276 = vunpack.c.l.b16 %v6128
  %v6277 = vunpack.c.h.b16 %v6128
  %v6278 = vunpack.c.l.b16 %v6129
  %v6279 = vunpack.c.h.b16 %v6129
  %v6280 = vunpack.c.l.b16 %v6130
  %v6281 = vunpack.c.h.b16 %v6130
  %v6282 = vunpack.c.l.b16 %v6131
  %v6283 = vunpack.c.h.b16 %v6131
  %v6284 = vunpack.c.l.b16 %v6132
  %v6285 = vunpack.c.h.b16 %v6132
  %v6286 = vunpack.c.l.b16 %v6133
  %v6287 = vunpack.c.h.b16 %v6133
  %v6288 = vunpack.c.l.b16 %v6134
  %v6289 = vunpack.c.h.b16 %v6134
  %v6290 = vunpack.c.l.b16 %v6135
  %v6291 = vunpack.c.h.b16 %v6135
  %v6292 = vunpack.c.l.b16 %v6136
  %v6293 = vunpack.c.h.b16 %v6136
  %v6294 = vunpack.c.l.b16 %v6137
  %v6295 = vunpack.c.h.b16 %v6137
  %v6296 = vunpack.c.l.b16 %v6138
  %v6297 = vunpack.c.h.b16 %v6138
  %v6298 = vunpack.c.l.b16 %v6139
  %v6299 = vunpack.c.h.b16 %v6139
  %v6300 = vunpack.c.l.b16 %v6140
  %v6301 = vunpack.c.h.b16 %v6140
  %v6302 = vunpack.c.l.b16 %v6141
  %v6303 = vunpack.c.h.b16 %v6141
  %v6304 = vunpack.c.l.b16 %v6142
  %v6305 = vunpack.c.h.b16 %v6142
  %v6306 = vunpack.c.l.b16 %v6143
  %v6307 = vunpack.c.h.b16 %v6143
  %v6308 = vunpack.c.l.b16 %v6144
  %v6309 = vunpack.c.h.b16 %v6144
  %v6310 = vunpack.c.l.b16 %v6145
  %v6311 = vunpack.c.h.b16 %v6145
  %v6312 = vunpack.c.l.b16 %v6146
  %v6313 = vunpack.c.h.b16 %v6146
  %v6314 = vunpack.c.l.b16 %v6147
  %v6315 = vunpack.c.h.b16 %v6147
  %v6316 = vunpack.c.l.b16 %v6148
  %v6317 = vunpack.c.h.b16 %v6148
  %v6318 = vunpack.c.l.b16 %v6149
  %v6319 = vunpack.c.h.b16 %v6149
  %v6320 = vunpack.c.l.b16 %v6150
  %v6321 = vunpack.c.h.b16 %v6150
  %v6322 = vunpack.c.l.b16 %v6151
  %v6323 = vunpack.c.h.b16 %v6151
  %v6324 = vunpack.c.l.b16 %v6152
  %v6325 = vunpack.c.h.b16 %v6152
  %v6326 = vunpack.c.l.b16 %v6153
  %v6327 = vunpack.c.h.b16 %v6153
  %v6328 = vunpack.c.l.b16 %v6154
  %v6329 = vunpack.c.h.b16 %v6154
  %v6330 = vunpack.c.l.b16 %v6155
  %v6331 = vunpack.c.h.b16 %v6155
  %v6332 = vunpack.c.l.b16 %v6156
  %v6333 = vunpack.c.h.b16 %v6156
  %v6334 = vunpack.c.l.b16 %v6157
  %v6335 = vunpack.c.h.b16 %v6157
  %v6336 = vunpack.c.l.b16 %v6158
  %v6337 = vunpack.c.h.b16 %v6158
  %v6338 = vunpack.c.l.b16 %v6159
  %v6339 = vunpack.c.h.b16 %v6159
  %v6340 = vunpack.c.l.b16 %v6160
  %v6341 = vunpack.c.h.b16 %v6160
  %v6342 = vunpack.c.l.b16 %v6161
  %v6343 = vunpack.c.h.b16 %v6161
  %v6344 = vunpack.c.l.b16 %v6162
  %v6345 = vunpack.c.h.b16 %v6162
  %v6346 = vunpack.c.l.b16 %v6163
  %v6347 = vunpack.c.h.b16 %v6163
  %v6348 = vunpack.c.l.b16 %v6164
  %v6349 = vunpack.c.h.b16 %v6164
  %v6350 = vunpack.c.l.b16 %v6165
  %v6351 = vunpack.c.h.b16 %v6165
  %v6352 = vunpack.c.l.b16 %v6166
  %v6353 = vunpack.c.h.b16 %v6166
  %v6354 = vunpack.c.l.b16 %v6167
  %v6355 = vunpack.c.h.b16 %v6167
  %v6356 = vunpack.c.l.b16 %v6168
  %v6357 = vunpack.c.h.b16 %v6168
  %v6358 = vunpack.c.l.b16 %v6169
  %v6359 = vunpack.c.h.b16 %v6169
  %v6360 = vunpack.c.l.b16 %v6170
  %v6361 = vunpack.c.h.b16 %v6170
  %v6362 = vunpack.c.l.b16 %v6171
  %v6363 = vunpack.c.h.b16 %v6171
  %v6364 = vpack.c.b16 %v6244, %v6236
  %v6365 = vpack.c.b16 %v6245, %v6237
  %v6366 = vpack.c.b16 %v6246, %v6238
  %v6367 = vpack.c.b16 %v6247, %v6239
  %v6368 = vpack.c.b16 %v6248, %v6240
  %v6369 = vpack.c.b16 %v6249, %v6241
  %v6370 = vpack.c.b16 %v6250, %v6242
  %v6371 = vpack.c.b16 %v6251, %v6243
  %v6372 = vpack.c.b16 %v6260, %v6252
  %v6373 = vpack.c.b16 %v6261, %v6253
  %v6374 = vpack.c.b16 %v6262, %v6254
  %v6375 = vpack.c.b16 %v6263, %v6255
  %v6376 = vpack.c.b16 %v6264, %v6256
  %v6377 = vpack.c.b16 %v6265, %v6257
  %v6378 = vpack.c.b16 %v6266, %v6258
  %v6379 = vpack.c.b16 %v6267, %v6259
  %v6380 = vpack.c.b16 %v6276, %v6268
  %v6381 = vpack.c.b16 %v6277, %v6269
  %v6382 = vpack.c.b16 %v6278, %v6270
  %v6383 = vpack.c.b16 %v6279, %v6271
  %v6384 = vpack.c.b16 %v6280, %v6272
  %v6385 = vpack.c.b16 %v6281, %v6273
  %v6386 = vpack.c.b16 %v6282, %v6274
  %v6387 = vpack.c.b16 %v6283, %v6275
  %v6388 = vpack.c.b16 %v6292, %v6284
  %v6389 = vpack.c.b16 %v6293, %v6285
  %v6390 = vpack.c.b16 %v6294, %v6286
  %v6391 = vpack.c.b16 %v6295, %v6287
  %v6392 = vpack.c.b16 %v6296, %v6288
  %v6393 = vpack.c.b16 %v6297, %v6289
  %v6394 = vpack.c.b16 %v6298, %v6290
  %v6395 = vpack.c.b16 %v6299, %v6291
  %v6396 = vpack.c.b16 %v6308, %v6300
  %v6397 = vpack.c.b16 %v6309, %v6301
  %v6398 = vpack.c.b16 %v6310, %v6302
  %v6399 = vpack.c.b16 %v6311, %v6303
  %v6400 = vpack.c.b16 %v6312, %v6304
  %v6401 = vpack.c.b16 %v6313, %v6305
  %v6402 = vpack.c.b16 %v6314, %v6306
  %v6403 = vpack.c.b16 %v6315, %v6307
  %v6404 = vpack.c.b16 %v6324, %v6316
  %v6405 = vpack.c.b16 %v6325, %v6317
  %v6406 = vpack.c.b16 %v6326, %v6318
  %v6407 = vpack.c.b16 %v6327, %v6319
  %v6408 = vpack.c.b16 %v6328, %v6320
  %v6409 = vpack.c.b16 %v6329, %v6321
  %v6410 = vpack.c.b16 %v6330, %v6322
  %v6411 = vpack.c.b16 %v6331, %v6323
  %v6412 = vpack.c.b16 %v6340, %v6332
  %v6413 = vpack.c.b16 %v6341, %v6333
  %v6414 = vpack.c.b16 %v6342, %v6334
  %v6415 = vpack.c.b16 %v6343, %v6335
  %v6416 = vpack.c.b16 %v6344, %v6336
  %v6417 = vpack.c.b16 %v6345, %v6337
  %v6418 = vpack.c.b16 %v6346, %v6338
  %v6419 = vpack.c.b16 %v6347, %v6339
  %v6420 = vpack.c.b16 %v6356, %v6348
  %v6421 = vpack.c.b16 %v6357, %v6349
  %v6422 = vpack.c.b16 %v6358, %v6350
  %v6423 = vpack.c.b16 %v6359, %v6351
  %v6424 = vpack.c.b16 %v6360, %v6352
  %v6425 = vpack.c.b16 %v6361, %v6353
  %v6426 = vpack.c.b16 %v6362, %v6354
  %v6427 = vpack.c.b16 %v6363, %v6355
  %6492 = vmatprep.subr.bf16.mxu0 %v6365
  %6493 = vmatpush1.bf16.msra.mxu0 %v6364
  %6494 = vmatprep.subr.bf16.mxu0 %v6373
  %6495 = vmatpush1.bf16.msra.mxu0 %v6372
  %6496 = vmatprep.subr.bf16.mxu0 %v6381
  %6497 = vmatpush1.bf16.msra.mxu0 %v6380
  %6498 = vmatprep.subr.bf16.mxu0 %v6389
  %6499 = vmatpush1.bf16.msra.mxu0 %v6388
  %6500 = vmatprep.subr.bf16.mxu0 %v6397
  %6501 = vmatpush1.bf16.msra.mxu0 %v6396
  %6502 = vmatprep.subr.bf16.mxu0 %v6405
  %6503 = vmatpush1.bf16.msra.mxu0 %v6404
  %6504 = vmatprep.subr.bf16.mxu0 %v6413
  %6505 = vmatpush1.bf16.msra.mxu0 %v6412
  %6506 = vmatprep.subr.bf16.mxu0 %v6421
  %6507 = vmatpush1.bf16.msra.mxu0 %v6420
  %6508 = vmatprep.subr.bf16.mxu0 0
  %6509 = vmatpush1.bf16.msra.mxu0 0
  %6510 = vmatprep.subr.bf16.mxu0 0
  %6511 = vmatpush1.bf16.msra.mxu0 0
  %6512 = vmatprep.subr.bf16.mxu0 0
  %6513 = vmatpush1.bf16.msra.mxu0 0
  %6514 = vmatprep.subr.bf16.mxu0 0
  %6515 = vmatpush1.bf16.msra.mxu0 0
  %6516 = vmatprep.subr.bf16.mxu0 0
  %6517 = vmatpush1.bf16.msra.mxu0 0
  %6518 = vmatprep.subr.bf16.mxu0 0
  %6519 = vmatpush1.bf16.msra.mxu0 0
  %6520 = vmatprep.subr.bf16.mxu0 0
  %6521 = vmatpush1.bf16.msra.mxu0 0
  %6522 = vmatprep.subr.bf16.mxu0 0
  %6523 = vmatpush1.bf16.msra.mxu0 0
  %6524 = vmatprep.mubr.bf16.mxu0 0
  %6525 = vmatmul.mubr.bf16.gmra.mrb[0].mxu0 %v6107
  %v6526 = vpop.f32.mrb[0].mxu0
  %v6527 = vadd.f32 0.0, %v6526
  %v6528 = vpop.f32.mrb[0].mxu0
  %v6529 = vadd.f32 0.0, %v6528
  %v6530 = vpop.f32.mrb[0].mxu0
  %v6531 = vpop.f32.mrb[0].mxu0
  %6532 = vdwg.mxu0
  %6533 = vmatprep.subr.bf16.mxu0 %v6367
  %6534 = vmatpush1.bf16.msra.mxu0 %v6366
  %6535 = vmatprep.subr.bf16.mxu0 %v6375
  %6536 = vmatpush1.bf16.msra.mxu0 %v6374
  %6537 = vmatprep.subr.bf16.mxu0 %v6383
  %6538 = vmatpush1.bf16.msra.mxu0 %v6382
  %6539 = vmatprep.subr.bf16.mxu0 %v6391
  %6540 = vmatpush1.bf16.msra.mxu0 %v6390
  %6541 = vmatprep.subr.bf16.mxu0 %v6399
  %6542 = vmatpush1.bf16.msra.mxu0 %v6398
  %6543 = vmatprep.subr.bf16.mxu0 %v6407
  %6544 = vmatpush1.bf16.msra.mxu0 %v6406
  %6545 = vmatprep.subr.bf16.mxu0 %v6415
  %6546 = vmatpush1.bf16.msra.mxu0 %v6414
  %6547 = vmatprep.subr.bf16.mxu0 %v6423
  %6548 = vmatpush1.bf16.msra.mxu0 %v6422
  %6549 = vmatprep.subr.bf16.mxu0 0
  %6550 = vmatpush1.bf16.msra.mxu0 0
  %6551 = vmatprep.subr.bf16.mxu0 0
  %6552 = vmatpush1.bf16.msra.mxu0 0
  %6553 = vmatprep.subr.bf16.mxu0 0
  %6554 = vmatpush1.bf16.msra.mxu0 0
  %6555 = vmatprep.subr.bf16.mxu0 0
  %6556 = vmatpush1.bf16.msra.mxu0 0
  %6557 = vmatprep.subr.bf16.mxu0 0
  %6558 = vmatpush1.bf16.msra.mxu0 0
  %6559 = vmatprep.subr.bf16.mxu0 0
  %6560 = vmatpush1.bf16.msra.mxu0 0
  %6561 = vmatprep.subr.bf16.mxu0 0
  %6562 = vmatpush1.bf16.msra.mxu0 0
  %6563 = vmatprep.subr.bf16.mxu0 0
  %6564 = vmatpush1.bf16.msra.mxu0 0
  %6565 = vmatprep.mubr.bf16.mxu0 0
  %6566 = vmatmul.mubr.bf16.gmra.mrb[0].mxu0 %v6107
  %v6567 = vpop.f32.mrb[0].mxu0
  %v6568 = vadd.f32 0.0, %v6567
  %v6569 = vpop.f32.mrb[0].mxu0
  %v6570 = vadd.f32 0.0, %v6569
  %v6571 = vpop.f32.mrb[0].mxu0
  %v6572 = vpop.f32.mrb[0].mxu0
  %6573 = vdwg.mxu0
  %6574 = vmatprep.subr.bf16.mxu0 %v6369
  %6575 = vmatpush1.bf16.msra.mxu0 %v6368
  %6576 = vmatprep.subr.bf16.mxu0 %v6377
  %6577 = vmatpush1.bf16.msra.mxu0 %v6376
  %6578 = vmatprep.subr.bf16.mxu0 %v6385
  %6579 = vmatpush1.bf16.msra.mxu0 %v6384
  %6580 = vmatprep.subr.bf16.mxu0 %v6393
  %6581 = vmatpush1.bf16.msra.mxu0 %v6392
  %6582 = vmatprep.subr.bf16.mxu0 %v6401
  %6583 = vmatpush1.bf16.msra.mxu0 %v6400
  %6584 = vmatprep.subr.bf16.mxu0 %v6409
  %6585 = vmatpush1.bf16.msra.mxu0 %v6408
  %6586 = vmatprep.subr.bf16.mxu0 %v6417
  %6587 = vmatpush1.bf16.msra.mxu0 %v6416
  %6588 = vmatprep.subr.bf16.mxu0 %v6425
  %6589 = vmatpush1.bf16.msra.mxu0 %v6424
  %6590 = vmatprep.subr.bf16.mxu0 0
  %6591 = vmatpush1.bf16.msra.mxu0 0
  %6592 = vmatprep.subr.bf16.mxu0 0
  %6593 = vmatpush1.bf16.msra.mxu0 0
  %6594 = vmatprep.subr.bf16.mxu0 0
  %6595 = vmatpush1.bf16.msra.mxu0 0
  %6596 = vmatprep.subr.bf16.mxu0 0
  %6597 = vmatpush1.bf16.msra.mxu0 0
  %6598 = vmatprep.subr.bf16.mxu0 0
  %6599 = vmatpush1.bf16.msra.mxu0 0
  %6600 = vmatprep.subr.bf16.mxu0 0
  %6601 = vmatpush1.bf16.msra.mxu0 0
  %6602 = vmatprep.subr.bf16.mxu0 0
  %6603 = vmatpush1.bf16.msra.mxu0 0
  %6604 = vmatprep.subr.bf16.mxu0 0
  %6605 = vmatpush1.bf16.msra.mxu0 0
  %6606 = vmatprep.mubr.bf16.mxu0 0
  %6607 = vmatmul.mubr.bf16.gmra.mrb[0].mxu0 %v6107
  %v6608 = vpop.f32.mrb[0].mxu0
  %v6609 = vadd.f32 0.0, %v6608
  %v6610 = vpop.f32.mrb[0].mxu0
  %v6611 = vadd.f32 0.0, %v6610
  %v6612 = vpop.f32.mrb[0].mxu0
  %v6613 = vpop.f32.mrb[0].mxu0
  %6614 = vdwg.mxu0
  %6615 = vmatprep.subr.bf16.mxu0 %v6371
  %6616 = vmatpush1.bf16.msra.mxu0 %v6370
  %6617 = vmatprep.subr.bf16.mxu0 %v6379
  %6618 = vmatpush1.bf16.msra.mxu0 %v6378
  %6619 = vmatprep.subr.bf16.mxu0 %v6387
  %6620 = vmatpush1.bf16.msra.mxu0 %v6386
  %6621 = vmatprep.subr.bf16.mxu0 %v6395
  %6622 = vmatpush1.bf16.msra.mxu0 %v6394
  %6623 = vmatprep.subr.bf16.mxu0 %v6403
  %6624 = vmatpush1.bf16.msra.mxu0 %v6402
  %6625 = vmatprep.subr.bf16.mxu0 %v6411
  %6626 = vmatpush1.bf16.msra.mxu0 %v6410
  %6627 = vmatprep.subr.bf16.mxu0 %v6419
  %6628 = vmatpush1.bf16.msra.mxu0 %v6418
  %6629 = vmatprep.subr.bf16.mxu0 %v6427
  %6630 = vmatpush1.bf16.msra.mxu0 %v6426
  %6631 = vmatprep.subr.bf16.mxu0 0
  %6632 = vmatpush1.bf16.msra.mxu0 0
  %6633 = vmatprep.subr.bf16.mxu0 0
  %6634 = vmatpush1.bf16.msra.mxu0 0
  %6635 = vmatprep.subr.bf16.mxu0 0
  %6636 = vmatpush1.bf16.msra.mxu0 0
  %6637 = vmatprep.subr.bf16.mxu0 0
  %6638 = vmatpush1.bf16.msra.mxu0 0
  %6639 = vmatprep.subr.bf16.mxu0 0
  %6640 = vmatpush1.bf16.msra.mxu0 0
  %6641 = vmatprep.subr.bf16.mxu0 0
  %6642 = vmatpush1.bf16.msra.mxu0 0
  %6643 = vmatprep.subr.bf16.mxu0 0
  %6644 = vmatpush1.bf16.msra.mxu0 0
  %6645 = vmatprep.subr.bf16.mxu0 0
  %6646 = vmatpush1.bf16.msra.mxu0 0
  %6647 = vmatprep.mubr.bf16.mxu0 0
  %6648 = vmatmul.mubr.bf16.gmra.mrb[0].mxu0 %v6107
  %v6649 = vpop.f32.mrb[0].mxu0
  %v6650 = vadd.f32 0.0, %v6649
  %v6651 = vpop.f32.mrb[0].mxu0
  %v6652 = vadd.f32 0.0, %v6651
  %v6653 = vpop.f32.mrb[0].mxu0
  %v6654 = vpop.f32.mrb[0].mxu0
  %6655 = vdwg.mxu0
  %v6656 = vmax.f32 %v6527, %v6609
  %v6657 = vmax.f32 %v6529, %v6611
  %v6658 = vmax.f32 %v6568, %v6650
  %v6659 = vmax.f32 %v6570, %v6652
  %v6660 = vld [vmem:[%s2] sm:$0xf]
  %v6662 = vlaneseq
  %v6663 = vshrl.u32 %v6662, 7
  %v6664 = vsub.s32 0, %v6663
  %v6665 = vrot.slane %v6660, %v6664
  %v6666 = vlaneseq
  %v6667 = vshrl.u32 %v6666, 7
  %v6668 = vsub.s32 1, %v6667
  %v6669 = vrot.slane %v6660, %v6668
  %v6670 = vlaneseq
  %v6671 = vshrl.u32 %v6670, 7
  %v6672 = vsub.s32 2, %v6671
  %v6673 = vrot.slane %v6660, %v6672
  %v6674 = vlaneseq
  %v6675 = vshrl.u32 %v6674, 7
  %v6676 = vsub.s32 3, %v6675
  %v6677 = vrot.slane %v6660, %v6676
  %v6682 = vadd.f32 %v6656, %v6665
  %v6683 = vadd.f32 %v6657, %v6669
  %v6684 = vadd.f32 %v6658, %v6673
  %v6685 = vadd.f32 %v6659, %v6677
  %v6686 = vmax.f32 %v6682, 0.0
  %v6687 = vmax.f32 %v6683, 0.0
  %v6688 = vmax.f32 %v6684, 0.0
  %v6689 = vmax.f32 %v6685, 0.0
  %v6690 = vmax.f32 %v6686, %v6688
  %v6691 = vmax.f32 %v6687, %v6689
  %v6692 = vld [vmem:[#allocation2] sm:$0xff]
  %v6693 = vpack.c.bf16 %v6690, %v6690
  %v6694 = vpack.c.bf16 %v6691, %v6691
  %s6695 = scalar_lea.vmem %s3, 1024
  %v6696 = vld [vmem:[%s6695] sm:$0xf]
  %v6697 = vld [vmem:[%s6695 + $0x4] sm:$0xf]
  %v6698 = vld [vmem:[%s6695 + $0x8] sm:$0xf]
  %v6699 = vld [vmem:[%s6695 + $0xc] sm:$0xf]
  %v6700 = vld [vmem:[%s6695 + $0x10] sm:$0xf]
  %v6701 = vld [vmem:[%s6695 + $0x14] sm:$0xf]
  %v6702 = vld [vmem:[%s6695 + $0x18] sm:$0xf]
  %v6703 = vld [vmem:[%s6695 + $0x1c] sm:$0xf]
  %v6704 = vld [vmem:[%s6695 + $0x20] sm:$0xf]
  %v6705 = vld [vmem:[%s6695 + $0x24] sm:$0xf]
  %v6706 = vld [vmem:[%s6695 + $0x28] sm:$0xf]
  %v6707 = vld [vmem:[%s6695 + $0x2c] sm:$0xf]
  %v6708 = vld [vmem:[%s6695 + $0x30] sm:$0xf]
  %v6709 = vld [vmem:[%s6695 + $0x34] sm:$0xf]
  %v6710 = vld [vmem:[%s6695 + $0x38] sm:$0xf]
  %v6711 = vld [vmem:[%s6695 + $0x3c] sm:$0xf]
  %v6712 = vld [vmem:[%s6695 + $0x40] sm:$0xf]
  %v6713 = vld [vmem:[%s6695 + $0x44] sm:$0xf]
  %v6714 = vld [vmem:[%s6695 + $0x48] sm:$0xf]
  %v6715 = vld [vmem:[%s6695 + $0x4c] sm:$0xf]
  %v6716 = vld [vmem:[%s6695 + $0x50] sm:$0xf]
  %v6717 = vld [vmem:[%s6695 + $0x54] sm:$0xf]
  %v6718 = vld [vmem:[%s6695 + $0x58] sm:$0xf]
  %v6719 = vld [vmem:[%s6695 + $0x5c] sm:$0xf]
  %v6720 = vld [vmem:[%s6695 + $0x60] sm:$0xf]
  %v6721 = vld [vmem:[%s6695 + $0x64] sm:$0xf]
  %v6722 = vld [vmem:[%s6695 + $0x68] sm:$0xf]
  %v6723 = vld [vmem:[%s6695 + $0x6c] sm:$0xf]
  %v6724 = vld [vmem:[%s6695 + $0x70] sm:$0xf]
  %v6725 = vld [vmem:[%s6695 + $0x74] sm:$0xf]
  %v6726 = vld [vmem:[%s6695 + $0x78] sm:$0xf]
  %v6727 = vld [vmem:[%s6695 + $0x7c] sm:$0xf]
  %v6760 = vunpack.c.l.b16 %v6696
  %v6761 = vunpack.c.l.b16 %v6697
  %v6762 = vunpack.c.l.b16 %v6698
  %v6763 = vunpack.c.l.b16 %v6699
  %v6764 = vunpack.c.l.b16 %v6700
  %v6765 = vunpack.c.l.b16 %v6701
  %v6766 = vunpack.c.l.b16 %v6702
  %v6767 = vunpack.c.l.b16 %v6703
  %v6768 = vunpack.c.l.b16 %v6704
  %v6769 = vunpack.c.l.b16 %v6705
  %v6770 = vunpack.c.l.b16 %v6706
  %v6771 = vunpack.c.l.b16 %v6707
  %v6772 = vunpack.c.l.b16 %v6708
  %v6773 = vunpack.c.l.b16 %v6709
  %v6774 = vunpack.c.l.b16 %v6710
  %v6775 = vunpack.c.l.b16 %v6711
  %v6776 = vunpack.c.l.b16 %v6712
  %v6777 = vunpack.c.l.b16 %v6713
  %v6778 = vunpack.c.l.b16 %v6714
  %v6779 = vunpack.c.l.b16 %v6715
  %v6780 = vunpack.c.l.b16 %v6716
  %v6781 = vunpack.c.l.b16 %v6717
  %v6782 = vunpack.c.l.b16 %v6718
  %v6783 = vunpack.c.l.b16 %v6719
  %v6784 = vunpack.c.l.b16 %v6720
  %v6785 = vunpack.c.l.b16 %v6721
  %v6786 = vunpack.c.l.b16 %v6722
  %v6787 = vunpack.c.l.b16 %v6723
  %v6788 = vunpack.c.l.b16 %v6724
  %v6789 = vunpack.c.l.b16 %v6725
  %v6790 = vunpack.c.l.b16 %v6726
  %v6791 = vunpack.c.l.b16 %v6727
  %v6792 = vpack.c.b16 %v6761, %v6760
  %v6793 = vpack.c.b16 %v6763, %v6762
  %v6794 = vpack.c.b16 %v6765, %v6764
  %v6795 = vpack.c.b16 %v6767, %v6766
  %v6796 = vpack.c.b16 %v6769, %v6768
  %v6797 = vpack.c.b16 %v6771, %v6770
  %v6798 = vpack.c.b16 %v6773, %v6772
  %v6799 = vpack.c.b16 %v6775, %v6774
  %v6800 = vpack.c.b16 %v6777, %v6776
  %v6801 = vpack.c.b16 %v6779, %v6778
  %v6802 = vpack.c.b16 %v6781, %v6780
  %v6803 = vpack.c.b16 %v6783, %v6782
  %v6804 = vpack.c.b16 %v6785, %v6784
  %v6805 = vpack.c.b16 %v6787, %v6786
  %v6806 = vpack.c.b16 %v6789, %v6788
  %v6807 = vpack.c.b16 %v6791, %v6790
  %6824 = vmatprep.subr.bf16.mxu0 0
  %6825 = vmatpush1.bf16.msra.mxu0 %v6792
  %6826 = vmatprep.subr.bf16.mxu0 0
  %6827 = vmatpush1.bf16.msra.mxu0 %v6793
  %6828 = vmatprep.subr.bf16.mxu0 0
  %6829 = vmatpush1.bf16.msra.mxu0 %v6794
  %6830 = vmatprep.subr.bf16.mxu0 0
  %6831 = vmatpush1.bf16.msra.mxu0 %v6795
  %6832 = vmatprep.subr.bf16.mxu0 0
  %6833 = vmatpush1.bf16.msra.mxu0 %v6796
  %6834 = vmatprep.subr.bf16.mxu0 0
  %6835 = vmatpush1.bf16.msra.mxu0 %v6797
  %6836 = vmatprep.subr.bf16.mxu0 0
  %6837 = vmatpush1.bf16.msra.mxu0 %v6798
  %6838 = vmatprep.subr.bf16.mxu0 0
  %6839 = vmatpush1.bf16.msra.mxu0 %v6799
  %6840 = vmatprep.subr.bf16.mxu0 0
  %6841 = vmatpush1.bf16.msra.mxu0 %v6800
  %6842 = vmatprep.subr.bf16.mxu0 0
  %6843 = vmatpush1.bf16.msra.mxu0 %v6801
  %6844 = vmatprep.subr.bf16.mxu0 0
  %6845 = vmatpush1.bf16.msra.mxu0 %v6802
  %6846 = vmatprep.subr.bf16.mxu0 0
  %6847 = vmatpush1.bf16.msra.mxu0 %v6803
  %6848 = vmatprep.subr.bf16.mxu0 0
  %6849 = vmatpush1.bf16.msra.mxu0 %v6804
  %6850 = vmatprep.subr.bf16.mxu0 0
  %6851 = vmatpush1.bf16.msra.mxu0 %v6805
  %6852 = vmatprep.subr.bf16.mxu0 0
  %6853 = vmatpush1.bf16.msra.mxu0 %v6806
  %6854 = vmatprep.subr.bf16.mxu0 0
  %6855 = vmatpush1.bf16.msra.mxu0 %v6807
  %6856 = vmatprep.mubr.bf16.mxu0 %v6694
  %6857 = vmatmul.mubr.bf16.gmra.mrb[0].mxu0 %v6693
  %v6858 = vpop.f32.mrb[0].mxu0
  %v6859 = vadd.f32 0.0, %v6858
  %v6860 = vpop.f32.mrb[0].mxu0
  %v6861 = vpop.f32.mrb[0].mxu0
  %v6862 = vpop.f32.mrb[0].mxu0
  %6863 = vdwg.mxu0
  %v6864 = vadd.f32 %v6692, %v6859
  %6865 = vst [vmem:[#allocation2] sm:$0xff] %v6864
  %s6866 = scalar_lea.vmem %s0, 36
  %v6867 = vld [vmem:[%s6866] sm:$0xf]
  %v6868 = vld [vmem:[%s1] sm:$0xff]
  %v6869 = vld [vmem:[%s1 + $0x8] sm:$0xff]
  %v6870 = vld [vmem:[%s1 + $0x10] sm:$0xff]
  %v6871 = vld [vmem:[%s1 + $0x18] sm:$0xff]
  %v6872 = vld [vmem:[%s1 + $0x20] sm:$0xff]
  %v6873 = vld [vmem:[%s1 + $0x28] sm:$0xff]
  %v6874 = vld [vmem:[%s1 + $0x30] sm:$0xff]
  %v6875 = vld [vmem:[%s1 + $0x38] sm:$0xff]
  %v6876 = vld [vmem:[%s1 + $0x40] sm:$0xff]
  %v6877 = vld [vmem:[%s1 + $0x48] sm:$0xff]
  %v6878 = vld [vmem:[%s1 + $0x50] sm:$0xff]
  %v6879 = vld [vmem:[%s1 + $0x58] sm:$0xff]
  %v6880 = vld [vmem:[%s1 + $0x60] sm:$0xff]
  %v6881 = vld [vmem:[%s1 + $0x68] sm:$0xff]
  %v6882 = vld [vmem:[%s1 + $0x70] sm:$0xff]
  %v6883 = vld [vmem:[%s1 + $0x78] sm:$0xff]
  %v6884 = vld [vmem:[%s1 + $0x80] sm:$0xff]
  %v6885 = vld [vmem:[%s1 + $0x88] sm:$0xff]
  %v6886 = vld [vmem:[%s1 + $0x90] sm:$0xff]
  %v6887 = vld [vmem:[%s1 + $0x98] sm:$0xff]
  %v6888 = vld [vmem:[%s1 + $0xa0] sm:$0xff]
  %v6889 = vld [vmem:[%s1 + $0xa8] sm:$0xff]
  %v6890 = vld [vmem:[%s1 + $0xb0] sm:$0xff]
  %v6891 = vld [vmem:[%s1 + $0xb8] sm:$0xff]
  %v6892 = vld [vmem:[%s1 + $0xc0] sm:$0xff]
  %v6893 = vld [vmem:[%s1 + $0xc8] sm:$0xff]
  %v6894 = vld [vmem:[%s1 + $0xd0] sm:$0xff]
  %v6895 = vld [vmem:[%s1 + $0xd8] sm:$0xff]
  %v6896 = vld [vmem:[%s1 + $0xe0] sm:$0xff]
  %v6897 = vld [vmem:[%s1 + $0xe8] sm:$0xff]
  %v6898 = vld [vmem:[%s1 + $0xf0] sm:$0xff]
  %v6899 = vld [vmem:[%s1 + $0xf8] sm:$0xff]
  %v6900 = vld [vmem:[%s1 + $0x100] sm:$0xff]
  %v6901 = vld [vmem:[%s1 + $0x108] sm:$0xff]
  %v6902 = vld [vmem:[%s1 + $0x110] sm:$0xff]
  %v6903 = vld [vmem:[%s1 + $0x118] sm:$0xff]
  %v6904 = vld [vmem:[%s1 + $0x120] sm:$0xff]
  %v6905 = vld [vmem:[%s1 + $0x128] sm:$0xff]
  %v6906 = vld [vmem:[%s1 + $0x130] sm:$0xff]
  %v6907 = vld [vmem:[%s1 + $0x138] sm:$0xff]
  %v6908 = vld [vmem:[%s1 + $0x140] sm:$0xff]
  %v6909 = vld [vmem:[%s1 + $0x148] sm:$0xff]
  %v6910 = vld [vmem:[%s1 + $0x150] sm:$0xff]
  %v6911 = vld [vmem:[%s1 + $0x158] sm:$0xff]
  %v6912 = vld [vmem:[%s1 + $0x160] sm:$0xff]
  %v6913 = vld [vmem:[%s1 + $0x168] sm:$0xff]
  %v6914 = vld [vmem:[%s1 + $0x170] sm:$0xff]
  %v6915 = vld [vmem:[%s1 + $0x178] sm:$0xff]
  %v6916 = vld [vmem:[%s1 + $0x180] sm:$0xff]
  %v6917 = vld [vmem:[%s1 + $0x188] sm:$0xff]
  %v6918 = vld [vmem:[%s1 + $0x190] sm:$0xff]
  %v6919 = vld [vmem:[%s1 + $0x198] sm:$0xff]
  %v6920 = vld [vmem:[%s1 + $0x1a0] sm:$0xff]
  %v6921 = vld [vmem:[%s1 + $0x1a8] sm:$0xff]
  %v6922 = vld [vmem:[%s1 + $0x1b0] sm:$0xff]
  %v6923 = vld [vmem:[%s1 + $0x1b8] sm:$0xff]
  %v6924 = vld [vmem:[%s1 + $0x1c0] sm:$0xff]
  %v6925 = vld [vmem:[%s1 + $0x1c8] sm:$0xff]
  %v6926 = vld [vmem:[%s1 + $0x1d0] sm:$0xff]
  %v6927 = vld [vmem:[%s1 + $0x1d8] sm:$0xff]
  %v6928 = vld [vmem:[%s1 + $0x1e0] sm:$0xff]
  %v6929 = vld [vmem:[%s1 + $0x1e8] sm:$0xff]
  %v6930 = vld [vmem:[%s1 + $0x1f0] sm:$0xff]
  %v6931 = vld [vmem:[%s1 + $0x1f8] sm:$0xff]
  %v6996 = vunpack.c.l.b16 %v6868
  %v6997 = vunpack.c.h.b16 %v6868
  %v6998 = vunpack.c.l.b16 %v6869
  %v6999 = vunpack.c.h.b16 %v6869
  %v7000 = vunpack.c.l.b16 %v6870
  %v7001 = vunpack.c.h.b16 %v6870
  %v7002 = vunpack.c.l.b16 %v6871
  %v7003 = vunpack.c.h.b16 %v6871
  %v7004 = vunpack.c.l.b16 %v6872
  %v7005 = vunpack.c.h.b16 %v6872
  %v7006 = vunpack.c.l.b16 %v6873
  %v7007 = vunpack.c.h.b16 %v6873
  %v7008 = vunpack.c.l.b16 %v6874
  %v7009 = vunpack.c.h.b16 %v6874
  %v7010 = vunpack.c.l.b16 %v6875
  %v7011 = vunpack.c.h.b16 %v6875
  %v7012 = vunpack.c.l.b16 %v6876
  %v7013 = vunpack.c.h.b16 %v6876
  %v7014 = vunpack.c.l.b16 %v6877
  %v7015 = vunpack.c.h.b16 %v6877
  %v7016 = vunpack.c.l.b16 %v6878
  %v7017 = vunpack.c.h.b16 %v6878
  %v7018 = vunpack.c.l.b16 %v6879
  %v7019 = vunpack.c.h.b16 %v6879
  %v7020 = vunpack.c.l.b16 %v6880
  %v7021 = vunpack.c.h.b16 %v6880
  %v7022 = vunpack.c.l.b16 %v6881
  %v7023 = vunpack.c.h.b16 %v6881
  %v7024 = vunpack.c.l.b16 %v6882
  %v7025 = vunpack.c.h.b16 %v6882
  %v7026 = vunpack.c.l.b16 %v6883
  %v7027 = vunpack.c.h.b16 %v6883
  %v7028 = vunpack.c.l.b16 %v6884
  %v7029 = vunpack.c.h.b16 %v6884
  %v7030 = vunpack.c.l.b16 %v6885
  %v7031 = vunpack.c.h.b16 %v6885
  %v7032 = vunpack.c.l.b16 %v6886
  %v7033 = vunpack.c.h.b16 %v6886
  %v7034 = vunpack.c.l.b16 %v6887
  %v7035 = vunpack.c.h.b16 %v6887
  %v7036 = vunpack.c.l.b16 %v6888
  %v7037 = vunpack.c.h.b16 %v6888
  %v7038 = vunpack.c.l.b16 %v6889
  %v7039 = vunpack.c.h.b16 %v6889
  %v7040 = vunpack.c.l.b16 %v6890
  %v7041 = vunpack.c.h.b16 %v6890
  %v7042 = vunpack.c.l.b16 %v6891
  %v7043 = vunpack.c.h.b16 %v6891
  %v7044 = vunpack.c.l.b16 %v6892
  %v7045 = vunpack.c.h.b16 %v6892
  %v7046 = vunpack.c.l.b16 %v6893
  %v7047 = vunpack.c.h.b16 %v6893
  %v7048 = vunpack.c.l.b16 %v6894
  %v7049 = vunpack.c.h.b16 %v6894
  %v7050 = vunpack.c.l.b16 %v6895
  %v7051 = vunpack.c.h.b16 %v6895
  %v7052 = vunpack.c.l.b16 %v6896
  %v7053 = vunpack.c.h.b16 %v6896
  %v7054 = vunpack.c.l.b16 %v6897
  %v7055 = vunpack.c.h.b16 %v6897
  %v7056 = vunpack.c.l.b16 %v6898
  %v7057 = vunpack.c.h.b16 %v6898
  %v7058 = vunpack.c.l.b16 %v6899
  %v7059 = vunpack.c.h.b16 %v6899
  %v7060 = vunpack.c.l.b16 %v6900
  %v7061 = vunpack.c.h.b16 %v6900
  %v7062 = vunpack.c.l.b16 %v6901
  %v7063 = vunpack.c.h.b16 %v6901
  %v7064 = vunpack.c.l.b16 %v6902
  %v7065 = vunpack.c.h.b16 %v6902
  %v7066 = vunpack.c.l.b16 %v6903
  %v7067 = vunpack.c.h.b16 %v6903
  %v7068 = vunpack.c.l.b16 %v6904
  %v7069 = vunpack.c.h.b16 %v6904
  %v7070 = vunpack.c.l.b16 %v6905
  %v7071 = vunpack.c.h.b16 %v6905
  %v7072 = vunpack.c.l.b16 %v6906
  %v7073 = vunpack.c.h.b16 %v6906
  %v7074 = vunpack.c.l.b16 %v6907
  %v7075 = vunpack.c.h.b16 %v6907
  %v7076 = vunpack.c.l.b16 %v6908
  %v7077 = vunpack.c.h.b16 %v6908
  %v7078 = vunpack.c.l.b16 %v6909
  %v7079 = vunpack.c.h.b16 %v6909
  %v7080 = vunpack.c.l.b16 %v6910
  %v7081 = vunpack.c.h.b16 %v6910
  %v7082 = vunpack.c.l.b16 %v6911
  %v7083 = vunpack.c.h.b16 %v6911
  %v7084 = vunpack.c.l.b16 %v6912
  %v7085 = vunpack.c.h.b16 %v6912
  %v7086 = vunpack.c.l.b16 %v6913
  %v7087 = vunpack.c.h.b16 %v6913
  %v7088 = vunpack.c.l.b16 %v6914
  %v7089 = vunpack.c.h.b16 %v6914
  %v7090 = vunpack.c.l.b16 %v6915
  %v7091 = vunpack.c.h.b16 %v6915
  %v7092 = vunpack.c.l.b16 %v6916
  %v7093 = vunpack.c.h.b16 %v6916
  %v7094 = vunpack.c.l.b16 %v6917
  %v7095 = vunpack.c.h.b16 %v6917
  %v7096 = vunpack.c.l.b16 %v6918
  %v7097 = vunpack.c.h.b16 %v6918
  %v7098 = vunpack.c.l.b16 %v6919
  %v7099 = vunpack.c.h.b16 %v6919
  %v7100 = vunpack.c.l.b16 %v6920
  %v7101 = vunpack.c.h.b16 %v6920
  %v7102 = vunpack.c.l.b16 %v6921
  %v7103 = vunpack.c.h.b16 %v6921
  %v7104 = vunpack.c.l.b16 %v6922
  %v7105 = vunpack.c.h.b16 %v6922
  %v7106 = vunpack.c.l.b16 %v6923
  %v7107 = vunpack.c.h.b16 %v6923
  %v7108 = vunpack.c.l.b16 %v6924
  %v7109 = vunpack.c.h.b16 %v6924
  %v7110 = vunpack.c.l.b16 %v6925
  %v7111 = vunpack.c.h.b16 %v6925
  %v7112 = vunpack.c.l.b16 %v6926
  %v7113 = vunpack.c.h.b16 %v6926
  %v7114 = vunpack.c.l.b16 %v6927
  %v7115 = vunpack.c.h.b16 %v6927
  %v7116 = vunpack.c.l.b16 %v6928
  %v7117 = vunpack.c.h.b16 %v6928
  %v7118 = vunpack.c.l.b16 %v6929
  %v7119 = vunpack.c.h.b16 %v6929
  %v7120 = vunpack.c.l.b16 %v6930
  %v7121 = vunpack.c.h.b16 %v6930
  %v7122 = vunpack.c.l.b16 %v6931
  %v7123 = vunpack.c.h.b16 %v6931
  %v7124 = vpack.c.b16 %v7004, %v6996
  %v7125 = vpack.c.b16 %v7005, %v6997
  %v7126 = vpack.c.b16 %v7006, %v6998
  %v7127 = vpack.c.b16 %v7007, %v6999
  %v7128 = vpack.c.b16 %v7008, %v7000
  %v7129 = vpack.c.b16 %v7009, %v7001
  %v7130 = vpack.c.b16 %v7010, %v7002
  %v7131 = vpack.c.b16 %v7011, %v7003
  %v7132 = vpack.c.b16 %v7020, %v7012
  %v7133 = vpack.c.b16 %v7021, %v7013
  %v7134 = vpack.c.b16 %v7022, %v7014
  %v7135 = vpack.c.b16 %v7023, %v7015
  %v7136 = vpack.c.b16 %v7024, %v7016
  %v7137 = vpack.c.b16 %v7025, %v7017
  %v7138 = vpack.c.b16 %v7026, %v7018
  %v7139 = vpack.c.b16 %v7027, %v7019
  %v7140 = vpack.c.b16 %v7036, %v7028
  %v7141 = vpack.c.b16 %v7037, %v7029
  %v7142 = vpack.c.b16 %v7038, %v7030
  %v7143 = vpack.c.b16 %v7039, %v7031
  %v7144 = vpack.c.b16 %v7040, %v7032
  %v7145 = vpack.c.b16 %v7041, %v7033
  %v7146 = vpack.c.b16 %v7042, %v7034
  %v7147 = vpack.c.b16 %v7043, %v7035
  %v7148 = vpack.c.b16 %v7052, %v7044
  %v7149 = vpack.c.b16 %v7053, %v7045
  %v7150 = vpack.c.b16 %v7054, %v7046
  %v7151 = vpack.c.b16 %v7055, %v7047
  %v7152 = vpack.c.b16 %v7056, %v7048
  %v7153 = vpack.c.b16 %v7057, %v7049
  %v7154 = vpack.c.b16 %v7058, %v7050
  %v7155 = vpack.c.b16 %v7059, %v7051
  %v7156 = vpack.c.b16 %v7068, %v7060
  %v7157 = vpack.c.b16 %v7069, %v7061
  %v7158 = vpack.c.b16 %v7070, %v7062
  %v7159 = vpack.c.b16 %v7071, %v7063
  %v7160 = vpack.c.b16 %v7072, %v7064
  %v7161 = vpack.c.b16 %v7073, %v7065
  %v7162 = vpack.c.b16 %v7074, %v7066
  %v7163 = vpack.c.b16 %v7075, %v7067
  %v7164 = vpack.c.b16 %v7084, %v7076
  %v7165 = vpack.c.b16 %v7085, %v7077
  %v7166 = vpack.c.b16 %v7086, %v7078
  %v7167 = vpack.c.b16 %v7087, %v7079
  %v7168 = vpack.c.b16 %v7088, %v7080
  %v7169 = vpack.c.b16 %v7089, %v7081
  %v7170 = vpack.c.b16 %v7090, %v7082
  %v7171 = vpack.c.b16 %v7091, %v7083
  %v7172 = vpack.c.b16 %v7100, %v7092
  %v7173 = vpack.c.b16 %v7101, %v7093
  %v7174 = vpack.c.b16 %v7102, %v7094
  %v7175 = vpack.c.b16 %v7103, %v7095
  %v7176 = vpack.c.b16 %v7104, %v7096
  %v7177 = vpack.c.b16 %v7105, %v7097
  %v7178 = vpack.c.b16 %v7106, %v7098
  %v7179 = vpack.c.b16 %v7107, %v7099
  %v7180 = vpack.c.b16 %v7116, %v7108
  %v7181 = vpack.c.b16 %v7117, %v7109
  %v7182 = vpack.c.b16 %v7118, %v7110
  %v7183 = vpack.c.b16 %v7119, %v7111
  %v7184 = vpack.c.b16 %v7120, %v7112
  %v7185 = vpack.c.b16 %v7121, %v7113
  %v7186 = vpack.c.b16 %v7122, %v7114
  %v7187 = vpack.c.b16 %v7123, %v7115
  %7252 = vmatprep.subr.bf16.mxu0 %v7125
  %7253 = vmatpush1.bf16.msra.mxu0 %v7124
  %7254 = vmatprep.subr.bf16.mxu0 %v7133
  %7255 = vmatpush1.bf16.msra.mxu0 %v7132
  %7256 = vmatprep.subr.bf16.mxu0 %v7141
  %7257 = vmatpush1.bf16.msra.mxu0 %v7140
  %7258 = vmatprep.subr.bf16.mxu0 %v7149
  %7259 = vmatpush1.bf16.msra.mxu0 %v7148
  %7260 = vmatprep.subr.bf16.mxu0 %v7157
  %7261 = vmatpush1.bf16.msra.mxu0 %v7156
  %7262 = vmatprep.subr.bf16.mxu0 %v7165
  %7263 = vmatpush1.bf16.msra.mxu0 %v7164
  %7264 = vmatprep.subr.bf16.mxu0 %v7173
  %7265 = vmatpush1.bf16.msra.mxu0 %v7172
  %7266 = vmatprep.subr.bf16.mxu0 %v7181
  %7267 = vmatpush1.bf16.msra.mxu0 %v7180
  %7268 = vmatprep.subr.bf16.mxu0 0
  %7269 = vmatpush1.bf16.msra.mxu0 0
  %7270 = vmatprep.subr.bf16.mxu0 0
  %7271 = vmatpush1.bf16.msra.mxu0 0
  %7272 = vmatprep.subr.bf16.mxu0 0
  %7273 = vmatpush1.bf16.msra.mxu0 0
  %7274 = vmatprep.subr.bf16.mxu0 0
  %7275 = vmatpush1.bf16.msra.mxu0 0
  %7276 = vmatprep.subr.bf16.mxu0 0
  %7277 = vmatpush1.bf16.msra.mxu0 0
  %7278 = vmatprep.subr.bf16.mxu0 0
  %7279 = vmatpush1.bf16.msra.mxu0 0
  %7280 = vmatprep.subr.bf16.mxu0 0
  %7281 = vmatpush1.bf16.msra.mxu0 0
  %7282 = vmatprep.subr.bf16.mxu0 0
  %7283 = vmatpush1.bf16.msra.mxu0 0
  %7284 = vmatprep.mubr.bf16.mxu0 0
  %7285 = vmatmul.mubr.bf16.gmra.mrb[0].mxu0 %v6867
  %v7286 = vpop.f32.mrb[0].mxu0
  %v7287 = vadd.f32 0.0, %v7286
  %v7288 = vpop.f32.mrb[0].mxu0
  %v7289 = vadd.f32 0.0, %v7288
  %v7290 = vpop.f32.mrb[0].mxu0
  %v7291 = vpop.f32.mrb[0].mxu0
  %7292 = vdwg.mxu0
  %7293 = vmatprep.subr.bf16.mxu0 %v7127
  %7294 = vmatpush1.bf16.msra.mxu0 %v7126
  %7295 = vmatprep.subr.bf16.mxu0 %v7135
  %7296 = vmatpush1.bf16.msra.mxu0 %v7134
  %7297 = vmatprep.subr.bf16.mxu0 %v7143
  %7298 = vmatpush1.bf16.msra.mxu0 %v7142
  %7299 = vmatprep.subr.bf16.mxu0 %v7151
  %7300 = vmatpush1.bf16.msra.mxu0 %v7150
  %7301 = vmatprep.subr.bf16.mxu0 %v7159
  %7302 = vmatpush1.bf16.msra.mxu0 %v7158
  %7303 = vmatprep.subr.bf16.mxu0 %v7167
  %7304 = vmatpush1.bf16.msra.mxu0 %v7166
  %7305 = vmatprep.subr.bf16.mxu0 %v7175
  %7306 = vmatpush1.bf16.msra.mxu0 %v7174
  %7307 = vmatprep.subr.bf16.mxu0 %v7183
  %7308 = vmatpush1.bf16.msra.mxu0 %v7182
  %7309 = vmatprep.subr.bf16.mxu0 0
  %7310 = vmatpush1.bf16.msra.mxu0 0
  %7311 = vmatprep.subr.bf16.mxu0 0
  %7312 = vmatpush1.bf16.msra.mxu0 0
  %7313 = vmatprep.subr.bf16.mxu0 0
  %7314 = vmatpush1.bf16.msra.mxu0 0
  %7315 = vmatprep.subr.bf16.mxu0 0
  %7316 = vmatpush1.bf16.msra.mxu0 0
  %7317 = vmatprep.subr.bf16.mxu0 0
  %7318 = vmatpush1.bf16.msra.mxu0 0
  %7319 = vmatprep.subr.bf16.mxu0 0
  %7320 = vmatpush1.bf16.msra.mxu0 0
  %7321 = vmatprep.subr.bf16.mxu0 0
  %7322 = vmatpush1.bf16.msra.mxu0 0
  %7323 = vmatprep.subr.bf16.mxu0 0
  %7324 = vmatpush1.bf16.msra.mxu0 0
  %7325 = vmatprep.mubr.bf16.mxu0 0
  %7326 = vmatmul.mubr.bf16.gmra.mrb[0].mxu0 %v6867
  %v7327 = vpop.f32.mrb[0].mxu0
  %v7328 = vadd.f32 0.0, %v7327
  %v7329 = vpop.f32.mrb[0].mxu0
  %v7330 = vadd.f32 0.0, %v7329
  %v7331 = vpop.f32.mrb[0].mxu0
  %v7332 = vpop.f32.mrb[0].mxu0
  %7333 = vdwg.mxu0
  %7334 = vmatprep.subr.bf16.mxu0 %v7129
  %7335 = vmatpush1.bf16.msra.mxu0 %v7128
  %7336 = vmatprep.subr.bf16.mxu0 %v7137
  %7337 = vmatpush1.bf16.msra.mxu0 %v7136
  %7338 = vmatprep.subr.bf16.mxu0 %v7145
  %7339 = vmatpush1.bf16.msra.mxu0 %v7144
  %7340 = vmatprep.subr.bf16.mxu0 %v7153
  %7341 = vmatpush1.bf16.msra.mxu0 %v7152
  %7342 = vmatprep.subr.bf16.mxu0 %v7161
  %7343 = vmatpush1.bf16.msra.mxu0 %v7160
  %7344 = vmatprep.subr.bf16.mxu0 %v7169
  %7345 = vmatpush1.bf16.msra.mxu0 %v7168
  %7346 = vmatprep.subr.bf16.mxu0 %v7177
  %7347 = vmatpush1.bf16.msra.mxu0 %v7176
  %7348 = vmatprep.subr.bf16.mxu0 %v7185
  %7349 = vmatpush1.bf16.msra.mxu0 %v7184
  %7350 = vmatprep.subr.bf16.mxu0 0
  %7351 = vmatpush1.bf16.msra.mxu0 0
  %7352 = vmatprep.subr.bf16.mxu0 0
  %7353 = vmatpush1.bf16.msra.mxu0 0
  %7354 = vmatprep.subr.bf16.mxu0 0
  %7355 = vmatpush1.bf16.msra.mxu0 0
  %7356 = vmatprep.subr.bf16.mxu0 0
  %7357 = vmatpush1.bf16.msra.mxu0 0
  %7358 = vmatprep.subr.bf16.mxu0 0
  %7359 = vmatpush1.bf16.msra.mxu0 0
  %7360 = vmatprep.subr.bf16.mxu0 0
  %7361 = vmatpush1.bf16.msra.mxu0 0
  %7362 = vmatprep.subr.bf16.mxu0 0
  %7363 = vmatpush1.bf16.msra.mxu0 0
  %7364 = vmatprep.subr.bf16.mxu0 0
  %7365 = vmatpush1.bf16.msra.mxu0 0
  %7366 = vmatprep.mubr.bf16.mxu0 0
  %7367 = vmatmul.mubr.bf16.gmra.mrb[0].mxu0 %v6867
  %v7368 = vpop.f32.mrb[0].mxu0
  %v7369 = vadd.f32 0.0, %v7368
  %v7370 = vpop.f32.mrb[0].mxu0
  %v7371 = vadd.f32 0.0, %v7370
  %v7372 = vpop.f32.mrb[0].mxu0
  %v7373 = vpop.f32.mrb[0].mxu0
  %7374 = vdwg.mxu0
  %7375 = vmatprep.subr.bf16.mxu0 %v7131
  %7376 = vmatpush1.bf16.msra.mxu0 %v7130
  %7377 = vmatprep.subr.bf16.mxu0 %v7139
  %7378 = vmatpush1.bf16.msra.mxu0 %v7138
  %7379 = vmatprep.subr.bf16.mxu0 %v7147
  %7380 = vmatpush1.bf16.msra.mxu0 %v7146
  %7381 = vmatprep.subr.bf16.mxu0 %v7155
  %7382 = vmatpush1.bf16.msra.mxu0 %v7154
  %7383 = vmatprep.subr.bf16.mxu0 %v7163
  %7384 = vmatpush1.bf16.msra.mxu0 %v7162
  %7385 = vmatprep.subr.bf16.mxu0 %v7171
  %7386 = vmatpush1.bf16.msra.mxu0 %v7170
  %7387 = vmatprep.subr.bf16.mxu0 %v7179
  %7388 = vmatpush1.bf16.msra.mxu0 %v7178
  %7389 = vmatprep.subr.bf16.mxu0 %v7187
  %7390 = vmatpush1.bf16.msra.mxu0 %v7186
  %7391 = vmatprep.subr.bf16.mxu0 0
  %7392 = vmatpush1.bf16.msra.mxu0 0
  %7393 = vmatprep.subr.bf16.mxu0 0
  %7394 = vmatpush1.bf16.msra.mxu0 0
  %7395 = vmatprep.subr.bf16.mxu0 0
  %7396 = vmatpush1.bf16.msra.mxu0 0
  %7397 = vmatprep.subr.bf16.mxu0 0
  %7398 = vmatpush1.bf16.msra.mxu0 0
  %7399 = vmatprep.subr.bf16.mxu0 0
  %7400 = vmatpush1.bf16.msra.mxu0 0
  %7401 = vmatprep.subr.bf16.mxu0 0
  %7402 = vmatpush1.bf16.msra.mxu0 0
  %7403 = vmatprep.subr.bf16.mxu0 0
  %7404 = vmatpush1.bf16.msra.mxu0 0
  %7405 = vmatprep.subr.bf16.mxu0 0
  %7406 = vmatpush1.bf16.msra.mxu0 0
  %7407 = vmatprep.mubr.bf16.mxu0 0
  %7408 = vmatmul.mubr.bf16.gmra.mrb[0].mxu0 %v6867
  %v7409 = vpop.f32.mrb[0].mxu0
  %v7410 = vadd.f32 0.0, %v7409
  %v7411 = vpop.f32.mrb[0].mxu0
  %v7412 = vadd.f32 0.0, %v7411
  %v7413 = vpop.f32.mrb[0].mxu0
  %v7414 = vpop.f32.mrb[0].mxu0
  %7415 = vdwg.mxu0
  %v7416 = vmax.f32 %v7287, %v7369
  %v7417 = vmax.f32 %v7289, %v7371
  %v7418 = vmax.f32 %v7328, %v7410
  %v7419 = vmax.f32 %v7330, %v7412
  %v7420 = vld [vmem:[%s2] sm:$0xf]
  %v7422 = vlaneseq
  %v7423 = vshrl.u32 %v7422, 7
  %v7424 = vsub.s32 0, %v7423
  %v7425 = vrot.slane %v7420, %v7424
  %v7426 = vlaneseq
  %v7427 = vshrl.u32 %v7426, 7
  %v7428 = vsub.s32 1, %v7427
  %v7429 = vrot.slane %v7420, %v7428
  %v7430 = vlaneseq
  %v7431 = vshrl.u32 %v7430, 7
  %v7432 = vsub.s32 2, %v7431
  %v7433 = vrot.slane %v7420, %v7432
  %v7434 = vlaneseq
  %v7435 = vshrl.u32 %v7434, 7
  %v7436 = vsub.s32 3, %v7435
  %v7437 = vrot.slane %v7420, %v7436
  %v7442 = vadd.f32 %v7416, %v7425
  %v7443 = vadd.f32 %v7417, %v7429
  %v7444 = vadd.f32 %v7418, %v7433
  %v7445 = vadd.f32 %v7419, %v7437
  %v7446 = vmax.f32 %v7442, 0.0
  %v7447 = vmax.f32 %v7443, 0.0
  %v7448 = vmax.f32 %v7444, 0.0
  %v7449 = vmax.f32 %v7445, 0.0
  %v7450 = vmax.f32 %v7446, %v7448
  %v7451 = vmax.f32 %v7447, %v7449
  %v7452 = vld [vmem:[#allocation2] sm:$0xff]
  %v7453 = vpack.c.bf16 %v7450, %v7450
  %v7454 = vpack.c.bf16 %v7451, %v7451
  %s7455 = scalar_lea.vmem %s3, 1152
  %v7456 = vld [vmem:[%s7455] sm:$0xf]
  %v7457 = vld [vmem:[%s7455 + $0x4] sm:$0xf]
  %v7458 = vld [vmem:[%s7455 + $0x8] sm:$0xf]
  %v7459 = vld [vmem:[%s7455 + $0xc] sm:$0xf]
  %v7460 = vld [vmem:[%s7455 + $0x10] sm:$0xf]
  %v7461 = vld [vmem:[%s7455 + $0x14] sm:$0xf]
  %v7462 = vld [vmem:[%s7455 + $0x18] sm:$0xf]
  %v7463 = vld [vmem:[%s7455 + $0x1c] sm:$0xf]
  %v7464 = vld [vmem:[%s7455 + $0x20] sm:$0xf]
  %v7465 = vld [vmem:[%s7455 + $0x24] sm:$0xf]
  %v7466 = vld [vmem:[%s7455 + $0x28] sm:$0xf]
  %v7467 = vld [vmem:[%s7455 + $0x2c] sm:$0xf]
  %v7468 = vld [vmem:[%s7455 + $0x30] sm:$0xf]
  %v7469 = vld [vmem:[%s7455 + $0x34] sm:$0xf]
  %v7470 = vld [vmem:[%s7455 + $0x38] sm:$0xf]
  %v7471 = vld [vmem:[%s7455 + $0x3c] sm:$0xf]
  %v7472 = vld [vmem:[%s7455 + $0x40] sm:$0xf]
  %v7473 = vld [vmem:[%s7455 + $0x44] sm:$0xf]
  %v7474 = vld [vmem:[%s7455 + $0x48] sm:$0xf]
  %v7475 = vld [vmem:[%s7455 + $0x4c] sm:$0xf]
  %v7476 = vld [vmem:[%s7455 + $0x50] sm:$0xf]
  %v7477 = vld [vmem:[%s7455 + $0x54] sm:$0xf]
  %v7478 = vld [vmem:[%s7455 + $0x58] sm:$0xf]
  %v7479 = vld [vmem:[%s7455 + $0x5c] sm:$0xf]
  %v7480 = vld [vmem:[%s7455 + $0x60] sm:$0xf]
  %v7481 = vld [vmem:[%s7455 + $0x64] sm:$0xf]
  %v7482 = vld [vmem:[%s7455 + $0x68] sm:$0xf]
  %v7483 = vld [vmem:[%s7455 + $0x6c] sm:$0xf]
  %v7484 = vld [vmem:[%s7455 + $0x70] sm:$0xf]
  %v7485 = vld [vmem:[%s7455 + $0x74] sm:$0xf]
  %v7486 = vld [vmem:[%s7455 + $0x78] sm:$0xf]
  %v7487 = vld [vmem:[%s7455 + $0x7c] sm:$0xf]
  %v7520 = vunpack.c.l.b16 %v7456
  %v7521 = vunpack.c.l.b16 %v7457
  %v7522 = vunpack.c.l.b16 %v7458
  %v7523 = vunpack.c.l.b16 %v7459
  %v7524 = vunpack.c.l.b16 %v7460
  %v7525 = vunpack.c.l.b16 %v7461
  %v7526 = vunpack.c.l.b16 %v7462
  %v7527 = vunpack.c.l.b16 %v7463
  %v7528 = vunpack.c.l.b16 %v7464
  %v7529 = vunpack.c.l.b16 %v7465
  %v7530 = vunpack.c.l.b16 %v7466
  %v7531 = vunpack.c.l.b16 %v7467
  %v7532 = vunpack.c.l.b16 %v7468
  %v7533 = vunpack.c.l.b16 %v7469
  %v7534 = vunpack.c.l.b16 %v7470
  %v7535 = vunpack.c.l.b16 %v7471
  %v7536 = vunpack.c.l.b16 %v7472
  %v7537 = vunpack.c.l.b16 %v7473
  %v7538 = vunpack.c.l.b16 %v7474
  %v7539 = vunpack.c.l.b16 %v7475
  %v7540 = vunpack.c.l.b16 %v7476
  %v7541 = vunpack.c.l.b16 %v7477
  %v7542 = vunpack.c.l.b16 %v7478
  %v7543 = vunpack.c.l.b16 %v7479
  %v7544 = vunpack.c.l.b16 %v7480
  %v7545 = vunpack.c.l.b16 %v7481
  %v7546 = vunpack.c.l.b16 %v7482
  %v7547 = vunpack.c.l.b16 %v7483
  %v7548 = vunpack.c.l.b16 %v7484
  %v7549 = vunpack.c.l.b16 %v7485
  %v7550 = vunpack.c.l.b16 %v7486
  %v7551 = vunpack.c.l.b16 %v7487
  %v7552 = vpack.c.b16 %v7521, %v7520
  %v7553 = vpack.c.b16 %v7523, %v7522
  %v7554 = vpack.c.b16 %v7525, %v7524
  %v7555 = vpack.c.b16 %v7527, %v7526
  %v7556 = vpack.c.b16 %v7529, %v7528
  %v7557 = vpack.c.b16 %v7531, %v7530
  %v7558 = vpack.c.b16 %v7533, %v7532
  %v7559 = vpack.c.b16 %v7535, %v7534
  %v7560 = vpack.c.b16 %v7537, %v7536
  %v7561 = vpack.c.b16 %v7539, %v7538
  %v7562 = vpack.c.b16 %v7541, %v7540
  %v7563 = vpack.c.b16 %v7543, %v7542
  %v7564 = vpack.c.b16 %v7545, %v7544
  %v7565 = vpack.c.b16 %v7547, %v7546
  %v7566 = vpack.c.b16 %v7549, %v7548
  %v7567 = vpack.c.b16 %v7551, %v7550
  %7584 = vmatprep.subr.bf16.mxu0 0
  %7585 = vmatpush1.bf16.msra.mxu0 %v7552
  %7586 = vmatprep.subr.bf16.mxu0 0
  %7587 = vmatpush1.bf16.msra.mxu0 %v7553
  %7588 = vmatprep.subr.bf16.mxu0 0
  %7589 = vmatpush1.bf16.msra.mxu0 %v7554
  %7590 = vmatprep.subr.bf16.mxu0 0
  %7591 = vmatpush1.bf16.msra.mxu0 %v7555
  %7592 = vmatprep.subr.bf16.mxu0 0
  %7593 = vmatpush1.bf16.msra.mxu0 %v7556
  %7594 = vmatprep.subr.bf16.mxu0 0
  %7595 = vmatpush1.bf16.msra.mxu0 %v7557
  %7596 = vmatprep.subr.bf16.mxu0 0
  %7597 = vmatpush1.bf16.msra.mxu0 %v7558
  %7598 = vmatprep.subr.bf16.mxu0 0
  %7599 = vmatpush1.bf16.msra.mxu0 %v7559
  %7600 = vmatprep.subr.bf16.mxu0 0
  %7601 = vmatpush1.bf16.msra.mxu0 %v7560
  %7602 = vmatprep.subr.bf16.mxu0 0
  %7603 = vmatpush1.bf16.msra.mxu0 %v7561
  %7604 = vmatprep.subr.bf16.mxu0 0
  %7605 = vmatpush1.bf16.msra.mxu0 %v7562
  %7606 = vmatprep.subr.bf16.mxu0 0
  %7607 = vmatpush1.bf16.msra.mxu0 %v7563
  %7608 = vmatprep.subr.bf16.mxu0 0
  %7609 = vmatpush1.bf16.msra.mxu0 %v7564
  %7610 = vmatprep.subr.bf16.mxu0 0
  %7611 = vmatpush1.bf16.msra.mxu0 %v7565
  %7612 = vmatprep.subr.bf16.mxu0 0
  %7613 = vmatpush1.bf16.msra.mxu0 %v7566
  %7614 = vmatprep.subr.bf16.mxu0 0
  %7615 = vmatpush1.bf16.msra.mxu0 %v7567
  %7616 = vmatprep.mubr.bf16.mxu0 %v7454
  %7617 = vmatmul.mubr.bf16.gmra.mrb[0].mxu0 %v7453
  %v7618 = vpop.f32.mrb[0].mxu0
  %v7619 = vadd.f32 0.0, %v7618
  %v7620 = vpop.f32.mrb[0].mxu0
  %v7621 = vpop.f32.mrb[0].mxu0
  %v7622 = vpop.f32.mrb[0].mxu0
  %7623 = vdwg.mxu0
  %v7624 = vadd.f32 %v7452, %v7619
  %7625 = vst [vmem:[#allocation2] sm:$0xff] %v7624
  %s7626 = scalar_lea.vmem %s0, 40
  %v7627 = vld [vmem:[%s7626] sm:$0xf]
  %v7628 = vld [vmem:[%s1] sm:$0xff]
  %v7629 = vld [vmem:[%s1 + $0x8] sm:$0xff]
  %v7630 = vld [vmem:[%s1 + $0x10] sm:$0xff]
  %v7631 = vld [vmem:[%s1 + $0x18] sm:$0xff]
  %v7632 = vld [vmem:[%s1 + $0x20] sm:$0xff]
  %v7633 = vld [vmem:[%s1 + $0x28] sm:$0xff]
  %v7634 = vld [vmem:[%s1 + $0x30] sm:$0xff]
  %v7635 = vld [vmem:[%s1 + $0x38] sm:$0xff]
  %v7636 = vld [vmem:[%s1 + $0x40] sm:$0xff]
  %v7637 = vld [vmem:[%s1 + $0x48] sm:$0xff]
  %v7638 = vld [vmem:[%s1 + $0x50] sm:$0xff]
  %v7639 = vld [vmem:[%s1 + $0x58] sm:$0xff]
  %v7640 = vld [vmem:[%s1 + $0x60] sm:$0xff]
  %v7641 = vld [vmem:[%s1 + $0x68] sm:$0xff]
  %v7642 = vld [vmem:[%s1 + $0x70] sm:$0xff]
  %v7643 = vld [vmem:[%s1 + $0x78] sm:$0xff]
  %v7644 = vld [vmem:[%s1 + $0x80] sm:$0xff]
  %v7645 = vld [vmem:[%s1 + $0x88] sm:$0xff]
  %v7646 = vld [vmem:[%s1 + $0x90] sm:$0xff]
  %v7647 = vld [vmem:[%s1 + $0x98] sm:$0xff]
  %v7648 = vld [vmem:[%s1 + $0xa0] sm:$0xff]
  %v7649 = vld [vmem:[%s1 + $0xa8] sm:$0xff]
  %v7650 = vld [vmem:[%s1 + $0xb0] sm:$0xff]
  %v7651 = vld [vmem:[%s1 + $0xb8] sm:$0xff]
  %v7652 = vld [vmem:[%s1 + $0xc0] sm:$0xff]
  %v7653 = vld [vmem:[%s1 + $0xc8] sm:$0xff]
  %v7654 = vld [vmem:[%s1 + $0xd0] sm:$0xff]
  %v7655 = vld [vmem:[%s1 + $0xd8] sm:$0xff]
  %v7656 = vld [vmem:[%s1 + $0xe0] sm:$0xff]
  %v7657 = vld [vmem:[%s1 + $0xe8] sm:$0xff]
  %v7658 = vld [vmem:[%s1 + $0xf0] sm:$0xff]
  %v7659 = vld [vmem:[%s1 + $0xf8] sm:$0xff]
  %v7660 = vld [vmem:[%s1 + $0x100] sm:$0xff]
  %v7661 = vld [vmem:[%s1 + $0x108] sm:$0xff]
  %v7662 = vld [vmem:[%s1 + $0x110] sm:$0xff]
  %v7663 = vld [vmem:[%s1 + $0x118] sm:$0xff]
  %v7664 = vld [vmem:[%s1 + $0x120] sm:$0xff]
  %v7665 = vld [vmem:[%s1 + $0x128] sm:$0xff]
  %v7666 = vld [vmem:[%s1 + $0x130] sm:$0xff]
  %v7667 = vld [vmem:[%s1 + $0x138] sm:$0xff]
  %v7668 = vld [vmem:[%s1 + $0x140] sm:$0xff]
  %v7669 = vld [vmem:[%s1 + $0x148] sm:$0xff]
  %v7670 = vld [vmem:[%s1 + $0x150] sm:$0xff]
  %v7671 = vld [vmem:[%s1 + $0x158] sm:$0xff]
  %v7672 = vld [vmem:[%s1 + $0x160] sm:$0xff]
  %v7673 = vld [vmem:[%s1 + $0x168] sm:$0xff]
  %v7674 = vld [vmem:[%s1 + $0x170] sm:$0xff]
  %v7675 = vld [vmem:[%s1 + $0x178] sm:$0xff]
  %v7676 = vld [vmem:[%s1 + $0x180] sm:$0xff]
  %v7677 = vld [vmem:[%s1 + $0x188] sm:$0xff]
  %v7678 = vld [vmem:[%s1 + $0x190] sm:$0xff]
  %v7679 = vld [vmem:[%s1 + $0x198] sm:$0xff]
  %v7680 = vld [vmem:[%s1 + $0x1a0] sm:$0xff]
  %v7681 = vld [vmem:[%s1 + $0x1a8] sm:$0xff]
  %v7682 = vld [vmem:[%s1 + $0x1b0] sm:$0xff]
  %v7683 = vld [vmem:[%s1 + $0x1b8] sm:$0xff]
  %v7684 = vld [vmem:[%s1 + $0x1c0] sm:$0xff]
  %v7685 = vld [vmem:[%s1 + $0x1c8] sm:$0xff]
  %v7686 = vld [vmem:[%s1 + $0x1d0] sm:$0xff]
  %v7687 = vld [vmem:[%s1 + $0x1d8] sm:$0xff]
  %v7688 = vld [vmem:[%s1 + $0x1e0] sm:$0xff]
  %v7689 = vld [vmem:[%s1 + $0x1e8] sm:$0xff]
  %v7690 = vld [vmem:[%s1 + $0x1f0] sm:$0xff]
  %v7691 = vld [vmem:[%s1 + $0x1f8] sm:$0xff]
  %v7756 = vunpack.c.l.b16 %v7628
  %v7757 = vunpack.c.h.b16 %v7628
  %v7758 = vunpack.c.l.b16 %v7629
  %v7759 = vunpack.c.h.b16 %v7629
  %v7760 = vunpack.c.l.b16 %v7630
  %v7761 = vunpack.c.h.b16 %v7630
  %v7762 = vunpack.c.l.b16 %v7631
  %v7763 = vunpack.c.h.b16 %v7631
  %v7764 = vunpack.c.l.b16 %v7632
  %v7765 = vunpack.c.h.b16 %v7632
  %v7766 = vunpack.c.l.b16 %v7633
  %v7767 = vunpack.c.h.b16 %v7633
  %v7768 = vunpack.c.l.b16 %v7634
  %v7769 = vunpack.c.h.b16 %v7634
  %v7770 = vunpack.c.l.b16 %v7635
  %v7771 = vunpack.c.h.b16 %v7635
  %v7772 = vunpack.c.l.b16 %v7636
  %v7773 = vunpack.c.h.b16 %v7636
  %v7774 = vunpack.c.l.b16 %v7637
  %v7775 = vunpack.c.h.b16 %v7637
  %v7776 = vunpack.c.l.b16 %v7638
  %v7777 = vunpack.c.h.b16 %v7638
  %v7778 = vunpack.c.l.b16 %v7639
  %v7779 = vunpack.c.h.b16 %v7639
  %v7780 = vunpack.c.l.b16 %v7640
  %v7781 = vunpack.c.h.b16 %v7640
  %v7782 = vunpack.c.l.b16 %v7641
  %v7783 = vunpack.c.h.b16 %v7641
  %v7784 = vunpack.c.l.b16 %v7642
  %v7785 = vunpack.c.h.b16 %v7642
  %v7786 = vunpack.c.l.b16 %v7643
  %v7787 = vunpack.c.h.b16 %v7643
  %v7788 = vunpack.c.l.b16 %v7644
  %v7789 = vunpack.c.h.b16 %v7644
  %v7790 = vunpack.c.l.b16 %v7645
  %v7791 = vunpack.c.h.b16 %v7645
  %v7792 = vunpack.c.l.b16 %v7646
  %v7793 = vunpack.c.h.b16 %v7646
  %v7794 = vunpack.c.l.b16 %v7647
  %v7795 = vunpack.c.h.b16 %v7647
  %v7796 = vunpack.c.l.b16 %v7648
  %v7797 = vunpack.c.h.b16 %v7648
  %v7798 = vunpack.c.l.b16 %v7649
  %v7799 = vunpack.c.h.b16 %v7649
  %v7800 = vunpack.c.l.b16 %v7650
  %v7801 = vunpack.c.h.b16 %v7650
  %v7802 = vunpack.c.l.b16 %v7651
  %v7803 = vunpack.c.h.b16 %v7651
  %v7804 = vunpack.c.l.b16 %v7652
  %v7805 = vunpack.c.h.b16 %v7652
  %v7806 = vunpack.c.l.b16 %v7653
  %v7807 = vunpack.c.h.b16 %v7653
  %v7808 = vunpack.c.l.b16 %v7654
  %v7809 = vunpack.c.h.b16 %v7654
  %v7810 = vunpack.c.l.b16 %v7655
  %v7811 = vunpack.c.h.b16 %v7655
  %v7812 = vunpack.c.l.b16 %v7656
  %v7813 = vunpack.c.h.b16 %v7656
  %v7814 = vunpack.c.l.b16 %v7657
  %v7815 = vunpack.c.h.b16 %v7657
  %v7816 = vunpack.c.l.b16 %v7658
  %v7817 = vunpack.c.h.b16 %v7658
  %v7818 = vunpack.c.l.b16 %v7659
  %v7819 = vunpack.c.h.b16 %v7659
  %v7820 = vunpack.c.l.b16 %v7660
  %v7821 = vunpack.c.h.b16 %v7660
  %v7822 = vunpack.c.l.b16 %v7661
  %v7823 = vunpack.c.h.b16 %v7661
  %v7824 = vunpack.c.l.b16 %v7662
  %v7825 = vunpack.c.h.b16 %v7662
  %v7826 = vunpack.c.l.b16 %v7663
  %v7827 = vunpack.c.h.b16 %v7663
  %v7828 = vunpack.c.l.b16 %v7664
  %v7829 = vunpack.c.h.b16 %v7664
  %v7830 = vunpack.c.l.b16 %v7665
  %v7831 = vunpack.c.h.b16 %v7665
  %v7832 = vunpack.c.l.b16 %v7666
  %v7833 = vunpack.c.h.b16 %v7666
  %v7834 = vunpack.c.l.b16 %v7667
  %v7835 = vunpack.c.h.b16 %v7667
  %v7836 = vunpack.c.l.b16 %v7668
  %v7837 = vunpack.c.h.b16 %v7668
  %v7838 = vunpack.c.l.b16 %v7669
  %v7839 = vunpack.c.h.b16 %v7669
  %v7840 = vunpack.c.l.b16 %v7670
  %v7841 = vunpack.c.h.b16 %v7670
  %v7842 = vunpack.c.l.b16 %v7671
  %v7843 = vunpack.c.h.b16 %v7671
  %v7844 = vunpack.c.l.b16 %v7672
  %v7845 = vunpack.c.h.b16 %v7672
  %v7846 = vunpack.c.l.b16 %v7673
  %v7847 = vunpack.c.h.b16 %v7673
  %v7848 = vunpack.c.l.b16 %v7674
  %v7849 = vunpack.c.h.b16 %v7674
  %v7850 = vunpack.c.l.b16 %v7675
  %v7851 = vunpack.c.h.b16 %v7675
  %v7852 = vunpack.c.l.b16 %v7676
  %v7853 = vunpack.c.h.b16 %v7676
  %v7854 = vunpack.c.l.b16 %v7677
  %v7855 = vunpack.c.h.b16 %v7677
  %v7856 = vunpack.c.l.b16 %v7678
  %v7857 = vunpack.c.h.b16 %v7678
  %v7858 = vunpack.c.l.b16 %v7679
  %v7859 = vunpack.c.h.b16 %v7679
  %v7860 = vunpack.c.l.b16 %v7680
  %v7861 = vunpack.c.h.b16 %v7680
  %v7862 = vunpack.c.l.b16 %v7681
  %v7863 = vunpack.c.h.b16 %v7681
  %v7864 = vunpack.c.l.b16 %v7682
  %v7865 = vunpack.c.h.b16 %v7682
  %v7866 = vunpack.c.l.b16 %v7683
  %v7867 = vunpack.c.h.b16 %v7683
  %v7868 = vunpack.c.l.b16 %v7684
  %v7869 = vunpack.c.h.b16 %v7684
  %v7870 = vunpack.c.l.b16 %v7685
  %v7871 = vunpack.c.h.b16 %v7685
  %v7872 = vunpack.c.l.b16 %v7686
  %v7873 = vunpack.c.h.b16 %v7686
  %v7874 = vunpack.c.l.b16 %v7687
  %v7875 = vunpack.c.h.b16 %v7687
  %v7876 = vunpack.c.l.b16 %v7688
  %v7877 = vunpack.c.h.b16 %v7688
  %v7878 = vunpack.c.l.b16 %v7689
  %v7879 = vunpack.c.h.b16 %v7689
  %v7880 = vunpack.c.l.b16 %v7690
  %v7881 = vunpack.c.h.b16 %v7690
  %v7882 = vunpack.c.l.b16 %v7691
  %v7883 = vunpack.c.h.b16 %v7691
  %v7884 = vpack.c.b16 %v7764, %v7756
  %v7885 = vpack.c.b16 %v7765, %v7757
  %v7886 = vpack.c.b16 %v7766, %v7758
  %v7887 = vpack.c.b16 %v7767, %v7759
  %v7888 = vpack.c.b16 %v7768, %v7760
  %v7889 = vpack.c.b16 %v7769, %v7761
  %v7890 = vpack.c.b16 %v7770, %v7762
  %v7891 = vpack.c.b16 %v7771, %v7763
  %v7892 = vpack.c.b16 %v7780, %v7772
  %v7893 = vpack.c.b16 %v7781, %v7773
  %v7894 = vpack.c.b16 %v7782, %v7774
  %v7895 = vpack.c.b16 %v7783, %v7775
  %v7896 = vpack.c.b16 %v7784, %v7776
  %v7897 = vpack.c.b16 %v7785, %v7777
  %v7898 = vpack.c.b16 %v7786, %v7778
  %v7899 = vpack.c.b16 %v7787, %v7779
  %v7900 = vpack.c.b16 %v7796, %v7788
  %v7901 = vpack.c.b16 %v7797, %v7789
  %v7902 = vpack.c.b16 %v7798, %v7790
  %v7903 = vpack.c.b16 %v7799, %v7791
  %v7904 = vpack.c.b16 %v7800, %v7792
  %v7905 = vpack.c.b16 %v7801, %v7793
  %v7906 = vpack.c.b16 %v7802, %v7794
  %v7907 = vpack.c.b16 %v7803, %v7795
  %v7908 = vpack.c.b16 %v7812, %v7804
  %v7909 = vpack.c.b16 %v7813, %v7805
  %v7910 = vpack.c.b16 %v7814, %v7806
  %v7911 = vpack.c.b16 %v7815, %v7807
  %v7912 = vpack.c.b16 %v7816, %v7808
  %v7913 = vpack.c.b16 %v7817, %v7809
  %v7914 = vpack.c.b16 %v7818, %v7810
  %v7915 = vpack.c.b16 %v7819, %v7811
  %v7916 = vpack.c.b16 %v7828, %v7820
  %v7917 = vpack.c.b16 %v7829, %v7821
  %v7918 = vpack.c.b16 %v7830, %v7822
  %v7919 = vpack.c.b16 %v7831, %v7823
  %v7920 = vpack.c.b16 %v7832, %v7824
  %v7921 = vpack.c.b16 %v7833, %v7825
  %v7922 = vpack.c.b16 %v7834, %v7826
  %v7923 = vpack.c.b16 %v7835, %v7827
  %v7924 = vpack.c.b16 %v7844, %v7836
  %v7925 = vpack.c.b16 %v7845, %v7837
  %v7926 = vpack.c.b16 %v7846, %v7838
  %v7927 = vpack.c.b16 %v7847, %v7839
  %v7928 = vpack.c.b16 %v7848, %v7840
  %v7929 = vpack.c.b16 %v7849, %v7841
  %v7930 = vpack.c.b16 %v7850, %v7842
  %v7931 = vpack.c.b16 %v7851, %v7843
  %v7932 = vpack.c.b16 %v7860, %v7852
  %v7933 = vpack.c.b16 %v7861, %v7853
  %v7934 = vpack.c.b16 %v7862, %v7854
  %v7935 = vpack.c.b16 %v7863, %v7855
  %v7936 = vpack.c.b16 %v7864, %v7856
  %v7937 = vpack.c.b16 %v7865, %v7857
  %v7938 = vpack.c.b16 %v7866, %v7858
  %v7939 = vpack.c.b16 %v7867, %v7859
  %v7940 = vpack.c.b16 %v7876, %v7868
  %v7941 = vpack.c.b16 %v7877, %v7869
  %v7942 = vpack.c.b16 %v7878, %v7870
  %v7943 = vpack.c.b16 %v7879, %v7871
  %v7944 = vpack.c.b16 %v7880, %v7872
  %v7945 = vpack.c.b16 %v7881, %v7873
  %v7946 = vpack.c.b16 %v7882, %v7874
  %v7947 = vpack.c.b16 %v7883, %v7875
  %8012 = vmatprep.subr.bf16.mxu0 %v7885
  %8013 = vmatpush1.bf16.msra.mxu0 %v7884
  %8014 = vmatprep.subr.bf16.mxu0 %v7893
  %8015 = vmatpush1.bf16.msra.mxu0 %v7892
  %8016 = vmatprep.subr.bf16.mxu0 %v7901
  %8017 = vmatpush1.bf16.msra.mxu0 %v7900
  %8018 = vmatprep.subr.bf16.mxu0 %v7909
  %8019 = vmatpush1.bf16.msra.mxu0 %v7908
  %8020 = vmatprep.subr.bf16.mxu0 %v7917
  %8021 = vmatpush1.bf16.msra.mxu0 %v7916
  %8022 = vmatprep.subr.bf16.mxu0 %v7925
  %8023 = vmatpush1.bf16.msra.mxu0 %v7924
  %8024 = vmatprep.subr.bf16.mxu0 %v7933
  %8025 = vmatpush1.bf16.msra.mxu0 %v7932
  %8026 = vmatprep.subr.bf16.mxu0 %v7941
  %8027 = vmatpush1.bf16.msra.mxu0 %v7940
  %8028 = vmatprep.subr.bf16.mxu0 0
  %8029 = vmatpush1.bf16.msra.mxu0 0
  %8030 = vmatprep.subr.bf16.mxu0 0
  %8031 = vmatpush1.bf16.msra.mxu0 0
  %8032 = vmatprep.subr.bf16.mxu0 0
  %8033 = vmatpush1.bf16.msra.mxu0 0
  %8034 = vmatprep.subr.bf16.mxu0 0
  %8035 = vmatpush1.bf16.msra.mxu0 0
  %8036 = vmatprep.subr.bf16.mxu0 0
  %8037 = vmatpush1.bf16.msra.mxu0 0
  %8038 = vmatprep.subr.bf16.mxu0 0
  %8039 = vmatpush1.bf16.msra.mxu0 0
  %8040 = vmatprep.subr.bf16.mxu0 0
  %8041 = vmatpush1.bf16.msra.mxu0 0
  %8042 = vmatprep.subr.bf16.mxu0 0
  %8043 = vmatpush1.bf16.msra.mxu0 0
  %8044 = vmatprep.mubr.bf16.mxu0 0
  %8045 = vmatmul.mubr.bf16.gmra.mrb[0].mxu0 %v7627
  %v8046 = vpop.f32.mrb[0].mxu0
  %v8047 = vadd.f32 0.0, %v8046
  %v8048 = vpop.f32.mrb[0].mxu0
  %v8049 = vadd.f32 0.0, %v8048
  %v8050 = vpop.f32.mrb[0].mxu0
  %v8051 = vpop.f32.mrb[0].mxu0
  %8052 = vdwg.mxu0
  %8053 = vmatprep.subr.bf16.mxu0 %v7887
  %8054 = vmatpush1.bf16.msra.mxu0 %v7886
  %8055 = vmatprep.subr.bf16.mxu0 %v7895
  %8056 = vmatpush1.bf16.msra.mxu0 %v7894
  %8057 = vmatprep.subr.bf16.mxu0 %v7903
  %8058 = vmatpush1.bf16.msra.mxu0 %v7902
  %8059 = vmatprep.subr.bf16.mxu0 %v7911
  %8060 = vmatpush1.bf16.msra.mxu0 %v7910
  %8061 = vmatprep.subr.bf16.mxu0 %v7919
  %8062 = vmatpush1.bf16.msra.mxu0 %v7918
  %8063 = vmatprep.subr.bf16.mxu0 %v7927
  %8064 = vmatpush1.bf16.msra.mxu0 %v7926
  %8065 = vmatprep.subr.bf16.mxu0 %v7935
  %8066 = vmatpush1.bf16.msra.mxu0 %v7934
  %8067 = vmatprep.subr.bf16.mxu0 %v7943
  %8068 = vmatpush1.bf16.msra.mxu0 %v7942
  %8069 = vmatprep.subr.bf16.mxu0 0
  %8070 = vmatpush1.bf16.msra.mxu0 0
  %8071 = vmatprep.subr.bf16.mxu0 0
  %8072 = vmatpush1.bf16.msra.mxu0 0
  %8073 = vmatprep.subr.bf16.mxu0 0
  %8074 = vmatpush1.bf16.msra.mxu0 0
  %8075 = vmatprep.subr.bf16.mxu0 0
  %8076 = vmatpush1.bf16.msra.mxu0 0
  %8077 = vmatprep.subr.bf16.mxu0 0
  %8078 = vmatpush1.bf16.msra.mxu0 0
  %8079 = vmatprep.subr.bf16.mxu0 0
  %8080 = vmatpush1.bf16.msra.mxu0 0
  %8081 = vmatprep.subr.bf16.mxu0 0
  %8082 = vmatpush1.bf16.msra.mxu0 0
  %8083 = vmatprep.subr.bf16.mxu0 0
  %8084 = vmatpush1.bf16.msra.mxu0 0
  %8085 = vmatprep.mubr.bf16.mxu0 0
  %8086 = vmatmul.mubr.bf16.gmra.mrb[0].mxu0 %v7627
  %v8087 = vpop.f32.mrb[0].mxu0
  %v8088 = vadd.f32 0.0, %v8087
  %v8089 = vpop.f32.mrb[0].mxu0
  %v8090 = vadd.f32 0.0, %v8089
  %v8091 = vpop.f32.mrb[0].mxu0
  %v8092 = vpop.f32.mrb[0].mxu0
  %8093 = vdwg.mxu0
  %8094 = vmatprep.subr.bf16.mxu0 %v7889
  %8095 = vmatpush1.bf16.msra.mxu0 %v7888
  %8096 = vmatprep.subr.bf16.mxu0 %v7897
  %8097 = vmatpush1.bf16.msra.mxu0 %v7896
  %8098 = vmatprep.subr.bf16.mxu0 %v7905
  %8099 = vmatpush1.bf16.msra.mxu0 %v7904
  %8100 = vmatprep.subr.bf16.mxu0 %v7913
  %8101 = vmatpush1.bf16.msra.mxu0 %v7912
  %8102 = vmatprep.subr.bf16.mxu0 %v7921
  %8103 = vmatpush1.bf16.msra.mxu0 %v7920
  %8104 = vmatprep.subr.bf16.mxu0 %v7929
  %8105 = vmatpush1.bf16.msra.mxu0 %v7928
  %8106 = vmatprep.subr.bf16.mxu0 %v7937
  %8107 = vmatpush1.bf16.msra.mxu0 %v7936
  %8108 = vmatprep.subr.bf16.mxu0 %v7945
  %8109 = vmatpush1.bf16.msra.mxu0 %v7944
  %8110 = vmatprep.subr.bf16.mxu0 0
  %8111 = vmatpush1.bf16.msra.mxu0 0
  %8112 = vmatprep.subr.bf16.mxu0 0
  %8113 = vmatpush1.bf16.msra.mxu0 0
  %8114 = vmatprep.subr.bf16.mxu0 0
  %8115 = vmatpush1.bf16.msra.mxu0 0
  %8116 = vmatprep.subr.bf16.mxu0 0
  %8117 = vmatpush1.bf16.msra.mxu0 0
  %8118 = vmatprep.subr.bf16.mxu0 0
  %8119 = vmatpush1.bf16.msra.mxu0 0
  %8120 = vmatprep.subr.bf16.mxu0 0
  %8121 = vmatpush1.bf16.msra.mxu0 0
  %8122 = vmatprep.subr.bf16.mxu0 0
  %8123 = vmatpush1.bf16.msra.mxu0 0
  %8124 = vmatprep.subr.bf16.mxu0 0
  %8125 = vmatpush1.bf16.msra.mxu0 0
  %8126 = vmatprep.mubr.bf16.mxu0 0
  %8127 = vmatmul.mubr.bf16.gmra.mrb[0].mxu0 %v7627
  %v8128 = vpop.f32.mrb[0].mxu0
  %v8129 = vadd.f32 0.0, %v8128
  %v8130 = vpop.f32.mrb[0].mxu0
  %v8131 = vadd.f32 0.0, %v8130
  %v8132 = vpop.f32.mrb[0].mxu0
  %v8133 = vpop.f32.mrb[0].mxu0
  %8134 = vdwg.mxu0
  %8135 = vmatprep.subr.bf16.mxu0 %v7891
  %8136 = vmatpush1.bf16.msra.mxu0 %v7890
  %8137 = vmatprep.subr.bf16.mxu0 %v7899
  %8138 = vmatpush1.bf16.msra.mxu0 %v7898
  %8139 = vmatprep.subr.bf16.mxu0 %v7907
  %8140 = vmatpush1.bf16.msra.mxu0 %v7906
  %8141 = vmatprep.subr.bf16.mxu0 %v7915
  %8142 = vmatpush1.bf16.msra.mxu0 %v7914
  %8143 = vmatprep.subr.bf16.mxu0 %v7923
  %8144 = vmatpush1.bf16.msra.mxu0 %v7922
  %8145 = vmatprep.subr.bf16.mxu0 %v7931
  %8146 = vmatpush1.bf16.msra.mxu0 %v7930
  %8147 = vmatprep.subr.bf16.mxu0 %v7939
  %8148 = vmatpush1.bf16.msra.mxu0 %v7938
  %8149 = vmatprep.subr.bf16.mxu0 %v7947
  %8150 = vmatpush1.bf16.msra.mxu0 %v7946
  %8151 = vmatprep.subr.bf16.mxu0 0
  %8152 = vmatpush1.bf16.msra.mxu0 0
  %8153 = vmatprep.subr.bf16.mxu0 0
  %8154 = vmatpush1.bf16.msra.mxu0 0
  %8155 = vmatprep.subr.bf16.mxu0 0
  %8156 = vmatpush1.bf16.msra.mxu0 0
  %8157 = vmatprep.subr.bf16.mxu0 0
  %8158 = vmatpush1.bf16.msra.mxu0 0
  %8159 = vmatprep.subr.bf16.mxu0 0
  %8160 = vmatpush1.bf16.msra.mxu0 0
  %8161 = vmatprep.subr.bf16.mxu0 0
  %8162 = vmatpush1.bf16.msra.mxu0 0
  %8163 = vmatprep.subr.bf16.mxu0 0
  %8164 = vmatpush1.bf16.msra.mxu0 0
  %8165 = vmatprep.subr.bf16.mxu0 0
  %8166 = vmatpush1.bf16.msra.mxu0 0
  %8167 = vmatprep.mubr.bf16.mxu0 0
  %8168 = vmatmul.mubr.bf16.gmra.mrb[0].mxu0 %v7627
  %v8169 = vpop.f32.mrb[0].mxu0
  %v8170 = vadd.f32 0.0, %v8169
  %v8171 = vpop.f32.mrb[0].mxu0
  %v8172 = vadd.f32 0.0, %v8171
  %v8173 = vpop.f32.mrb[0].mxu0
  %v8174 = vpop.f32.mrb[0].mxu0
  %8175 = vdwg.mxu0
  %v8176 = vmax.f32 %v8047, %v8129
  %v8177 = vmax.f32 %v8049, %v8131
  %v8178 = vmax.f32 %v8088, %v8170
  %v8179 = vmax.f32 %v8090, %v8172
  %v8180 = vld [vmem:[%s2] sm:$0xf]
  %v8182 = vlaneseq
  %v8183 = vshrl.u32 %v8182, 7
  %v8184 = vsub.s32 0, %v8183
  %v8185 = vrot.slane %v8180, %v8184
  %v8186 = vlaneseq
  %v8187 = vshrl.u32 %v8186, 7
  %v8188 = vsub.s32 1, %v8187
  %v8189 = vrot.slane %v8180, %v8188
  %v8190 = vlaneseq
  %v8191 = vshrl.u32 %v8190, 7
  %v8192 = vsub.s32 2, %v8191
  %v8193 = vrot.slane %v8180, %v8192
  %v8194 = vlaneseq
  %v8195 = vshrl.u32 %v8194, 7
  %v8196 = vsub.s32 3, %v8195
  %v8197 = vrot.slane %v8180, %v8196
  %v8202 = vadd.f32 %v8176, %v8185
  %v8203 = vadd.f32 %v8177, %v8189
  %v8204 = vadd.f32 %v8178, %v8193
  %v8205 = vadd.f32 %v8179, %v8197
  %v8206 = vmax.f32 %v8202, 0.0
  %v8207 = vmax.f32 %v8203, 0.0
  %v8208 = vmax.f32 %v8204, 0.0
  %v8209 = vmax.f32 %v8205, 0.0
  %v8210 = vmax.f32 %v8206, %v8208
  %v8211 = vmax.f32 %v8207, %v8209
  %v8212 = vld [vmem:[#allocation2] sm:$0xff]
  %v8213 = vpack.c.bf16 %v8210, %v8210
  %v8214 = vpack.c.bf16 %v8211, %v8211
  %s8215 = scalar_lea.vmem %s3, 1280
  %v8216 = vld [vmem:[%s8215] sm:$0xf]
  %v8217 = vld [vmem:[%s8215 + $0x4] sm:$0xf]
  %v8218 = vld [vmem:[%s8215 + $0x8] sm:$0xf]
  %v8219 = vld [vmem:[%s8215 + $0xc] sm:$0xf]
  %v8220 = vld [vmem:[%s8215 + $0x10] sm:$0xf]
  %v8221 = vld [vmem:[%s8215 + $0x14] sm:$0xf]
  %v8222 = vld [vmem:[%s8215 + $0x18] sm:$0xf]
  %v8223 = vld [vmem:[%s8215 + $0x1c] sm:$0xf]
  %v8224 = vld [vmem:[%s8215 + $0x20] sm:$0xf]
  %v8225 = vld [vmem:[%s8215 + $0x24] sm:$0xf]
  %v8226 = vld [vmem:[%s8215 + $0x28] sm:$0xf]
  %v8227 = vld [vmem:[%s8215 + $0x2c] sm:$0xf]
  %v8228 = vld [vmem:[%s8215 + $0x30] sm:$0xf]
  %v8229 = vld [vmem:[%s8215 + $0x34] sm:$0xf]
  %v8230 = vld [vmem:[%s8215 + $0x38] sm:$0xf]
  %v8231 = vld [vmem:[%s8215 + $0x3c] sm:$0xf]
  %v8232 = vld [vmem:[%s8215 + $0x40] sm:$0xf]
  %v8233 = vld [vmem:[%s8215 + $0x44] sm:$0xf]
  %v8234 = vld [vmem:[%s8215 + $0x48] sm:$0xf]
  %v8235 = vld [vmem:[%s8215 + $0x4c] sm:$0xf]
  %v8236 = vld [vmem:[%s8215 + $0x50] sm:$0xf]
  %v8237 = vld [vmem:[%s8215 + $0x54] sm:$0xf]
  %v8238 = vld [vmem:[%s8215 + $0x58] sm:$0xf]
  %v8239 = vld [vmem:[%s8215 + $0x5c] sm:$0xf]
  %v8240 = vld [vmem:[%s8215 + $0x60] sm:$0xf]
  %v8241 = vld [vmem:[%s8215 + $0x64] sm:$0xf]
  %v8242 = vld [vmem:[%s8215 + $0x68] sm:$0xf]
  %v8243 = vld [vmem:[%s8215 + $0x6c] sm:$0xf]
  %v8244 = vld [vmem:[%s8215 + $0x70] sm:$0xf]
  %v8245 = vld [vmem:[%s8215 + $0x74] sm:$0xf]
  %v8246 = vld [vmem:[%s8215 + $0x78] sm:$0xf]
  %v8247 = vld [vmem:[%s8215 + $0x7c] sm:$0xf]
  %v8280 = vunpack.c.l.b16 %v8216
  %v8281 = vunpack.c.l.b16 %v8217
  %v8282 = vunpack.c.l.b16 %v8218
  %v8283 = vunpack.c.l.b16 %v8219
  %v8284 = vunpack.c.l.b16 %v8220
  %v8285 = vunpack.c.l.b16 %v8221
  %v8286 = vunpack.c.l.b16 %v8222
  %v8287 = vunpack.c.l.b16 %v8223
  %v8288 = vunpack.c.l.b16 %v8224
  %v8289 = vunpack.c.l.b16 %v8225
  %v8290 = vunpack.c.l.b16 %v8226
  %v8291 = vunpack.c.l.b16 %v8227
  %v8292 = vunpack.c.l.b16 %v8228
  %v8293 = vunpack.c.l.b16 %v8229
  %v8294 = vunpack.c.l.b16 %v8230
  %v8295 = vunpack.c.l.b16 %v8231
  %v8296 = vunpack.c.l.b16 %v8232
  %v8297 = vunpack.c.l.b16 %v8233
  %v8298 = vunpack.c.l.b16 %v8234
  %v8299 = vunpack.c.l.b16 %v8235
  %v8300 = vunpack.c.l.b16 %v8236
  %v8301 = vunpack.c.l.b16 %v8237
  %v8302 = vunpack.c.l.b16 %v8238
  %v8303 = vunpack.c.l.b16 %v8239
  %v8304 = vunpack.c.l.b16 %v8240
  %v8305 = vunpack.c.l.b16 %v8241
  %v8306 = vunpack.c.l.b16 %v8242
  %v8307 = vunpack.c.l.b16 %v8243
  %v8308 = vunpack.c.l.b16 %v8244
  %v8309 = vunpack.c.l.b16 %v8245
  %v8310 = vunpack.c.l.b16 %v8246
  %v8311 = vunpack.c.l.b16 %v8247
  %v8312 = vpack.c.b16 %v8281, %v8280
  %v8313 = vpack.c.b16 %v8283, %v8282
  %v8314 = vpack.c.b16 %v8285, %v8284
  %v8315 = vpack.c.b16 %v8287, %v8286
  %v8316 = vpack.c.b16 %v8289, %v8288
  %v8317 = vpack.c.b16 %v8291, %v8290
  %v8318 = vpack.c.b16 %v8293, %v8292
  %v8319 = vpack.c.b16 %v8295, %v8294
  %v8320 = vpack.c.b16 %v8297, %v8296
  %v8321 = vpack.c.b16 %v8299, %v8298
  %v8322 = vpack.c.b16 %v8301, %v8300
  %v8323 = vpack.c.b16 %v8303, %v8302
  %v8324 = vpack.c.b16 %v8305, %v8304
  %v8325 = vpack.c.b16 %v8307, %v8306
  %v8326 = vpack.c.b16 %v8309, %v8308
  %v8327 = vpack.c.b16 %v8311, %v8310
  %8344 = vmatprep.subr.bf16.mxu0 0
  %8345 = vmatpush1.bf16.msra.mxu0 %v8312
  %8346 = vmatprep.subr.bf16.mxu0 0
  %8347 = vmatpush1.bf16.msra.mxu0 %v8313
  %8348 = vmatprep.subr.bf16.mxu0 0
  %8349 = vmatpush1.bf16.msra.mxu0 %v8314
  %8350 = vmatprep.subr.bf16.mxu0 0
  %8351 = vmatpush1.bf16.msra.mxu0 %v8315
  %8352 = vmatprep.subr.bf16.mxu0 0
  %8353 = vmatpush1.bf16.msra.mxu0 %v8316
  %8354 = vmatprep.subr.bf16.mxu0 0
  %8355 = vmatpush1.bf16.msra.mxu0 %v8317
  %8356 = vmatprep.subr.bf16.mxu0 0
  %8357 = vmatpush1.bf16.msra.mxu0 %v8318
  %8358 = vmatprep.subr.bf16.mxu0 0
  %8359 = vmatpush1.bf16.msra.mxu0 %v8319
  %8360 = vmatprep.subr.bf16.mxu0 0
  %8361 = vmatpush1.bf16.msra.mxu0 %v8320
  %8362 = vmatprep.subr.bf16.mxu0 0
  %8363 = vmatpush1.bf16.msra.mxu0 %v8321
  %8364 = vmatprep.subr.bf16.mxu0 0
  %8365 = vmatpush1.bf16.msra.mxu0 %v8322
  %8366 = vmatprep.subr.bf16.mxu0 0
  %8367 = vmatpush1.bf16.msra.mxu0 %v8323
  %8368 = vmatprep.subr.bf16.mxu0 0
  %8369 = vmatpush1.bf16.msra.mxu0 %v8324
  %8370 = vmatprep.subr.bf16.mxu0 0
  %8371 = vmatpush1.bf16.msra.mxu0 %v8325
  %8372 = vmatprep.subr.bf16.mxu0 0
  %8373 = vmatpush1.bf16.msra.mxu0 %v8326
  %8374 = vmatprep.subr.bf16.mxu0 0
  %8375 = vmatpush1.bf16.msra.mxu0 %v8327
  %8376 = vmatprep.mubr.bf16.mxu0 %v8214
  %8377 = vmatmul.mubr.bf16.gmra.mrb[0].mxu0 %v8213
  %v8378 = vpop.f32.mrb[0].mxu0
  %v8379 = vadd.f32 0.0, %v8378
  %v8380 = vpop.f32.mrb[0].mxu0
  %v8381 = vpop.f32.mrb[0].mxu0
  %v8382 = vpop.f32.mrb[0].mxu0
  %8383 = vdwg.mxu0
  %v8384 = vadd.f32 %v8212, %v8379
  %8385 = vst [vmem:[#allocation2] sm:$0xff] %v8384
  %s8386 = scalar_lea.vmem %s0, 44
  %v8387 = vld [vmem:[%s8386] sm:$0xf]
  %v8388 = vld [vmem:[%s1] sm:$0xff]
  %v8389 = vld [vmem:[%s1 + $0x8] sm:$0xff]
  %v8390 = vld [vmem:[%s1 + $0x10] sm:$0xff]
  %v8391 = vld [vmem:[%s1 + $0x18] sm:$0xff]
  %v8392 = vld [vmem:[%s1 + $0x20] sm:$0xff]
  %v8393 = vld [vmem:[%s1 + $0x28] sm:$0xff]
  %v8394 = vld [vmem:[%s1 + $0x30] sm:$0xff]
  %v8395 = vld [vmem:[%s1 + $0x38] sm:$0xff]
  %v8396 = vld [vmem:[%s1 + $0x40] sm:$0xff]
  %v8397 = vld [vmem:[%s1 + $0x48] sm:$0xff]
  %v8398 = vld [vmem:[%s1 + $0x50] sm:$0xff]
  %v8399 = vld [vmem:[%s1 + $0x58] sm:$0xff]
  %v8400 = vld [vmem:[%s1 + $0x60] sm:$0xff]
  %v8401 = vld [vmem:[%s1 + $0x68] sm:$0xff]
  %v8402 = vld [vmem:[%s1 + $0x70] sm:$0xff]
  %v8403 = vld [vmem:[%s1 + $0x78] sm:$0xff]
  %v8404 = vld [vmem:[%s1 + $0x80] sm:$0xff]
  %v8405 = vld [vmem:[%s1 + $0x88] sm:$0xff]
  %v8406 = vld [vmem:[%s1 + $0x90] sm:$0xff]
  %v8407 = vld [vmem:[%s1 + $0x98] sm:$0xff]
  %v8408 = vld [vmem:[%s1 + $0xa0] sm:$0xff]
  %v8409 = vld [vmem:[%s1 + $0xa8] sm:$0xff]
  %v8410 = vld [vmem:[%s1 + $0xb0] sm:$0xff]
  %v8411 = vld [vmem:[%s1 + $0xb8] sm:$0xff]
  %v8412 = vld [vmem:[%s1 + $0xc0] sm:$0xff]
  %v8413 = vld [vmem:[%s1 + $0xc8] sm:$0xff]
  %v8414 = vld [vmem:[%s1 + $0xd0] sm:$0xff]
  %v8415 = vld [vmem:[%s1 + $0xd8] sm:$0xff]
  %v8416 = vld [vmem:[%s1 + $0xe0] sm:$0xff]
  %v8417 = vld [vmem:[%s1 + $0xe8] sm:$0xff]
  %v8418 = vld [vmem:[%s1 + $0xf0] sm:$0xff]
  %v8419 = vld [vmem:[%s1 + $0xf8] sm:$0xff]
  %v8420 = vld [vmem:[%s1 + $0x100] sm:$0xff]
  %v8421 = vld [vmem:[%s1 + $0x108] sm:$0xff]
  %v8422 = vld [vmem:[%s1 + $0x110] sm:$0xff]
  %v8423 = vld [vmem:[%s1 + $0x118] sm:$0xff]
  %v8424 = vld [vmem:[%s1 + $0x120] sm:$0xff]
  %v8425 = vld [vmem:[%s1 + $0x128] sm:$0xff]
  %v8426 = vld [vmem:[%s1 + $0x130] sm:$0xff]
  %v8427 = vld [vmem:[%s1 + $0x138] sm:$0xff]
  %v8428 = vld [vmem:[%s1 + $0x140] sm:$0xff]
  %v8429 = vld [vmem:[%s1 + $0x148] sm:$0xff]
  %v8430 = vld [vmem:[%s1 + $0x150] sm:$0xff]
  %v8431 = vld [vmem:[%s1 + $0x158] sm:$0xff]
  %v8432 = vld [vmem:[%s1 + $0x160] sm:$0xff]
  %v8433 = vld [vmem:[%s1 + $0x168] sm:$0xff]
  %v8434 = vld [vmem:[%s1 + $0x170] sm:$0xff]
  %v8435 = vld [vmem:[%s1 + $0x178] sm:$0xff]
  %v8436 = vld [vmem:[%s1 + $0x180] sm:$0xff]
  %v8437 = vld [vmem:[%s1 + $0x188] sm:$0xff]
  %v8438 = vld [vmem:[%s1 + $0x190] sm:$0xff]
  %v8439 = vld [vmem:[%s1 + $0x198] sm:$0xff]
  %v8440 = vld [vmem:[%s1 + $0x1a0] sm:$0xff]
  %v8441 = vld [vmem:[%s1 + $0x1a8] sm:$0xff]
  %v8442 = vld [vmem:[%s1 + $0x1b0] sm:$0xff]
  %v8443 = vld [vmem:[%s1 + $0x1b8] sm:$0xff]
  %v8444 = vld [vmem:[%s1 + $0x1c0] sm:$0xff]
  %v8445 = vld [vmem:[%s1 + $0x1c8] sm:$0xff]
  %v8446 = vld [vmem:[%s1 + $0x1d0] sm:$0xff]
  %v8447 = vld [vmem:[%s1 + $0x1d8] sm:$0xff]
  %v8448 = vld [vmem:[%s1 + $0x1e0] sm:$0xff]
  %v8449 = vld [vmem:[%s1 + $0x1e8] sm:$0xff]
  %v8450 = vld [vmem:[%s1 + $0x1f0] sm:$0xff]
  %v8451 = vld [vmem:[%s1 + $0x1f8] sm:$0xff]
  %v8516 = vunpack.c.l.b16 %v8388
  %v8517 = vunpack.c.h.b16 %v8388
  %v8518 = vunpack.c.l.b16 %v8389
  %v8519 = vunpack.c.h.b16 %v8389
  %v8520 = vunpack.c.l.b16 %v8390
  %v8521 = vunpack.c.h.b16 %v8390
  %v8522 = vunpack.c.l.b16 %v8391
  %v8523 = vunpack.c.h.b16 %v8391
  %v8524 = vunpack.c.l.b16 %v8392
  %v8525 = vunpack.c.h.b16 %v8392
  %v8526 = vunpack.c.l.b16 %v8393
  %v8527 = vunpack.c.h.b16 %v8393
  %v8528 = vunpack.c.l.b16 %v8394
  %v8529 = vunpack.c.h.b16 %v8394
  %v8530 = vunpack.c.l.b16 %v8395
  %v8531 = vunpack.c.h.b16 %v8395
  %v8532 = vunpack.c.l.b16 %v8396
  %v8533 = vunpack.c.h.b16 %v8396
  %v8534 = vunpack.c.l.b16 %v8397
  %v8535 = vunpack.c.h.b16 %v8397
  %v8536 = vunpack.c.l.b16 %v8398
  %v8537 = vunpack.c.h.b16 %v8398
  %v8538 = vunpack.c.l.b16 %v8399
  %v8539 = vunpack.c.h.b16 %v8399
  %v8540 = vunpack.c.l.b16 %v8400
  %v8541 = vunpack.c.h.b16 %v8400
  %v8542 = vunpack.c.l.b16 %v8401
  %v8543 = vunpack.c.h.b16 %v8401
  %v8544 = vunpack.c.l.b16 %v8402
  %v8545 = vunpack.c.h.b16 %v8402
  %v8546 = vunpack.c.l.b16 %v8403
  %v8547 = vunpack.c.h.b16 %v8403
  %v8548 = vunpack.c.l.b16 %v8404
  %v8549 = vunpack.c.h.b16 %v8404
  %v8550 = vunpack.c.l.b16 %v8405
  %v8551 = vunpack.c.h.b16 %v8405
  %v8552 = vunpack.c.l.b16 %v8406
  %v8553 = vunpack.c.h.b16 %v8406
  %v8554 = vunpack.c.l.b16 %v8407
  %v8555 = vunpack.c.h.b16 %v8407
  %v8556 = vunpack.c.l.b16 %v8408
  %v8557 = vunpack.c.h.b16 %v8408
  %v8558 = vunpack.c.l.b16 %v8409
  %v8559 = vunpack.c.h.b16 %v8409
  %v8560 = vunpack.c.l.b16 %v8410
  %v8561 = vunpack.c.h.b16 %v8410
  %v8562 = vunpack.c.l.b16 %v8411
  %v8563 = vunpack.c.h.b16 %v8411
  %v8564 = vunpack.c.l.b16 %v8412
  %v8565 = vunpack.c.h.b16 %v8412
  %v8566 = vunpack.c.l.b16 %v8413
  %v8567 = vunpack.c.h.b16 %v8413
  %v8568 = vunpack.c.l.b16 %v8414
  %v8569 = vunpack.c.h.b16 %v8414
  %v8570 = vunpack.c.l.b16 %v8415
  %v8571 = vunpack.c.h.b16 %v8415
  %v8572 = vunpack.c.l.b16 %v8416
  %v8573 = vunpack.c.h.b16 %v8416
  %v8574 = vunpack.c.l.b16 %v8417
  %v8575 = vunpack.c.h.b16 %v8417
  %v8576 = vunpack.c.l.b16 %v8418
  %v8577 = vunpack.c.h.b16 %v8418
  %v8578 = vunpack.c.l.b16 %v8419
  %v8579 = vunpack.c.h.b16 %v8419
  %v8580 = vunpack.c.l.b16 %v8420
  %v8581 = vunpack.c.h.b16 %v8420
  %v8582 = vunpack.c.l.b16 %v8421
  %v8583 = vunpack.c.h.b16 %v8421
  %v8584 = vunpack.c.l.b16 %v8422
  %v8585 = vunpack.c.h.b16 %v8422
  %v8586 = vunpack.c.l.b16 %v8423
  %v8587 = vunpack.c.h.b16 %v8423
  %v8588 = vunpack.c.l.b16 %v8424
  %v8589 = vunpack.c.h.b16 %v8424
  %v8590 = vunpack.c.l.b16 %v8425
  %v8591 = vunpack.c.h.b16 %v8425
  %v8592 = vunpack.c.l.b16 %v8426
  %v8593 = vunpack.c.h.b16 %v8426
  %v8594 = vunpack.c.l.b16 %v8427
  %v8595 = vunpack.c.h.b16 %v8427
  %v8596 = vunpack.c.l.b16 %v8428
  %v8597 = vunpack.c.h.b16 %v8428
  %v8598 = vunpack.c.l.b16 %v8429
  %v8599 = vunpack.c.h.b16 %v8429
  %v8600 = vunpack.c.l.b16 %v8430
  %v8601 = vunpack.c.h.b16 %v8430
  %v8602 = vunpack.c.l.b16 %v8431
  %v8603 = vunpack.c.h.b16 %v8431
  %v8604 = vunpack.c.l.b16 %v8432
  %v8605 = vunpack.c.h.b16 %v8432
  %v8606 = vunpack.c.l.b16 %v8433
  %v8607 = vunpack.c.h.b16 %v8433
  %v8608 = vunpack.c.l.b16 %v8434
  %v8609 = vunpack.c.h.b16 %v8434
  %v8610 = vunpack.c.l.b16 %v8435
  %v8611 = vunpack.c.h.b16 %v8435
  %v8612 = vunpack.c.l.b16 %v8436
  %v8613 = vunpack.c.h.b16 %v8436
  %v8614 = vunpack.c.l.b16 %v8437
  %v8615 = vunpack.c.h.b16 %v8437
  %v8616 = vunpack.c.l.b16 %v8438
  %v8617 = vunpack.c.h.b16 %v8438
  %v8618 = vunpack.c.l.b16 %v8439
  %v8619 = vunpack.c.h.b16 %v8439
  %v8620 = vunpack.c.l.b16 %v8440
  %v8621 = vunpack.c.h.b16 %v8440
  %v8622 = vunpack.c.l.b16 %v8441
  %v8623 = vunpack.c.h.b16 %v8441
  %v8624 = vunpack.c.l.b16 %v8442
  %v8625 = vunpack.c.h.b16 %v8442
  %v8626 = vunpack.c.l.b16 %v8443
  %v8627 = vunpack.c.h.b16 %v8443
  %v8628 = vunpack.c.l.b16 %v8444
  %v8629 = vunpack.c.h.b16 %v8444
  %v8630 = vunpack.c.l.b16 %v8445
  %v8631 = vunpack.c.h.b16 %v8445
  %v8632 = vunpack.c.l.b16 %v8446
  %v8633 = vunpack.c.h.b16 %v8446
  %v8634 = vunpack.c.l.b16 %v8447
  %v8635 = vunpack.c.h.b16 %v8447
  %v8636 = vunpack.c.l.b16 %v8448
  %v8637 = vunpack.c.h.b16 %v8448
  %v8638 = vunpack.c.l.b16 %v8449
  %v8639 = vunpack.c.h.b16 %v8449
  %v8640 = vunpack.c.l.b16 %v8450
  %v8641 = vunpack.c.h.b16 %v8450
  %v8642 = vunpack.c.l.b16 %v8451
  %v8643 = vunpack.c.h.b16 %v8451
  %v8644 = vpack.c.b16 %v8524, %v8516
  %v8645 = vpack.c.b16 %v8525, %v8517
  %v8646 = vpack.c.b16 %v8526, %v8518
  %v8647 = vpack.c.b16 %v8527, %v8519
  %v8648 = vpack.c.b16 %v8528, %v8520
  %v8649 = vpack.c.b16 %v8529, %v8521
  %v8650 = vpack.c.b16 %v8530, %v8522
  %v8651 = vpack.c.b16 %v8531, %v8523
  %v8652 = vpack.c.b16 %v8540, %v8532
  %v8653 = vpack.c.b16 %v8541, %v8533
  %v8654 = vpack.c.b16 %v8542, %v8534
  %v8655 = vpack.c.b16 %v8543, %v8535
  %v8656 = vpack.c.b16 %v8544, %v8536
  %v8657 = vpack.c.b16 %v8545, %v8537
  %v8658 = vpack.c.b16 %v8546, %v8538
  %v8659 = vpack.c.b16 %v8547, %v8539
  %v8660 = vpack.c.b16 %v8556, %v8548
  %v8661 = vpack.c.b16 %v8557, %v8549
  %v8662 = vpack.c.b16 %v8558, %v8550
  %v8663 = vpack.c.b16 %v8559, %v8551
  %v8664 = vpack.c.b16 %v8560, %v8552
  %v8665 = vpack.c.b16 %v8561, %v8553
  %v8666 = vpack.c.b16 %v8562, %v8554
  %v8667 = vpack.c.b16 %v8563, %v8555
  %v8668 = vpack.c.b16 %v8572, %v8564
  %v8669 = vpack.c.b16 %v8573, %v8565
  %v8670 = vpack.c.b16 %v8574, %v8566
  %v8671 = vpack.c.b16 %v8575, %v8567
  %v8672 = vpack.c.b16 %v8576, %v8568
  %v8673 = vpack.c.b16 %v8577, %v8569
  %v8674 = vpack.c.b16 %v8578, %v8570
  %v8675 = vpack.c.b16 %v8579, %v8571
  %v8676 = vpack.c.b16 %v8588, %v8580
  %v8677 = vpack.c.b16 %v8589, %v8581
  %v8678 = vpack.c.b16 %v8590, %v8582
  %v8679 = vpack.c.b16 %v8591, %v8583
  %v8680 = vpack.c.b16 %v8592, %v8584
  %v8681 = vpack.c.b16 %v8593, %v8585
  %v8682 = vpack.c.b16 %v8594, %v8586
  %v8683 = vpack.c.b16 %v8595, %v8587
  %v8684 = vpack.c.b16 %v8604, %v8596
  %v8685 = vpack.c.b16 %v8605, %v8597
  %v8686 = vpack.c.b16 %v8606, %v8598
  %v8687 = vpack.c.b16 %v8607, %v8599
  %v8688 = vpack.c.b16 %v8608, %v8600
  %v8689 = vpack.c.b16 %v8609, %v8601
  %v8690 = vpack.c.b16 %v8610, %v8602
  %v8691 = vpack.c.b16 %v8611, %v8603
  %v8692 = vpack.c.b16 %v8620, %v8612
  %v8693 = vpack.c.b16 %v8621, %v8613
  %v8694 = vpack.c.b16 %v8622, %v8614
  %v8695 = vpack.c.b16 %v8623, %v8615
  %v8696 = vpack.c.b16 %v8624, %v8616
  %v8697 = vpack.c.b16 %v8625, %v8617
  %v8698 = vpack.c.b16 %v8626, %v8618
  %v8699 = vpack.c.b16 %v8627, %v8619
  %v8700 = vpack.c.b16 %v8636, %v8628
  %v8701 = vpack.c.b16 %v8637, %v8629
  %v8702 = vpack.c.b16 %v8638, %v8630
  %v8703 = vpack.c.b16 %v8639, %v8631
  %v8704 = vpack.c.b16 %v8640, %v8632
  %v8705 = vpack.c.b16 %v8641, %v8633
  %v8706 = vpack.c.b16 %v8642, %v8634
  %v8707 = vpack.c.b16 %v8643, %v8635
  %8772 = vmatprep.subr.bf16.mxu0 %v8645
  %8773 = vmatpush1.bf16.msra.mxu0 %v8644
  %8774 = vmatprep.subr.bf16.mxu0 %v8653
  %8775 = vmatpush1.bf16.msra.mxu0 %v8652
  %8776 = vmatprep.subr.bf16.mxu0 %v8661
  %8777 = vmatpush1.bf16.msra.mxu0 %v8660
  %8778 = vmatprep.subr.bf16.mxu0 %v8669
  %8779 = vmatpush1.bf16.msra.mxu0 %v8668
  %8780 = vmatprep.subr.bf16.mxu0 %v8677
  %8781 = vmatpush1.bf16.msra.mxu0 %v8676
  %8782 = vmatprep.subr.bf16.mxu0 %v8685
  %8783 = vmatpush1.bf16.msra.mxu0 %v8684
  %8784 = vmatprep.subr.bf16.mxu0 %v8693
  %8785 = vmatpush1.bf16.msra.mxu0 %v8692
  %8786 = vmatprep.subr.bf16.mxu0 %v8701
  %8787 = vmatpush1.bf16.msra.mxu0 %v8700
  %8788 = vmatprep.subr.bf16.mxu0 0
  %8789 = vmatpush1.bf16.msra.mxu0 0
  %8790 = vmatprep.subr.bf16.mxu0 0
  %8791 = vmatpush1.bf16.msra.mxu0 0
  %8792 = vmatprep.subr.bf16.mxu0 0
  %8793 = vmatpush1.bf16.msra.mxu0 0
  %8794 = vmatprep.subr.bf16.mxu0 0
  %8795 = vmatpush1.bf16.msra.mxu0 0
  %8796 = vmatprep.subr.bf16.mxu0 0
  %8797 = vmatpush1.bf16.msra.mxu0 0
  %8798 = vmatprep.subr.bf16.mxu0 0
  %8799 = vmatpush1.bf16.msra.mxu0 0
  %8800 = vmatprep.subr.bf16.mxu0 0
  %8801 = vmatpush1.bf16.msra.mxu0 0
  %8802 = vmatprep.subr.bf16.mxu0 0
  %8803 = vmatpush1.bf16.msra.mxu0 0
  %8804 = vmatprep.mubr.bf16.mxu0 0
  %8805 = vmatmul.mubr.bf16.gmra.mrb[0].mxu0 %v8387
  %v8806 = vpop.f32.mrb[0].mxu0
  %v8807 = vadd.f32 0.0, %v8806
  %v8808 = vpop.f32.mrb[0].mxu0
  %v8809 = vadd.f32 0.0, %v8808
  %v8810 = vpop.f32.mrb[0].mxu0
  %v8811 = vpop.f32.mrb[0].mxu0
  %8812 = vdwg.mxu0
  %8813 = vmatprep.subr.bf16.mxu0 %v8647
  %8814 = vmatpush1.bf16.msra.mxu0 %v8646
  %8815 = vmatprep.subr.bf16.mxu0 %v8655
  %8816 = vmatpush1.bf16.msra.mxu0 %v8654
  %8817 = vmatprep.subr.bf16.mxu0 %v8663
  %8818 = vmatpush1.bf16.msra.mxu0 %v8662
  %8819 = vmatprep.subr.bf16.mxu0 %v8671
  %8820 = vmatpush1.bf16.msra.mxu0 %v8670
  %8821 = vmatprep.subr.bf16.mxu0 %v8679
  %8822 = vmatpush1.bf16.msra.mxu0 %v8678
  %8823 = vmatprep.subr.bf16.mxu0 %v8687
  %8824 = vmatpush1.bf16.msra.mxu0 %v8686
  %8825 = vmatprep.subr.bf16.mxu0 %v8695
  %8826 = vmatpush1.bf16.msra.mxu0 %v8694
  %8827 = vmatprep.subr.bf16.mxu0 %v8703
  %8828 = vmatpush1.bf16.msra.mxu0 %v8702
  %8829 = vmatprep.subr.bf16.mxu0 0
  %8830 = vmatpush1.bf16.msra.mxu0 0
  %8831 = vmatprep.subr.bf16.mxu0 0
  %8832 = vmatpush1.bf16.msra.mxu0 0
  %8833 = vmatprep.subr.bf16.mxu0 0
  %8834 = vmatpush1.bf16.msra.mxu0 0
  %8835 = vmatprep.subr.bf16.mxu0 0
  %8836 = vmatpush1.bf16.msra.mxu0 0
  %8837 = vmatprep.subr.bf16.mxu0 0
  %8838 = vmatpush1.bf16.msra.mxu0 0
  %8839 = vmatprep.subr.bf16.mxu0 0
  %8840 = vmatpush1.bf16.msra.mxu0 0
  %8841 = vmatprep.subr.bf16.mxu0 0
  %8842 = vmatpush1.bf16.msra.mxu0 0
  %8843 = vmatprep.subr.bf16.mxu0 0
  %8844 = vmatpush1.bf16.msra.mxu0 0
  %8845 = vmatprep.mubr.bf16.mxu0 0
  %8846 = vmatmul.mubr.bf16.gmra.mrb[0].mxu0 %v8387
  %v8847 = vpop.f32.mrb[0].mxu0
  %v8848 = vadd.f32 0.0, %v8847
  %v8849 = vpop.f32.mrb[0].mxu0
  %v8850 = vadd.f32 0.0, %v8849
  %v8851 = vpop.f32.mrb[0].mxu0
  %v8852 = vpop.f32.mrb[0].mxu0
  %8853 = vdwg.mxu0
  %8854 = vmatprep.subr.bf16.mxu0 %v8649
  %8855 = vmatpush1.bf16.msra.mxu0 %v8648
  %8856 = vmatprep.subr.bf16.mxu0 %v8657
  %8857 = vmatpush1.bf16.msra.mxu0 %v8656
  %8858 = vmatprep.subr.bf16.mxu0 %v8665
  %8859 = vmatpush1.bf16.msra.mxu0 %v8664
  %8860 = vmatprep.subr.bf16.mxu0 %v8673
  %8861 = vmatpush1.bf16.msra.mxu0 %v8672
  %8862 = vmatprep.subr.bf16.mxu0 %v8681
  %8863 = vmatpush1.bf16.msra.mxu0 %v8680
  %8864 = vmatprep.subr.bf16.mxu0 %v8689
  %8865 = vmatpush1.bf16.msra.mxu0 %v8688
  %8866 = vmatprep.subr.bf16.mxu0 %v8697
  %8867 = vmatpush1.bf16.msra.mxu0 %v8696
  %8868 = vmatprep.subr.bf16.mxu0 %v8705
  %8869 = vmatpush1.bf16.msra.mxu0 %v8704
  %8870 = vmatprep.subr.bf16.mxu0 0
  %8871 = vmatpush1.bf16.msra.mxu0 0
  %8872 = vmatprep.subr.bf16.mxu0 0
  %8873 = vmatpush1.bf16.msra.mxu0 0
  %8874 = vmatprep.subr.bf16.mxu0 0
  %8875 = vmatpush1.bf16.msra.mxu0 0
  %8876 = vmatprep.subr.bf16.mxu0 0
  %8877 = vmatpush1.bf16.msra.mxu0 0
  %8878 = vmatprep.subr.bf16.mxu0 0
  %8879 = vmatpush1.bf16.msra.mxu0 0
  %8880 = vmatprep.subr.bf16.mxu0 0
  %8881 = vmatpush1.bf16.msra.mxu0 0
  %8882 = vmatprep.subr.bf16.mxu0 0
  %8883 = vmatpush1.bf16.msra.mxu0 0
  %8884 = vmatprep.subr.bf16.mxu0 0
  %8885 = vmatpush1.bf16.msra.mxu0 0
  %8886 = vmatprep.mubr.bf16.mxu0 0
  %8887 = vmatmul.mubr.bf16.gmra.mrb[0].mxu0 %v8387
  %v8888 = vpop.f32.mrb[0].mxu0
  %v8889 = vadd.f32 0.0, %v8888
  %v8890 = vpop.f32.mrb[0].mxu0
  %v8891 = vadd.f32 0.0, %v8890
  %v8892 = vpop.f32.mrb[0].mxu0
  %v8893 = vpop.f32.mrb[0].mxu0
  %8894 = vdwg.mxu0
  %8895 = vmatprep.subr.bf16.mxu0 %v8651
  %8896 = vmatpush1.bf16.msra.mxu0 %v8650
  %8897 = vmatprep.subr.bf16.mxu0 %v8659
  %8898 = vmatpush1.bf16.msra.mxu0 %v8658
  %8899 = vmatprep.subr.bf16.mxu0 %v8667
  %8900 = vmatpush1.bf16.msra.mxu0 %v8666
  %8901 = vmatprep.subr.bf16.mxu0 %v8675
  %8902 = vmatpush1.bf16.msra.mxu0 %v8674
  %8903 = vmatprep.subr.bf16.mxu0 %v8683
  %8904 = vmatpush1.bf16.msra.mxu0 %v8682
  %8905 = vmatprep.subr.bf16.mxu0 %v8691
  %8906 = vmatpush1.bf16.msra.mxu0 %v8690
  %8907 = vmatprep.subr.bf16.mxu0 %v8699
  %8908 = vmatpush1.bf16.msra.mxu0 %v8698
  %8909 = vmatprep.subr.bf16.mxu0 %v8707
  %8910 = vmatpush1.bf16.msra.mxu0 %v8706
  %8911 = vmatprep.subr.bf16.mxu0 0
  %8912 = vmatpush1.bf16.msra.mxu0 0
  %8913 = vmatprep.subr.bf16.mxu0 0
  %8914 = vmatpush1.bf16.msra.mxu0 0
  %8915 = vmatprep.subr.bf16.mxu0 0
  %8916 = vmatpush1.bf16.msra.mxu0 0
  %8917 = vmatprep.subr.bf16.mxu0 0
  %8918 = vmatpush1.bf16.msra.mxu0 0
  %8919 = vmatprep.subr.bf16.mxu0 0
  %8920 = vmatpush1.bf16.msra.mxu0 0
  %8921 = vmatprep.subr.bf16.mxu0 0
  %8922 = vmatpush1.bf16.msra.mxu0 0
  %8923 = vmatprep.subr.bf16.mxu0 0
  %8924 = vmatpush1.bf16.msra.mxu0 0
  %8925 = vmatprep.subr.bf16.mxu0 0
  %8926 = vmatpush1.bf16.msra.mxu0 0
  %8927 = vmatprep.mubr.bf16.mxu0 0
  %8928 = vmatmul.mubr.bf16.gmra.mrb[0].mxu0 %v8387
  %v8929 = vpop.f32.mrb[0].mxu0
  %v8930 = vadd.f32 0.0, %v8929
  %v8931 = vpop.f32.mrb[0].mxu0
  %v8932 = vadd.f32 0.0, %v8931
  %v8933 = vpop.f32.mrb[0].mxu0
  %v8934 = vpop.f32.mrb[0].mxu0
  %8935 = vdwg.mxu0
  %v8936 = vmax.f32 %v8807, %v8889
  %v8937 = vmax.f32 %v8809, %v8891
  %v8938 = vmax.f32 %v8848, %v8930
  %v8939 = vmax.f32 %v8850, %v8932
  %v8940 = vld [vmem:[%s2] sm:$0xf]
  %v8942 = vlaneseq
  %v8943 = vshrl.u32 %v8942, 7
  %v8944 = vsub.s32 0, %v8943
  %v8945 = vrot.slane %v8940, %v8944
  %v8946 = vlaneseq
  %v8947 = vshrl.u32 %v8946, 7
  %v8948 = vsub.s32 1, %v8947
  %v8949 = vrot.slane %v8940, %v8948
  %v8950 = vlaneseq
  %v8951 = vshrl.u32 %v8950, 7
  %v8952 = vsub.s32 2, %v8951
  %v8953 = vrot.slane %v8940, %v8952
  %v8954 = vlaneseq
  %v8955 = vshrl.u32 %v8954, 7
  %v8956 = vsub.s32 3, %v8955
  %v8957 = vrot.slane %v8940, %v8956
  %v8962 = vadd.f32 %v8936, %v8945
  %v8963 = vadd.f32 %v8937, %v8949
  %v8964 = vadd.f32 %v8938, %v8953
  %v8965 = vadd.f32 %v8939, %v8957
  %v8966 = vmax.f32 %v8962, 0.0
  %v8967 = vmax.f32 %v8963, 0.0
  %v8968 = vmax.f32 %v8964, 0.0
  %v8969 = vmax.f32 %v8965, 0.0
  %v8970 = vmax.f32 %v8966, %v8968
  %v8971 = vmax.f32 %v8967, %v8969
  %v8972 = vld [vmem:[#allocation2] sm:$0xff]
  %v8973 = vpack.c.bf16 %v8970, %v8970
  %v8974 = vpack.c.bf16 %v8971, %v8971
  %s8975 = scalar_lea.vmem %s3, 1408
  %v8976 = vld [vmem:[%s8975] sm:$0xf]
  %v8977 = vld [vmem:[%s8975 + $0x4] sm:$0xf]
  %v8978 = vld [vmem:[%s8975 + $0x8] sm:$0xf]
  %v8979 = vld [vmem:[%s8975 + $0xc] sm:$0xf]
  %v8980 = vld [vmem:[%s8975 + $0x10] sm:$0xf]
  %v8981 = vld [vmem:[%s8975 + $0x14] sm:$0xf]
  %v8982 = vld [vmem:[%s8975 + $0x18] sm:$0xf]
  %v8983 = vld [vmem:[%s8975 + $0x1c] sm:$0xf]
  %v8984 = vld [vmem:[%s8975 + $0x20] sm:$0xf]
  %v8985 = vld [vmem:[%s8975 + $0x24] sm:$0xf]
  %v8986 = vld [vmem:[%s8975 + $0x28] sm:$0xf]
  %v8987 = vld [vmem:[%s8975 + $0x2c] sm:$0xf]
  %v8988 = vld [vmem:[%s8975 + $0x30] sm:$0xf]
  %v8989 = vld [vmem:[%s8975 + $0x34] sm:$0xf]
  %v8990 = vld [vmem:[%s8975 + $0x38] sm:$0xf]
  %v8991 = vld [vmem:[%s8975 + $0x3c] sm:$0xf]
  %v8992 = vld [vmem:[%s8975 + $0x40] sm:$0xf]
  %v8993 = vld [vmem:[%s8975 + $0x44] sm:$0xf]
  %v8994 = vld [vmem:[%s8975 + $0x48] sm:$0xf]
  %v8995 = vld [vmem:[%s8975 + $0x4c] sm:$0xf]
  %v8996 = vld [vmem:[%s8975 + $0x50] sm:$0xf]
  %v8997 = vld [vmem:[%s8975 + $0x54] sm:$0xf]
  %v8998 = vld [vmem:[%s8975 + $0x58] sm:$0xf]
  %v8999 = vld [vmem:[%s8975 + $0x5c] sm:$0xf]
  %v9000 = vld [vmem:[%s8975 + $0x60] sm:$0xf]
  %v9001 = vld [vmem:[%s8975 + $0x64] sm:$0xf]
  %v9002 = vld [vmem:[%s8975 + $0x68] sm:$0xf]
  %v9003 = vld [vmem:[%s8975 + $0x6c] sm:$0xf]
  %v9004 = vld [vmem:[%s8975 + $0x70] sm:$0xf]
  %v9005 = vld [vmem:[%s8975 + $0x74] sm:$0xf]
  %v9006 = vld [vmem:[%s8975 + $0x78] sm:$0xf]
  %v9007 = vld [vmem:[%s8975 + $0x7c] sm:$0xf]
  %v9040 = vunpack.c.l.b16 %v8976
  %v9041 = vunpack.c.l.b16 %v8977
  %v9042 = vunpack.c.l.b16 %v8978
  %v9043 = vunpack.c.l.b16 %v8979
  %v9044 = vunpack.c.l.b16 %v8980
  %v9045 = vunpack.c.l.b16 %v8981
  %v9046 = vunpack.c.l.b16 %v8982
  %v9047 = vunpack.c.l.b16 %v8983
  %v9048 = vunpack.c.l.b16 %v8984
  %v9049 = vunpack.c.l.b16 %v8985
  %v9050 = vunpack.c.l.b16 %v8986
  %v9051 = vunpack.c.l.b16 %v8987
  %v9052 = vunpack.c.l.b16 %v8988
  %v9053 = vunpack.c.l.b16 %v8989
  %v9054 = vunpack.c.l.b16 %v8990
  %v9055 = vunpack.c.l.b16 %v8991
  %v9056 = vunpack.c.l.b16 %v8992
  %v9057 = vunpack.c.l.b16 %v8993
  %v9058 = vunpack.c.l.b16 %v8994
  %v9059 = vunpack.c.l.b16 %v8995
  %v9060 = vunpack.c.l.b16 %v8996
  %v9061 = vunpack.c.l.b16 %v8997
  %v9062 = vunpack.c.l.b16 %v8998
  %v9063 = vunpack.c.l.b16 %v8999
  %v9064 = vunpack.c.l.b16 %v9000
  %v9065 = vunpack.c.l.b16 %v9001
  %v9066 = vunpack.c.l.b16 %v9002
  %v9067 = vunpack.c.l.b16 %v9003
  %v9068 = vunpack.c.l.b16 %v9004
  %v9069 = vunpack.c.l.b16 %v9005
  %v9070 = vunpack.c.l.b16 %v9006
  %v9071 = vunpack.c.l.b16 %v9007
  %v9072 = vpack.c.b16 %v9041, %v9040
  %v9073 = vpack.c.b16 %v9043, %v9042
  %v9074 = vpack.c.b16 %v9045, %v9044
  %v9075 = vpack.c.b16 %v9047, %v9046
  %v9076 = vpack.c.b16 %v9049, %v9048
  %v9077 = vpack.c.b16 %v9051, %v9050
  %v9078 = vpack.c.b16 %v9053, %v9052
  %v9079 = vpack.c.b16 %v9055, %v9054
  %v9080 = vpack.c.b16 %v9057, %v9056
  %v9081 = vpack.c.b16 %v9059, %v9058
  %v9082 = vpack.c.b16 %v9061, %v9060
  %v9083 = vpack.c.b16 %v9063, %v9062
  %v9084 = vpack.c.b16 %v9065, %v9064
  %v9085 = vpack.c.b16 %v9067, %v9066
  %v9086 = vpack.c.b16 %v9069, %v9068
  %v9087 = vpack.c.b16 %v9071, %v9070
  %9104 = vmatprep.subr.bf16.mxu0 0
  %9105 = vmatpush1.bf16.msra.mxu0 %v9072
  %9106 = vmatprep.subr.bf16.mxu0 0
  %9107 = vmatpush1.bf16.msra.mxu0 %v9073
  %9108 = vmatprep.subr.bf16.mxu0 0
  %9109 = vmatpush1.bf16.msra.mxu0 %v9074
  %9110 = vmatprep.subr.bf16.mxu0 0
  %9111 = vmatpush1.bf16.msra.mxu0 %v9075
  %9112 = vmatprep.subr.bf16.mxu0 0
  %9113 = vmatpush1.bf16.msra.mxu0 %v9076
  %9114 = vmatprep.subr.bf16.mxu0 0
  %9115 = vmatpush1.bf16.msra.mxu0 %v9077
  %9116 = vmatprep.subr.bf16.mxu0 0
  %9117 = vmatpush1.bf16.msra.mxu0 %v9078
  %9118 = vmatprep.subr.bf16.mxu0 0
  %9119 = vmatpush1.bf16.msra.mxu0 %v9079
  %9120 = vmatprep.subr.bf16.mxu0 0
  %9121 = vmatpush1.bf16.msra.mxu0 %v9080
  %9122 = vmatprep.subr.bf16.mxu0 0
  %9123 = vmatpush1.bf16.msra.mxu0 %v9081
  %9124 = vmatprep.subr.bf16.mxu0 0
  %9125 = vmatpush1.bf16.msra.mxu0 %v9082
  %9126 = vmatprep.subr.bf16.mxu0 0
  %9127 = vmatpush1.bf16.msra.mxu0 %v9083
  %9128 = vmatprep.subr.bf16.mxu0 0
  %9129 = vmatpush1.bf16.msra.mxu0 %v9084
  %9130 = vmatprep.subr.bf16.mxu0 0
  %9131 = vmatpush1.bf16.msra.mxu0 %v9085
  %9132 = vmatprep.subr.bf16.mxu0 0
  %9133 = vmatpush1.bf16.msra.mxu0 %v9086
  %9134 = vmatprep.subr.bf16.mxu0 0
  %9135 = vmatpush1.bf16.msra.mxu0 %v9087
  %9136 = vmatprep.mubr.bf16.mxu0 %v8974
  %9137 = vmatmul.mubr.bf16.gmra.mrb[0].mxu0 %v8973
  %v9138 = vpop.f32.mrb[0].mxu0
  %v9139 = vadd.f32 0.0, %v9138
  %v9140 = vpop.f32.mrb[0].mxu0
  %v9141 = vpop.f32.mrb[0].mxu0
  %v9142 = vpop.f32.mrb[0].mxu0
  %9143 = vdwg.mxu0
  %v9144 = vadd.f32 %v8972, %v9139
  %9145 = vst [vmem:[#allocation2] sm:$0xff] %v9144
  %s9146 = scalar_lea.vmem %s0, 48
  %v9147 = vld [vmem:[%s9146] sm:$0xf]
  %v9148 = vld [vmem:[%s1] sm:$0xff]
  %v9149 = vld [vmem:[%s1 + $0x8] sm:$0xff]
  %v9150 = vld [vmem:[%s1 + $0x10] sm:$0xff]
  %v9151 = vld [vmem:[%s1 + $0x18] sm:$0xff]
  %v9152 = vld [vmem:[%s1 + $0x20] sm:$0xff]
  %v9153 = vld [vmem:[%s1 + $0x28] sm:$0xff]
  %v9154 = vld [vmem:[%s1 + $0x30] sm:$0xff]
  %v9155 = vld [vmem:[%s1 + $0x38] sm:$0xff]
  %v9156 = vld [vmem:[%s1 + $0x40] sm:$0xff]
  %v9157 = vld [vmem:[%s1 + $0x48] sm:$0xff]
  %v9158 = vld [vmem:[%s1 + $0x50] sm:$0xff]
  %v9159 = vld [vmem:[%s1 + $0x58] sm:$0xff]
  %v9160 = vld [vmem:[%s1 + $0x60] sm:$0xff]
  %v9161 = vld [vmem:[%s1 + $0x68] sm:$0xff]
  %v9162 = vld [vmem:[%s1 + $0x70] sm:$0xff]
  %v9163 = vld [vmem:[%s1 + $0x78] sm:$0xff]
  %v9164 = vld [vmem:[%s1 + $0x80] sm:$0xff]
  %v9165 = vld [vmem:[%s1 + $0x88] sm:$0xff]
  %v9166 = vld [vmem:[%s1 + $0x90] sm:$0xff]
  %v9167 = vld [vmem:[%s1 + $0x98] sm:$0xff]
  %v9168 = vld [vmem:[%s1 + $0xa0] sm:$0xff]
  %v9169 = vld [vmem:[%s1 + $0xa8] sm:$0xff]
  %v9170 = vld [vmem:[%s1 + $0xb0] sm:$0xff]
  %v9171 = vld [vmem:[%s1 + $0xb8] sm:$0xff]
  %v9172 = vld [vmem:[%s1 + $0xc0] sm:$0xff]
  %v9173 = vld [vmem:[%s1 + $0xc8] sm:$0xff]
  %v9174 = vld [vmem:[%s1 + $0xd0] sm:$0xff]
  %v9175 = vld [vmem:[%s1 + $0xd8] sm:$0xff]
  %v9176 = vld [vmem:[%s1 + $0xe0] sm:$0xff]
  %v9177 = vld [vmem:[%s1 + $0xe8] sm:$0xff]
  %v9178 = vld [vmem:[%s1 + $0xf0] sm:$0xff]
  %v9179 = vld [vmem:[%s1 + $0xf8] sm:$0xff]
  %v9180 = vld [vmem:[%s1 + $0x100] sm:$0xff]
  %v9181 = vld [vmem:[%s1 + $0x108] sm:$0xff]
  %v9182 = vld [vmem:[%s1 + $0x110] sm:$0xff]
  %v9183 = vld [vmem:[%s1 + $0x118] sm:$0xff]
  %v9184 = vld [vmem:[%s1 + $0x120] sm:$0xff]
  %v9185 = vld [vmem:[%s1 + $0x128] sm:$0xff]
  %v9186 = vld [vmem:[%s1 + $0x130] sm:$0xff]
  %v9187 = vld [vmem:[%s1 + $0x138] sm:$0xff]
  %v9188 = vld [vmem:[%s1 + $0x140] sm:$0xff]
  %v9189 = vld [vmem:[%s1 + $0x148] sm:$0xff]
  %v9190 = vld [vmem:[%s1 + $0x150] sm:$0xff]
  %v9191 = vld [vmem:[%s1 + $0x158] sm:$0xff]
  %v9192 = vld [vmem:[%s1 + $0x160] sm:$0xff]
  %v9193 = vld [vmem:[%s1 + $0x168] sm:$0xff]
  %v9194 = vld [vmem:[%s1 + $0x170] sm:$0xff]
  %v9195 = vld [vmem:[%s1 + $0x178] sm:$0xff]
  %v9196 = vld [vmem:[%s1 + $0x180] sm:$0xff]
  %v9197 = vld [vmem:[%s1 + $0x188] sm:$0xff]
  %v9198 = vld [vmem:[%s1 + $0x190] sm:$0xff]
  %v9199 = vld [vmem:[%s1 + $0x198] sm:$0xff]
  %v9200 = vld [vmem:[%s1 + $0x1a0] sm:$0xff]
  %v9201 = vld [vmem:[%s1 + $0x1a8] sm:$0xff]
  %v9202 = vld [vmem:[%s1 + $0x1b0] sm:$0xff]
  %v9203 = vld [vmem:[%s1 + $0x1b8] sm:$0xff]
  %v9204 = vld [vmem:[%s1 + $0x1c0] sm:$0xff]
  %v9205 = vld [vmem:[%s1 + $0x1c8] sm:$0xff]
  %v9206 = vld [vmem:[%s1 + $0x1d0] sm:$0xff]
  %v9207 = vld [vmem:[%s1 + $0x1d8] sm:$0xff]
  %v9208 = vld [vmem:[%s1 + $0x1e0] sm:$0xff]
  %v9209 = vld [vmem:[%s1 + $0x1e8] sm:$0xff]
  %v9210 = vld [vmem:[%s1 + $0x1f0] sm:$0xff]
  %v9211 = vld [vmem:[%s1 + $0x1f8] sm:$0xff]
  %v9276 = vunpack.c.l.b16 %v9148
  %v9277 = vunpack.c.h.b16 %v9148
  %v9278 = vunpack.c.l.b16 %v9149
  %v9279 = vunpack.c.h.b16 %v9149
  %v9280 = vunpack.c.l.b16 %v9150
  %v9281 = vunpack.c.h.b16 %v9150
  %v9282 = vunpack.c.l.b16 %v9151
  %v9283 = vunpack.c.h.b16 %v9151
  %v9284 = vunpack.c.l.b16 %v9152
  %v9285 = vunpack.c.h.b16 %v9152
  %v9286 = vunpack.c.l.b16 %v9153
  %v9287 = vunpack.c.h.b16 %v9153
  %v9288 = vunpack.c.l.b16 %v9154
  %v9289 = vunpack.c.h.b16 %v9154
  %v9290 = vunpack.c.l.b16 %v9155
  %v9291 = vunpack.c.h.b16 %v9155
  %v9292 = vunpack.c.l.b16 %v9156
  %v9293 = vunpack.c.h.b16 %v9156
  %v9294 = vunpack.c.l.b16 %v9157
  %v9295 = vunpack.c.h.b16 %v9157
  %v9296 = vunpack.c.l.b16 %v9158
  %v9297 = vunpack.c.h.b16 %v9158
  %v9298 = vunpack.c.l.b16 %v9159
  %v9299 = vunpack.c.h.b16 %v9159
  %v9300 = vunpack.c.l.b16 %v9160
  %v9301 = vunpack.c.h.b16 %v9160
  %v9302 = vunpack.c.l.b16 %v9161
  %v9303 = vunpack.c.h.b16 %v9161
  %v9304 = vunpack.c.l.b16 %v9162
  %v9305 = vunpack.c.h.b16 %v9162
  %v9306 = vunpack.c.l.b16 %v9163
  %v9307 = vunpack.c.h.b16 %v9163
  %v9308 = vunpack.c.l.b16 %v9164
  %v9309 = vunpack.c.h.b16 %v9164
  %v9310 = vunpack.c.l.b16 %v9165
  %v9311 = vunpack.c.h.b16 %v9165
  %v9312 = vunpack.c.l.b16 %v9166
  %v9313 = vunpack.c.h.b16 %v9166
  %v9314 = vunpack.c.l.b16 %v9167
  %v9315 = vunpack.c.h.b16 %v9167
  %v9316 = vunpack.c.l.b16 %v9168
  %v9317 = vunpack.c.h.b16 %v9168
  %v9318 = vunpack.c.l.b16 %v9169
  %v9319 = vunpack.c.h.b16 %v9169
  %v9320 = vunpack.c.l.b16 %v9170
  %v9321 = vunpack.c.h.b16 %v9170
  %v9322 = vunpack.c.l.b16 %v9171
  %v9323 = vunpack.c.h.b16 %v9171
  %v9324 = vunpack.c.l.b16 %v9172
  %v9325 = vunpack.c.h.b16 %v9172
  %v9326 = vunpack.c.l.b16 %v9173
  %v9327 = vunpack.c.h.b16 %v9173
  %v9328 = vunpack.c.l.b16 %v9174
  %v9329 = vunpack.c.h.b16 %v9174
  %v9330 = vunpack.c.l.b16 %v9175
  %v9331 = vunpack.c.h.b16 %v9175
  %v9332 = vunpack.c.l.b16 %v9176
  %v9333 = vunpack.c.h.b16 %v9176
  %v9334 = vunpack.c.l.b16 %v9177
  %v9335 = vunpack.c.h.b16 %v9177
  %v9336 = vunpack.c.l.b16 %v9178
  %v9337 = vunpack.c.h.b16 %v9178
  %v9338 = vunpack.c.l.b16 %v9179
  %v9339 = vunpack.c.h.b16 %v9179
  %v9340 = vunpack.c.l.b16 %v9180
  %v9341 = vunpack.c.h.b16 %v9180
  %v9342 = vunpack.c.l.b16 %v9181
  %v9343 = vunpack.c.h.b16 %v9181
  %v9344 = vunpack.c.l.b16 %v9182
  %v9345 = vunpack.c.h.b16 %v9182
  %v9346 = vunpack.c.l.b16 %v9183
  %v9347 = vunpack.c.h.b16 %v9183
  %v9348 = vunpack.c.l.b16 %v9184
  %v9349 = vunpack.c.h.b16 %v9184
  %v9350 = vunpack.c.l.b16 %v9185
  %v9351 = vunpack.c.h.b16 %v9185
  %v9352 = vunpack.c.l.b16 %v9186
  %v9353 = vunpack.c.h.b16 %v9186
  %v9354 = vunpack.c.l.b16 %v9187
  %v9355 = vunpack.c.h.b16 %v9187
  %v9356 = vunpack.c.l.b16 %v9188
  %v9357 = vunpack.c.h.b16 %v9188
  %v9358 = vunpack.c.l.b16 %v9189
  %v9359 = vunpack.c.h.b16 %v9189
  %v9360 = vunpack.c.l.b16 %v9190
  %v9361 = vunpack.c.h.b16 %v9190
  %v9362 = vunpack.c.l.b16 %v9191
  %v9363 = vunpack.c.h.b16 %v9191
  %v9364 = vunpack.c.l.b16 %v9192
  %v9365 = vunpack.c.h.b16 %v9192
  %v9366 = vunpack.c.l.b16 %v9193
  %v9367 = vunpack.c.h.b16 %v9193
  %v9368 = vunpack.c.l.b16 %v9194
  %v9369 = vunpack.c.h.b16 %v9194
  %v9370 = vunpack.c.l.b16 %v9195
  %v9371 = vunpack.c.h.b16 %v9195
  %v9372 = vunpack.c.l.b16 %v9196
  %v9373 = vunpack.c.h.b16 %v9196
  %v9374 = vunpack.c.l.b16 %v9197
  %v9375 = vunpack.c.h.b16 %v9197
  %v9376 = vunpack.c.l.b16 %v9198
  %v9377 = vunpack.c.h.b16 %v9198
  %v9378 = vunpack.c.l.b16 %v9199
  %v9379 = vunpack.c.h.b16 %v9199
  %v9380 = vunpack.c.l.b16 %v9200
  %v9381 = vunpack.c.h.b16 %v9200
  %v9382 = vunpack.c.l.b16 %v9201
  %v9383 = vunpack.c.h.b16 %v9201
  %v9384 = vunpack.c.l.b16 %v9202
  %v9385 = vunpack.c.h.b16 %v9202
  %v9386 = vunpack.c.l.b16 %v9203
  %v9387 = vunpack.c.h.b16 %v9203
  %v9388 = vunpack.c.l.b16 %v9204
  %v9389 = vunpack.c.h.b16 %v9204
  %v9390 = vunpack.c.l.b16 %v9205
  %v9391 = vunpack.c.h.b16 %v9205
  %v9392 = vunpack.c.l.b16 %v9206
  %v9393 = vunpack.c.h.b16 %v9206
  %v9394 = vunpack.c.l.b16 %v9207
  %v9395 = vunpack.c.h.b16 %v9207
  %v9396 = vunpack.c.l.b16 %v9208
  %v9397 = vunpack.c.h.b16 %v9208
  %v9398 = vunpack.c.l.b16 %v9209
  %v9399 = vunpack.c.h.b16 %v9209
  %v9400 = vunpack.c.l.b16 %v9210
  %v9401 = vunpack.c.h.b16 %v9210
  %v9402 = vunpack.c.l.b16 %v9211
  %v9403 = vunpack.c.h.b16 %v9211
  %v9404 = vpack.c.b16 %v9284, %v9276
  %v9405 = vpack.c.b16 %v9285, %v9277
  %v9406 = vpack.c.b16 %v9286, %v9278
  %v9407 = vpack.c.b16 %v9287, %v9279
  %v9408 = vpack.c.b16 %v9288, %v9280
  %v9409 = vpack.c.b16 %v9289, %v9281
  %v9410 = vpack.c.b16 %v9290, %v9282
  %v9411 = vpack.c.b16 %v9291, %v9283
  %v9412 = vpack.c.b16 %v9300, %v9292
  %v9413 = vpack.c.b16 %v9301, %v9293
  %v9414 = vpack.c.b16 %v9302, %v9294
  %v9415 = vpack.c.b16 %v9303, %v9295
  %v9416 = vpack.c.b16 %v9304, %v9296
  %v9417 = vpack.c.b16 %v9305, %v9297
  %v9418 = vpack.c.b16 %v9306, %v9298
  %v9419 = vpack.c.b16 %v9307, %v9299
  %v9420 = vpack.c.b16 %v9316, %v9308
  %v9421 = vpack.c.b16 %v9317, %v9309
  %v9422 = vpack.c.b16 %v9318, %v9310
  %v9423 = vpack.c.b16 %v9319, %v9311
  %v9424 = vpack.c.b16 %v9320, %v9312
  %v9425 = vpack.c.b16 %v9321, %v9313
  %v9426 = vpack.c.b16 %v9322, %v9314
  %v9427 = vpack.c.b16 %v9323, %v9315
  %v9428 = vpack.c.b16 %v9332, %v9324
  %v9429 = vpack.c.b16 %v9333, %v9325
  %v9430 = vpack.c.b16 %v9334, %v9326
  %v9431 = vpack.c.b16 %v9335, %v9327
  %v9432 = vpack.c.b16 %v9336, %v9328
  %v9433 = vpack.c.b16 %v9337, %v9329
  %v9434 = vpack.c.b16 %v9338, %v9330
  %v9435 = vpack.c.b16 %v9339, %v9331
  %v9436 = vpack.c.b16 %v9348, %v9340
  %v9437 = vpack.c.b16 %v9349, %v9341
  %v9438 = vpack.c.b16 %v9350, %v9342
  %v9439 = vpack.c.b16 %v9351, %v9343
  %v9440 = vpack.c.b16 %v9352, %v9344
  %v9441 = vpack.c.b16 %v9353, %v9345
  %v9442 = vpack.c.b16 %v9354, %v9346
  %v9443 = vpack.c.b16 %v9355, %v9347
  %v9444 = vpack.c.b16 %v9364, %v9356
  %v9445 = vpack.c.b16 %v9365, %v9357
  %v9446 = vpack.c.b16 %v9366, %v9358
  %v9447 = vpack.c.b16 %v9367, %v9359
  %v9448 = vpack.c.b16 %v9368, %v9360
  %v9449 = vpack.c.b16 %v9369, %v9361
  %v9450 = vpack.c.b16 %v9370, %v9362
  %v9451 = vpack.c.b16 %v9371, %v9363
  %v9452 = vpack.c.b16 %v9380, %v9372
  %v9453 = vpack.c.b16 %v9381, %v9373
  %v9454 = vpack.c.b16 %v9382, %v9374
  %v9455 = vpack.c.b16 %v9383, %v9375
  %v9456 = vpack.c.b16 %v9384, %v9376
  %v9457 = vpack.c.b16 %v9385, %v9377
  %v9458 = vpack.c.b16 %v9386, %v9378
  %v9459 = vpack.c.b16 %v9387, %v9379
  %v9460 = vpack.c.b16 %v9396, %v9388
  %v9461 = vpack.c.b16 %v9397, %v9389
  %v9462 = vpack.c.b16 %v9398, %v9390
  %v9463 = vpack.c.b16 %v9399, %v9391
  %v9464 = vpack.c.b16 %v9400, %v9392
  %v9465 = vpack.c.b16 %v9401, %v9393
  %v9466 = vpack.c.b16 %v9402, %v9394
  %v9467 = vpack.c.b16 %v9403, %v9395
  %9532 = vmatprep.subr.bf16.mxu0 %v9405
  %9533 = vmatpush1.bf16.msra.mxu0 %v9404
  %9534 = vmatprep.subr.bf16.mxu0 %v9413
  %9535 = vmatpush1.bf16.msra.mxu0 %v9412
  %9536 = vmatprep.subr.bf16.mxu0 %v9421
  %9537 = vmatpush1.bf16.msra.mxu0 %v9420
  %9538 = vmatprep.subr.bf16.mxu0 %v9429
  %9539 = vmatpush1.bf16.msra.mxu0 %v9428
  %9540 = vmatprep.subr.bf16.mxu0 %v9437
  %9541 = vmatpush1.bf16.msra.mxu0 %v9436
  %9542 = vmatprep.subr.bf16.mxu0 %v9445
  %9543 = vmatpush1.bf16.msra.mxu0 %v9444
  %9544 = vmatprep.subr.bf16.mxu0 %v9453
  %9545 = vmatpush1.bf16.msra.mxu0 %v9452
  %9546 = vmatprep.subr.bf16.mxu0 %v9461
  %9547 = vmatpush1.bf16.msra.mxu0 %v9460
  %9548 = vmatprep.subr.bf16.mxu0 0
  %9549 = vmatpush1.bf16.msra.mxu0 0
  %9550 = vmatprep.subr.bf16.mxu0 0
  %9551 = vmatpush1.bf16.msra.mxu0 0
  %9552 = vmatprep.subr.bf16.mxu0 0
  %9553 = vmatpush1.bf16.msra.mxu0 0
  %9554 = vmatprep.subr.bf16.mxu0 0
  %9555 = vmatpush1.bf16.msra.mxu0 0
  %9556 = vmatprep.subr.bf16.mxu0 0
  %9557 = vmatpush1.bf16.msra.mxu0 0
  %9558 = vmatprep.subr.bf16.mxu0 0
  %9559 = vmatpush1.bf16.msra.mxu0 0
  %9560 = vmatprep.subr.bf16.mxu0 0
  %9561 = vmatpush1.bf16.msra.mxu0 0
  %9562 = vmatprep.subr.bf16.mxu0 0
  %9563 = vmatpush1.bf16.msra.mxu0 0
  %9564 = vmatprep.mubr.bf16.mxu0 0
  %9565 = vmatmul.mubr.bf16.gmra.mrb[0].mxu0 %v9147
  %v9566 = vpop.f32.mrb[0].mxu0
  %v9567 = vadd.f32 0.0, %v9566
  %v9568 = vpop.f32.mrb[0].mxu0
  %v9569 = vadd.f32 0.0, %v9568
  %v9570 = vpop.f32.mrb[0].mxu0
  %v9571 = vpop.f32.mrb[0].mxu0
  %9572 = vdwg.mxu0
  %9573 = vmatprep.subr.bf16.mxu0 %v9407
  %9574 = vmatpush1.bf16.msra.mxu0 %v9406
  %9575 = vmatprep.subr.bf16.mxu0 %v9415
  %9576 = vmatpush1.bf16.msra.mxu0 %v9414
  %9577 = vmatprep.subr.bf16.mxu0 %v9423
  %9578 = vmatpush1.bf16.msra.mxu0 %v9422
  %9579 = vmatprep.subr.bf16.mxu0 %v9431
  %9580 = vmatpush1.bf16.msra.mxu0 %v9430
  %9581 = vmatprep.subr.bf16.mxu0 %v9439
  %9582 = vmatpush1.bf16.msra.mxu0 %v9438
  %9583 = vmatprep.subr.bf16.mxu0 %v9447
  %9584 = vmatpush1.bf16.msra.mxu0 %v9446
  %9585 = vmatprep.subr.bf16.mxu0 %v9455
  %9586 = vmatpush1.bf16.msra.mxu0 %v9454
  %9587 = vmatprep.subr.bf16.mxu0 %v9463
  %9588 = vmatpush1.bf16.msra.mxu0 %v9462
  %9589 = vmatprep.subr.bf16.mxu0 0
  %9590 = vmatpush1.bf16.msra.mxu0 0
  %9591 = vmatprep.subr.bf16.mxu0 0
  %9592 = vmatpush1.bf16.msra.mxu0 0
  %9593 = vmatprep.subr.bf16.mxu0 0
  %9594 = vmatpush1.bf16.msra.mxu0 0
  %9595 = vmatprep.subr.bf16.mxu0 0
  %9596 = vmatpush1.bf16.msra.mxu0 0
  %9597 = vmatprep.subr.bf16.mxu0 0
  %9598 = vmatpush1.bf16.msra.mxu0 0
  %9599 = vmatprep.subr.bf16.mxu0 0
  %9600 = vmatpush1.bf16.msra.mxu0 0
  %9601 = vmatprep.subr.bf16.mxu0 0
  %9602 = vmatpush1.bf16.msra.mxu0 0
  %9603 = vmatprep.subr.bf16.mxu0 0
  %9604 = vmatpush1.bf16.msra.mxu0 0
  %9605 = vmatprep.mubr.bf16.mxu0 0
  %9606 = vmatmul.mubr.bf16.gmra.mrb[0].mxu0 %v9147
  %v9607 = vpop.f32.mrb[0].mxu0
  %v9608 = vadd.f32 0.0, %v9607
  %v9609 = vpop.f32.mrb[0].mxu0
  %v9610 = vadd.f32 0.0, %v9609
  %v9611 = vpop.f32.mrb[0].mxu0
  %v9612 = vpop.f32.mrb[0].mxu0
  %9613 = vdwg.mxu0
  %9614 = vmatprep.subr.bf16.mxu0 %v9409
  %9615 = vmatpush1.bf16.msra.mxu0 %v9408
  %9616 = vmatprep.subr.bf16.mxu0 %v9417
  %9617 = vmatpush1.bf16.msra.mxu0 %v9416
  %9618 = vmatprep.subr.bf16.mxu0 %v9425
  %9619 = vmatpush1.bf16.msra.mxu0 %v9424
  %9620 = vmatprep.subr.bf16.mxu0 %v9433
  %9621 = vmatpush1.bf16.msra.mxu0 %v9432
  %9622 = vmatprep.subr.bf16.mxu0 %v9441
  %9623 = vmatpush1.bf16.msra.mxu0 %v9440
  %9624 = vmatprep.subr.bf16.mxu0 %v9449
  %9625 = vmatpush1.bf16.msra.mxu0 %v9448
  %9626 = vmatprep.subr.bf16.mxu0 %v9457
  %9627 = vmatpush1.bf16.msra.mxu0 %v9456
  %9628 = vmatprep.subr.bf16.mxu0 %v9465
  %9629 = vmatpush1.bf16.msra.mxu0 %v9464
  %9630 = vmatprep.subr.bf16.mxu0 0
  %9631 = vmatpush1.bf16.msra.mxu0 0
  %9632 = vmatprep.subr.bf16.mxu0 0
  %9633 = vmatpush1.bf16.msra.mxu0 0
  %9634 = vmatprep.subr.bf16.mxu0 0
  %9635 = vmatpush1.bf16.msra.mxu0 0
  %9636 = vmatprep.subr.bf16.mxu0 0
  %9637 = vmatpush1.bf16.msra.mxu0 0
  %9638 = vmatprep.subr.bf16.mxu0 0
  %9639 = vmatpush1.bf16.msra.mxu0 0
  %9640 = vmatprep.subr.bf16.mxu0 0
  %9641 = vmatpush1.bf16.msra.mxu0 0
  %9642 = vmatprep.subr.bf16.mxu0 0
  %9643 = vmatpush1.bf16.msra.mxu0 0
  %9644 = vmatprep.subr.bf16.mxu0 0
  %9645 = vmatpush1.bf16.msra.mxu0 0
  %9646 = vmatprep.mubr.bf16.mxu0 0
  %9647 = vmatmul.mubr.bf16.gmra.mrb[0].mxu0 %v9147
  %v9648 = vpop.f32.mrb[0].mxu0
  %v9649 = vadd.f32 0.0, %v9648
  %v9650 = vpop.f32.mrb[0].mxu0
  %v9651 = vadd.f32 0.0, %v9650
  %v9652 = vpop.f32.mrb[0].mxu0
  %v9653 = vpop.f32.mrb[0].mxu0
  %9654 = vdwg.mxu0
  %9655 = vmatprep.subr.bf16.mxu0 %v9411
  %9656 = vmatpush1.bf16.msra.mxu0 %v9410
  %9657 = vmatprep.subr.bf16.mxu0 %v9419
  %9658 = vmatpush1.bf16.msra.mxu0 %v9418
  %9659 = vmatprep.subr.bf16.mxu0 %v9427
  %9660 = vmatpush1.bf16.msra.mxu0 %v9426
  %9661 = vmatprep.subr.bf16.mxu0 %v9435
  %9662 = vmatpush1.bf16.msra.mxu0 %v9434
  %9663 = vmatprep.subr.bf16.mxu0 %v9443
  %9664 = vmatpush1.bf16.msra.mxu0 %v9442
  %9665 = vmatprep.subr.bf16.mxu0 %v9451
  %9666 = vmatpush1.bf16.msra.mxu0 %v9450
  %9667 = vmatprep.subr.bf16.mxu0 %v9459
  %9668 = vmatpush1.bf16.msra.mxu0 %v9458
  %9669 = vmatprep.subr.bf16.mxu0 %v9467
  %9670 = vmatpush1.bf16.msra.mxu0 %v9466
  %9671 = vmatprep.subr.bf16.mxu0 0
  %9672 = vmatpush1.bf16.msra.mxu0 0
  %9673 = vmatprep.subr.bf16.mxu0 0
  %9674 = vmatpush1.bf16.msra.mxu0 0
  %9675 = vmatprep.subr.bf16.mxu0 0
  %9676 = vmatpush1.bf16.msra.mxu0 0
  %9677 = vmatprep.subr.bf16.mxu0 0
  %9678 = vmatpush1.bf16.msra.mxu0 0
  %9679 = vmatprep.subr.bf16.mxu0 0
  %9680 = vmatpush1.bf16.msra.mxu0 0
  %9681 = vmatprep.subr.bf16.mxu0 0
  %9682 = vmatpush1.bf16.msra.mxu0 0
  %9683 = vmatprep.subr.bf16.mxu0 0
  %9684 = vmatpush1.bf16.msra.mxu0 0
  %9685 = vmatprep.subr.bf16.mxu0 0
  %9686 = vmatpush1.bf16.msra.mxu0 0
  %9687 = vmatprep.mubr.bf16.mxu0 0
  %9688 = vmatmul.mubr.bf16.gmra.mrb[0].mxu0 %v9147
  %v9689 = vpop.f32.mrb[0].mxu0
  %v9690 = vadd.f32 0.0, %v9689
  %v9691 = vpop.f32.mrb[0].mxu0
  %v9692 = vadd.f32 0.0, %v9691
  %v9693 = vpop.f32.mrb[0].mxu0
  %v9694 = vpop.f32.mrb[0].mxu0
  %9695 = vdwg.mxu0
  %v9696 = vmax.f32 %v9567, %v9649
  %v9697 = vmax.f32 %v9569, %v9651
  %v9698 = vmax.f32 %v9608, %v9690
  %v9699 = vmax.f32 %v9610, %v9692
  %v9700 = vld [vmem:[%s2] sm:$0xf]
  %v9702 = vlaneseq
  %v9703 = vshrl.u32 %v9702, 7
  %v9704 = vsub.s32 0, %v9703
  %v9705 = vrot.slane %v9700, %v9704
  %v9706 = vlaneseq
  %v9707 = vshrl.u32 %v9706, 7
  %v9708 = vsub.s32 1, %v9707
  %v9709 = vrot.slane %v9700, %v9708
  %v9710 = vlaneseq
  %v9711 = vshrl.u32 %v9710, 7
  %v9712 = vsub.s32 2, %v9711
  %v9713 = vrot.slane %v9700, %v9712
  %v9714 = vlaneseq
  %v9715 = vshrl.u32 %v9714, 7
  %v9716 = vsub.s32 3, %v9715
  %v9717 = vrot.slane %v9700, %v9716
  %v9722 = vadd.f32 %v9696, %v9705
  %v9723 = vadd.f32 %v9697, %v9709
  %v9724 = vadd.f32 %v9698, %v9713
  %v9725 = vadd.f32 %v9699, %v9717
  %v9726 = vmax.f32 %v9722, 0.0
  %v9727 = vmax.f32 %v9723, 0.0
  %v9728 = vmax.f32 %v9724, 0.0
  %v9729 = vmax.f32 %v9725, 0.0
  %v9730 = vmax.f32 %v9726, %v9728
  %v9731 = vmax.f32 %v9727, %v9729
  %v9732 = vld [vmem:[#allocation2] sm:$0xff]
  %v9733 = vpack.c.bf16 %v9730, %v9730
  %v9734 = vpack.c.bf16 %v9731, %v9731
  %s9735 = scalar_lea.vmem %s3, 1536
  %v9736 = vld [vmem:[%s9735] sm:$0xf]
  %v9737 = vld [vmem:[%s9735 + $0x4] sm:$0xf]
  %v9738 = vld [vmem:[%s9735 + $0x8] sm:$0xf]
  %v9739 = vld [vmem:[%s9735 + $0xc] sm:$0xf]
  %v9740 = vld [vmem:[%s9735 + $0x10] sm:$0xf]
  %v9741 = vld [vmem:[%s9735 + $0x14] sm:$0xf]
  %v9742 = vld [vmem:[%s9735 + $0x18] sm:$0xf]
  %v9743 = vld [vmem:[%s9735 + $0x1c] sm:$0xf]
  %v9744 = vld [vmem:[%s9735 + $0x20] sm:$0xf]
  %v9745 = vld [vmem:[%s9735 + $0x24] sm:$0xf]
  %v9746 = vld [vmem:[%s9735 + $0x28] sm:$0xf]
  %v9747 = vld [vmem:[%s9735 + $0x2c] sm:$0xf]
  %v9748 = vld [vmem:[%s9735 + $0x30] sm:$0xf]
  %v9749 = vld [vmem:[%s9735 + $0x34] sm:$0xf]
  %v9750 = vld [vmem:[%s9735 + $0x38] sm:$0xf]
  %v9751 = vld [vmem:[%s9735 + $0x3c] sm:$0xf]
  %v9752 = vld [vmem:[%s9735 + $0x40] sm:$0xf]
  %v9753 = vld [vmem:[%s9735 + $0x44] sm:$0xf]
  %v9754 = vld [vmem:[%s9735 + $0x48] sm:$0xf]
  %v9755 = vld [vmem:[%s9735 + $0x4c] sm:$0xf]
  %v9756 = vld [vmem:[%s9735 + $0x50] sm:$0xf]
  %v9757 = vld [vmem:[%s9735 + $0x54] sm:$0xf]
  %v9758 = vld [vmem:[%s9735 + $0x58] sm:$0xf]
  %v9759 = vld [vmem:[%s9735 + $0x5c] sm:$0xf]
  %v9760 = vld [vmem:[%s9735 + $0x60] sm:$0xf]
  %v9761 = vld [vmem:[%s9735 + $0x64] sm:$0xf]
  %v9762 = vld [vmem:[%s9735 + $0x68] sm:$0xf]
  %v9763 = vld [vmem:[%s9735 + $0x6c] sm:$0xf]
  %v9764 = vld [vmem:[%s9735 + $0x70] sm:$0xf]
  %v9765 = vld [vmem:[%s9735 + $0x74] sm:$0xf]
  %v9766 = vld [vmem:[%s9735 + $0x78] sm:$0xf]
  %v9767 = vld [vmem:[%s9735 + $0x7c] sm:$0xf]
  %v9800 = vunpack.c.l.b16 %v9736
  %v9801 = vunpack.c.l.b16 %v9737
  %v9802 = vunpack.c.l.b16 %v9738
  %v9803 = vunpack.c.l.b16 %v9739
  %v9804 = vunpack.c.l.b16 %v9740
  %v9805 = vunpack.c.l.b16 %v9741
  %v9806 = vunpack.c.l.b16 %v9742
  %v9807 = vunpack.c.l.b16 %v9743
  %v9808 = vunpack.c.l.b16 %v9744
  %v9809 = vunpack.c.l.b16 %v9745
  %v9810 = vunpack.c.l.b16 %v9746
  %v9811 = vunpack.c.l.b16 %v9747
  %v9812 = vunpack.c.l.b16 %v9748
  %v9813 = vunpack.c.l.b16 %v9749
  %v9814 = vunpack.c.l.b16 %v9750
  %v9815 = vunpack.c.l.b16 %v9751
  %v9816 = vunpack.c.l.b16 %v9752
  %v9817 = vunpack.c.l.b16 %v9753
  %v9818 = vunpack.c.l.b16 %v9754
  %v9819 = vunpack.c.l.b16 %v9755
  %v9820 = vunpack.c.l.b16 %v9756
  %v9821 = vunpack.c.l.b16 %v9757
  %v9822 = vunpack.c.l.b16 %v9758
  %v9823 = vunpack.c.l.b16 %v9759
  %v9824 = vunpack.c.l.b16 %v9760
  %v9825 = vunpack.c.l.b16 %v9761
  %v9826 = vunpack.c.l.b16 %v9762
  %v9827 = vunpack.c.l.b16 %v9763
  %v9828 = vunpack.c.l.b16 %v9764
  %v9829 = vunpack.c.l.b16 %v9765
  %v9830 = vunpack.c.l.b16 %v9766
  %v9831 = vunpack.c.l.b16 %v9767
  %v9832 = vpack.c.b16 %v9801, %v9800
  %v9833 = vpack.c.b16 %v9803, %v9802
  %v9834 = vpack.c.b16 %v9805, %v9804
  %v9835 = vpack.c.b16 %v9807, %v9806
  %v9836 = vpack.c.b16 %v9809, %v9808
  %v9837 = vpack.c.b16 %v9811, %v9810
  %v9838 = vpack.c.b16 %v9813, %v9812
  %v9839 = vpack.c.b16 %v9815, %v9814
  %v9840 = vpack.c.b16 %v9817, %v9816
  %v9841 = vpack.c.b16 %v9819, %v9818
  %v9842 = vpack.c.b16 %v9821, %v9820
  %v9843 = vpack.c.b16 %v9823, %v9822
  %v9844 = vpack.c.b16 %v9825, %v9824
  %v9845 = vpack.c.b16 %v9827, %v9826
  %v9846 = vpack.c.b16 %v9829, %v9828
  %v9847 = vpack.c.b16 %v9831, %v9830
  %9864 = vmatprep.subr.bf16.mxu0 0
  %9865 = vmatpush1.bf16.msra.mxu0 %v9832
  %9866 = vmatprep.subr.bf16.mxu0 0
  %9867 = vmatpush1.bf16.msra.mxu0 %v9833
  %9868 = vmatprep.subr.bf16.mxu0 0
  %9869 = vmatpush1.bf16.msra.mxu0 %v9834
  %9870 = vmatprep.subr.bf16.mxu0 0
  %9871 = vmatpush1.bf16.msra.mxu0 %v9835
  %9872 = vmatprep.subr.bf16.mxu0 0
  %9873 = vmatpush1.bf16.msra.mxu0 %v9836
  %9874 = vmatprep.subr.bf16.mxu0 0
  %9875 = vmatpush1.bf16.msra.mxu0 %v9837
  %9876 = vmatprep.subr.bf16.mxu0 0
  %9877 = vmatpush1.bf16.msra.mxu0 %v9838
  %9878 = vmatprep.subr.bf16.mxu0 0
  %9879 = vmatpush1.bf16.msra.mxu0 %v9839
  %9880 = vmatprep.subr.bf16.mxu0 0
  %9881 = vmatpush1.bf16.msra.mxu0 %v9840
  %9882 = vmatprep.subr.bf16.mxu0 0
  %9883 = vmatpush1.bf16.msra.mxu0 %v9841
  %9884 = vmatprep.subr.bf16.mxu0 0
  %9885 = vmatpush1.bf16.msra.mxu0 %v9842
  %9886 = vmatprep.subr.bf16.mxu0 0
  %9887 = vmatpush1.bf16.msra.mxu0 %v9843
  %9888 = vmatprep.subr.bf16.mxu0 0
  %9889 = vmatpush1.bf16.msra.mxu0 %v9844
  %9890 = vmatprep.subr.bf16.mxu0 0
  %9891 = vmatpush1.bf16.msra.mxu0 %v9845
  %9892 = vmatprep.subr.bf16.mxu0 0
  %9893 = vmatpush1.bf16.msra.mxu0 %v9846
  %9894 = vmatprep.subr.bf16.mxu0 0
  %9895 = vmatpush1.bf16.msra.mxu0 %v9847
  %9896 = vmatprep.mubr.bf16.mxu0 %v9734
  %9897 = vmatmul.mubr.bf16.gmra.mrb[0].mxu0 %v9733
  %v9898 = vpop.f32.mrb[0].mxu0
  %v9899 = vadd.f32 0.0, %v9898
  %v9900 = vpop.f32.mrb[0].mxu0
  %v9901 = vpop.f32.mrb[0].mxu0
  %v9902 = vpop.f32.mrb[0].mxu0
  %9903 = vdwg.mxu0
  %v9904 = vadd.f32 %v9732, %v9899
  %9905 = vst [vmem:[#allocation2] sm:$0xff] %v9904
  %v9906 = vld [vmem:[#allocation2] sm:$0xff]
  %v9907 = vld [vmem:[%s4] sm:$0x1]
  %v9909 = vlaneseq
  %v9910 = vshrl.u32 %v9909, 7
  %v9911 = vsub.s32 0, %v9910
  %v9912 = vrot.slane %v9907, %v9911
  %v9914 = vadd.f32 %v9906, %v9912
  %v9915 = vmax.f32 %v9914, 0.0
  %v9916 = vpack.c.bf16 %v9915, %v9915
  %v9917 = vld [vmem:[%s5] sm:$0xf]
  %v9918 = vld [vmem:[%s5 + $0x4] sm:$0xf]
  %v9919 = vld [vmem:[%s5 + $0x8] sm:$0xf]
  %v9920 = vld [vmem:[%s5 + $0xc] sm:$0xf]
  %v9921 = vld [vmem:[%s5 + $0x10] sm:$0xf]
  %v9922 = vld [vmem:[%s5 + $0x14] sm:$0xf]
  %v9923 = vld [vmem:[%s5 + $0x18] sm:$0xf]
  %v9924 = vld [vmem:[%s5 + $0x1c] sm:$0xf]
  %v9925 = vld [vmem:[%s5 + $0x20] sm:$0xf]
  %v9926 = vld [vmem:[%s5 + $0x24] sm:$0xf]
  %v9927 = vld [vmem:[%s5 + $0x28] sm:$0xf]
  %v9928 = vld [vmem:[%s5 + $0x2c] sm:$0xf]
  %v9929 = vld [vmem:[%s5 + $0x30] sm:$0xf]
  %v9930 = vld [vmem:[%s5 + $0x34] sm:$0xf]
  %v9931 = vld [vmem:[%s5 + $0x38] sm:$0xf]
  %v9932 = vld [vmem:[%s5 + $0x3c] sm:$0xf]
  %v9933 = vld [vmem:[%s6] sm:$0x1]
  %v9935 = vlaneseq
  %v9936 = vshrl.u32 %v9935, 7
  %v9937 = vsub.s32 0, %v9936
  %v9938 = vrot.slane %v9933, %v9937
  %v9956 = vunpack.c.l.b16 %v9917
  %v9957 = vunpack.c.l.b16 %v9918
  %v9958 = vunpack.c.l.b16 %v9919
  %v9959 = vunpack.c.l.b16 %v9920
  %v9960 = vunpack.c.l.b16 %v9921
  %v9961 = vunpack.c.l.b16 %v9922
  %v9962 = vunpack.c.l.b16 %v9923
  %v9963 = vunpack.c.l.b16 %v9924
  %v9964 = vunpack.c.l.b16 %v9925
  %v9965 = vunpack.c.l.b16 %v9926
  %v9966 = vunpack.c.l.b16 %v9927
  %v9967 = vunpack.c.l.b16 %v9928
  %v9968 = vunpack.c.l.b16 %v9929
  %v9969 = vunpack.c.l.b16 %v9930
  %v9970 = vunpack.c.l.b16 %v9931
  %v9971 = vunpack.c.l.b16 %v9932
  %v9972 = vpack.c.b16 %v9957, %v9956
  %v9973 = vpack.c.b16 %v9959, %v9958
  %v9974 = vpack.c.b16 %v9961, %v9960
  %v9975 = vpack.c.b16 %v9963, %v9962
  %v9976 = vpack.c.b16 %v9965, %v9964
  %v9977 = vpack.c.b16 %v9967, %v9966
  %v9978 = vpack.c.b16 %v9969, %v9968
  %v9979 = vpack.c.b16 %v9971, %v9970
  %9988 = vmatprep.subr.bf16.mxu0 0
  %9989 = vmatpush1.bf16.msra.mxu0 %v9972
  %9990 = vmatprep.subr.bf16.mxu0 0
  %9991 = vmatpush1.bf16.msra.mxu0 %v9973
  %9992 = vmatprep.subr.bf16.mxu0 0
  %9993 = vmatpush1.bf16.msra.mxu0 %v9974
  %9994 = vmatprep.subr.bf16.mxu0 0
  %9995 = vmatpush1.bf16.msra.mxu0 %v9975
  %9996 = vmatprep.subr.bf16.mxu0 0
  %9997 = vmatpush1.bf16.msra.mxu0 %v9976
  %9998 = vmatprep.subr.bf16.mxu0 0
  %9999 = vmatpush1.bf16.msra.mxu0 %v9977
  %10000 = vmatprep.subr.bf16.mxu0 0
  %10001 = vmatpush1.bf16.msra.mxu0 %v9978
  %10002 = vmatprep.subr.bf16.mxu0 0
  %10003 = vmatpush1.bf16.msra.mxu0 %v9979
  %10004 = vmatprep.subr.bf16.mxu0 0
  %10005 = vmatpush1.bf16.msra.mxu0 0
  %10006 = vmatprep.subr.bf16.mxu0 0
  %10007 = vmatpush1.bf16.msra.mxu0 0
  %10008 = vmatprep.subr.bf16.mxu0 0
  %10009 = vmatpush1.bf16.msra.mxu0 0
  %10010 = vmatprep.subr.bf16.mxu0 0
  %10011 = vmatpush1.bf16.msra.mxu0 0
  %10012 = vmatprep.subr.bf16.mxu0 0
  %10013 = vmatpush1.bf16.msra.mxu0 0
  %10014 = vmatprep.subr.bf16.mxu0 0
  %10015 = vmatpush1.bf16.msra.mxu0 0
  %10016 = vmatprep.subr.bf16.mxu0 0
  %10017 = vmatpush1.bf16.msra.mxu0 0
  %10018 = vmatprep.subr.bf16.mxu0 0
  %10019 = vmatpush1.bf16.msra.mxu0 0
  %10020 = vmatprep.mubr.bf16.mxu0 0
  %10021 = vmatmul.mubr.bf16.gmra.mrb[0].mxu0 %v9916
  %v10022 = vpop.f32.mrb[0].mxu0
  %v10023 = vadd.f32 %v9938, %v10022
  %v10024 = vpop.f32.mrb[0].mxu0
  %v10025 = vpop.f32.mrb[0].mxu0
  %v10026 = vpop.f32.mrb[0].mxu0
  %10027 = vdwg.mxu0
  %10028 = vmax.xlane.f32.xlu0 %v10023
  %v10029 = vpop.xlane.xlu0 %10028
  %v10030 = vsub.f32 %v10023, %v10029
  %v10031 = vmul.f32 %v10030, 1.442695
  %v10032 = vpow.pop %v10031
  %10033 = vadd.xlane.f32.xlu0 %v10032
  %v10034 = vpop.xlane.xlu0 %10033
  %v10035 = vlog2.pop %v10034
  %v10036 = vmul.f32 %v10035, 0.6931472
  %v10037 = vsub.f32 %v10030, %v10036
  %10038 = vst [vmem:[%s7] sm:$0xff] %v10037
  // Predicated region
  $region30: #{net_forward.1} parent=0 // pred_check
    _
  $region31: #{net_forward.1} parent=0 // pred_check_branch
    %10040 = sbr.rel (0) target = $region33
  $region32: #{net_forward.1} parent=0 // pred_region
    _
  $region33: #{net_forward.1} parent=0 // pred_fallthru
    _
  // Predicated region
  $region34: #{net_forward.1} parent=0 // pred_check
    _
  $region35: #{net_forward.1} parent=0 // pred_check_branch
    %10042 = sbr.rel (0) target = $region37
  $region36: #{net_forward.1} parent=0 // pred_region
    _
  $region37: #{net_forward.1} parent=0 // pred_fallthru
    _

</llo_original>
